<compile_context>
chip_gen: v7x
topology: tpu7x:2x2x1
jax: 0.10.0
libtpu: 0.0.40
codegen_flags: <defaults>
</compile_context>

<pallas_src>
import functools

import jax
import jax.numpy as jnp
from jax import lax
from jax.experimental import pallas as pl
from jax.experimental.pallas import tpu as pltpu

EPS = 1e-3      # BatchNorm eps in the PyTorch module
CP = 128        # channel axis padded to one full lane width (lane-dense stores)


# ------------------------- Pallas kernel: fused matmul ------------------------

def _mm_kernel(p_ref, w_ref, b_ref, o_ref, *, relu):
    """out = maybe_relu(patches @ wmat + bias); bf16 operands, f32 accumulate."""
    acc = jnp.dot(p_ref[...], w_ref[...], preferred_element_type=jnp.float32)
    acc = acc + b_ref[...]
    if relu:
        acc = jnp.maximum(acc, 0.0)
    o_ref[...] = acc


def matmul_bias_act(patches, wmat, bias, relu):
    """Single fused (M,K)x(K,Np) matmul; Np is a multiple of 128 (lane dense)."""
    M, K = patches.shape
    Np = wmat.shape[1]
    # Collapse the grid: whole M in one step when small; >=2 steps when larger
    # so both v7x TensorCores get work on the biggest layer.
    TM = M if (M <= 256 or M % 256 != 0) else 256
    return pl.pallas_call(
        functools.partial(_mm_kernel, relu=relu),
        out_shape=jax.ShapeDtypeStruct((M, Np), jnp.float32),
        grid=(M // TM,),
        in_specs=[pl.BlockSpec((TM, K), lambda i: (i, 0)),
                  pl.BlockSpec((K, Np), lambda i: (0, 0)),
                  pl.BlockSpec((1, Np), lambda i: (0, 0))],
        out_specs=pl.BlockSpec((TM, Np), lambda i: (i, 0)),
        compiler_params=pltpu.CompilerParams(dimension_semantics=("parallel",)),
    )(patches, wmat, bias)


# --------------- Pallas kernel: fused non_bottleneck_1d block -----------------

def _nb_kernel(x_ref, w1_ref, b1_ref, w2_ref, b2_ref, w3_ref, b3_ref, w4_ref,
               b4_ref, o_ref, *, W):
    """One ERFNet non_bottleneck_1d block (dilation 1), fully fused.

    x_ref / o_ref : (M, CP) f32, one image, rows ordered r = h*W + w.
    wK_ref        : (3, CP, CP) bf16 tap matrices [ci, co] (BN scale folded).
    bK_ref        : (1, CP) f32 bias / folded-BN shift.
    Intermediates never leave VMEM; the +-1 spatial shifts are implemented as
    0/1 selection-matrix matmuls (each output row picks exactly one input row
    or zero, hence exact for bf16 data).
    """
    M = x_ref.shape[0]
    bf16 = jnp.bfloat16
    x = x_ref[...]                             # (M, CP) f32
    x_bf = x.astype(bf16)

    r = lax.broadcasted_iota(jnp.int32, (M, M), 0)     # output row index
    c = lax.broadcasted_iota(jnp.int32, (M, M), 1)     # source row index
    wcol = jnp.bitwise_and(r, W - 1)                   # w = r % W (W power of 2)

    def sel_mat(delta, check_w):
        sel = (c - r) == delta
        if check_w:            # +-1 shifts along W must not wrap across rows
            sel = sel & (wcol + delta >= 0) & (wcol + delta < W)
        return jnp.where(sel, 1.0, 0.0).astype(bf16)

    s_hm, s_hp = sel_mat(-W, False), sel_mat(W, False)   # +-1 along H
    s_wm, s_wp = sel_mat(-1, True), sel_mat(1, True)     # +-1 along W

    def shift(a, s):
        return jnp.dot(s, a, preferred_element_type=jnp.float32).astype(bf16)

    def conv(a, s_m, s_p, w_ref, b_ref, residual=None):
        taps = (shift(a, s_m), a, shift(a, s_p))
        acc = b_ref[...]
        for t in range(3):
            acc = acc + jnp.dot(taps[t], w_ref[t],
                                preferred_element_type=jnp.float32)
        if residual is not None:
            acc = acc + residual
        return jnp.maximum(acc, 0.0)

    y = conv(x_bf, s_hm, s_hp, w1_ref, b1_ref).astype(bf16)       # conv3x1_1+relu
    y = conv(y, s_wm, s_wp, w2_ref, b2_ref).astype(bf16)          # conv1x3_1+bn1+relu
    y = conv(y, s_hm, s_hp, w3_ref, b3_ref).astype(bf16)          # conv3x1_2+relu
    # conv1x3_2 + bn2 + residual + relu (Dropout2d has p=0 -> skipped, matching
    # the PyTorch `if self.dropout.p != 0` guard).
    o_ref[...] = conv(y, s_wm, s_wp, w4_ref, b4_ref, residual=x)


def nb_block(x2d, prm, H, W):
    """Run one fused non_bottleneck_1d block. x2d: (N*H*W, CP) f32."""
    assert W & (W - 1) == 0, "fused kernel assumes W is a power of two"
    M = H * W
    N = x2d.shape[0] // M
    wspec = pl.BlockSpec((3, CP, CP), lambda n: (0, 0, 0))
    bspec = pl.BlockSpec((1, CP), lambda n: (0, 0))
    return pl.pallas_call(
        functools.partial(_nb_kernel, W=W),
        out_shape=jax.ShapeDtypeStruct((N * M, CP), jnp.float32),
        grid=(N,),                        # one image per step; parallel for v7x
        in_specs=[pl.BlockSpec((M, CP), lambda n: (n, 0)),
                  wspec, bspec, wspec, bspec, wspec, bspec, wspec, bspec],
        out_specs=pl.BlockSpec((M, CP), lambda n: (n, 0)),
        compiler_params=pltpu.CompilerParams(dimension_semantics=("parallel",)),
    )(x2d, prm["w1"], prm["b1"], prm["w2"], prm["b2"],
      prm["w3"], prm["b3"], prm["w4"], prm["b4"])


# ------------------------------ parameter prep --------------------------------

def bn_fold(bn, conv_bias):
    """Eval-mode BatchNorm folded to per-channel scale/shift (conv bias included)."""
    scale = bn["gamma"] / jnp.sqrt(bn["var"] + EPS)
    shift = bn["beta"] + (conv_bias - bn["mean"]) * scale
    return scale, shift


def prep_nb(p, C):
    """Fold BN, transpose conv weights to [ci, co] tap matrices, pad channels to CP."""
    def w_taps(w, scale=None):
        along_h = w.shape[2] == 3                       # (C,C,3,1) vs (C,C,1,3)
        taps = [w[:, :, k, 0].T if along_h else w[:, :, 0, k].T for k in range(3)]
        m = jnp.stack(taps, 0)                          # (3, C, C) = [tap, ci, co]
        if scale is not None:
            m = m * scale.reshape(1, 1, C)
        return jnp.pad(m, ((0, 0), (0, CP - C), (0, CP - C))).astype(jnp.bfloat16)

    def b_pad(b):
        return jnp.pad(b, (0, CP - C)).reshape(1, CP).astype(jnp.float32)

    s1, sh1 = bn_fold(p["bn1"], p["b13_1"])
    s2, sh2 = bn_fold(p["bn2"], p["b13_2"])
    return dict(w1=w_taps(p["w31_1"]),      b1=b_pad(p["b31_1"]),
                w2=w_taps(p["w13_1"], s1),  b2=b_pad(sh1),
                w3=w_taps(p["w31_2"]),      b3=b_pad(p["b31_2"]),
                w4=w_taps(p["w13_2"], s2),  b4=b_pad(sh2))


# ----------------- ConvTranspose2d via output-phase decomposition -------------

def convT_phase_fused(x, w_iohw, *, padding, scale, shift, relu):
    """PyTorch ConvTranspose2d, stride 2, as one fused Pallas matmul.

    The output is split into its 4 interleaved phases out[2i+a, 2j+b]; every
    phase is a stride-1 combination of at most 4 shifted input taps, so the
    layer becomes ONE (N*H*W, taps*CP) x (taps*CP, 4*Cout) matmul with a
    lane-dense (multiple of 128) output.  Covers the decoder's (k=3,p=1,op=1)
    and (k=2,p=0,op=0) configurations (output spatial size = 2H).
    x: (N,H,W,Cp) f32 with real input channels = w_iohw.shape[0] (rest zero).
    """
    N, H, W, Cp = x.shape
    cin, cout, kh, kw = w_iohw.shape
    phases = ((0, 0), (0, 1), (1, 0), (1, 1))

    def kidx(a, t):
        ki = a + padding - 2 * t
        return ki if 0 <= ki < kh else None

    taps = [t for t in phases
            if any(kidx(a, t[0]) is not None and kidx(b, t[1]) is not None
                   for a, b in phases)]

    # Shifted input copies (zero beyond the border), concatenated along channels.
    xpad = jnp.pad(x, ((0, 0), (0, 1), (0, 1), (0, 0)))
    cols = [xpad[:, ti:ti + H, tj:tj + W, :] for ti, tj in taps]
    patches = jnp.concatenate(cols, axis=-1).reshape(N * H * W, len(taps) * Cp)

    # Block weight: rows = (tap, ci), cols = (phase, co); BN scale folded in.
    wblk = jnp.zeros((len(taps), Cp, 4, cout), jnp.float32)
    for t_i, (ti, tj) in enumerate(taps):
        for p_i, (a, b) in enumerate(phases):
            ki, kj = kidx(a, ti), kidx(b, tj)
            if ki is not None and kj is not None:
                wblk = wblk.at[t_i, :cin, p_i, :].set(w_iohw[:, :, ki, kj])
    wblk = (wblk * scale.reshape(1, 1, 1, cout)).reshape(len(taps) * Cp, 4 * cout)
    bblk = jnp.tile(shift, 4).reshape(1, 4 * cout)

    ncol = 4 * cout
    ncol_p = max(128, -(-ncol // 128) * 128)            # lane-dense output width
    wblk = jnp.pad(wblk, ((0, 0), (0, ncol_p - ncol))).astype(jnp.bfloat16)
    bblk = jnp.pad(bblk, ((0, 0), (0, ncol_p - ncol))).astype(jnp.float32)

    out = matmul_bias_act(patches.astype(jnp.bfloat16), wblk, bblk, relu)
    out = out[:, :ncol].reshape(N, H, W, 2, 2, cout)
    out = out.transpose(0, 1, 3, 2, 4, 5).reshape(N, 2 * H, 2 * W, cout)
    return out


# --------------------------------- Decoder ------------------------------------

def decoder_forward(x_nchw, params):
    N = x_nchw.shape[0]
    nc = params["out_w"].shape[1]
    x = jnp.transpose(x_nchw, (0, 2, 3, 1)).astype(jnp.float32)       # (N,4,4,128)

    # UpsamplerBlock(128 -> 64): ConvT(3,s2,p1,op1) + BN + ReLU
    s, sh = bn_fold(params["up1"]["bn"], params["up1"]["b"])
    x = convT_phase_fused(x, params["up1"]["w"], padding=1,
                          scale=s, shift=sh, relu=True)               # (N,8,8,64)
    H = W = 8
    x = jnp.pad(x, ((0, 0), (0, 0), (0, 0), (0, CP - 64))).reshape(N * H * W, CP)
    x = nb_block(x, prep_nb(params["nb1"], 64), H, W)
    x = nb_block(x, prep_nb(params["nb2"], 64), H, W)

    # UpsamplerBlock(64 -> 16)
    x = x.reshape(N, H, W, CP)
    s, sh = bn_fold(params["up2"]["bn"], params["up2"]["b"])
    x = convT_phase_fused(x, params["up2"]["w"], padding=1,
                          scale=s, shift=sh, relu=True)               # (N,16,16,16)
    H = W = 16
    x = jnp.pad(x, ((0, 0), (0, 0), (0, 0), (0, CP - 16))).reshape(N * H * W, CP)
    x = nb_block(x, prep_nb(params["nb3"], 16), H, W)
    x = nb_block(x, prep_nb(params["nb4"], 16), H, W)

    # output ConvTranspose2d(16 -> num_classes, 2, stride 2)
    x = x.reshape(N, H, W, CP)
    x = convT_phase_fused(x, params["out_w"], padding=0,
                          scale=jnp.ones((nc,), jnp.float32),
                          shift=params["out_b"], relu=False)          # (N,32,32,nc)
    return jnp.transpose(x, (0, 3, 1, 2))                             # NHWC -> NCHW


# --------------------- independent plain-XLA reference ------------------------

def _conv_ref(x, w_oihw, pads, dil=(1, 1)):
    w = jnp.transpose(w_oihw, (2, 3, 1, 0)).astype(jnp.bfloat16)       # HWIO
    return lax.conv_general_dilated(
        x.astype(jnp.bfloat16), w, window_strides=(1, 1),
        padding=[(pads[0], pads[0]), (pads[1], pads[1])], rhs_dilation=dil,
        dimension_numbers=("NHWC", "HWIO", "NHWC"),
        preferred_element_type=jnp.float32)


def _convT_ref(x, w_iohw, stride, padding, out_pad):
    k = w_iohw.shape[2]
    w = jnp.transpose(w_iohw[:, :, ::-1, ::-1], (2, 3, 0, 1)).astype(jnp.bfloat16)
    lo, hi = k - 1 - padding, k - 1 - padding + out_pad
    return lax.conv_general_dilated(
        x.astype(jnp.bfloat16), w, window_strides=(1, 1),
        padding=[(lo, hi), (lo, hi)], lhs_dilation=(stride, stride),
        dimension_numbers=("NHWC", "HWIO", "NHWC"),
        preferred_element_type=jnp.float32)


def decoder_ref(x_nchw, params):
    """Reference via lax convs (same bf16-operand / f32-accumulate precision)."""
    def upsampler(x, p):
        s, sh = bn_fold(p["bn"], p["b"])
        return jax.nn.relu(_convT_ref(x, p["w"] * s[None, :, None, None], 2, 1, 1) + sh)

    def nb(x, p):
        y = jax.nn.relu(_conv_ref(x, p["w31_1"], (1, 0)) + p["b31_1"])
        s1, sh1 = bn_fold(p["bn1"], p["b13_1"])
        y = jax.nn.relu(_conv_ref(y, p["w13_1"] * s1[:, None, None, None], (0, 1)) + sh1)
        y = jax.nn.relu(_conv_ref(y, p["w31_2"], (1, 0)) + p["b31_2"])
        s2, sh2 = bn_fold(p["bn2"], p["b13_2"])
        y = _conv_ref(y, p["w13_2"] * s2[:, None, None, None], (0, 1)) + sh2
        return jax.nn.relu(y + x)

    x = jnp.transpose(x_nchw, (0, 2, 3, 1)).astype(jnp.float32)
    x = upsampler(x, params["up1"])
    x = nb(x, params["nb1"])
    x = nb(x, params["nb2"])
    x = upsampler(x, params["up2"])
    x = nb(x, params["nb3"])
    x = nb(x, params["nb4"])
    x = _convT_ref(x, params["out_w"], 2, 0, 0) + params["out_b"]
    return jnp.transpose(x, (0, 3, 1, 2))


# ------------------------------ param init ------------------------------------

def init_params(key, num_classes):
    keys = iter(jax.random.split(key, 256))

    def nrm(shape, s=0.1):
        return s * jax.random.normal(next(keys), shape, jnp.float32)

    def bn(c):
        return dict(gamma=1.0 + 0.1 * jax.random.normal(next(keys), (c,), jnp.float32),
                    beta=0.1 * jax.random.normal(next(keys), (c,), jnp.float32),
                    mean=0.1 * jax.random.normal(next(keys), (c,), jnp.float32),
                    var=1.0 + 0.1 * jnp.abs(jax.random.normal(next(keys), (c,), jnp.float32)))

    def upsampler(cin, cout):
        return dict(w=nrm((cin, cout, 3, 3)), b=nrm((cout,)), bn=bn(cout))

    def nb1d(c):
        return dict(w31_1=nrm((c, c, 3, 1)), b31_1=nrm((c,)),
                    w13_1=nrm((c, c, 1, 3)), b13_1=nrm((c,)),
                    bn1=bn(c),
                    w31_2=nrm((c, c, 3, 1)), b31_2=nrm((c,)),
                    w13_2=nrm((c, c, 1, 3)), b13_2=nrm((c,)),
                    bn2=bn(c))

    return dict(up1=upsampler(128, 64),
                nb1=nb1d(64), nb2=nb1d(64),
                up2=upsampler(64, 16),
                nb3=nb1d(16), nb4=nb1d(16),
                out_w=nrm((16, num_classes, 2, 2)),
                out_b=nrm((num_classes,)))


# --------------------------------- main ----------------------------------------

if __name__ == "__main__":
    num_classes = 5
    key = jax.random.PRNGKey(0)
    k_in, k_par = jax.random.split(key)

    # Decoder expects 128 input channels (ERFNet bottleneck features), NCHW.
    x = jax.random.normal(k_in, (2, 128, 4, 4), jnp.float32)
    params = init_params(k_par, num_classes)

    fwd = jax.jit(decoder_forward)
    out = jax.block_until_ready(fwd(x, params))
    assert out.shape == (2, num_classes, 32, 32), out.shape
    assert bool(jnp.all(jnp.isfinite(out)))

    # Independent XLA reference (lax convs, same precision choices).
    ref = jax.block_until_ready(jax.jit(decoder_ref)(x, params))
    err = float(jnp.max(jnp.abs(out - ref)))
    assert jnp.allclose(out, ref, rtol=2e-2, atol=2e-2), err

    print("KERNEL_OK")
</pallas_src>

<mosaic_0001>
module attributes {stable_mosaic.version = 11 : i64} {
  func.func @_mm_kernel(%arg0: i32, %arg1: memref<32x512xbf16, #tpu.memory_space<vmem>>, %arg2: memref<512x256xbf16, #tpu.memory_space<vmem>>, %arg3: memref<1x256xf32, #tpu.memory_space<vmem>>, %arg4: memref<32x256xf32, #tpu.memory_space<vmem>>) attributes {dimension_semantics = [#tpu.dimension_semantics<parallel>], iteration_bounds = array<i64: 1>, scalar_prefetch = 0 : i64, scratch_operands = 0 : i64, tpu.core_type = #tpu.core_type<tc>, window_params = [{transform_indices = @transform_0, window_bounds = array<i64: 32, 512>}, {pipeline_mode = #tpu.pipeline_mode<synchronous>, transform_indices = @transform_1, window_bounds = array<i64: 512, 256>}, {pipeline_mode = #tpu.pipeline_mode<synchronous>, transform_indices = @transform_2, window_bounds = array<i64: 1, 256>}, {transform_indices = @transform_3, window_bounds = array<i64: 32, 256>}]} {
    %c0 = arith.constant 0 : index
    %c0_0 = arith.constant 0 : index
    %0 = vector.load %arg1[%c0, %c0_0] : memref<32x512xbf16, #tpu.memory_space<vmem>>, vector<32x512xbf16>
    %c0_1 = arith.constant 0 : index
    %c0_2 = arith.constant 0 : index
    %1 = vector.load %arg2[%c0_1, %c0_2] : memref<512x256xbf16, #tpu.memory_space<vmem>>, vector<512x256xbf16>
    %cst = arith.constant dense<0.000000e+00> : vector<32x256xf32>
    %2 = tpu.matmul %0, %1, %cst {dimension_numbers = #tpu.dot_dimension_numbers<[1], [0], [0], [1], [0, 0, 1, 1], [], []>} : vector<32x512xbf16>, vector<512x256xbf16>, vector<32x256xf32> -> vector<32x256xf32>
    %c0_3 = arith.constant 0 : index
    %c0_4 = arith.constant 0 : index
    %3 = vector.load %arg3[%c0_3, %c0_4] : memref<1x256xf32, #tpu.memory_space<vmem>>, vector<1x256xf32>
    %4 = vector.broadcast %3 : vector<1x256xf32> to vector<32x256xf32>
    %5 = arith.addf %2, %4 : vector<32x256xf32>
    %cst_5 = arith.constant 0.000000e+00 : f32
    %6 = vector.broadcast %cst_5 : f32 to vector<32x256xf32>
    %7 = arith.maximumf %5, %6 : vector<32x256xf32>
    %c0_6 = arith.constant 0 : index
    %c0_7 = arith.constant 0 : index
    %8 = vector.load %arg4[%c0_6, %c0_7] : memref<32x256xf32, #tpu.memory_space<vmem>>, vector<32x256xf32>
    tpu.vector_store %arg4[%c0_6, %c0_7], %7 {strides = array<i32>} : memref<32x256xf32, #tpu.memory_space<vmem>>, vector<32x256xf32>,
    return
  }
  func.func @transform_0(%arg0: i32) -> (i32, i32) {
    %c0_i32 = arith.constant 0 : i32
    %c0_i32_0 = arith.constant 0 : i32
    return %arg0, %c0_i32 : i32, i32
  }
  func.func @transform_1(%arg0: i32) -> (i32, i32) {
    %c0_i32 = arith.constant 0 : i32
    %c0_i32_0 = arith.constant 0 : i32
    %c0_i32_1 = arith.constant 0 : i32
    return %c0_i32, %c0_i32_0 : i32, i32
  }
  func.func @transform_2(%arg0: i32) -> (i32, i32) {
    %c0_i32 = arith.constant 0 : i32
    %c0_i32_0 = arith.constant 0 : i32
    %c0_i32_1 = arith.constant 0 : i32
    return %c0_i32, %c0_i32_0 : i32, i32
  }
  func.func @transform_3(%arg0: i32) -> (i32, i32) {
    %c0_i32 = arith.constant 0 : i32
    %c0_i32_0 = arith.constant 0 : i32
    return %arg0, %c0_i32 : i32, i32
  }
}

module attributes {stable_mosaic.version = 11 : i64} {
  func.func @_nb_kernel(%arg0: i32, %arg1: memref<64x128xf32, #tpu.memory_space<vmem>>, %arg2: memref<3x128x128xbf16, #tpu.memory_space<vmem>>, %arg3: memref<1x128xf32, #tpu.memory_space<vmem>>, %arg4: memref<3x128x128xbf16, #tpu.memory_space<vmem>>, %arg5: memref<1x128xf32, #tpu.memory_space<vmem>>, %arg6: memref<3x128x128xbf16, #tpu.memory_space<vmem>>, %arg7: memref<1x128xf32, #tpu.memory_space<vmem>>, %arg8: memref<3x128x128xbf16, #tpu.memory_space<vmem>>, %arg9: memref<1x128xf32, #tpu.memory_space<vmem>>, %arg10: memref<64x128xf32, #tpu.memory_space<vmem>>) attributes {dimension_semantics = [#tpu.dimension_semantics<parallel>], iteration_bounds = array<i64: 2>, scalar_prefetch = 0 : i64, scratch_operands = 0 : i64, tpu.core_type = #tpu.core_type<tc>, window_params = [{transform_indices = @transform_0, window_bounds = array<i64: 64, 128>}, {pipeline_mode = #tpu.pipeline_mode<synchronous>, transform_indices = @transform_1, window_bounds = array<i64: 3, 128, 128>}, {pipeline_mode = #tpu.pipeline_mode<synchronous>, transform_indices = @transform_2, window_bounds = array<i64: 1, 128>}, {pipeline_mode = #tpu.pipeline_mode<synchronous>, transform_indices = @transform_3, window_bounds = array<i64: 3, 128, 128>}, {pipeline_mode = #tpu.pipeline_mode<synchronous>, transform_indices = @transform_4, window_bounds = array<i64: 1, 128>}, {pipeline_mode = #tpu.pipeline_mode<synchronous>, transform_indices = @transform_5, window_bounds = array<i64: 3, 128, 128>}, {pipeline_mode = #tpu.pipeline_mode<synchronous>, transform_indices = @transform_6, window_bounds = array<i64: 1, 128>}, {pipeline_mode = #tpu.pipeline_mode<synchronous>, transform_indices = @transform_7, window_bounds = array<i64: 3, 128, 128>}, {pipeline_mode = #tpu.pipeline_mode<synchronous>, transform_indices = @transform_8, window_bounds = array<i64: 1, 128>}, {transform_indices = @transform_9, window_bounds = array<i64: 64, 128>}]} {
    %c0 = arith.constant 0 : index
    %c0_0 = arith.constant 0 : index
    %0 = vector.load %arg1[%c0, %c0_0] : memref<64x128xf32, #tpu.memory_space<vmem>>, vector<64x128xf32>
    %1 = arith.truncf %0 : vector<64x128xf32> to vector<64x128xbf16>
    %2 = tpu.iota {dimensions = array<i32: 0>} : vector<64x64xi32>
    %3 = tpu.iota {dimensions = array<i32: 1>} : vector<64x64xi32>
    %c7_i32 = arith.constant 7 : i32
    %4 = vector.broadcast %c7_i32 : i32 to vector<64x64xi32>
    %5 = arith.andi %2, %4 : vector<64x64xi32>
    %6 = arith.subi %3, %2 : vector<64x64xi32>
    %c-8_i32 = arith.constant -8 : i32
    %7 = vector.broadcast %c-8_i32 : i32 to vector<64x64xi32>
    %8 = arith.cmpi eq, %6, %7 : vector<64x64xi32>
    %cst = arith.constant 1.000000e+00 : f32
    %cst_1 = arith.constant 0.000000e+00 : f32
    %9 = vector.broadcast %cst : f32 to vector<64x64xf32>
    %10 = vector.broadcast %cst_1 : f32 to vector<64x64xf32>
    %11 = arith.select %8, %9, %10 : vector<64x64xi1>, vector<64x64xf32>
    %12 = arith.truncf %11 : vector<64x64xf32> to vector<64x64xbf16>
    %13 = arith.subi %3, %2 : vector<64x64xi32>
    %c8_i32 = arith.constant 8 : i32
    %14 = vector.broadcast %c8_i32 : i32 to vector<64x64xi32>
    %15 = arith.cmpi eq, %13, %14 : vector<64x64xi32>
    %cst_2 = arith.constant 1.000000e+00 : f32
    %cst_3 = arith.constant 0.000000e+00 : f32
    %16 = vector.broadcast %cst_2 : f32 to vector<64x64xf32>
    %17 = vector.broadcast %cst_3 : f32 to vector<64x64xf32>
    %18 = arith.select %15, %16, %17 : vector<64x64xi1>, vector<64x64xf32>
    %19 = arith.truncf %18 : vector<64x64xf32> to vector<64x64xbf16>
    %20 = arith.subi %3, %2 : vector<64x64xi32>
    %c-1_i32 = arith.constant -1 : i32
    %21 = vector.broadcast %c-1_i32 : i32 to vector<64x64xi32>
    %22 = arith.cmpi eq, %20, %21 : vector<64x64xi32>
    %c-1_i32_4 = arith.constant -1 : i32
    %23 = vector.broadcast %c-1_i32_4 : i32 to vector<64x64xi32>
    %24 = arith.addi %5, %23 : vector<64x64xi32>
    %c0_i32 = arith.constant 0 : i32
    %25 = vector.broadcast %c0_i32 : i32 to vector<64x64xi32>
    %26 = arith.cmpi sge, %24, %25 : vector<64x64xi32>
    %27 = arith.andi %22, %26 : vector<64x64xi1>
    %c-1_i32_5 = arith.constant -1 : i32
    %28 = vector.broadcast %c-1_i32_5 : i32 to vector<64x64xi32>
    %29 = arith.addi %5, %28 : vector<64x64xi32>
    %c8_i32_6 = arith.constant 8 : i32
    %30 = vector.broadcast %c8_i32_6 : i32 to vector<64x64xi32>
    %31 = arith.cmpi slt, %29, %30 : vector<64x64xi32>
    %32 = arith.andi %27, %31 : vector<64x64xi1>
    %cst_7 = arith.constant 1.000000e+00 : f32
    %cst_8 = arith.constant 0.000000e+00 : f32
    %33 = vector.broadcast %cst_7 : f32 to vector<64x64xf32>
    %34 = vector.broadcast %cst_8 : f32 to vector<64x64xf32>
    %35 = arith.select %32, %33, %34 : vector<64x64xi1>, vector<64x64xf32>
    %36 = arith.truncf %35 : vector<64x64xf32> to vector<64x64xbf16>
    %37 = arith.subi %3, %2 : vector<64x64xi32>
    %c1_i32 = arith.constant 1 : i32
    %38 = vector.broadcast %c1_i32 : i32 to vector<64x64xi32>
    %39 = arith.cmpi eq, %37, %38 : vector<64x64xi32>
    %c1_i32_9 = arith.constant 1 : i32
    %40 = vector.broadcast %c1_i32_9 : i32 to vector<64x64xi32>
    %41 = arith.addi %5, %40 : vector<64x64xi32>
    %c0_i32_10 = arith.constant 0 : i32
    %42 = vector.broadcast %c0_i32_10 : i32 to vector<64x64xi32>
    %43 = arith.cmpi sge, %41, %42 : vector<64x64xi32>
    %44 = arith.andi %39, %43 : vector<64x64xi1>
    %c1_i32_11 = arith.constant 1 : i32
    %45 = vector.broadcast %c1_i32_11 : i32 to vector<64x64xi32>
    %46 = arith.addi %5, %45 : vector<64x64xi32>
    %c8_i32_12 = arith.constant 8 : i32
    %47 = vector.broadcast %c8_i32_12 : i32 to vector<64x64xi32>
    %48 = arith.cmpi slt, %46, %47 : vector<64x64xi32>
    %49 = arith.andi %44, %48 : vector<64x64xi1>
    %cst_13 = arith.constant 1.000000e+00 : f32
    %cst_14 = arith.constant 0.000000e+00 : f32
    %50 = vector.broadcast %cst_13 : f32 to vector<64x64xf32>
    %51 = vector.broadcast %cst_14 : f32 to vector<64x64xf32>
    %52 = arith.select %49, %50, %51 : vector<64x64xi1>, vector<64x64xf32>
    %53 = arith.truncf %52 : vector<64x64xf32> to vector<64x64xbf16>
    %cst_15 = arith.constant dense<0.000000e+00> : vector<64x128xf32>
    %54 = tpu.matmul %12, %1, %cst_15 {dimension_numbers = #tpu.dot_dimension_numbers<[1], [0], [0], [1], [0, 0, 1, 1], [], []>} : vector<64x64xbf16>, vector<64x128xbf16>, vector<64x128xf32> -> vector<64x128xf32>
    %55 = arith.truncf %54 : vector<64x128xf32> to vector<64x128xbf16>
    %cst_16 = arith.constant dense<0.000000e+00> : vector<64x128xf32>
    %56 = tpu.matmul %19, %1, %cst_16 {dimension_numbers = #tpu.dot_dimension_numbers<[1], [0], [0], [1], [0, 0, 1, 1], [], []>} : vector<64x64xbf16>, vector<64x128xbf16>, vector<64x128xf32> -> vector<64x128xf32>
    %57 = arith.truncf %56 : vector<64x128xf32> to vector<64x128xbf16>
    %c0_17 = arith.constant 0 : index
    %c0_18 = arith.constant 0 : index
    %58 = vector.load %arg3[%c0_17, %c0_18] : memref<1x128xf32, #tpu.memory_space<vmem>>, vector<1x128xf32>
    %c0_19 = arith.constant 0 : index
    %c0_20 = arith.constant 0 : index
    %c0_21 = arith.constant 0 : index
    %59 = vector.load %arg2[%c0_19, %c0_20, %c0_21] : memref<3x128x128xbf16, #tpu.memory_space<vmem>>, vector<1x128x128xbf16>
    %60 = vector.shape_cast %59 : vector<1x128x128xbf16> to vector<128x128xbf16>
    %cst_22 = arith.constant dense<0.000000e+00> : vector<64x128xf32>
    %61 = tpu.matmul %55, %60, %cst_22 {dimension_numbers = #tpu.dot_dimension_numbers<[1], [0], [0], [1], [0, 0, 1, 1], [], []>} : vector<64x128xbf16>, vector<128x128xbf16>, vector<64x128xf32> -> vector<64x128xf32>
    %62 = vector.broadcast %58 : vector<1x128xf32> to vector<64x128xf32>
    %63 = arith.addf %62, %61 : vector<64x128xf32>
    %c1 = arith.constant 1 : index
    %c0_23 = arith.constant 0 : index
    %c0_24 = arith.constant 0 : index
    %64 = vector.load %arg2[%c1, %c0_23, %c0_24] : memref<3x128x128xbf16, #tpu.memory_space<vmem>>, vector<1x128x128xbf16>
    %65 = vector.shape_cast %64 : vector<1x128x128xbf16> to vector<128x128xbf16>
    %cst_25 = arith.constant dense<0.000000e+00> : vector<64x128xf32>
    %66 = tpu.matmul %1, %65, %cst_25 {dimension_numbers = #tpu.dot_dimension_numbers<[1], [0], [0], [1], [0, 0, 1, 1], [], []>} : vector<64x128xbf16>, vector<128x128xbf16>, vector<64x128xf32> -> vector<64x128xf32>
    %67 = arith.addf %63, %66 : vector<64x128xf32>
    %c2 = arith.constant 2 : index
    %c0_26 = arith.constant 0 : index
    %c0_27 = arith.constant 0 : index
    %68 = vector.load %arg2[%c2, %c0_26, %c0_27] : memref<3x128x128xbf16, #tpu.memory_space<vmem>>, vector<1x128x128xbf16>
    %69 = vector.shape_cast %68 : vector<1x128x128xbf16> to vector<128x128xbf16>
    %cst_28 = arith.constant dense<0.000000e+00> : vector<64x128xf32>
    %70 = tpu.matmul %57, %69, %cst_28 {dimension_numbers = #tpu.dot_dimension_numbers<[1], [0], [0], [1], [0, 0, 1, 1], [], []>} : vector<64x128xbf16>, vector<128x128xbf16>, vector<64x128xf32> -> vector<64x128xf32>
    %71 = arith.addf %67, %70 : vector<64x128xf32>
    %cst_29 = arith.constant 0.000000e+00 : f32
    %72 = vector.broadcast %cst_29 : f32 to vector<64x128xf32>
    %73 = arith.maximumf %71, %72 : vector<64x128xf32>
    %74 = arith.truncf %73 : vector<64x128xf32> to vector<64x128xbf16>
    %cst_30 = arith.constant dense<0.000000e+00> : vector<64x128xf32>
    %75 = tpu.matmul %36, %74, %cst_30 {dimension_numbers = #tpu.dot_dimension_numbers<[1], [0], [0], [1], [0, 0, 1, 1], [], []>} : vector<64x64xbf16>, vector<64x128xbf16>, vector<64x128xf32> -> vector<64x128xf32>
    %76 = arith.truncf %75 : vector<64x128xf32> to vector<64x128xbf16>
    %cst_31 = arith.constant dense<0.000000e+00> : vector<64x128xf32>
    %77 = tpu.matmul %53, %74, %cst_31 {dimension_numbers = #tpu.dot_dimension_numbers<[1], [0], [0], [1], [0, 0, 1, 1], [], []>} : vector<64x64xbf16>, vector<64x128xbf16>, vector<64x128xf32> -> vector<64x128xf32>
    %78 = arith.truncf %77 : vector<64x128xf32> to vector<64x128xbf16>
    %c0_32 = arith.constant 0 : index
    %c0_33 = arith.constant 0 : index
    %79 = vector.load %arg5[%c0_32, %c0_33] : memref<1x128xf32, #tpu.memory_space<vmem>>, vector<1x128xf32>
    %c0_34 = arith.constant 0 : index
    %c0_35 = arith.constant 0 : index
    %c0_36 = arith.constant 0 : index
    %80 = vector.load %arg4[%c0_34, %c0_35, %c0_36] : memref<3x128x128xbf16, #tpu.memory_space<vmem>>, vector<1x128x128xbf16>
    %81 = vector.shape_cast %80 : vector<1x128x128xbf16> to vector<128x128xbf16>
    %cst_37 = arith.constant dense<0.000000e+00> : vector<64x128xf32>
    %82 = tpu.matmul %76, %81, %cst_37 {dimension_numbers = #tpu.dot_dimension_numbers<[1], [0], [0], [1], [0, 0, 1, 1], [], []>} : vector<64x128xbf16>, vector<128x128xbf16>, vector<64x128xf32> -> vector<64x128xf32>
    %83 = vector.broadcast %79 : vector<1x128xf32> to vector<64x128xf32>
    %84 = arith.addf %83, %82 : vector<64x128xf32>
    %c1_38 = arith.constant 1 : index
    %c0_39 = arith.constant 0 : index
    %c0_40 = arith.constant 0 : index
    %85 = vector.load %arg4[%c1_38, %c0_39, %c0_40] : memref<3x128x128xbf16, #tpu.memory_space<vmem>>, vector<1x128x128xbf16>
    %86 = vector.shape_cast %85 : vector<1x128x128xbf16> to vector<128x128xbf16>
    %cst_41 = arith.constant dense<0.000000e+00> : vector<64x128xf32>
    %87 = tpu.matmul %74, %86, %cst_41 {dimension_numbers = #tpu.dot_dimension_numbers<[1], [0], [0], [1], [0, 0, 1, 1], [], []>} : vector<64x128xbf16>, vector<128x128xbf16>, vector<64x128xf32> -> vector<64x128xf32>
    %88 = arith.addf %84, %87 : vector<64x128xf32>
    %c2_42 = arith.constant 2 : index
    %c0_43 = arith.constant 0 : index
    %c0_44 = arith.constant 0 : index
    %89 = vector.load %arg4[%c2_42, %c0_43, %c0_44] : memref<3x128x128xbf16, #tpu.memory_space<vmem>>, vector<1x128x128xbf16>
    %90 = vector.shape_cast %89 : vector<1x128x128xbf16> to vector<128x128xbf16>
    %cst_45 = arith.constant dense<0.000000e+00> : vector<64x128xf32>
    %91 = tpu.matmul %78, %90, %cst_45 {dimension_numbers = #tpu.dot_dimension_numbers<[1], [0], [0], [1], [0, 0, 1, 1], [], []>} : vector<64x128xbf16>, vector<128x128xbf16>, vector<64x128xf32> -> vector<64x128xf32>
    %92 = arith.addf %88, %91 : vector<64x128xf32>
    %cst_46 = arith.constant 0.000000e+00 : f32
    %93 = vector.broadcast %cst_46 : f32 to vector<64x128xf32>
    %94 = arith.maximumf %92, %93 : vector<64x128xf32>
    %95 = arith.truncf %94 : vector<64x128xf32> to vector<64x128xbf16>
    %cst_47 = arith.constant dense<0.000000e+00> : vector<64x128xf32>
    %96 = tpu.matmul %12, %95, %cst_47 {dimension_numbers = #tpu.dot_dimension_numbers<[1], [0], [0], [1], [0, 0, 1, 1], [], []>} : vector<64x64xbf16>, vector<64x128xbf16>, vector<64x128xf32> -> vector<64x128xf32>
    %97 = arith.truncf %96 : vector<64x128xf32> to vector<64x128xbf16>
    %cst_48 = arith.constant dense<0.000000e+00> : vector<64x128xf32>
    %98 = tpu.matmul %19, %95, %cst_48 {dimension_numbers = #tpu.dot_dimension_numbers<[1], [0], [0], [1], [0, 0, 1, 1], [], []>} : vector<64x64xbf16>, vector<64x128xbf16>, vector<64x128xf32> -> vector<64x128xf32>
    %99 = arith.truncf %98 : vector<64x128xf32> to vector<64x128xbf16>
    %c0_49 = arith.constant 0 : index
    %c0_50 = arith.constant 0 : index
    %100 = vector.load %arg7[%c0_49, %c0_50] : memref<1x128xf32, #tpu.memory_space<vmem>>, vector<1x128xf32>
    %c0_51 = arith.constant 0 : index
    %c0_52 = arith.constant 0 : index
    %c0_53 = arith.constant 0 : index
    %101 = vector.load %arg6[%c0_51, %c0_52, %c0_53] : memref<3x128x128xbf16, #tpu.memory_space<vmem>>, vector<1x128x128xbf16>
    %102 = vector.shape_cast %101 : vector<1x128x128xbf16> to vector<128x128xbf16>
    %cst_54 = arith.constant dense<0.000000e+00> : vector<64x128xf32>
    %103 = tpu.matmul %97, %102, %cst_54 {dimension_numbers = #tpu.dot_dimension_numbers<[1], [0], [0], [1], [0, 0, 1, 1], [], []>} : vector<64x128xbf16>, vector<128x128xbf16>, vector<64x128xf32> -> vector<64x128xf32>
    %104 = vector.broadcast %100 : vector<1x128xf32> to vector<64x128xf32>
    %105 = arith.addf %104, %103 : vector<64x128xf32>
    %c1_55 = arith.constant 1 : index
    %c0_56 = arith.constant 0 : index
    %c0_57 = arith.constant 0 : index
    %106 = vector.load %arg6[%c1_55, %c0_56, %c0_57] : memref<3x128x128xbf16, #tpu.memory_space<vmem>>, vector<1x128x128xbf16>
    %107 = vector.shape_cast %106 : vector<1x128x128xbf16> to vector<128x128xbf16>
    %cst_58 = arith.constant dense<0.000000e+00> : vector<64x128xf32>
    %108 = tpu.matmul %95, %107, %cst_58 {dimension_numbers = #tpu.dot_dimension_numbers<[1], [0], [0], [1], [0, 0, 1, 1], [], []>} : vector<64x128xbf16>, vector<128x128xbf16>, vector<64x128xf32> -> vector<64x128xf32>
    %109 = arith.addf %105, %108 : vector<64x128xf32>
    %c2_59 = arith.constant 2 : index
    %c0_60 = arith.constant 0 : index
    %c0_61 = arith.constant 0 : index
    %110 = vector.load %arg6[%c2_59, %c0_60, %c0_61] : memref<3x128x128xbf16, #tpu.memory_space<vmem>>, vector<1x128x128xbf16>
    %111 = vector.shape_cast %110 : vector<1x128x128xbf16> to vector<128x128xbf16>
    %cst_62 = arith.constant dense<0.000000e+00> : vector<64x128xf32>
    %112 = tpu.matmul %99, %111, %cst_62 {dimension_numbers = #tpu.dot_dimension_numbers<[1], [0], [0], [1], [0, 0, 1, 1], [], []>} : vector<64x128xbf16>, vector<128x128xbf16>, vector<64x128xf32> -> vector<64x128xf32>
    %113 = arith.addf %109, %112 : vector<64x128xf32>
    %cst_63 = arith.constant 0.000000e+00 : f32
    %114 = vector.broadcast %cst_63 : f32 to vector<64x128xf32>
    %115 = arith.maximumf %113, %114 : vector<64x128xf32>
    %116 = arith.truncf %115 : vector<64x128xf32> to vector<64x128xbf16>
    %cst_64 = arith.constant dense<0.000000e+00> : vector<64x128xf32>
    %117 = tpu.matmul %36, %116, %cst_64 {dimension_numbers = #tpu.dot_dimension_numbers<[1], [0], [0], [1], [0, 0, 1, 1], [], []>} : vector<64x64xbf16>, vector<64x128xbf16>, vector<64x128xf32> -> vector<64x128xf32>
    %118 = arith.truncf %117 : vector<64x128xf32> to vector<64x128xbf16>
    %cst_65 = arith.constant dense<0.000000e+00> : vector<64x128xf32>
    %119 = tpu.matmul %53, %116, %cst_65 {dimension_numbers = #tpu.dot_dimension_numbers<[1], [0], [0], [1], [0, 0, 1, 1], [], []>} : vector<64x64xbf16>, vector<64x128xbf16>, vector<64x128xf32> -> vector<64x128xf32>
    %120 = arith.truncf %119 : vector<64x128xf32> to vector<64x128xbf16>
    %c0_66 = arith.constant 0 : index
    %c0_67 = arith.constant 0 : index
    %121 = vector.load %arg9[%c0_66, %c0_67] : memref<1x128xf32, #tpu.memory_space<vmem>>, vector<1x128xf32>
    %c0_68 = arith.constant 0 : index
    %c0_69 = arith.constant 0 : index
    %c0_70 = arith.constant 0 : index
    %122 = vector.load %arg8[%c0_68, %c0_69, %c0_70] : memref<3x128x128xbf16, #tpu.memory_space<vmem>>, vector<1x128x128xbf16>
    %123 = vector.shape_cast %122 : vector<1x128x128xbf16> to vector<128x128xbf16>
    %cst_71 = arith.constant dense<0.000000e+00> : vector<64x128xf32>
    %124 = tpu.matmul %118, %123, %cst_71 {dimension_numbers = #tpu.dot_dimension_numbers<[1], [0], [0], [1], [0, 0, 1, 1], [], []>} : vector<64x128xbf16>, vector<128x128xbf16>, vector<64x128xf32> -> vector<64x128xf32>
    %125 = vector.broadcast %121 : vector<1x128xf32> to vector<64x128xf32>
    %126 = arith.addf %125, %124 : vector<64x128xf32>
    %c1_72 = arith.constant 1 : index
    %c0_73 = arith.constant 0 : index
    %c0_74 = arith.constant 0 : index
    %127 = vector.load %arg8[%c1_72, %c0_73, %c0_74] : memref<3x128x128xbf16, #tpu.memory_space<vmem>>, vector<1x128x128xbf16>
    %128 = vector.shape_cast %127 : vector<1x128x128xbf16> to vector<128x128xbf16>
    %cst_75 = arith.constant dense<0.000000e+00> : vector<64x128xf32>
    %129 = tpu.matmul %116, %128, %cst_75 {dimension_numbers = #tpu.dot_dimension_numbers<[1], [0], [0], [1], [0, 0, 1, 1], [], []>} : vector<64x128xbf16>, vector<128x128xbf16>, vector<64x128xf32> -> vector<64x128xf32>
    %130 = arith.addf %126, %129 : vector<64x128xf32>
    %c2_76 = arith.constant 2 : index
    %c0_77 = arith.constant 0 : index
    %c0_78 = arith.constant 0 : index
    %131 = vector.load %arg8[%c2_76, %c0_77, %c0_78] : memref<3x128x128xbf16, #tpu.memory_space<vmem>>, vector<1x128x128xbf16>
    %132 = vector.shape_cast %131 : vector<1x128x128xbf16> to vector<128x128xbf16>
    %cst_79 = arith.constant dense<0.000000e+00> : vector<64x128xf32>
    %133 = tpu.matmul %120, %132, %cst_79 {dimension_numbers = #tpu.dot_dimension_numbers<[1], [0], [0], [1], [0, 0, 1, 1], [], []>} : vector<64x128xbf16>, vector<128x128xbf16>, vector<64x128xf32> -> vector<64x128xf32>
    %134 = arith.addf %130, %133 : vector<64x128xf32>
    %135 = arith.addf %134, %0 : vector<64x128xf32>
    %cst_80 = arith.constant 0.000000e+00 : f32
    %136 = vector.broadcast %cst_80 : f32 to vector<64x128xf32>
    %137 = arith.maximumf %135, %136 : vector<64x128xf32>
    %c0_81 = arith.constant 0 : index
    %c0_82 = arith.constant 0 : index
    %138 = vector.load %arg10[%c0_81, %c0_82] : memref<64x128xf32, #tpu.memory_space<vmem>>, vector<64x128xf32>
    tpu.vector_store %arg10[%c0_81, %c0_82], %137 {strides = array<i32>} : memref<64x128xf32, #tpu.memory_space<vmem>>, vector<64x128xf32>,
    return
  }
  func.func @transform_0(%arg0: i32) -> (i32, i32) {
    %c0_i32 = arith.constant 0 : i32
    %c0_i32_0 = arith.constant 0 : i32
    return %arg0, %c0_i32 : i32, i32
  }
  func.func @transform_1(%arg0: i32) -> (i32, i32, i32) {
    %c0_i32 = arith.constant 0 : i32
    %c0_i32_0 = arith.constant 0 : i32
    %c0_i32_1 = arith.constant 0 : i32
    %c0_i32_2 = arith.constant 0 : i32
    return %c0_i32, %c0_i32_0, %c0_i32_1 : i32, i32, i32
  }
  func.func @transform_2(%arg0: i32) -> (i32, i32) {
    %c0_i32 = arith.constant 0 : i32
    %c0_i32_0 = arith.constant 0 : i32
    %c0_i32_1 = arith.constant 0 : i32
    return %c0_i32, %c0_i32_0 : i32, i32
  }
  func.func @transform_3(%arg0: i32) -> (i32, i32, i32) {
    %c0_i32 = arith.constant 0 : i32
    %c0_i32_0 = arith.constant 0 : i32
    %c0_i32_1 = arith.constant 0 : i32
    %c0_i32_2 = arith.constant 0 : i32
    return %c0_i32, %c0_i32_0, %c0_i32_1 : i32, i32, i32
  }
  func.func @transform_4(%arg0: i32) -> (i32, i32) {
    %c0_i32 = arith.constant 0 : i32
    %c0_i32_0 = arith.constant 0 : i32
    %c0_i32_1 = arith.constant 0 : i32
    return %c0_i32, %c0_i32_0 : i32, i32
  }
  func.func @transform_5(%arg0: i32) -> (i32, i32, i32) {
    %c0_i32 = arith.constant 0 : i32
    %c0_i32_0 = arith.constant 0 : i32
    %c0_i32_1 = arith.constant 0 : i32
    %c0_i32_2 = arith.constant 0 : i32
    return %c0_i32, %c0_i32_0, %c0_i32_1 : i32, i32, i32
  }
  func.func @transform_6(%arg0: i32) -> (i32, i32) {
    %c0_i32 = arith.constant 0 : i32
    %c0_i32_0 = arith.constant 0 : i32
    %c0_i32_1 = arith.constant 0 : i32
    return %c0_i32, %c0_i32_0 : i32, i32
  }
  func.func @transform_7(%arg0: i32) -> (i32, i32, i32) {
    %c0_i32 = arith.constant 0 : i32
    %c0_i32_0 = arith.constant 0 : i32
    %c0_i32_1 = arith.constant 0 : i32
    %c0_i32_2 = arith.constant 0 : i32
    return %c0_i32, %c0_i32_0, %c0_i32_1 : i32, i32, i32
  }
  func.func @transform_8(%arg0: i32) -> (i32, i32) {
    %c0_i32 = arith.constant 0 : i32
    %c0_i32_0 = arith.constant 0 : i32
    %c0_i32_1 = arith.constant 0 : i32
    return %c0_i32, %c0_i32_0 : i32, i32
  }
  func.func @transform_9(%arg0: i32) -> (i32, i32) {
    %c0_i32 = arith.constant 0 : i32
    %c0_i32_0 = arith.constant 0 : i32
    return %arg0, %c0_i32 : i32, i32
  }
}

module attributes {stable_mosaic.version = 11 : i64} {
  func.func @_mm_kernel(%arg0: i32, %arg1: memref<128x512xbf16, #tpu.memory_space<vmem>>, %arg2: memref<512x128xbf16, #tpu.memory_space<vmem>>, %arg3: memref<1x128xf32, #tpu.memory_space<vmem>>, %arg4: memref<128x128xf32, #tpu.memory_space<vmem>>) attributes {dimension_semantics = [#tpu.dimension_semantics<parallel>], iteration_bounds = array<i64: 1>, scalar_prefetch = 0 : i64, scratch_operands = 0 : i64, tpu.core_type = #tpu.core_type<tc>, window_params = [{transform_indices = @transform_0, window_bounds = array<i64: 128, 512>}, {pipeline_mode = #tpu.pipeline_mode<synchronous>, transform_indices = @transform_1, window_bounds = array<i64: 512, 128>}, {pipeline_mode = #tpu.pipeline_mode<synchronous>, transform_indices = @transform_2, window_bounds = array<i64: 1, 128>}, {transform_indices = @transform_3, window_bounds = array<i64: 128, 128>}]} {
    %c0 = arith.constant 0 : index
    %c0_0 = arith.constant 0 : index
    %0 = vector.load %arg1[%c0, %c0_0] : memref<128x512xbf16, #tpu.memory_space<vmem>>, vector<128x512xbf16>
    %c0_1 = arith.constant 0 : index
    %c0_2 = arith.constant 0 : index
    %1 = vector.load %arg2[%c0_1, %c0_2] : memref<512x128xbf16, #tpu.memory_space<vmem>>, vector<512x128xbf16>
    %cst = arith.constant dense<0.000000e+00> : vector<128x128xf32>
    %2 = tpu.matmul %0, %1, %cst {dimension_numbers = #tpu.dot_dimension_numbers<[1], [0], [0], [1], [0, 0, 1, 1], [], []>} : vector<128x512xbf16>, vector<512x128xbf16>, vector<128x128xf32> -> vector<128x128xf32>
    %c0_3 = arith.constant 0 : index
    %c0_4 = arith.constant 0 : index
    %3 = vector.load %arg3[%c0_3, %c0_4] : memref<1x128xf32, #tpu.memory_space<vmem>>, vector<1x128xf32>
    %4 = vector.broadcast %3 : vector<1x128xf32> to vector<128x128xf32>
    %5 = arith.addf %2, %4 : vector<128x128xf32>
    %cst_5 = arith.constant 0.000000e+00 : f32
    %6 = vector.broadcast %cst_5 : f32 to vector<128x128xf32>
    %7 = arith.maximumf %5, %6 : vector<128x128xf32>
    %c0_6 = arith.constant 0 : index
    %c0_7 = arith.constant 0 : index
    %8 = vector.load %arg4[%c0_6, %c0_7] : memref<128x128xf32, #tpu.memory_space<vmem>>, vector<128x128xf32>
    tpu.vector_store %arg4[%c0_6, %c0_7], %7 {strides = array<i32>} : memref<128x128xf32, #tpu.memory_space<vmem>>, vector<128x128xf32>,
    return
  }
  func.func @transform_0(%arg0: i32) -> (i32, i32) {
    %c0_i32 = arith.constant 0 : i32
    %c0_i32_0 = arith.constant 0 : i32
    return %arg0, %c0_i32 : i32, i32
  }
  func.func @transform_1(%arg0: i32) -> (i32, i32) {
    %c0_i32 = arith.constant 0 : i32
    %c0_i32_0 = arith.constant 0 : i32
    %c0_i32_1 = arith.constant 0 : i32
    return %c0_i32, %c0_i32_0 : i32, i32
  }
  func.func @transform_2(%arg0: i32) -> (i32, i32) {
    %c0_i32 = arith.constant 0 : i32
    %c0_i32_0 = arith.constant 0 : i32
    %c0_i32_1 = arith.constant 0 : i32
    return %c0_i32, %c0_i32_0 : i32, i32
  }
  func.func @transform_3(%arg0: i32) -> (i32, i32) {
    %c0_i32 = arith.constant 0 : i32
    %c0_i32_0 = arith.constant 0 : i32
    return %arg0, %c0_i32 : i32, i32
  }
}

module attributes {stable_mosaic.version = 11 : i64} {
  func.func @_nb_kernel(%arg0: i32, %arg1: memref<256x128xf32, #tpu.memory_space<vmem>>, %arg2: memref<3x128x128xbf16, #tpu.memory_space<vmem>>, %arg3: memref<1x128xf32, #tpu.memory_space<vmem>>, %arg4: memref<3x128x128xbf16, #tpu.memory_space<vmem>>, %arg5: memref<1x128xf32, #tpu.memory_space<vmem>>, %arg6: memref<3x128x128xbf16, #tpu.memory_space<vmem>>, %arg7: memref<1x128xf32, #tpu.memory_space<vmem>>, %arg8: memref<3x128x128xbf16, #tpu.memory_space<vmem>>, %arg9: memref<1x128xf32, #tpu.memory_space<vmem>>, %arg10: memref<256x128xf32, #tpu.memory_space<vmem>>) attributes {dimension_semantics = [#tpu.dimension_semantics<parallel>], iteration_bounds = array<i64: 2>, scalar_prefetch = 0 : i64, scratch_operands = 0 : i64, tpu.core_type = #tpu.core_type<tc>, window_params = [{transform_indices = @transform_0, window_bounds = array<i64: 256, 128>}, {pipeline_mode = #tpu.pipeline_mode<synchronous>, transform_indices = @transform_1, window_bounds = array<i64: 3, 128, 128>}, {pipeline_mode = #tpu.pipeline_mode<synchronous>, transform_indices = @transform_2, window_bounds = array<i64: 1, 128>}, {pipeline_mode = #tpu.pipeline_mode<synchronous>, transform_indices = @transform_3, window_bounds = array<i64: 3, 128, 128>}, {pipeline_mode = #tpu.pipeline_mode<synchronous>, transform_indices = @transform_4, window_bounds = array<i64: 1, 128>}, {pipeline_mode = #tpu.pipeline_mode<synchronous>, transform_indices = @transform_5, window_bounds = array<i64: 3, 128, 128>}, {pipeline_mode = #tpu.pipeline_mode<synchronous>, transform_indices = @transform_6, window_bounds = array<i64: 1, 128>}, {pipeline_mode = #tpu.pipeline_mode<synchronous>, transform_indices = @transform_7, window_bounds = array<i64: 3, 128, 128>}, {pipeline_mode = #tpu.pipeline_mode<synchronous>, transform_indices = @transform_8, window_bounds = array<i64: 1, 128>}, {transform_indices = @transform_9, window_bounds = array<i64: 256, 128>}]} {
    %c0 = arith.constant 0 : index
    %c0_0 = arith.constant 0 : index
    %0 = vector.load %arg1[%c0, %c0_0] : memref<256x128xf32, #tpu.memory_space<vmem>>, vector<256x128xf32>
    %1 = arith.truncf %0 : vector<256x128xf32> to vector<256x128xbf16>
    %2 = tpu.iota {dimensions = array<i32: 0>} : vector<256x256xi32>
    %3 = tpu.iota {dimensions = array<i32: 1>} : vector<256x256xi32>
    %c15_i32 = arith.constant 15 : i32
    %4 = vector.broadcast %c15_i32 : i32 to vector<256x256xi32>
    %5 = arith.andi %2, %4 : vector<256x256xi32>
    %6 = arith.subi %3, %2 : vector<256x256xi32>
    %c-16_i32 = arith.constant -16 : i32
    %7 = vector.broadcast %c-16_i32 : i32 to vector<256x256xi32>
    %8 = arith.cmpi eq, %6, %7 : vector<256x256xi32>
    %cst = arith.constant 1.000000e+00 : f32
    %cst_1 = arith.constant 0.000000e+00 : f32
    %9 = vector.broadcast %cst : f32 to vector<256x256xf32>
    %10 = vector.broadcast %cst_1 : f32 to vector<256x256xf32>
    %11 = arith.select %8, %9, %10 : vector<256x256xi1>, vector<256x256xf32>
    %12 = arith.truncf %11 : vector<256x256xf32> to vector<256x256xbf16>
    %13 = arith.subi %3, %2 : vector<256x256xi32>
    %c16_i32 = arith.constant 16 : i32
    %14 = vector.broadcast %c16_i32 : i32 to vector<256x256xi32>
    %15 = arith.cmpi eq, %13, %14 : vector<256x256xi32>
    %cst_2 = arith.constant 1.000000e+00 : f32
    %cst_3 = arith.constant 0.000000e+00 : f32
    %16 = vector.broadcast %cst_2 : f32 to vector<256x256xf32>
    %17 = vector.broadcast %cst_3 : f32 to vector<256x256xf32>
    %18 = arith.select %15, %16, %17 : vector<256x256xi1>, vector<256x256xf32>
    %19 = arith.truncf %18 : vector<256x256xf32> to vector<256x256xbf16>
    %20 = arith.subi %3, %2 : vector<256x256xi32>
    %c-1_i32 = arith.constant -1 : i32
    %21 = vector.broadcast %c-1_i32 : i32 to vector<256x256xi32>
    %22 = arith.cmpi eq, %20, %21 : vector<256x256xi32>
    %c-1_i32_4 = arith.constant -1 : i32
    %23 = vector.broadcast %c-1_i32_4 : i32 to vector<256x256xi32>
    %24 = arith.addi %5, %23 : vector<256x256xi32>
    %c0_i32 = arith.constant 0 : i32
    %25 = vector.broadcast %c0_i32 : i32 to vector<256x256xi32>
    %26 = arith.cmpi sge, %24, %25 : vector<256x256xi32>
    %27 = arith.andi %22, %26 : vector<256x256xi1>
    %c-1_i32_5 = arith.constant -1 : i32
    %28 = vector.broadcast %c-1_i32_5 : i32 to vector<256x256xi32>
    %29 = arith.addi %5, %28 : vector<256x256xi32>
    %c16_i32_6 = arith.constant 16 : i32
    %30 = vector.broadcast %c16_i32_6 : i32 to vector<256x256xi32>
    %31 = arith.cmpi slt, %29, %30 : vector<256x256xi32>
    %32 = arith.andi %27, %31 : vector<256x256xi1>
    %cst_7 = arith.constant 1.000000e+00 : f32
    %cst_8 = arith.constant 0.000000e+00 : f32
    %33 = vector.broadcast %cst_7 : f32 to vector<256x256xf32>
    %34 = vector.broadcast %cst_8 : f32 to vector<256x256xf32>
    %35 = arith.select %32, %33, %34 : vector<256x256xi1>, vector<256x256xf32>
    %36 = arith.truncf %35 : vector<256x256xf32> to vector<256x256xbf16>
    %37 = arith.subi %3, %2 : vector<256x256xi32>
    %c1_i32 = arith.constant 1 : i32
    %38 = vector.broadcast %c1_i32 : i32 to vector<256x256xi32>
    %39 = arith.cmpi eq, %37, %38 : vector<256x256xi32>
    %c1_i32_9 = arith.constant 1 : i32
    %40 = vector.broadcast %c1_i32_9 : i32 to vector<256x256xi32>
    %41 = arith.addi %5, %40 : vector<256x256xi32>
    %c0_i32_10 = arith.constant 0 : i32
    %42 = vector.broadcast %c0_i32_10 : i32 to vector<256x256xi32>
    %43 = arith.cmpi sge, %41, %42 : vector<256x256xi32>
    %44 = arith.andi %39, %43 : vector<256x256xi1>
    %c1_i32_11 = arith.constant 1 : i32
    %45 = vector.broadcast %c1_i32_11 : i32 to vector<256x256xi32>
    %46 = arith.addi %5, %45 : vector<256x256xi32>
    %c16_i32_12 = arith.constant 16 : i32
    %47 = vector.broadcast %c16_i32_12 : i32 to vector<256x256xi32>
    %48 = arith.cmpi slt, %46, %47 : vector<256x256xi32>
    %49 = arith.andi %44, %48 : vector<256x256xi1>
    %cst_13 = arith.constant 1.000000e+00 : f32
    %cst_14 = arith.constant 0.000000e+00 : f32
    %50 = vector.broadcast %cst_13 : f32 to vector<256x256xf32>
    %51 = vector.broadcast %cst_14 : f32 to vector<256x256xf32>
    %52 = arith.select %49, %50, %51 : vector<256x256xi1>, vector<256x256xf32>
    %53 = arith.truncf %52 : vector<256x256xf32> to vector<256x256xbf16>
    %cst_15 = arith.constant dense<0.000000e+00> : vector<256x128xf32>
    %54 = tpu.matmul %12, %1, %cst_15 {dimension_numbers = #tpu.dot_dimension_numbers<[1], [0], [0], [1], [0, 0, 1, 1], [], []>} : vector<256x256xbf16>, vector<256x128xbf16>, vector<256x128xf32> -> vector<256x128xf32>
    %55 = arith.truncf %54 : vector<256x128xf32> to vector<256x128xbf16>
    %cst_16 = arith.constant dense<0.000000e+00> : vector<256x128xf32>
    %56 = tpu.matmul %19, %1, %cst_16 {dimension_numbers = #tpu.dot_dimension_numbers<[1], [0], [0], [1], [0, 0, 1, 1], [], []>} : vector<256x256xbf16>, vector<256x128xbf16>, vector<256x128xf32> -> vector<256x128xf32>
    %57 = arith.truncf %56 : vector<256x128xf32> to vector<256x128xbf16>
    %c0_17 = arith.constant 0 : index
    %c0_18 = arith.constant 0 : index
    %58 = vector.load %arg3[%c0_17, %c0_18] : memref<1x128xf32, #tpu.memory_space<vmem>>, vector<1x128xf32>
    %c0_19 = arith.constant 0 : index
    %c0_20 = arith.constant 0 : index
    %c0_21 = arith.constant 0 : index
    %59 = vector.load %arg2[%c0_19, %c0_20, %c0_21] : memref<3x128x128xbf16, #tpu.memory_space<vmem>>, vector<1x128x128xbf16>
    %60 = vector.shape_cast %59 : vector<1x128x128xbf16> to vector<128x128xbf16>
    %cst_22 = arith.constant dense<0.000000e+00> : vector<256x128xf32>
    %61 = tpu.matmul %55, %60, %cst_22 {dimension_numbers = #tpu.dot_dimension_numbers<[1], [0], [0], [1], [0, 0, 1, 1], [], []>} : vector<256x128xbf16>, vector<128x128xbf16>, vector<256x128xf32> -> vector<256x128xf32>
    %62 = vector.broadcast %58 : vector<1x128xf32> to vector<256x128xf32>
    %63 = arith.addf %62, %61 : vector<256x128xf32>
    %c1 = arith.constant 1 : index
    %c0_23 = arith.constant 0 : index
    %c0_24 = arith.constant 0 : index
    %64 = vector.load %arg2[%c1, %c0_23, %c0_24] : memref<3x128x128xbf16, #tpu.memory_space<vmem>>, vector<1x128x128xbf16>
    %65 = vector.shape_cast %64 : vector<1x128x128xbf16> to vector<128x128xbf16>
    %cst_25 = arith.constant dense<0.000000e+00> : vector<256x128xf32>
    %66 = tpu.matmul %1, %65, %cst_25 {dimension_numbers = #tpu.dot_dimension_numbers<[1], [0], [0], [1], [0, 0, 1, 1], [], []>} : vector<256x128xbf16>, vector<128x128xbf16>, vector<256x128xf32> -> vector<256x128xf32>
    %67 = arith.addf %63, %66 : vector<256x128xf32>
    %c2 = arith.constant 2 : index
    %c0_26 = arith.constant 0 : index
    %c0_27 = arith.constant 0 : index
    %68 = vector.load %arg2[%c2, %c0_26, %c0_27] : memref<3x128x128xbf16, #tpu.memory_space<vmem>>, vector<1x128x128xbf16>
    %69 = vector.shape_cast %68 : vector<1x128x128xbf16> to vector<128x128xbf16>
    %cst_28 = arith.constant dense<0.000000e+00> : vector<256x128xf32>
    %70 = tpu.matmul %57, %69, %cst_28 {dimension_numbers = #tpu.dot_dimension_numbers<[1], [0], [0], [1], [0, 0, 1, 1], [], []>} : vector<256x128xbf16>, vector<128x128xbf16>, vector<256x128xf32> -> vector<256x128xf32>
    %71 = arith.addf %67, %70 : vector<256x128xf32>
    %cst_29 = arith.constant 0.000000e+00 : f32
    %72 = vector.broadcast %cst_29 : f32 to vector<256x128xf32>
    %73 = arith.maximumf %71, %72 : vector<256x128xf32>
    %74 = arith.truncf %73 : vector<256x128xf32> to vector<256x128xbf16>
    %cst_30 = arith.constant dense<0.000000e+00> : vector<256x128xf32>
    %75 = tpu.matmul %36, %74, %cst_30 {dimension_numbers = #tpu.dot_dimension_numbers<[1], [0], [0], [1], [0, 0, 1, 1], [], []>} : vector<256x256xbf16>, vector<256x128xbf16>, vector<256x128xf32> -> vector<256x128xf32>
    %76 = arith.truncf %75 : vector<256x128xf32> to vector<256x128xbf16>
    %cst_31 = arith.constant dense<0.000000e+00> : vector<256x128xf32>
    %77 = tpu.matmul %53, %74, %cst_31 {dimension_numbers = #tpu.dot_dimension_numbers<[1], [0], [0], [1], [0, 0, 1, 1], [], []>} : vector<256x256xbf16>, vector<256x128xbf16>, vector<256x128xf32> -> vector<256x128xf32>
    %78 = arith.truncf %77 : vector<256x128xf32> to vector<256x128xbf16>
    %c0_32 = arith.constant 0 : index
    %c0_33 = arith.constant 0 : index
    %79 = vector.load %arg5[%c0_32, %c0_33] : memref<1x128xf32, #tpu.memory_space<vmem>>, vector<1x128xf32>
    %c0_34 = arith.constant 0 : index
    %c0_35 = arith.constant 0 : index
    %c0_36 = arith.constant 0 : index
    %80 = vector.load %arg4[%c0_34, %c0_35, %c0_36] : memref<3x128x128xbf16, #tpu.memory_space<vmem>>, vector<1x128x128xbf16>
    %81 = vector.shape_cast %80 : vector<1x128x128xbf16> to vector<128x128xbf16>
    %cst_37 = arith.constant dense<0.000000e+00> : vector<256x128xf32>
    %82 = tpu.matmul %76, %81, %cst_37 {dimension_numbers = #tpu.dot_dimension_numbers<[1], [0], [0], [1], [0, 0, 1, 1], [], []>} : vector<256x128xbf16>, vector<128x128xbf16>, vector<256x128xf32> -> vector<256x128xf32>
    %83 = vector.broadcast %79 : vector<1x128xf32> to vector<256x128xf32>
    %84 = arith.addf %83, %82 : vector<256x128xf32>
    %c1_38 = arith.constant 1 : index
    %c0_39 = arith.constant 0 : index
    %c0_40 = arith.constant 0 : index
    %85 = vector.load %arg4[%c1_38, %c0_39, %c0_40] : memref<3x128x128xbf16, #tpu.memory_space<vmem>>, vector<1x128x128xbf16>
    %86 = vector.shape_cast %85 : vector<1x128x128xbf16> to vector<128x128xbf16>
    %cst_41 = arith.constant dense<0.000000e+00> : vector<256x128xf32>
    %87 = tpu.matmul %74, %86, %cst_41 {dimension_numbers = #tpu.dot_dimension_numbers<[1], [0], [0], [1], [0, 0, 1, 1], [], []>} : vector<256x128xbf16>, vector<128x128xbf16>, vector<256x128xf32> -> vector<256x128xf32>
    %88 = arith.addf %84, %87 : vector<256x128xf32>
    %c2_42 = arith.constant 2 : index
    %c0_43 = arith.constant 0 : index
    %c0_44 = arith.constant 0 : index
    %89 = vector.load %arg4[%c2_42, %c0_43, %c0_44] : memref<3x128x128xbf16, #tpu.memory_space<vmem>>, vector<1x128x128xbf16>
    %90 = vector.shape_cast %89 : vector<1x128x128xbf16> to vector<128x128xbf16>
    %cst_45 = arith.constant dense<0.000000e+00> : vector<256x128xf32>
    %91 = tpu.matmul %78, %90, %cst_45 {dimension_numbers = #tpu.dot_dimension_numbers<[1], [0], [0], [1], [0, 0, 1, 1], [], []>} : vector<256x128xbf16>, vector<128x128xbf16>, vector<256x128xf32> -> vector<256x128xf32>
    %92 = arith.addf %88, %91 : vector<256x128xf32>
    %cst_46 = arith.constant 0.000000e+00 : f32
    %93 = vector.broadcast %cst_46 : f32 to vector<256x128xf32>
    %94 = arith.maximumf %92, %93 : vector<256x128xf32>
    %95 = arith.truncf %94 : vector<256x128xf32> to vector<256x128xbf16>
    %cst_47 = arith.constant dense<0.000000e+00> : vector<256x128xf32>
    %96 = tpu.matmul %12, %95, %cst_47 {dimension_numbers = #tpu.dot_dimension_numbers<[1], [0], [0], [1], [0, 0, 1, 1], [], []>} : vector<256x256xbf16>, vector<256x128xbf16>, vector<256x128xf32> -> vector<256x128xf32>
    %97 = arith.truncf %96 : vector<256x128xf32> to vector<256x128xbf16>
    %cst_48 = arith.constant dense<0.000000e+00> : vector<256x128xf32>
    %98 = tpu.matmul %19, %95, %cst_48 {dimension_numbers = #tpu.dot_dimension_numbers<[1], [0], [0], [1], [0, 0, 1, 1], [], []>} : vector<256x256xbf16>, vector<256x128xbf16>, vector<256x128xf32> -> vector<256x128xf32>
    %99 = arith.truncf %98 : vector<256x128xf32> to vector<256x128xbf16>
    %c0_49 = arith.constant 0 : index
    %c0_50 = arith.constant 0 : index
    %100 = vector.load %arg7[%c0_49, %c0_50] : memref<1x128xf32, #tpu.memory_space<vmem>>, vector<1x128xf32>
    %c0_51 = arith.constant 0 : index
    %c0_52 = arith.constant 0 : index
    %c0_53 = arith.constant 0 : index
    %101 = vector.load %arg6[%c0_51, %c0_52, %c0_53] : memref<3x128x128xbf16, #tpu.memory_space<vmem>>, vector<1x128x128xbf16>
    %102 = vector.shape_cast %101 : vector<1x128x128xbf16> to vector<128x128xbf16>
    %cst_54 = arith.constant dense<0.000000e+00> : vector<256x128xf32>
    %103 = tpu.matmul %97, %102, %cst_54 {dimension_numbers = #tpu.dot_dimension_numbers<[1], [0], [0], [1], [0, 0, 1, 1], [], []>} : vector<256x128xbf16>, vector<128x128xbf16>, vector<256x128xf32> -> vector<256x128xf32>
    %104 = vector.broadcast %100 : vector<1x128xf32> to vector<256x128xf32>
    %105 = arith.addf %104, %103 : vector<256x128xf32>
    %c1_55 = arith.constant 1 : index
    %c0_56 = arith.constant 0 : index
    %c0_57 = arith.constant 0 : index
    %106 = vector.load %arg6[%c1_55, %c0_56, %c0_57] : memref<3x128x128xbf16, #tpu.memory_space<vmem>>, vector<1x128x128xbf16>
    %107 = vector.shape_cast %106 : vector<1x128x128xbf16> to vector<128x128xbf16>
    %cst_58 = arith.constant dense<0.000000e+00> : vector<256x128xf32>
    %108 = tpu.matmul %95, %107, %cst_58 {dimension_numbers = #tpu.dot_dimension_numbers<[1], [0], [0], [1], [0, 0, 1, 1], [], []>} : vector<256x128xbf16>, vector<128x128xbf16>, vector<256x128xf32> -> vector<256x128xf32>
    %109 = arith.addf %105, %108 : vector<256x128xf32>
    %c2_59 = arith.constant 2 : index
    %c0_60 = arith.constant 0 : index
    %c0_61 = arith.constant 0 : index
    %110 = vector.load %arg6[%c2_59, %c0_60, %c0_61] : memref<3x128x128xbf16, #tpu.memory_space<vmem>>, vector<1x128x128xbf16>
    %111 = vector.shape_cast %110 : vector<1x128x128xbf16> to vector<128x128xbf16>
    %cst_62 = arith.constant dense<0.000000e+00> : vector<256x128xf32>
    %112 = tpu.matmul %99, %111, %cst_62 {dimension_numbers = #tpu.dot_dimension_numbers<[1], [0], [0], [1], [0, 0, 1, 1], [], []>} : vector<256x128xbf16>, vector<128x128xbf16>, vector<256x128xf32> -> vector<256x128xf32>
    %113 = arith.addf %109, %112 : vector<256x128xf32>
    %cst_63 = arith.constant 0.000000e+00 : f32
    %114 = vector.broadcast %cst_63 : f32 to vector<256x128xf32>
    %115 = arith.maximumf %113, %114 : vector<256x128xf32>
    %116 = arith.truncf %115 : vector<256x128xf32> to vector<256x128xbf16>
    %cst_64 = arith.constant dense<0.000000e+00> : vector<256x128xf32>
    %117 = tpu.matmul %36, %116, %cst_64 {dimension_numbers = #tpu.dot_dimension_numbers<[1], [0], [0], [1], [0, 0, 1, 1], [], []>} : vector<256x256xbf16>, vector<256x128xbf16>, vector<256x128xf32> -> vector<256x128xf32>
    %118 = arith.truncf %117 : vector<256x128xf32> to vector<256x128xbf16>
    %cst_65 = arith.constant dense<0.000000e+00> : vector<256x128xf32>
    %119 = tpu.matmul %53, %116, %cst_65 {dimension_numbers = #tpu.dot_dimension_numbers<[1], [0], [0], [1], [0, 0, 1, 1], [], []>} : vector<256x256xbf16>, vector<256x128xbf16>, vector<256x128xf32> -> vector<256x128xf32>
    %120 = arith.truncf %119 : vector<256x128xf32> to vector<256x128xbf16>
    %c0_66 = arith.constant 0 : index
    %c0_67 = arith.constant 0 : index
    %121 = vector.load %arg9[%c0_66, %c0_67] : memref<1x128xf32, #tpu.memory_space<vmem>>, vector<1x128xf32>
    %c0_68 = arith.constant 0 : index
    %c0_69 = arith.constant 0 : index
    %c0_70 = arith.constant 0 : index
    %122 = vector.load %arg8[%c0_68, %c0_69, %c0_70] : memref<3x128x128xbf16, #tpu.memory_space<vmem>>, vector<1x128x128xbf16>
    %123 = vector.shape_cast %122 : vector<1x128x128xbf16> to vector<128x128xbf16>
    %cst_71 = arith.constant dense<0.000000e+00> : vector<256x128xf32>
    %124 = tpu.matmul %118, %123, %cst_71 {dimension_numbers = #tpu.dot_dimension_numbers<[1], [0], [0], [1], [0, 0, 1, 1], [], []>} : vector<256x128xbf16>, vector<128x128xbf16>, vector<256x128xf32> -> vector<256x128xf32>
    %125 = vector.broadcast %121 : vector<1x128xf32> to vector<256x128xf32>
    %126 = arith.addf %125, %124 : vector<256x128xf32>
    %c1_72 = arith.constant 1 : index
    %c0_73 = arith.constant 0 : index
    %c0_74 = arith.constant 0 : index
    %127 = vector.load %arg8[%c1_72, %c0_73, %c0_74] : memref<3x128x128xbf16, #tpu.memory_space<vmem>>, vector<1x128x128xbf16>
    %128 = vector.shape_cast %127 : vector<1x128x128xbf16> to vector<128x128xbf16>
    %cst_75 = arith.constant dense<0.000000e+00> : vector<256x128xf32>
    %129 = tpu.matmul %116, %128, %cst_75 {dimension_numbers = #tpu.dot_dimension_numbers<[1], [0], [0], [1], [0, 0, 1, 1], [], []>} : vector<256x128xbf16>, vector<128x128xbf16>, vector<256x128xf32> -> vector<256x128xf32>
    %130 = arith.addf %126, %129 : vector<256x128xf32>
    %c2_76 = arith.constant 2 : index
    %c0_77 = arith.constant 0 : index
    %c0_78 = arith.constant 0 : index
    %131 = vector.load %arg8[%c2_76, %c0_77, %c0_78] : memref<3x128x128xbf16, #tpu.memory_space<vmem>>, vector<1x128x128xbf16>
    %132 = vector.shape_cast %131 : vector<1x128x128xbf16> to vector<128x128xbf16>
    %cst_79 = arith.constant dense<0.000000e+00> : vector<256x128xf32>
    %133 = tpu.matmul %120, %132, %cst_79 {dimension_numbers = #tpu.dot_dimension_numbers<[1], [0], [0], [1], [0, 0, 1, 1], [], []>} : vector<256x128xbf16>, vector<128x128xbf16>, vector<256x128xf32> -> vector<256x128xf32>
    %134 = arith.addf %130, %133 : vector<256x128xf32>
    %135 = arith.addf %134, %0 : vector<256x128xf32>
    %cst_80 = arith.constant 0.000000e+00 : f32
    %136 = vector.broadcast %cst_80 : f32 to vector<256x128xf32>
    %137 = arith.maximumf %135, %136 : vector<256x128xf32>
    %c0_81 = arith.constant 0 : index
    %c0_82 = arith.constant 0 : index
    %138 = vector.load %arg10[%c0_81, %c0_82] : memref<256x128xf32, #tpu.memory_space<vmem>>, vector<256x128xf32>
    tpu.vector_store %arg10[%c0_81, %c0_82], %137 {strides = array<i32>} : memref<256x128xf32, #tpu.memory_space<vmem>>, vector<256x128xf32>,
    return
  }
  func.func @transform_0(%arg0: i32) -> (i32, i32) {
    %c0_i32 = arith.constant 0 : i32
    %c0_i32_0 = arith.constant 0 : i32
    return %arg0, %c0_i32 : i32, i32
  }
  func.func @transform_1(%arg0: i32) -> (i32, i32, i32) {
    %c0_i32 = arith.constant 0 : i32
    %c0_i32_0 = arith.constant 0 : i32
    %c0_i32_1 = arith.constant 0 : i32
    %c0_i32_2 = arith.constant 0 : i32
    return %c0_i32, %c0_i32_0, %c0_i32_1 : i32, i32, i32
  }
  func.func @transform_2(%arg0: i32) -> (i32, i32) {
    %c0_i32 = arith.constant 0 : i32
    %c0_i32_0 = arith.constant 0 : i32
    %c0_i32_1 = arith.constant 0 : i32
    return %c0_i32, %c0_i32_0 : i32, i32
  }
  func.func @transform_3(%arg0: i32) -> (i32, i32, i32) {
    %c0_i32 = arith.constant 0 : i32
    %c0_i32_0 = arith.constant 0 : i32
    %c0_i32_1 = arith.constant 0 : i32
    %c0_i32_2 = arith.constant 0 : i32
    return %c0_i32, %c0_i32_0, %c0_i32_1 : i32, i32, i32
  }
  func.func @transform_4(%arg0: i32) -> (i32, i32) {
    %c0_i32 = arith.constant 0 : i32
    %c0_i32_0 = arith.constant 0 : i32
    %c0_i32_1 = arith.constant 0 : i32
    return %c0_i32, %c0_i32_0 : i32, i32
  }
  func.func @transform_5(%arg0: i32) -> (i32, i32, i32) {
    %c0_i32 = arith.constant 0 : i32
    %c0_i32_0 = arith.constant 0 : i32
    %c0_i32_1 = arith.constant 0 : i32
    %c0_i32_2 = arith.constant 0 : i32
    return %c0_i32, %c0_i32_0, %c0_i32_1 : i32, i32, i32
  }
  func.func @transform_6(%arg0: i32) -> (i32, i32) {
    %c0_i32 = arith.constant 0 : i32
    %c0_i32_0 = arith.constant 0 : i32
    %c0_i32_1 = arith.constant 0 : i32
    return %c0_i32, %c0_i32_0 : i32, i32
  }
  func.func @transform_7(%arg0: i32) -> (i32, i32, i32) {
    %c0_i32 = arith.constant 0 : i32
    %c0_i32_0 = arith.constant 0 : i32
    %c0_i32_1 = arith.constant 0 : i32
    %c0_i32_2 = arith.constant 0 : i32
    return %c0_i32, %c0_i32_0, %c0_i32_1 : i32, i32, i32
  }
  func.func @transform_8(%arg0: i32) -> (i32, i32) {
    %c0_i32 = arith.constant 0 : i32
    %c0_i32_0 = arith.constant 0 : i32
    %c0_i32_1 = arith.constant 0 : i32
    return %c0_i32, %c0_i32_0 : i32, i32
  }
  func.func @transform_9(%arg0: i32) -> (i32, i32) {
    %c0_i32 = arith.constant 0 : i32
    %c0_i32_0 = arith.constant 0 : i32
    return %arg0, %c0_i32 : i32, i32
  }
}

module attributes {stable_mosaic.version = 11 : i64} {
  func.func @_mm_kernel(%arg0: i32, %arg1: memref<256x128xbf16, #tpu.memory_space<vmem>>, %arg2: memref<128x128xbf16, #tpu.memory_space<vmem>>, %arg3: memref<1x128xf32, #tpu.memory_space<vmem>>, %arg4: memref<256x128xf32, #tpu.memory_space<vmem>>) attributes {dimension_semantics = [#tpu.dimension_semantics<parallel>], iteration_bounds = array<i64: 2>, scalar_prefetch = 0 : i64, scratch_operands = 0 : i64, tpu.core_type = #tpu.core_type<tc>, window_params = [{transform_indices = @transform_0, window_bounds = array<i64: 256, 128>}, {pipeline_mode = #tpu.pipeline_mode<synchronous>, transform_indices = @transform_1, window_bounds = array<i64: 128, 128>}, {pipeline_mode = #tpu.pipeline_mode<synchronous>, transform_indices = @transform_2, window_bounds = array<i64: 1, 128>}, {transform_indices = @transform_3, window_bounds = array<i64: 256, 128>}]} {
    %c0 = arith.constant 0 : index
    %c0_0 = arith.constant 0 : index
    %0 = vector.load %arg1[%c0, %c0_0] : memref<256x128xbf16, #tpu.memory_space<vmem>>, vector<256x128xbf16>
    %c0_1 = arith.constant 0 : index
    %c0_2 = arith.constant 0 : index
    %1 = vector.load %arg2[%c0_1, %c0_2] : memref<128x128xbf16, #tpu.memory_space<vmem>>, vector<128x128xbf16>
    %cst = arith.constant dense<0.000000e+00> : vector<256x128xf32>
    %2 = tpu.matmul %0, %1, %cst {dimension_numbers = #tpu.dot_dimension_numbers<[1], [0], [0], [1], [0, 0, 1, 1], [], []>} : vector<256x128xbf16>, vector<128x128xbf16>, vector<256x128xf32> -> vector<256x128xf32>
    %c0_3 = arith.constant 0 : index
    %c0_4 = arith.constant 0 : index
    %3 = vector.load %arg3[%c0_3, %c0_4] : memref<1x128xf32, #tpu.memory_space<vmem>>, vector<1x128xf32>
    %4 = vector.broadcast %3 : vector<1x128xf32> to vector<256x128xf32>
    %5 = arith.addf %2, %4 : vector<256x128xf32>
    %c0_5 = arith.constant 0 : index
    %c0_6 = arith.constant 0 : index
    %6 = vector.load %arg4[%c0_5, %c0_6] : memref<256x128xf32, #tpu.memory_space<vmem>>, vector<256x128xf32>
    tpu.vector_store %arg4[%c0_5, %c0_6], %5 {strides = array<i32>} : memref<256x128xf32, #tpu.memory_space<vmem>>, vector<256x128xf32>,
    return
  }
  func.func @transform_0(%arg0: i32) -> (i32, i32) {
    %c0_i32 = arith.constant 0 : i32
    %c0_i32_0 = arith.constant 0 : i32
    return %arg0, %c0_i32 : i32, i32
  }
  func.func @transform_1(%arg0: i32) -> (i32, i32) {
    %c0_i32 = arith.constant 0 : i32
    %c0_i32_0 = arith.constant 0 : i32
    %c0_i32_1 = arith.constant 0 : i32
    return %c0_i32, %c0_i32_0 : i32, i32
  }
  func.func @transform_2(%arg0: i32) -> (i32, i32) {
    %c0_i32 = arith.constant 0 : i32
    %c0_i32_0 = arith.constant 0 : i32
    %c0_i32_1 = arith.constant 0 : i32
    return %c0_i32, %c0_i32_0 : i32, i32
  }
  func.func @transform_3(%arg0: i32) -> (i32, i32) {
    %c0_i32 = arith.constant 0 : i32
    %c0_i32_0 = arith.constant 0 : i32
    return %arg0, %c0_i32 : i32, i32
  }
}

</mosaic_0001>

<llo_original>
// kernel: tile.18
$region0: #{tile.18}
  #allocation0 [shape = 's32[1]{0}', space=sflag, size = 0x4, scoped, tag = 'scoped memory for tile.18']
  %s0 = inlined_call_operand.vmem [shape: f32[64], index: 0, kind: input, shape index: {}]
  %s1 = inlined_call_operand.vmem [shape: f32[4,64], index: 1, kind: output, shape index: {}]
  // Predicated region
  $region2: #{tile.18} parent=0 // pred_check
    _
  $region3: #{tile.18} parent=0 // pred_check_branch
    %3 = sbr.rel (0) target = $region5
  $region4: #{tile.18} parent=0 // pred_region
    _
  $region5: #{tile.18} parent=0 // pred_fallthru
    _
  %v4 = vld [vmem:[%s0] ss:$0 sm:$0xff]
  %5 = vst [vmem:[%s1] sm:$0xf] %v4

// kernel: tile.19
$region0: #{tile.19}
  %s0 = inlined_call_operand.vmem [shape: f32[4,64], index: 0, kind: input, shape index: {}]
  %s1 = inlined_call_operand.vmem [shape: f32[1,256], index: 1, kind: output, shape index: {}]
  $region1: #{tile.19} parent=0
    #allocation0 [shape = 'u8[8192]{0}', space=vmem, size = 0x2000, scoped, tag = 'scoped mem for output reshape']
    #allocation1 [shape = 'u8[4096]{0}', space=vmem, size = 0x1000, scoped, tag = 'scoped mem for input reshape']
    %s3 = sshllo.u32 0, 4
    %v4 = vld [vmem:[%s0] sm:%s3]
    %5 = vst [vmem:[#allocation1] sm:%s3] %v4
    %s6 = smov 3
    %v7 = vld [vmem:[#allocation1] ss:$2 sm:%s6]
    %vm8 = vcmask 523264
    %9 = vst.msk [vmem:[#allocation0] ss:$8 sm:$0x3] %vm8, %v7
    %s10 = scalar_lea.vmem [#allocation1], 1
    %s11 = smov 3
    %v12 = vld [vmem:[%s10] ss:$2 sm:%s11]
    %13 = vrot.lane.b32.xlu0 %v12, 64
    %v14 = vpop.permute.xlu0 %13
    %vm15 = vcmask 1048064
    %16 = vst.msk [vmem:[#allocation0] ss:$8 sm:$0x3] %vm15, %v14
    %s18 = sshllo.u32 0, 1
    %v20 = vld [vmem:[#allocation0] sm:%s18]
    %s21 = sshllo.u32 0, 1
    %22 = vst [vmem:[%s1] sm:%s21] %v20
    %s23 = scalar_lea.vmem [#allocation0], 8
    %v24 = vld [vmem:[%s23] sm:%s18]
    %s25 = sshllo.u32 0, 1
    %s26 = scalar_lea.vmem %s1, 1
    %27 = vst [vmem:[%s26] sm:%s25] %v24

// kernel: decoder_forward.7
$region0: #{decoder_forward.7}
  #allocation0 [shape = 'u32[]', space=smem, size = 0x4, offset = 0x4, fixed_abs, tag = 'smem constant byte address 0x4 - core index']
  #allocation1 [shape = 'u32[144,128]{1,0:T(1,128)}', space=vmem, size = 0x12000, scoped, tag = 'internal scratch']
  %s0 = inlined_call_operand.vmem [shape: bf16[32,512], index: 0, kind: input, shape index: {}]
  %s1 = inlined_call_operand.vmem [shape: bf16[512,256], index: 1, kind: input, shape index: {}]
  %s2 = inlined_call_operand.vmem [shape: f32[1,256], index: 2, kind: input, shape index: {}]
  %s3 = inlined_call_operand.vmem [shape: f32[32,256], index: 3, kind: output, shape index: {}]
  %s4 = sld [smem:[#allocation0]]
  $region22: #{decoder_forward.7} parent=0
    _
  %s6 = ssub.s32 1, %s4
  %s7 = scalar_select 0, %s6, %s4
  // Predicated region
  $region2: #{decoder_forward.7} parent=0 // pred_check
    _
  $region3: #{decoder_forward.7} parent=0 // pred_check_branch
    %9 = sbr.rel (0) target = $region5
  $region4: #{decoder_forward.7} parent=0 // pred_region
    _
  $region5: #{decoder_forward.7} parent=0 // pred_fallthru
    _
  // Predicated region
  $region6: #{decoder_forward.7} parent=0 // pred_check
    _
  $region7: #{decoder_forward.7} parent=0 // pred_check_branch
    %11 = sbr.rel (0) target = $region9
  $region8: #{decoder_forward.7} parent=0 // pred_region
    _
  $region9: #{decoder_forward.7} parent=0 // pred_fallthru
    _
  // Predicated region
  $region10: #{decoder_forward.7} parent=0 // pred_check
    _
  $region11: #{decoder_forward.7} parent=0 // pred_check_branch
    %13 = sbr.rel (0) target = $region13
  $region12: #{decoder_forward.7} parent=0 // pred_region
    _
  $region13: #{decoder_forward.7} parent=0 // pred_fallthru
    _
  %v14 = vld [vmem:[%s0] sm:$0xff]
  %v15 = vld [vmem:[%s0 + $0x8] sm:$0xff]
  %v16 = vld [vmem:[%s0 + $0x10] sm:$0xff]
  %v17 = vld [vmem:[%s0 + $0x18] sm:$0xff]
  %v18 = vld [vmem:[%s0 + $0x20] sm:$0xff]
  %v19 = vld [vmem:[%s0 + $0x28] sm:$0xff]
  %v20 = vld [vmem:[%s0 + $0x30] sm:$0xff]
  %v21 = vld [vmem:[%s0 + $0x38] sm:$0xff]
  %v22 = vld [vmem:[%s1] sm:$0xff]
  %v23 = vld [vmem:[%s1 + $0x8] sm:$0xff]
  %v24 = vld [vmem:[%s1 + $0x10] sm:$0xff]
  %v25 = vld [vmem:[%s1 + $0x18] sm:$0xff]
  %v26 = vld [vmem:[%s1 + $0x20] sm:$0xff]
  %v27 = vld [vmem:[%s1 + $0x28] sm:$0xff]
  %v28 = vld [vmem:[%s1 + $0x30] sm:$0xff]
  %v29 = vld [vmem:[%s1 + $0x38] sm:$0xff]
  %v30 = vld [vmem:[%s1 + $0x40] sm:$0xff]
  %v31 = vld [vmem:[%s1 + $0x48] sm:$0xff]
  %v32 = vld [vmem:[%s1 + $0x50] sm:$0xff]
  %v33 = vld [vmem:[%s1 + $0x58] sm:$0xff]
  %v34 = vld [vmem:[%s1 + $0x60] sm:$0xff]
  %v35 = vld [vmem:[%s1 + $0x68] sm:$0xff]
  %v36 = vld [vmem:[%s1 + $0x70] sm:$0xff]
  %v37 = vld [vmem:[%s1 + $0x78] sm:$0xff]
  %v38 = vld [vmem:[%s1 + $0x80] sm:$0xff]
  %v39 = vld [vmem:[%s1 + $0x88] sm:$0xff]
  %v40 = vld [vmem:[%s1 + $0x90] sm:$0xff]
  %v41 = vld [vmem:[%s1 + $0x98] sm:$0xff]
  %v42 = vld [vmem:[%s1 + $0xa0] sm:$0xff]
  %v43 = vld [vmem:[%s1 + $0xa8] sm:$0xff]
  %v44 = vld [vmem:[%s1 + $0xb0] sm:$0xff]
  %v45 = vld [vmem:[%s1 + $0xb8] sm:$0xff]
  %v46 = vld [vmem:[%s1 + $0xc0] sm:$0xff]
  %v47 = vld [vmem:[%s1 + $0xc8] sm:$0xff]
  %v48 = vld [vmem:[%s1 + $0xd0] sm:$0xff]
  %v49 = vld [vmem:[%s1 + $0xd8] sm:$0xff]
  %v50 = vld [vmem:[%s1 + $0xe0] sm:$0xff]
  %v51 = vld [vmem:[%s1 + $0xe8] sm:$0xff]
  %v52 = vld [vmem:[%s1 + $0xf0] sm:$0xff]
  %v53 = vld [vmem:[%s1 + $0xf8] sm:$0xff]
  %v54 = vld [vmem:[%s1 + $0x100] sm:$0xff]
  %v55 = vld [vmem:[%s1 + $0x108] sm:$0xff]
  %v56 = vld [vmem:[%s1 + $0x110] sm:$0xff]
  %v57 = vld [vmem:[%s1 + $0x118] sm:$0xff]
  %v58 = vld [vmem:[%s1 + $0x120] sm:$0xff]
  %v59 = vld [vmem:[%s1 + $0x128] sm:$0xff]
  %v60 = vld [vmem:[%s1 + $0x130] sm:$0xff]
  %v61 = vld [vmem:[%s1 + $0x138] sm:$0xff]
  %v62 = vld [vmem:[%s1 + $0x140] sm:$0xff]
  %v63 = vld [vmem:[%s1 + $0x148] sm:$0xff]
  %v64 = vld [vmem:[%s1 + $0x150] sm:$0xff]
  %v65 = vld [vmem:[%s1 + $0x158] sm:$0xff]
  %v66 = vld [vmem:[%s1 + $0x160] sm:$0xff]
  %v67 = vld [vmem:[%s1 + $0x168] sm:$0xff]
  %v68 = vld [vmem:[%s1 + $0x170] sm:$0xff]
  %v69 = vld [vmem:[%s1 + $0x178] sm:$0xff]
  %v70 = vld [vmem:[%s1 + $0x180] sm:$0xff]
  %v71 = vld [vmem:[%s1 + $0x188] sm:$0xff]
  %v72 = vld [vmem:[%s1 + $0x190] sm:$0xff]
  %v73 = vld [vmem:[%s1 + $0x198] sm:$0xff]
  %v74 = vld [vmem:[%s1 + $0x1a0] sm:$0xff]
  %v75 = vld [vmem:[%s1 + $0x1a8] sm:$0xff]
  %v76 = vld [vmem:[%s1 + $0x1b0] sm:$0xff]
  %v77 = vld [vmem:[%s1 + $0x1b8] sm:$0xff]
  %v78 = vld [vmem:[%s1 + $0x1c0] sm:$0xff]
  %v79 = vld [vmem:[%s1 + $0x1c8] sm:$0xff]
  %v80 = vld [vmem:[%s1 + $0x1d0] sm:$0xff]
  %v81 = vld [vmem:[%s1 + $0x1d8] sm:$0xff]
  %v82 = vld [vmem:[%s1 + $0x1e0] sm:$0xff]
  %v83 = vld [vmem:[%s1 + $0x1e8] sm:$0xff]
  %v84 = vld [vmem:[%s1 + $0x1f0] sm:$0xff]
  %v85 = vld [vmem:[%s1 + $0x1f8] sm:$0xff]
  %v86 = vld [vmem:[%s2] sm:$0x3]
  %v88 = vlaneseq
  %v89 = vshrl.u32 %v88, 7
  %v90 = vsub.s32 0, %v89
  %v91 = vrot.slane %v86, %v90
  %v92 = vlaneseq
  %v93 = vshrl.u32 %v92, 7
  %v94 = vsub.s32 1, %v93
  %v95 = vrot.slane %v86, %v94
  %v106 = vunpack.c.l.b16 %v14
  %v107 = vunpack.c.h.b16 %v14
  %v108 = vunpack.c.l.b16 %v15
  %v109 = vunpack.c.h.b16 %v15
  %v110 = vunpack.c.l.b16 %v16
  %v111 = vunpack.c.h.b16 %v16
  %v112 = vunpack.c.l.b16 %v17
  %v113 = vunpack.c.h.b16 %v17
  %v114 = vunpack.c.l.b16 %v18
  %v115 = vunpack.c.h.b16 %v18
  %v116 = vunpack.c.l.b16 %v19
  %v117 = vunpack.c.h.b16 %v19
  %v118 = vunpack.c.l.b16 %v20
  %v119 = vunpack.c.h.b16 %v20
  %v120 = vunpack.c.l.b16 %v21
  %v121 = vunpack.c.h.b16 %v21
  %v122 = vpack.c.b16 %v110, %v106
  %v123 = vpack.c.b16 %v111, %v107
  %v124 = vpack.c.b16 %v112, %v108
  %v125 = vpack.c.b16 %v113, %v109
  %v126 = vpack.c.b16 %v118, %v114
  %v127 = vpack.c.b16 %v119, %v115
  %v128 = vpack.c.b16 %v120, %v116
  %v129 = vpack.c.b16 %v121, %v117
  %v202 = vunpack.c.l.b16 %v22
  %v203 = vunpack.c.h.b16 %v22
  %v204 = vunpack.c.l.b16 %v23
  %v205 = vunpack.c.h.b16 %v23
  %v206 = vunpack.c.l.b16 %v24
  %v207 = vunpack.c.h.b16 %v24
  %v208 = vunpack.c.l.b16 %v25
  %v209 = vunpack.c.h.b16 %v25
  %v210 = vunpack.c.l.b16 %v26
  %v211 = vunpack.c.h.b16 %v26
  %v212 = vunpack.c.l.b16 %v27
  %v213 = vunpack.c.h.b16 %v27
  %v214 = vunpack.c.l.b16 %v28
  %v215 = vunpack.c.h.b16 %v28
  %v216 = vunpack.c.l.b16 %v29
  %v217 = vunpack.c.h.b16 %v29
  %v218 = vunpack.c.l.b16 %v30
  %v219 = vunpack.c.h.b16 %v30
  %v220 = vunpack.c.l.b16 %v31
  %v221 = vunpack.c.h.b16 %v31
  %v222 = vunpack.c.l.b16 %v32
  %v223 = vunpack.c.h.b16 %v32
  %v224 = vunpack.c.l.b16 %v33
  %v225 = vunpack.c.h.b16 %v33
  %v226 = vunpack.c.l.b16 %v34
  %v227 = vunpack.c.h.b16 %v34
  %v228 = vunpack.c.l.b16 %v35
  %v229 = vunpack.c.h.b16 %v35
  %v230 = vunpack.c.l.b16 %v36
  %v231 = vunpack.c.h.b16 %v36
  %v232 = vunpack.c.l.b16 %v37
  %v233 = vunpack.c.h.b16 %v37
  %v234 = vunpack.c.l.b16 %v38
  %v235 = vunpack.c.h.b16 %v38
  %v236 = vunpack.c.l.b16 %v39
  %v237 = vunpack.c.h.b16 %v39
  %v238 = vunpack.c.l.b16 %v40
  %v239 = vunpack.c.h.b16 %v40
  %v240 = vunpack.c.l.b16 %v41
  %v241 = vunpack.c.h.b16 %v41
  %v242 = vunpack.c.l.b16 %v42
  %v243 = vunpack.c.h.b16 %v42
  %v244 = vunpack.c.l.b16 %v43
  %v245 = vunpack.c.h.b16 %v43
  %v246 = vunpack.c.l.b16 %v44
  %v247 = vunpack.c.h.b16 %v44
  %v248 = vunpack.c.l.b16 %v45
  %v249 = vunpack.c.h.b16 %v45
  %v250 = vunpack.c.l.b16 %v46
  %v251 = vunpack.c.h.b16 %v46
  %v252 = vunpack.c.l.b16 %v47
  %v253 = vunpack.c.h.b16 %v47
  %v254 = vunpack.c.l.b16 %v48
  %v255 = vunpack.c.h.b16 %v48
  %v256 = vunpack.c.l.b16 %v49
  %v257 = vunpack.c.h.b16 %v49
  %v258 = vunpack.c.l.b16 %v50
  %v259 = vunpack.c.h.b16 %v50
  %v260 = vunpack.c.l.b16 %v51
  %v261 = vunpack.c.h.b16 %v51
  %v262 = vunpack.c.l.b16 %v52
  %v263 = vunpack.c.h.b16 %v52
  %v264 = vunpack.c.l.b16 %v53
  %v265 = vunpack.c.h.b16 %v53
  %v266 = vunpack.c.l.b16 %v54
  %v267 = vunpack.c.h.b16 %v54
  %v268 = vunpack.c.l.b16 %v55
  %v269 = vunpack.c.h.b16 %v55
  %v270 = vunpack.c.l.b16 %v56
  %v271 = vunpack.c.h.b16 %v56
  %v272 = vunpack.c.l.b16 %v57
  %v273 = vunpack.c.h.b16 %v57
  %v274 = vunpack.c.l.b16 %v58
  %v275 = vunpack.c.h.b16 %v58
  %v276 = vunpack.c.l.b16 %v59
  %v277 = vunpack.c.h.b16 %v59
  %v278 = vunpack.c.l.b16 %v60
  %v279 = vunpack.c.h.b16 %v60
  %v280 = vunpack.c.l.b16 %v61
  %v281 = vunpack.c.h.b16 %v61
  %v282 = vunpack.c.l.b16 %v62
  %v283 = vunpack.c.h.b16 %v62
  %v284 = vunpack.c.l.b16 %v63
  %v285 = vunpack.c.h.b16 %v63
  %v286 = vunpack.c.l.b16 %v64
  %v287 = vunpack.c.h.b16 %v64
  %v288 = vunpack.c.l.b16 %v65
  %v289 = vunpack.c.h.b16 %v65
  %v290 = vunpack.c.l.b16 %v66
  %v291 = vunpack.c.h.b16 %v66
  %v292 = vunpack.c.l.b16 %v67
  %v293 = vunpack.c.h.b16 %v67
  %v294 = vunpack.c.l.b16 %v68
  %v295 = vunpack.c.h.b16 %v68
  %v296 = vunpack.c.l.b16 %v69
  %v297 = vunpack.c.h.b16 %v69
  %v298 = vunpack.c.l.b16 %v70
  %v299 = vunpack.c.h.b16 %v70
  %v300 = vunpack.c.l.b16 %v71
  %v301 = vunpack.c.h.b16 %v71
  %v302 = vunpack.c.l.b16 %v72
  %v303 = vunpack.c.h.b16 %v72
  %v304 = vunpack.c.l.b16 %v73
  %v305 = vunpack.c.h.b16 %v73
  %v306 = vunpack.c.l.b16 %v74
  %v307 = vunpack.c.h.b16 %v74
  %v308 = vunpack.c.l.b16 %v75
  %v309 = vunpack.c.h.b16 %v75
  %v310 = vunpack.c.l.b16 %v76
  %v311 = vunpack.c.h.b16 %v76
  %v312 = vunpack.c.l.b16 %v77
  %v313 = vunpack.c.h.b16 %v77
  %v314 = vunpack.c.l.b16 %v78
  %v315 = vunpack.c.h.b16 %v78
  %v316 = vunpack.c.l.b16 %v79
  %v317 = vunpack.c.h.b16 %v79
  %v318 = vunpack.c.l.b16 %v80
  %v319 = vunpack.c.h.b16 %v80
  %v320 = vunpack.c.l.b16 %v81
  %v321 = vunpack.c.h.b16 %v81
  %v322 = vunpack.c.l.b16 %v82
  %v323 = vunpack.c.h.b16 %v82
  %v324 = vunpack.c.l.b16 %v83
  %v325 = vunpack.c.h.b16 %v83
  %v326 = vunpack.c.l.b16 %v84
  %v327 = vunpack.c.h.b16 %v84
  %v328 = vunpack.c.l.b16 %v85
  %v329 = vunpack.c.h.b16 %v85
  %v330 = vpack.c.b16 %v204, %v202
  %v331 = vpack.c.b16 %v205, %v203
  %v332 = vpack.c.b16 %v208, %v206
  %v333 = vpack.c.b16 %v209, %v207
  %v334 = vpack.c.b16 %v212, %v210
  %v335 = vpack.c.b16 %v213, %v211
  %v336 = vpack.c.b16 %v216, %v214
  %v337 = vpack.c.b16 %v217, %v215
  %v338 = vpack.c.b16 %v220, %v218
  %v339 = vpack.c.b16 %v221, %v219
  %v340 = vpack.c.b16 %v224, %v222
  %v341 = vpack.c.b16 %v225, %v223
  %v342 = vpack.c.b16 %v228, %v226
  %v343 = vpack.c.b16 %v229, %v227
  %v344 = vpack.c.b16 %v232, %v230
  %v345 = vpack.c.b16 %v233, %v231
  %v346 = vpack.c.b16 %v236, %v234
  %v347 = vpack.c.b16 %v237, %v235
  %v348 = vpack.c.b16 %v240, %v238
  %v349 = vpack.c.b16 %v241, %v239
  %v350 = vpack.c.b16 %v244, %v242
  %v351 = vpack.c.b16 %v245, %v243
  %v352 = vpack.c.b16 %v248, %v246
  %v353 = vpack.c.b16 %v249, %v247
  %v354 = vpack.c.b16 %v252, %v250
  %v355 = vpack.c.b16 %v253, %v251
  %v356 = vpack.c.b16 %v256, %v254
  %v357 = vpack.c.b16 %v257, %v255
  %v358 = vpack.c.b16 %v260, %v258
  %v359 = vpack.c.b16 %v261, %v259
  %v360 = vpack.c.b16 %v264, %v262
  %v361 = vpack.c.b16 %v265, %v263
  %v362 = vpack.c.b16 %v268, %v266
  %v363 = vpack.c.b16 %v269, %v267
  %v364 = vpack.c.b16 %v272, %v270
  %v365 = vpack.c.b16 %v273, %v271
  %v366 = vpack.c.b16 %v276, %v274
  %v367 = vpack.c.b16 %v277, %v275
  %v368 = vpack.c.b16 %v280, %v278
  %v369 = vpack.c.b16 %v281, %v279
  %v370 = vpack.c.b16 %v284, %v282
  %v371 = vpack.c.b16 %v285, %v283
  %v372 = vpack.c.b16 %v288, %v286
  %v373 = vpack.c.b16 %v289, %v287
  %v374 = vpack.c.b16 %v292, %v290
  %v375 = vpack.c.b16 %v293, %v291
  %v376 = vpack.c.b16 %v296, %v294
  %v377 = vpack.c.b16 %v297, %v295
  %v378 = vpack.c.b16 %v300, %v298
  %v379 = vpack.c.b16 %v301, %v299
  %v380 = vpack.c.b16 %v304, %v302
  %v381 = vpack.c.b16 %v305, %v303
  %v382 = vpack.c.b16 %v308, %v306
  %v383 = vpack.c.b16 %v309, %v307
  %v384 = vpack.c.b16 %v312, %v310
  %v385 = vpack.c.b16 %v313, %v311
  %v386 = vpack.c.b16 %v316, %v314
  %v387 = vpack.c.b16 %v317, %v315
  %v388 = vpack.c.b16 %v320, %v318
  %v389 = vpack.c.b16 %v321, %v319
  %v390 = vpack.c.b16 %v324, %v322
  %v391 = vpack.c.b16 %v325, %v323
  %v392 = vpack.c.b16 %v328, %v326
  %v393 = vpack.c.b16 %v329, %v327
  %458 = vmatprep.subr.bf16.mxu0 %v331
  %459 = vmatpush1.bf16.msra.mxu0 %v330
  %460 = vmatprep.subr.bf16.mxu0 %v333
  %461 = vmatpush1.bf16.msra.mxu0 %v332
  %462 = vmatprep.subr.bf16.mxu0 %v335
  %463 = vmatpush1.bf16.msra.mxu0 %v334
  %464 = vmatprep.subr.bf16.mxu0 %v337
  %465 = vmatpush1.bf16.msra.mxu0 %v336
  %466 = vmatprep.subr.bf16.mxu0 %v339
  %467 = vmatpush1.bf16.msra.mxu0 %v338
  %468 = vmatprep.subr.bf16.mxu0 %v341
  %469 = vmatpush1.bf16.msra.mxu0 %v340
  %470 = vmatprep.subr.bf16.mxu0 %v343
  %471 = vmatpush1.bf16.msra.mxu0 %v342
  %472 = vmatprep.subr.bf16.mxu0 %v345
  %473 = vmatpush1.bf16.msra.mxu0 %v344
  %474 = vmatprep.subr.bf16.mxu0 %v347
  %475 = vmatpush1.bf16.msra.mxu0 %v346
  %476 = vmatprep.subr.bf16.mxu0 %v349
  %477 = vmatpush1.bf16.msra.mxu0 %v348
  %478 = vmatprep.subr.bf16.mxu0 %v351
  %479 = vmatpush1.bf16.msra.mxu0 %v350
  %480 = vmatprep.subr.bf16.mxu0 %v353
  %481 = vmatpush1.bf16.msra.mxu0 %v352
  %482 = vmatprep.subr.bf16.mxu0 %v355
  %483 = vmatpush1.bf16.msra.mxu0 %v354
  %484 = vmatprep.subr.bf16.mxu0 %v357
  %485 = vmatpush1.bf16.msra.mxu0 %v356
  %486 = vmatprep.subr.bf16.mxu0 %v359
  %487 = vmatpush1.bf16.msra.mxu0 %v358
  %488 = vmatprep.subr.bf16.mxu0 %v361
  %489 = vmatpush1.bf16.msra.mxu0 %v360
  %490 = vmatprep.mubr.bf16.mxu0 %v123
  %491 = vmatmul.mubr.bf16.gmra.mrb[0].mxu0 %v122
  %v492 = vpop.f32.mrb[0].mxu0
  %v493 = vadd.f32 %v91, %v492
  %v494 = vpop.f32.mrb[0].mxu0
  %v495 = vadd.f32 %v95, %v494
  %v496 = vpop.f32.mrb[0].mxu0
  %v497 = vadd.f32 %v91, %v496
  %v498 = vpop.f32.mrb[0].mxu0
  %v499 = vadd.f32 %v95, %v498
  %500 = vmatprep.mubr.bf16.mxu0 %v127
  %501 = vmatmul.mubr.bf16.gmra.mrb[0].mxu0 %v126
  %v502 = vpop.f32.mrb[0].mxu0
  %v503 = vadd.f32 %v91, %v502
  %v504 = vpop.f32.mrb[0].mxu0
  %v505 = vadd.f32 %v95, %v504
  %v506 = vpop.f32.mrb[0].mxu0
  %v507 = vadd.f32 %v91, %v506
  %v508 = vpop.f32.mrb[0].mxu0
  %v509 = vadd.f32 %v95, %v508
  %510 = vdwg.mxu0
  %511 = vmatprep.subr.bf16.mxu0 %v363
  %512 = vmatpush1.bf16.msra.mxu0 %v362
  %513 = vmatprep.subr.bf16.mxu0 %v365
  %514 = vmatpush1.bf16.msra.mxu0 %v364
  %515 = vmatprep.subr.bf16.mxu0 %v367
  %516 = vmatpush1.bf16.msra.mxu0 %v366
  %517 = vmatprep.subr.bf16.mxu0 %v369
  %518 = vmatpush1.bf16.msra.mxu0 %v368
  %519 = vmatprep.subr.bf16.mxu0 %v371
  %520 = vmatpush1.bf16.msra.mxu0 %v370
  %521 = vmatprep.subr.bf16.mxu0 %v373
  %522 = vmatpush1.bf16.msra.mxu0 %v372
  %523 = vmatprep.subr.bf16.mxu0 %v375
  %524 = vmatpush1.bf16.msra.mxu0 %v374
  %525 = vmatprep.subr.bf16.mxu0 %v377
  %526 = vmatpush1.bf16.msra.mxu0 %v376
  %527 = vmatprep.subr.bf16.mxu0 %v379
  %528 = vmatpush1.bf16.msra.mxu0 %v378
  %529 = vmatprep.subr.bf16.mxu0 %v381
  %530 = vmatpush1.bf16.msra.mxu0 %v380
  %531 = vmatprep.subr.bf16.mxu0 %v383
  %532 = vmatpush1.bf16.msra.mxu0 %v382
  %533 = vmatprep.subr.bf16.mxu0 %v385
  %534 = vmatpush1.bf16.msra.mxu0 %v384
  %535 = vmatprep.subr.bf16.mxu0 %v387
  %536 = vmatpush1.bf16.msra.mxu0 %v386
  %537 = vmatprep.subr.bf16.mxu0 %v389
  %538 = vmatpush1.bf16.msra.mxu0 %v388
  %539 = vmatprep.subr.bf16.mxu0 %v391
  %540 = vmatpush1.bf16.msra.mxu0 %v390
  %541 = vmatprep.subr.bf16.mxu0 %v393
  %542 = vmatpush1.bf16.msra.mxu0 %v392
  %543 = vmatprep.mubr.bf16.mxu0 %v125
  %544 = vmatmul.mubr.bf16.gmra.mrb[0].mxu0 %v124
  %v545 = vpop.f32.mrb[0].mxu0
  %v546 = vadd.f32 %v493, %v545
  %v547 = vpop.f32.mrb[0].mxu0
  %v548 = vadd.f32 %v495, %v547
  %v549 = vpop.f32.mrb[0].mxu0
  %v550 = vadd.f32 %v497, %v549
  %v551 = vpop.f32.mrb[0].mxu0
  %v552 = vadd.f32 %v499, %v551
  %553 = vmatprep.mubr.bf16.mxu0 %v129
  %554 = vmatmul.mubr.bf16.gmra.mrb[0].mxu0 %v128
  %v555 = vpop.f32.mrb[0].mxu0
  %v556 = vadd.f32 %v503, %v555
  %v557 = vpop.f32.mrb[0].mxu0
  %v558 = vadd.f32 %v505, %v557
  %v559 = vpop.f32.mrb[0].mxu0
  %v560 = vadd.f32 %v507, %v559
  %v561 = vpop.f32.mrb[0].mxu0
  %v562 = vadd.f32 %v509, %v561
  %563 = vdwg.mxu0
  %v564 = vmax.f32 %v546, 0.0
  %v565 = vmax.f32 %v548, 0.0
  %v566 = vmax.f32 %v550, 0.0
  %v567 = vmax.f32 %v552, 0.0
  %v568 = vmax.f32 %v556, 0.0
  %v569 = vmax.f32 %v558, 0.0
  %v570 = vmax.f32 %v560, 0.0
  %v571 = vmax.f32 %v562, 0.0
  %572 = vst [vmem:[%s3] sm:$0xff] %v564
  %573 = vst [vmem:[%s3 + $0x8] sm:$0xff] %v565
  %574 = vst [vmem:[%s3 + $0x10] sm:$0xff] %v566
  %575 = vst [vmem:[%s3 + $0x18] sm:$0xff] %v567
  %576 = vst [vmem:[%s3 + $0x20] sm:$0xff] %v568
  %577 = vst [vmem:[%s3 + $0x28] sm:$0xff] %v569
  %578 = vst [vmem:[%s3 + $0x30] sm:$0xff] %v570
  %579 = vst [vmem:[%s3 + $0x38] sm:$0xff] %v571
  // Predicated region
  $region14: #{decoder_forward.7} parent=0 // pred_check
    _
  $region15: #{decoder_forward.7} parent=0 // pred_check_branch
    %581 = sbr.rel (0) target = $region17
  $region16: #{decoder_forward.7} parent=0 // pred_region
    _
  $region17: #{decoder_forward.7} parent=0 // pred_fallthru
    _
  // Predicated region
  $region18: #{decoder_forward.7} parent=0 // pred_check
    _
  $region19: #{decoder_forward.7} parent=0 // pred_check_branch
    %583 = sbr.rel (0) target = $region21
  $region20: #{decoder_forward.7} parent=0 // pred_region
    _
  $region21: #{decoder_forward.7} parent=0 // pred_fallthru
    _

// kernel: decoder_forward.8
$region0: #{decoder_forward.8}
  #allocation0 [shape = 'u32[]', space=smem, size = 0x4, offset = 0x4, fixed_abs, tag = 'smem constant byte address 0x4 - core index']
  #allocation1 [shape = 'u32[144,128]{1,0:T(1,128)}', space=vmem, size = 0x12000, scoped, tag = 'internal scratch']
  %s0 = inlined_call_operand.vmem [shape: f32[128,128], index: 0, kind: input, shape index: {}]
  %s1 = inlined_call_operand.vmem [shape: bf16[3,128,128], index: 1, kind: input, shape index: {}]
  %s2 = inlined_call_operand.vmem [shape: f32[1,128], index: 2, kind: input, shape index: {}]
  %s3 = inlined_call_operand.vmem [shape: bf16[3,128,128], index: 3, kind: input, shape index: {}]
  %s4 = inlined_call_operand.vmem [shape: f32[1,128], index: 4, kind: input, shape index: {}]
  %s5 = inlined_call_operand.vmem [shape: bf16[3,128,128], index: 5, kind: input, shape index: {}]
  %s6 = inlined_call_operand.vmem [shape: f32[1,128], index: 6, kind: input, shape index: {}]
  %s7 = inlined_call_operand.vmem [shape: bf16[3,128,128], index: 7, kind: input, shape index: {}]
  %s8 = inlined_call_operand.vmem [shape: f32[1,128], index: 8, kind: input, shape index: {}]
  %s9 = inlined_call_operand.vmem [shape: f32[128,128], index: 9, kind: output, shape index: {}]
  %s10 = sld [smem:[#allocation0]]
  $region69: #{decoder_forward.8} parent=0
    _
  %s12 = ssub.s32 1, %s10
  %s13 = scalar_select 0, %s12, %s10
  loop: start=0, step=1, limit=4
  $region2: #{decoder_forward.8} parent=0 // loop_pre_header
    _
  $region3: #{decoder_forward.8} parent=0 // loop_header
    %s15 = sphi 0, %s19
    %p16 = scmp.ge.s32.totalorder %s15, 4
    %s25 = sphi 0, %s27
    %s28 = sphi 0, %s25
    %s29 = sphi 0, %s28
    %s45 = sphi 0, %s29
    %s49 = sphi 0, %s49
    %s51 = sphi 0, %s49
    %s52 = sphi 0, %s51
    %s66 = sphi 0, %s52
    %s70 = sphi 0, %s70
    %s72 = sphi 0, %s70
    %s73 = sphi 0, %s72
    %s87 = sphi 0, %s73
    %s91 = sphi 0, %s91
    %s93 = sphi 0, %s91
    %s94 = sphi 0, %s93
    %s108 = sphi 0, %s94
    %s112 = sphi 0, %s112
    %s114 = sphi 0, %s112
    %s115 = sphi 0, %s114
    %s129 = sphi 0, %s115
    %s133 = sphi 0, %s133
    %s135 = sphi 0, %s133
    %s136 = sphi 0, %s135
    %s150 = sphi 0, %s136
    %s154 = sphi 0, %s154
    %s156 = sphi 0, %s154
    %s157 = sphi 0, %s156
    %s171 = sphi 0, %s157
    %s175 = sphi 0, %s175
    %s177 = sphi 0, %s175
    %s178 = sphi 0, %s177
    %s192 = sphi 0, %s178
    %s196 = sphi 0, %s196
    %s198 = sphi 0, %s196
    %s199 = sphi 0, %s198
    %s213 = sphi 0, %s199
    %s219 = sphi 0, %s221
    %s222 = sphi 0, %s219
    %s223 = sphi 0, %s222
    %s239 = sphi 0, %s223
  $region4: #{decoder_forward.8} parent=0 // loop_header_branch
    %18 = sbr.rel (%p16) target = $region8
  $region5: #{decoder_forward.8} parent=0 // loop_body
    %s20 = ssub.s32 %s15, 1
    %s21 = ssub.s32 %s15, 2
    %s22 = sadd.s32 %s15, 1
    %s23 = ssub.s32 %s15, %s22
    %p24 = scmp.eq.s32.totalorder %s23, 0
    %s26 = sadd.s32 %s25, 1
    %s27 = scalar_select %p24, %s25, %s26
    %p30 = pneg %p24
    %p31 = scmp.eq.s32.totalorder %s15, 1
    %p32 = por %p30, %p31
    %p33 = scmp.ne.s32.totalorder %s25, %s28
    %p34 = scmp.eq.s32.totalorder %s15, 0
    %p35 = por %p33, %p34
    %p36 = scmp.ne.s32.totalorder %s25, %s28
    %p37 = scmp.eq.s32.totalorder %s20, 1
    %p38 = por %p36, %p37
    %p39 = scmp.ne.s32.totalorder %s28, %s29
    %p40 = scmp.eq.s32.totalorder %s20, 0
    %p41 = por %p39, %p40
    %p42 = scmp.ne.s32.totalorder %s28, %s29
    %p43 = scmp.eq.s32.totalorder %s21, 1
    %p44 = por %p42, %p43
    %p46 = scmp.ne.s32.totalorder %s29, %s45
    %p47 = scmp.eq.s32.totalorder %s21, 0
    %p48 = por %p46, %p47
    %s50 = sadd.s32 %s49, 1
    %p53 = scmp.eq.s32.totalorder %s15, 1
    %p54 = scmp.ne.s32.totalorder %s49, %s51
    %p55 = scmp.eq.s32.totalorder %s15, 0
    %p56 = por %p54, %p55
    %p57 = scmp.ne.s32.totalorder %s49, %s51
    %p58 = scmp.eq.s32.totalorder %s20, 1
    %p59 = por %p57, %p58
    %p60 = scmp.ne.s32.totalorder %s51, %s52
    %p61 = scmp.eq.s32.totalorder %s20, 0
    %p62 = por %p60, %p61
    %p63 = scmp.ne.s32.totalorder %s51, %s52
    %p64 = scmp.eq.s32.totalorder %s21, 1
    %p65 = por %p63, %p64
    %p67 = scmp.ne.s32.totalorder %s52, %s66
    %p68 = scmp.eq.s32.totalorder %s21, 0
    %p69 = por %p67, %p68
    %s71 = sadd.s32 %s70, 1
    %p74 = scmp.eq.s32.totalorder %s15, 1
    %p75 = scmp.ne.s32.totalorder %s70, %s72
    %p76 = scmp.eq.s32.totalorder %s15, 0
    %p77 = por %p75, %p76
    %p78 = scmp.ne.s32.totalorder %s70, %s72
    %p79 = scmp.eq.s32.totalorder %s20, 1
    %p80 = por %p78, %p79
    %p81 = scmp.ne.s32.totalorder %s72, %s73
    %p82 = scmp.eq.s32.totalorder %s20, 0
    %p83 = por %p81, %p82
    %p84 = scmp.ne.s32.totalorder %s72, %s73
    %p85 = scmp.eq.s32.totalorder %s21, 1
    %p86 = por %p84, %p85
    %p88 = scmp.ne.s32.totalorder %s73, %s87
    %p89 = scmp.eq.s32.totalorder %s21, 0
    %p90 = por %p88, %p89
    %s92 = sadd.s32 %s91, 1
    %p95 = scmp.eq.s32.totalorder %s15, 1
    %p96 = scmp.ne.s32.totalorder %s91, %s93
    %p97 = scmp.eq.s32.totalorder %s15, 0
    %p98 = por %p96, %p97
    %p99 = scmp.ne.s32.totalorder %s91, %s93
    %p100 = scmp.eq.s32.totalorder %s20, 1
    %p101 = por %p99, %p100
    %p102 = scmp.ne.s32.totalorder %s93, %s94
    %p103 = scmp.eq.s32.totalorder %s20, 0
    %p104 = por %p102, %p103
    %p105 = scmp.ne.s32.totalorder %s93, %s94
    %p106 = scmp.eq.s32.totalorder %s21, 1
    %p107 = por %p105, %p106
    %p109 = scmp.ne.s32.totalorder %s94, %s108
    %p110 = scmp.eq.s32.totalorder %s21, 0
    %p111 = por %p109, %p110
    %s113 = sadd.s32 %s112, 1
    %p116 = scmp.eq.s32.totalorder %s15, 1
    %p117 = scmp.ne.s32.totalorder %s112, %s114
    %p118 = scmp.eq.s32.totalorder %s15, 0
    %p119 = por %p117, %p118
    %p120 = scmp.ne.s32.totalorder %s112, %s114
    %p121 = scmp.eq.s32.totalorder %s20, 1
    %p122 = por %p120, %p121
    %p123 = scmp.ne.s32.totalorder %s114, %s115
    %p124 = scmp.eq.s32.totalorder %s20, 0
    %p125 = por %p123, %p124
    %p126 = scmp.ne.s32.totalorder %s114, %s115
    %p127 = scmp.eq.s32.totalorder %s21, 1
    %p128 = por %p126, %p127
    %p130 = scmp.ne.s32.totalorder %s115, %s129
    %p131 = scmp.eq.s32.totalorder %s21, 0
    %p132 = por %p130, %p131
    %s134 = sadd.s32 %s133, 1
    %p137 = scmp.eq.s32.totalorder %s15, 1
    %p138 = scmp.ne.s32.totalorder %s133, %s135
    %p139 = scmp.eq.s32.totalorder %s15, 0
    %p140 = por %p138, %p139
    %p141 = scmp.ne.s32.totalorder %s133, %s135
    %p142 = scmp.eq.s32.totalorder %s20, 1
    %p143 = por %p141, %p142
    %p144 = scmp.ne.s32.totalorder %s135, %s136
    %p145 = scmp.eq.s32.totalorder %s20, 0
    %p146 = por %p144, %p145
    %p147 = scmp.ne.s32.totalorder %s135, %s136
    %p148 = scmp.eq.s32.totalorder %s21, 1
    %p149 = por %p147, %p148
    %p151 = scmp.ne.s32.totalorder %s136, %s150
    %p152 = scmp.eq.s32.totalorder %s21, 0
    %p153 = por %p151, %p152
    %s155 = sadd.s32 %s154, 1
    %p158 = scmp.eq.s32.totalorder %s15, 1
    %p159 = scmp.ne.s32.totalorder %s154, %s156
    %p160 = scmp.eq.s32.totalorder %s15, 0
    %p161 = por %p159, %p160
    %p162 = scmp.ne.s32.totalorder %s154, %s156
    %p163 = scmp.eq.s32.totalorder %s20, 1
    %p164 = por %p162, %p163
    %p165 = scmp.ne.s32.totalorder %s156, %s157
    %p166 = scmp.eq.s32.totalorder %s20, 0
    %p167 = por %p165, %p166
    %p168 = scmp.ne.s32.totalorder %s156, %s157
    %p169 = scmp.eq.s32.totalorder %s21, 1
    %p170 = por %p168, %p169
    %p172 = scmp.ne.s32.totalorder %s157, %s171
    %p173 = scmp.eq.s32.totalorder %s21, 0
    %p174 = por %p172, %p173
    %s176 = sadd.s32 %s175, 1
    %p179 = scmp.eq.s32.totalorder %s15, 1
    %p180 = scmp.ne.s32.totalorder %s175, %s177
    %p181 = scmp.eq.s32.totalorder %s15, 0
    %p182 = por %p180, %p181
    %p183 = scmp.ne.s32.totalorder %s175, %s177
    %p184 = scmp.eq.s32.totalorder %s20, 1
    %p185 = por %p183, %p184
    %p186 = scmp.ne.s32.totalorder %s177, %s178
    %p187 = scmp.eq.s32.totalorder %s20, 0
    %p188 = por %p186, %p187
    %p189 = scmp.ne.s32.totalorder %s177, %s178
    %p190 = scmp.eq.s32.totalorder %s21, 1
    %p191 = por %p189, %p190
    %p193 = scmp.ne.s32.totalorder %s178, %s192
    %p194 = scmp.eq.s32.totalorder %s21, 0
    %p195 = por %p193, %p194
    %s197 = sadd.s32 %s196, 1
    %p200 = scmp.eq.s32.totalorder %s15, 1
    %p201 = scmp.ne.s32.totalorder %s196, %s198
    %p202 = scmp.eq.s32.totalorder %s15, 0
    %p203 = por %p201, %p202
    %p204 = scmp.ne.s32.totalorder %s196, %s198
    %p205 = scmp.eq.s32.totalorder %s20, 1
    %p206 = por %p204, %p205
    %p207 = scmp.ne.s32.totalorder %s198, %s199
    %p208 = scmp.eq.s32.totalorder %s20, 0
    %p209 = por %p207, %p208
    %p210 = scmp.ne.s32.totalorder %s198, %s199
    %p211 = scmp.eq.s32.totalorder %s21, 1
    %p212 = por %p210, %p211
    %p214 = scmp.ne.s32.totalorder %s199, %s213
    %p215 = scmp.eq.s32.totalorder %s21, 0
    %p216 = por %p214, %p215
    %s217 = ssub.s32 %s15, %s22
    %p218 = scmp.eq.s32.totalorder %s217, 0
    %s220 = sadd.s32 %s219, 1
    %s221 = scalar_select %p218, %s219, %s220
    %p224 = pneg %p218
    %p225 = scmp.eq.s32.totalorder %s15, 1
    %p226 = por %p224, %p225
    %p227 = scmp.ne.s32.totalorder %s219, %s222
    %p228 = scmp.eq.s32.totalorder %s15, 0
    %p229 = por %p227, %p228
    %p230 = scmp.ne.s32.totalorder %s219, %s222
    %p231 = scmp.eq.s32.totalorder %s20, 1
    %p232 = por %p230, %p231
    %p233 = scmp.ne.s32.totalorder %s222, %s223
    %p234 = scmp.eq.s32.totalorder %s20, 0
    %p235 = por %p233, %p234
    %p236 = scmp.ne.s32.totalorder %s222, %s223
    %p237 = scmp.eq.s32.totalorder %s21, 1
    %p238 = por %p236, %p237
    %p240 = scmp.ne.s32.totalorder %s223, %s239
    %p241 = scmp.eq.s32.totalorder %s21, 0
    %p242 = por %p240, %p241
    %p243 = scmp.le.s32.totalorder 1, %s15
    %p244 = scmp.lt.s32.totalorder %s15, 3
    %p245 = pnand %p243, %p244
    %p246 = pneg %p245
    // Predicated region
    $region9: #{decoder_forward.8} parent=5 // pred_check
      _
    $region10: #{decoder_forward.8} parent=5 // pred_check_branch
      %248 = sbr.rel (%p245) target = $region12
    $region11: #{decoder_forward.8} parent=5 // pred_region
      %s249 = ssub.s32 %s15, 1
      // Predicated region
      $region13: #{decoder_forward.8} parent=11 // pred_check
        %p250 = pneg %p62
      $region14: #{decoder_forward.8} parent=11 // pred_check_branch
        %252 = sbr.rel (%p250) target = $region16
      $region15: #{decoder_forward.8} parent=11 // pred_region
        _
      $region16: #{decoder_forward.8} parent=11 // pred_fallthru
        _
      // Predicated region
      $region17: #{decoder_forward.8} parent=11 // pred_check
        %p253 = pneg %p83
      $region18: #{decoder_forward.8} parent=11 // pred_check_branch
        %255 = sbr.rel (%p253) target = $region20
      $region19: #{decoder_forward.8} parent=11 // pred_region
        _
      $region20: #{decoder_forward.8} parent=11 // pred_fallthru
        _
      // Predicated region
      $region21: #{decoder_forward.8} parent=11 // pred_check
        %p256 = pneg %p104
      $region22: #{decoder_forward.8} parent=11 // pred_check_branch
        %258 = sbr.rel (%p256) target = $region24
      $region23: #{decoder_forward.8} parent=11 // pred_region
        _
      $region24: #{decoder_forward.8} parent=11 // pred_fallthru
        _
      // Predicated region
      $region25: #{decoder_forward.8} parent=11 // pred_check
        %p259 = pneg %p125
      $region26: #{decoder_forward.8} parent=11 // pred_check_branch
        %261 = sbr.rel (%p259) target = $region28
      $region27: #{decoder_forward.8} parent=11 // pred_region
        _
      $region28: #{decoder_forward.8} parent=11 // pred_fallthru
        _
      // Predicated region
      $region29: #{decoder_forward.8} parent=11 // pred_check
        %p262 = pneg %p146
      $region30: #{decoder_forward.8} parent=11 // pred_check_branch
        %264 = sbr.rel (%p262) target = $region32
      $region31: #{decoder_forward.8} parent=11 // pred_region
        _
      $region32: #{decoder_forward.8} parent=11 // pred_fallthru
        _
      // Predicated region
      $region33: #{decoder_forward.8} parent=11 // pred_check
        %p265 = pneg %p167
      $region34: #{decoder_forward.8} parent=11 // pred_check_branch
        %267 = sbr.rel (%p265) target = $region36
      $region35: #{decoder_forward.8} parent=11 // pred_region
        _
      $region36: #{decoder_forward.8} parent=11 // pred_fallthru
        _
      // Predicated region
      $region37: #{decoder_forward.8} parent=11 // pred_check
        %p268 = pneg %p188
      $region38: #{decoder_forward.8} parent=11 // pred_check_branch
        %270 = sbr.rel (%p268) target = $region40
      $region39: #{decoder_forward.8} parent=11 // pred_region
        _
      $region40: #{decoder_forward.8} parent=11 // pred_fallthru
        _
      // Predicated region
      $region41: #{decoder_forward.8} parent=11 // pred_check
        %p271 = pneg %p209
      $region42: #{decoder_forward.8} parent=11 // pred_check_branch
        %273 = sbr.rel (%p271) target = $region44
      $region43: #{decoder_forward.8} parent=11 // pred_region
        _
      $region44: #{decoder_forward.8} parent=11 // pred_fallthru
        _
    $region12: #{decoder_forward.8} parent=5 // pred_fallthru
      _
    %p274 = scmp.lt.s32.totalorder %s15, 2
    // Predicated region
    $region45: #{decoder_forward.8} parent=5 // pred_check
      %p275 = pneg %p274
    $region46: #{decoder_forward.8} parent=5 // pred_check_branch
      %277 = sbr.rel (%p275) target = $region48
    $region47: #{decoder_forward.8} parent=5 // pred_region
      // Predicated region
      $region49: #{decoder_forward.8} parent=47 // pred_check
        %p278 = pneg %p35
      $region50: #{decoder_forward.8} parent=47 // pred_check_branch
        %280 = sbr.rel (%p278) target = $region52
      $region51: #{decoder_forward.8} parent=47 // pred_region
        %s281 = smul.u32 8, %s15
        %p282 = scmp.lt.s32.totalorder %s281, 15
        %s283 = scalar_select %p282, %s281, 15
        %s284 = smul.addr %s283, 8
        %s285 = scalar_lea.vmem %s0, %s284
        %s286 = smul.u32 8, %s15
      $region52: #{decoder_forward.8} parent=47 // pred_fallthru
        _
    $region48: #{decoder_forward.8} parent=5 // pred_fallthru
      _
    %p287 = scmp.le.s32.totalorder 1, %s15
    %p288 = scmp.lt.s32.totalorder %s15, 3
    %p289 = pnand %p287, %p288
    %p290 = pneg %p289
    // Predicated region
    $region53: #{decoder_forward.8} parent=5 // pred_check
      _
    $region54: #{decoder_forward.8} parent=5 // pred_check_branch
      %292 = sbr.rel (%p289) target = $region56
    $region55: #{decoder_forward.8} parent=5 // pred_region
      %s293 = ssub.s32 %s15, 1
      %s294 = smul.u32 8, %s20
      %p295 = scmp.lt.s32.totalorder %s294, 15
      %s296 = scalar_select %p295, %s294, 15
      %s297 = smul.addr %s296, 8
      %s298 = scalar_lea.vmem %s0, %s297
      %p299 = pneg %p41
      %p300 = pneg %p38
      %p301 = pneg %p62
      %p302 = pneg %p59
      %p303 = pneg %p83
      %p304 = pneg %p80
      %p305 = pneg %p104
      %p306 = pneg %p101
      %p307 = pneg %p125
      %p308 = pneg %p122
      %p309 = pneg %p146
      %p310 = pneg %p143
      %p311 = pneg %p167
      %p312 = pneg %p164
      %p313 = pneg %p188
      %p314 = pneg %p185
      %p315 = pneg %p209
      %p316 = pneg %p206
      %p317 = pneg %p235
      %p318 = pneg %p232
      %s319 = smul.u32 8, %s20
      %p320 = scmp.lt.s32.totalorder %s319, 15
      %s321 = scalar_select %p320, %s319, 15
      %s322 = smul.addr %s321, 8
      %s323 = scalar_lea.vmem %s9, %s322
      %s324 = smul.u32 8, %s20
      %p325 = scmp.lt.s32.totalorder %s324, 15
      %s326 = scalar_select %p325, %s324, 15
      %s327 = smul.addr %s326, 8
      %s328 = scalar_lea.vmem %s0, %s327
      %s329 = smul.u32 8, %s20
      %s330 = smul.u32 8, %s20
      %p331 = scmp.lt.s32.totalorder %s330, 15
      %s332 = scalar_select %p331, %s330, 15
      %s333 = smul.addr %s332, 8
      %s334 = scalar_lea.vmem %s9, %s333
      %s335 = smul.u32 8, %s20
      %v337 = vld [vmem:[%s328] sm:$0xff]
      %v338 = vld [vmem:[%s328 + $0x8] sm:$0xff]
      %v339 = vld [vmem:[%s328 + $0x10] sm:$0xff]
      %v340 = vld [vmem:[%s328 + $0x18] sm:$0xff]
      %v341 = vld [vmem:[%s328 + $0x20] sm:$0xff]
      %v342 = vld [vmem:[%s328 + $0x28] sm:$0xff]
      %v343 = vld [vmem:[%s328 + $0x30] sm:$0xff]
      %v344 = vld [vmem:[%s328 + $0x38] sm:$0xff]
      %v345 = vpack.c.bf16 %v338, %v337
      %v346 = vpack.c.bf16 %v340, %v339
      %v347 = vpack.c.bf16 %v342, %v341
      %v348 = vpack.c.bf16 %v344, %v343
      %v349 = vlaneseq
      %v350 = vshrl.u32 %v349, 7
      %v351 = vadd.s32 %v350, 8
      %v352 = vadd.s32 %v350, 16
      %v353 = vadd.s32 %v350, 24
      %v354 = vadd.s32 %v350, 32
      %v355 = vadd.s32 %v350, 40
      %v356 = vadd.s32 %v350, 48
      %v357 = vadd.s32 %v350, 56
      %v358 = vlaneseq
      %v359 = vand.u32 %v358, 127
      %v360 = vand.u32 %v350, 7
      %v361 = vand.u32 %v351, 7
      %v362 = vand.u32 %v352, 7
      %v363 = vand.u32 %v353, 7
      %v364 = vand.u32 %v354, 7
      %v365 = vand.u32 %v355, 7
      %v366 = vand.u32 %v356, 7
      %v367 = vand.u32 %v357, 7
      %v368 = vsub.s32 %v359, %v350
      %v369 = vsub.s32 %v359, %v351
      %v370 = vsub.s32 %v359, %v352
      %v371 = vsub.s32 %v359, %v353
      %v372 = vsub.s32 %v359, %v354
      %v373 = vsub.s32 %v359, %v355
      %v374 = vsub.s32 %v359, %v356
      %v375 = vsub.s32 %v359, %v357
      %vm376 = vcmp.eq.s32.totalorder %v368, 4294967288
      %vm377 = vcmp.eq.s32.totalorder %v369, 4294967288
      %vm378 = vcmp.eq.s32.totalorder %v370, 4294967288
      %vm379 = vcmp.eq.s32.totalorder %v371, 4294967288
      %vm380 = vcmp.eq.s32.totalorder %v372, 4294967288
      %vm381 = vcmp.eq.s32.totalorder %v373, 4294967288
      %vm382 = vcmp.eq.s32.totalorder %v374, 4294967288
      %vm383 = vcmp.eq.s32.totalorder %v375, 4294967288
      %v384 = vsel %vm376, 1.0, 0.0
      %v385 = vsel %vm377, 1.0, 0.0
      %v386 = vsel %vm378, 1.0, 0.0
      %v387 = vsel %vm379, 1.0, 0.0
      %v388 = vsel %vm380, 1.0, 0.0
      %v389 = vsel %vm381, 1.0, 0.0
      %v390 = vsel %vm382, 1.0, 0.0
      %v391 = vsel %vm383, 1.0, 0.0
      %v392 = vpack.c.bf16 %v385, %v384
      %v393 = vpack.c.bf16 %v387, %v386
      %v394 = vpack.c.bf16 %v389, %v388
      %v395 = vpack.c.bf16 %v391, %v390
      %vm396 = vcmp.eq.s32.totalorder %v368, 8
      %vm397 = vcmp.eq.s32.totalorder %v369, 8
      %vm398 = vcmp.eq.s32.totalorder %v370, 8
      %vm399 = vcmp.eq.s32.totalorder %v371, 8
      %vm400 = vcmp.eq.s32.totalorder %v372, 8
      %vm401 = vcmp.eq.s32.totalorder %v373, 8
      %vm402 = vcmp.eq.s32.totalorder %v374, 8
      %vm403 = vcmp.eq.s32.totalorder %v375, 8
      %v404 = vsel %vm396, 1.0, 0.0
      %v405 = vsel %vm397, 1.0, 0.0
      %v406 = vsel %vm398, 1.0, 0.0
      %v407 = vsel %vm399, 1.0, 0.0
      %v408 = vsel %vm400, 1.0, 0.0
      %v409 = vsel %vm401, 1.0, 0.0
      %v410 = vsel %vm402, 1.0, 0.0
      %v411 = vsel %vm403, 1.0, 0.0
      %v412 = vpack.c.bf16 %v405, %v404
      %v413 = vpack.c.bf16 %v407, %v406
      %v414 = vpack.c.bf16 %v409, %v408
      %v415 = vpack.c.bf16 %v411, %v410
      %vm416 = vcmp.eq.s32.totalorder %v368, 4294967295
      %vm417 = vcmp.eq.s32.totalorder %v369, 4294967295
      %vm418 = vcmp.eq.s32.totalorder %v370, 4294967295
      %vm419 = vcmp.eq.s32.totalorder %v371, 4294967295
      %vm420 = vcmp.eq.s32.totalorder %v372, 4294967295
      %vm421 = vcmp.eq.s32.totalorder %v373, 4294967295
      %vm422 = vcmp.eq.s32.totalorder %v374, 4294967295
      %vm423 = vcmp.eq.s32.totalorder %v375, 4294967295
      %v424 = vadd.s32 %v360, 4294967295
      %v425 = vadd.s32 %v361, 4294967295
      %v426 = vadd.s32 %v362, 4294967295
      %v427 = vadd.s32 %v363, 4294967295
      %v428 = vadd.s32 %v364, 4294967295
      %v429 = vadd.s32 %v365, 4294967295
      %v430 = vadd.s32 %v366, 4294967295
      %v431 = vadd.s32 %v367, 4294967295
      %vm432 = vcmp.ge.s32.totalorder %v424, 0
      %vm433 = vcmp.ge.s32.totalorder %v425, 0
      %vm434 = vcmp.ge.s32.totalorder %v426, 0
      %vm435 = vcmp.ge.s32.totalorder %v427, 0
      %vm436 = vcmp.ge.s32.totalorder %v428, 0
      %vm437 = vcmp.ge.s32.totalorder %v429, 0
      %vm438 = vcmp.ge.s32.totalorder %v430, 0
      %vm439 = vcmp.ge.s32.totalorder %v431, 0
      %vm440 = vmand %vm416, %vm432
      %vm441 = vmand %vm417, %vm433
      %vm442 = vmand %vm418, %vm434
      %vm443 = vmand %vm419, %vm435
      %vm444 = vmand %vm420, %vm436
      %vm445 = vmand %vm421, %vm437
      %vm446 = vmand %vm422, %vm438
      %vm447 = vmand %vm423, %vm439
      %vm448 = vcmp.lt.s32.totalorder %v424, 8
      %vm449 = vcmp.lt.s32.totalorder %v425, 8
      %vm450 = vcmp.lt.s32.totalorder %v426, 8
      %vm451 = vcmp.lt.s32.totalorder %v427, 8
      %vm452 = vcmp.lt.s32.totalorder %v428, 8
      %vm453 = vcmp.lt.s32.totalorder %v429, 8
      %vm454 = vcmp.lt.s32.totalorder %v430, 8
      %vm455 = vcmp.lt.s32.totalorder %v431, 8
      %vm456 = vmand %vm440, %vm448
      %vm457 = vmand %vm441, %vm449
      %vm458 = vmand %vm442, %vm450
      %vm459 = vmand %vm443, %vm451
      %vm460 = vmand %vm444, %vm452
      %vm461 = vmand %vm445, %vm453
      %vm462 = vmand %vm446, %vm454
      %vm463 = vmand %vm447, %vm455
      %v464 = vsel %vm456, 1.0, 0.0
      %v465 = vsel %vm457, 1.0, 0.0
      %v466 = vsel %vm458, 1.0, 0.0
      %v467 = vsel %vm459, 1.0, 0.0
      %v468 = vsel %vm460, 1.0, 0.0
      %v469 = vsel %vm461, 1.0, 0.0
      %v470 = vsel %vm462, 1.0, 0.0
      %v471 = vsel %vm463, 1.0, 0.0
      %v472 = vpack.c.bf16 %v465, %v464
      %v473 = vpack.c.bf16 %v467, %v466
      %v474 = vpack.c.bf16 %v469, %v468
      %v475 = vpack.c.bf16 %v471, %v470
      %vm476 = vcmp.eq.s32.totalorder %v368, 1
      %vm477 = vcmp.eq.s32.totalorder %v369, 1
      %vm478 = vcmp.eq.s32.totalorder %v370, 1
      %vm479 = vcmp.eq.s32.totalorder %v371, 1
      %vm480 = vcmp.eq.s32.totalorder %v372, 1
      %vm481 = vcmp.eq.s32.totalorder %v373, 1
      %vm482 = vcmp.eq.s32.totalorder %v374, 1
      %vm483 = vcmp.eq.s32.totalorder %v375, 1
      %v484 = vadd.s32 %v360, 1
      %v485 = vadd.s32 %v361, 1
      %v486 = vadd.s32 %v362, 1
      %v487 = vadd.s32 %v363, 1
      %v488 = vadd.s32 %v364, 1
      %v489 = vadd.s32 %v365, 1
      %v490 = vadd.s32 %v366, 1
      %v491 = vadd.s32 %v367, 1
      %vm492 = vcmp.ge.s32.totalorder %v484, 0
      %vm493 = vcmp.ge.s32.totalorder %v485, 0
      %vm494 = vcmp.ge.s32.totalorder %v486, 0
      %vm495 = vcmp.ge.s32.totalorder %v487, 0
      %vm496 = vcmp.ge.s32.totalorder %v488, 0
      %vm497 = vcmp.ge.s32.totalorder %v489, 0
      %vm498 = vcmp.ge.s32.totalorder %v490, 0
      %vm499 = vcmp.ge.s32.totalorder %v491, 0
      %vm500 = vmand %vm476, %vm492
      %vm501 = vmand %vm477, %vm493
      %vm502 = vmand %vm478, %vm494
      %vm503 = vmand %vm479, %vm495
      %vm504 = vmand %vm480, %vm496
      %vm505 = vmand %vm481, %vm497
      %vm506 = vmand %vm482, %vm498
      %vm507 = vmand %vm483, %vm499
      %vm508 = vcmp.lt.s32.totalorder %v484, 8
      %vm509 = vcmp.lt.s32.totalorder %v485, 8
      %vm510 = vcmp.lt.s32.totalorder %v486, 8
      %vm511 = vcmp.lt.s32.totalorder %v487, 8
      %vm512 = vcmp.lt.s32.totalorder %v488, 8
      %vm513 = vcmp.lt.s32.totalorder %v489, 8
      %vm514 = vcmp.lt.s32.totalorder %v490, 8
      %vm515 = vcmp.lt.s32.totalorder %v491, 8
      %vm516 = vmand %vm500, %vm508
      %vm517 = vmand %vm501, %vm509
      %vm518 = vmand %vm502, %vm510
      %vm519 = vmand %vm503, %vm511
      %vm520 = vmand %vm504, %vm512
      %vm521 = vmand %vm505, %vm513
      %vm522 = vmand %vm506, %vm514
      %vm523 = vmand %vm507, %vm515
      %v524 = vsel %vm516, 1.0, 0.0
      %v525 = vsel %vm517, 1.0, 0.0
      %v526 = vsel %vm518, 1.0, 0.0
      %v527 = vsel %vm519, 1.0, 0.0
      %v528 = vsel %vm520, 1.0, 0.0
      %v529 = vsel %vm521, 1.0, 0.0
      %v530 = vsel %vm522, 1.0, 0.0
      %v531 = vsel %vm523, 1.0, 0.0
      %v532 = vpack.c.bf16 %v525, %v524
      %v533 = vpack.c.bf16 %v527, %v526
      %v534 = vpack.c.bf16 %v529, %v528
      %v535 = vpack.c.bf16 %v531, %v530
      %vm536 = vcmask 523264
      %v538 = vsel %vm536, %v392, 0
      %v541 = vsel %vm536, %v393, 0
      %v544 = vsel %vm536, %v394, 0
      %v547 = vsel %vm536, %v395, 0
      %549 = vmatprep.subr.bf16.mxu0 0
      %550 = vmatpush1.bf16.msra.mxu0 %v345
      %551 = vmatprep.subr.bf16.mxu0 0
      %552 = vmatpush1.bf16.msra.mxu0 %v346
      %553 = vmatprep.subr.bf16.mxu0 0
      %554 = vmatpush1.bf16.msra.mxu0 %v347
      %555 = vmatprep.subr.bf16.mxu0 0
      %556 = vmatpush1.bf16.msra.mxu0 %v348
      %557 = vmatprep.subr.bf16.mxu0 0
      %558 = vmatpush1.bf16.msra.mxu0 0
      %559 = vmatprep.subr.bf16.mxu0 0
      %560 = vmatpush1.bf16.msra.mxu0 0
      %561 = vmatprep.subr.bf16.mxu0 0
      %562 = vmatpush1.bf16.msra.mxu0 0
      %563 = vmatprep.subr.bf16.mxu0 0
      %564 = vmatpush1.bf16.msra.mxu0 0
      %565 = vmatprep.subr.bf16.mxu0 0
      %566 = vmatpush1.bf16.msra.mxu0 0
      %567 = vmatprep.subr.bf16.mxu0 0
      %568 = vmatpush1.bf16.msra.mxu0 0
      %569 = vmatprep.subr.bf16.mxu0 0
      %570 = vmatpush1.bf16.msra.mxu0 0
      %571 = vmatprep.subr.bf16.mxu0 0
      %572 = vmatpush1.bf16.msra.mxu0 0
      %573 = vmatprep.subr.bf16.mxu0 0
      %574 = vmatpush1.bf16.msra.mxu0 0
      %575 = vmatprep.subr.bf16.mxu0 0
      %576 = vmatpush1.bf16.msra.mxu0 0
      %577 = vmatprep.subr.bf16.mxu0 0
      %578 = vmatpush1.bf16.msra.mxu0 0
      %579 = vmatprep.subr.bf16.mxu0 0
      %580 = vmatpush1.bf16.msra.mxu0 0
      %581 = vmatprep.mubr.bf16.mxu0 0
      %582 = vmatmul.mubr.bf16.gmra.mrb[0].mxu0 %v538
      %v583 = vpop.f32.mrb[0].mxu0
      %v584 = vadd.f32 0.0, %v583
      %v585 = vpop.f32.mrb[0].mxu0
      %v586 = vpop.f32.mrb[0].mxu0
      %v587 = vadd.f32 0.0, %v586
      %v588 = vpop.f32.mrb[0].mxu0
      %589 = vmatprep.mubr.bf16.mxu0 0
      %590 = vmatmul.mubr.bf16.gmra.mrb[0].mxu0 %v541
      %v591 = vpop.f32.mrb[0].mxu0
      %v592 = vadd.f32 0.0, %v591
      %v593 = vpop.f32.mrb[0].mxu0
      %v594 = vpop.f32.mrb[0].mxu0
      %v595 = vadd.f32 0.0, %v594
      %v596 = vpop.f32.mrb[0].mxu0
      %597 = vmatprep.mubr.bf16.mxu0 0
      %598 = vmatmul.mubr.bf16.gmra.mrb[0].mxu0 %v544
      %v599 = vpop.f32.mrb[0].mxu0
      %v600 = vadd.f32 0.0, %v599
      %v601 = vpop.f32.mrb[0].mxu0
      %v602 = vpop.f32.mrb[0].mxu0
      %v603 = vadd.f32 0.0, %v602
      %v604 = vpop.f32.mrb[0].mxu0
      %605 = vmatprep.mubr.bf16.mxu0 0
      %606 = vmatmul.mubr.bf16.gmra.mrb[0].mxu0 %v547
      %v607 = vpop.f32.mrb[0].mxu0
      %v608 = vadd.f32 0.0, %v607
      %v609 = vpop.f32.mrb[0].mxu0
      %v610 = vpop.f32.mrb[0].mxu0
      %v611 = vadd.f32 0.0, %v610
      %v612 = vpop.f32.mrb[0].mxu0
      %613 = vdwg.mxu0
      %v614 = vpack.c.bf16 %v587, %v584
      %v615 = vpack.c.bf16 %v595, %v592
      %v616 = vpack.c.bf16 %v603, %v600
      %v617 = vpack.c.bf16 %v611, %v608
      %v619 = vsel %vm536, %v412, 0
      %v622 = vsel %vm536, %v413, 0
      %v625 = vsel %vm536, %v414, 0
      %v628 = vsel %vm536, %v415, 0
      %630 = vmatprep.subr.bf16.mxu0 0
      %631 = vmatpush1.bf16.msra.mxu0 %v345
      %632 = vmatprep.subr.bf16.mxu0 0
      %633 = vmatpush1.bf16.msra.mxu0 %v346
      %634 = vmatprep.subr.bf16.mxu0 0
      %635 = vmatpush1.bf16.msra.mxu0 %v347
      %636 = vmatprep.subr.bf16.mxu0 0
      %637 = vmatpush1.bf16.msra.mxu0 %v348
      %638 = vmatprep.subr.bf16.mxu0 0
      %639 = vmatpush1.bf16.msra.mxu0 0
      %640 = vmatprep.subr.bf16.mxu0 0
      %641 = vmatpush1.bf16.msra.mxu0 0
      %642 = vmatprep.subr.bf16.mxu0 0
      %643 = vmatpush1.bf16.msra.mxu0 0
      %644 = vmatprep.subr.bf16.mxu0 0
      %645 = vmatpush1.bf16.msra.mxu0 0
      %646 = vmatprep.subr.bf16.mxu0 0
      %647 = vmatpush1.bf16.msra.mxu0 0
      %648 = vmatprep.subr.bf16.mxu0 0
      %649 = vmatpush1.bf16.msra.mxu0 0
      %650 = vmatprep.subr.bf16.mxu0 0
      %651 = vmatpush1.bf16.msra.mxu0 0
      %652 = vmatprep.subr.bf16.mxu0 0
      %653 = vmatpush1.bf16.msra.mxu0 0
      %654 = vmatprep.subr.bf16.mxu0 0
      %655 = vmatpush1.bf16.msra.mxu0 0
      %656 = vmatprep.subr.bf16.mxu0 0
      %657 = vmatpush1.bf16.msra.mxu0 0
      %658 = vmatprep.subr.bf16.mxu0 0
      %659 = vmatpush1.bf16.msra.mxu0 0
      %660 = vmatprep.subr.bf16.mxu0 0
      %661 = vmatpush1.bf16.msra.mxu0 0
      %662 = vmatprep.mubr.bf16.mxu0 0
      %663 = vmatmul.mubr.bf16.gmra.mrb[0].mxu0 %v619
      %v664 = vpop.f32.mrb[0].mxu0
      %v665 = vadd.f32 0.0, %v664
      %v666 = vpop.f32.mrb[0].mxu0
      %v667 = vpop.f32.mrb[0].mxu0
      %v668 = vadd.f32 0.0, %v667
      %v669 = vpop.f32.mrb[0].mxu0
      %670 = vmatprep.mubr.bf16.mxu0 0
      %671 = vmatmul.mubr.bf16.gmra.mrb[0].mxu0 %v622
      %v672 = vpop.f32.mrb[0].mxu0
      %v673 = vadd.f32 0.0, %v672
      %v674 = vpop.f32.mrb[0].mxu0
      %v675 = vpop.f32.mrb[0].mxu0
      %v676 = vadd.f32 0.0, %v675
      %v677 = vpop.f32.mrb[0].mxu0
      %678 = vmatprep.mubr.bf16.mxu0 0
      %679 = vmatmul.mubr.bf16.gmra.mrb[0].mxu0 %v625
      %v680 = vpop.f32.mrb[0].mxu0
      %v681 = vadd.f32 0.0, %v680
      %v682 = vpop.f32.mrb[0].mxu0
      %v683 = vpop.f32.mrb[0].mxu0
      %v684 = vadd.f32 0.0, %v683
      %v685 = vpop.f32.mrb[0].mxu0
      %686 = vmatprep.mubr.bf16.mxu0 0
      %687 = vmatmul.mubr.bf16.gmra.mrb[0].mxu0 %v628
      %v688 = vpop.f32.mrb[0].mxu0
      %v689 = vadd.f32 0.0, %v688
      %v690 = vpop.f32.mrb[0].mxu0
      %v691 = vpop.f32.mrb[0].mxu0
      %v692 = vadd.f32 0.0, %v691
      %v693 = vpop.f32.mrb[0].mxu0
      %694 = vdwg.mxu0
      %v695 = vpack.c.bf16 %v668, %v665
      %v696 = vpack.c.bf16 %v676, %v673
      %v697 = vpack.c.bf16 %v684, %v681
      %v698 = vpack.c.bf16 %v692, %v689
      %v699 = vld [vmem:[%s2] sm:$0x1]
      %v700 = vld [vmem:[%s1] sm:$0xf]
      %v701 = vld [vmem:[%s1 + $0x4] sm:$0xf]
      %v702 = vld [vmem:[%s1 + $0x8] sm:$0xf]
      %v703 = vld [vmem:[%s1 + $0xc] sm:$0xf]
      %v704 = vld [vmem:[%s1 + $0x10] sm:$0xf]
      %v705 = vld [vmem:[%s1 + $0x14] sm:$0xf]
      %v706 = vld [vmem:[%s1 + $0x18] sm:$0xf]
      %v707 = vld [vmem:[%s1 + $0x1c] sm:$0xf]
      %v708 = vld [vmem:[%s1 + $0x20] sm:$0xf]
      %v709 = vld [vmem:[%s1 + $0x24] sm:$0xf]
      %v710 = vld [vmem:[%s1 + $0x28] sm:$0xf]
      %v711 = vld [vmem:[%s1 + $0x2c] sm:$0xf]
      %v712 = vld [vmem:[%s1 + $0x30] sm:$0xf]
      %v713 = vld [vmem:[%s1 + $0x34] sm:$0xf]
      %v714 = vld [vmem:[%s1 + $0x38] sm:$0xf]
      %v715 = vld [vmem:[%s1 + $0x3c] sm:$0xf]
      %v732 = vunpack.c.l.b16 %v700
      %v733 = vunpack.c.l.b16 %v701
      %v734 = vunpack.c.l.b16 %v702
      %v735 = vunpack.c.l.b16 %v703
      %v736 = vunpack.c.l.b16 %v704
      %v737 = vunpack.c.l.b16 %v705
      %v738 = vunpack.c.l.b16 %v706
      %v739 = vunpack.c.l.b16 %v707
      %v740 = vunpack.c.l.b16 %v708
      %v741 = vunpack.c.l.b16 %v709
      %v742 = vunpack.c.l.b16 %v710
      %v743 = vunpack.c.l.b16 %v711
      %v744 = vunpack.c.l.b16 %v712
      %v745 = vunpack.c.l.b16 %v713
      %v746 = vunpack.c.l.b16 %v714
      %v747 = vunpack.c.l.b16 %v715
      %v748 = vpack.c.b16 %v733, %v732
      %v749 = vpack.c.b16 %v735, %v734
      %v750 = vpack.c.b16 %v737, %v736
      %v751 = vpack.c.b16 %v739, %v738
      %v752 = vpack.c.b16 %v741, %v740
      %v753 = vpack.c.b16 %v743, %v742
      %v754 = vpack.c.b16 %v745, %v744
      %v755 = vpack.c.b16 %v747, %v746
      %764 = vmatprep.subr.bf16.mxu0 0
      %765 = vmatpush1.bf16.msra.mxu0 %v748
      %766 = vmatprep.subr.bf16.mxu0 0
      %767 = vmatpush1.bf16.msra.mxu0 %v749
      %768 = vmatprep.subr.bf16.mxu0 0
      %769 = vmatpush1.bf16.msra.mxu0 %v750
      %770 = vmatprep.subr.bf16.mxu0 0
      %771 = vmatpush1.bf16.msra.mxu0 %v751
      %772 = vmatprep.subr.bf16.mxu0 0
      %773 = vmatpush1.bf16.msra.mxu0 %v752
      %774 = vmatprep.subr.bf16.mxu0 0
      %775 = vmatpush1.bf16.msra.mxu0 %v753
      %776 = vmatprep.subr.bf16.mxu0 0
      %777 = vmatpush1.bf16.msra.mxu0 %v754
      %778 = vmatprep.subr.bf16.mxu0 0
      %779 = vmatpush1.bf16.msra.mxu0 %v755
      %780 = vmatprep.subr.bf16.mxu0 0
      %781 = vmatpush1.bf16.msra.mxu0 0
      %782 = vmatprep.subr.bf16.mxu0 0
      %783 = vmatpush1.bf16.msra.mxu0 0
      %784 = vmatprep.subr.bf16.mxu0 0
      %785 = vmatpush1.bf16.msra.mxu0 0
      %786 = vmatprep.subr.bf16.mxu0 0
      %787 = vmatpush1.bf16.msra.mxu0 0
      %788 = vmatprep.subr.bf16.mxu0 0
      %789 = vmatpush1.bf16.msra.mxu0 0
      %790 = vmatprep.subr.bf16.mxu0 0
      %791 = vmatpush1.bf16.msra.mxu0 0
      %792 = vmatprep.subr.bf16.mxu0 0
      %793 = vmatpush1.bf16.msra.mxu0 0
      %794 = vmatprep.subr.bf16.mxu0 0
      %795 = vmatpush1.bf16.msra.mxu0 0
      %796 = vmatprep.mubr.bf16.mxu0 0
      %797 = vmatmul.mubr.bf16.gmra.mrb[0].mxu0 %v614
      %v798 = vpop.f32.mrb[0].mxu0
      %v799 = vadd.f32 0.0, %v798
      %v800 = vpop.f32.mrb[0].mxu0
      %v801 = vpop.f32.mrb[0].mxu0
      %v802 = vadd.f32 0.0, %v801
      %v803 = vpop.f32.mrb[0].mxu0
      %804 = vmatprep.mubr.bf16.mxu0 0
      %805 = vmatmul.mubr.bf16.gmra.mrb[0].mxu0 %v615
      %v806 = vpop.f32.mrb[0].mxu0
      %v807 = vadd.f32 0.0, %v806
      %v808 = vpop.f32.mrb[0].mxu0
      %v809 = vpop.f32.mrb[0].mxu0
      %v810 = vadd.f32 0.0, %v809
      %v811 = vpop.f32.mrb[0].mxu0
      %812 = vmatprep.mubr.bf16.mxu0 0
      %813 = vmatmul.mubr.bf16.gmra.mrb[0].mxu0 %v616
      %v814 = vpop.f32.mrb[0].mxu0
      %v815 = vadd.f32 0.0, %v814
      %v816 = vpop.f32.mrb[0].mxu0
      %v817 = vpop.f32.mrb[0].mxu0
      %v818 = vadd.f32 0.0, %v817
      %v819 = vpop.f32.mrb[0].mxu0
      %820 = vmatprep.mubr.bf16.mxu0 0
      %821 = vmatmul.mubr.bf16.gmra.mrb[0].mxu0 %v617
      %v822 = vpop.f32.mrb[0].mxu0
      %v823 = vadd.f32 0.0, %v822
      %v824 = vpop.f32.mrb[0].mxu0
      %v825 = vpop.f32.mrb[0].mxu0
      %v826 = vadd.f32 0.0, %v825
      %v827 = vpop.f32.mrb[0].mxu0
      %828 = vdwg.mxu0
      %v830 = vlaneseq
      %v831 = vshrl.u32 %v830, 7
      %v832 = vsub.s32 0, %v831
      %v833 = vrot.slane %v699, %v832
      %v835 = vadd.f32 %v833, %v799
      %v836 = vadd.f32 %v833, %v802
      %v837 = vadd.f32 %v833, %v807
      %v838 = vadd.f32 %v833, %v810
      %v839 = vadd.f32 %v833, %v815
      %v840 = vadd.f32 %v833, %v818
      %v841 = vadd.f32 %v833, %v823
      %v842 = vadd.f32 %v833, %v826
      %s843 = scalar_lea.vmem %s1, 64
      %v844 = vld [vmem:[%s843] sm:$0xf]
      %v845 = vld [vmem:[%s843 + $0x4] sm:$0xf]
      %v846 = vld [vmem:[%s843 + $0x8] sm:$0xf]
      %v847 = vld [vmem:[%s843 + $0xc] sm:$0xf]
      %v848 = vld [vmem:[%s843 + $0x10] sm:$0xf]
      %v849 = vld [vmem:[%s843 + $0x14] sm:$0xf]
      %v850 = vld [vmem:[%s843 + $0x18] sm:$0xf]
      %v851 = vld [vmem:[%s843 + $0x1c] sm:$0xf]
      %v852 = vld [vmem:[%s843 + $0x20] sm:$0xf]
      %v853 = vld [vmem:[%s843 + $0x24] sm:$0xf]
      %v854 = vld [vmem:[%s843 + $0x28] sm:$0xf]
      %v855 = vld [vmem:[%s843 + $0x2c] sm:$0xf]
      %v856 = vld [vmem:[%s843 + $0x30] sm:$0xf]
      %v857 = vld [vmem:[%s843 + $0x34] sm:$0xf]
      %v858 = vld [vmem:[%s843 + $0x38] sm:$0xf]
      %v859 = vld [vmem:[%s843 + $0x3c] sm:$0xf]
      %v876 = vunpack.c.l.b16 %v844
      %v877 = vunpack.c.l.b16 %v845
      %v878 = vunpack.c.l.b16 %v846
      %v879 = vunpack.c.l.b16 %v847
      %v880 = vunpack.c.l.b16 %v848
      %v881 = vunpack.c.l.b16 %v849
      %v882 = vunpack.c.l.b16 %v850
      %v883 = vunpack.c.l.b16 %v851
      %v884 = vunpack.c.l.b16 %v852
      %v885 = vunpack.c.l.b16 %v853
      %v886 = vunpack.c.l.b16 %v854
      %v887 = vunpack.c.l.b16 %v855
      %v888 = vunpack.c.l.b16 %v856
      %v889 = vunpack.c.l.b16 %v857
      %v890 = vunpack.c.l.b16 %v858
      %v891 = vunpack.c.l.b16 %v859
      %v892 = vpack.c.b16 %v877, %v876
      %v893 = vpack.c.b16 %v879, %v878
      %v894 = vpack.c.b16 %v881, %v880
      %v895 = vpack.c.b16 %v883, %v882
      %v896 = vpack.c.b16 %v885, %v884
      %v897 = vpack.c.b16 %v887, %v886
      %v898 = vpack.c.b16 %v889, %v888
      %v899 = vpack.c.b16 %v891, %v890
      %908 = vmatprep.subr.bf16.mxu0 0
      %909 = vmatpush1.bf16.msra.mxu0 %v892
      %910 = vmatprep.subr.bf16.mxu0 0
      %911 = vmatpush1.bf16.msra.mxu0 %v893
      %912 = vmatprep.subr.bf16.mxu0 0
      %913 = vmatpush1.bf16.msra.mxu0 %v894
      %914 = vmatprep.subr.bf16.mxu0 0
      %915 = vmatpush1.bf16.msra.mxu0 %v895
      %916 = vmatprep.subr.bf16.mxu0 0
      %917 = vmatpush1.bf16.msra.mxu0 %v896
      %918 = vmatprep.subr.bf16.mxu0 0
      %919 = vmatpush1.bf16.msra.mxu0 %v897
      %920 = vmatprep.subr.bf16.mxu0 0
      %921 = vmatpush1.bf16.msra.mxu0 %v898
      %922 = vmatprep.subr.bf16.mxu0 0
      %923 = vmatpush1.bf16.msra.mxu0 %v899
      %924 = vmatprep.subr.bf16.mxu0 0
      %925 = vmatpush1.bf16.msra.mxu0 0
      %926 = vmatprep.subr.bf16.mxu0 0
      %927 = vmatpush1.bf16.msra.mxu0 0
      %928 = vmatprep.subr.bf16.mxu0 0
      %929 = vmatpush1.bf16.msra.mxu0 0
      %930 = vmatprep.subr.bf16.mxu0 0
      %931 = vmatpush1.bf16.msra.mxu0 0
      %932 = vmatprep.subr.bf16.mxu0 0
      %933 = vmatpush1.bf16.msra.mxu0 0
      %934 = vmatprep.subr.bf16.mxu0 0
      %935 = vmatpush1.bf16.msra.mxu0 0
      %936 = vmatprep.subr.bf16.mxu0 0
      %937 = vmatpush1.bf16.msra.mxu0 0
      %938 = vmatprep.subr.bf16.mxu0 0
      %939 = vmatpush1.bf16.msra.mxu0 0
      %940 = vmatprep.mubr.bf16.mxu0 0
      %941 = vmatmul.mubr.bf16.gmra.mrb[0].mxu0 %v345
      %v942 = vpop.f32.mrb[0].mxu0
      %v943 = vadd.f32 0.0, %v942
      %v944 = vpop.f32.mrb[0].mxu0
      %v945 = vpop.f32.mrb[0].mxu0
      %v946 = vadd.f32 0.0, %v945
      %v947 = vpop.f32.mrb[0].mxu0
      %948 = vmatprep.mubr.bf16.mxu0 0
      %949 = vmatmul.mubr.bf16.gmra.mrb[0].mxu0 %v346
      %v950 = vpop.f32.mrb[0].mxu0
      %v951 = vadd.f32 0.0, %v950
      %v952 = vpop.f32.mrb[0].mxu0
      %v953 = vpop.f32.mrb[0].mxu0
      %v954 = vadd.f32 0.0, %v953
      %v955 = vpop.f32.mrb[0].mxu0
      %956 = vmatprep.mubr.bf16.mxu0 0
      %957 = vmatmul.mubr.bf16.gmra.mrb[0].mxu0 %v347
      %v958 = vpop.f32.mrb[0].mxu0
      %v959 = vadd.f32 0.0, %v958
      %v960 = vpop.f32.mrb[0].mxu0
      %v961 = vpop.f32.mrb[0].mxu0
      %v962 = vadd.f32 0.0, %v961
      %v963 = vpop.f32.mrb[0].mxu0
      %964 = vmatprep.mubr.bf16.mxu0 0
      %965 = vmatmul.mubr.bf16.gmra.mrb[0].mxu0 %v348
      %v966 = vpop.f32.mrb[0].mxu0
      %v967 = vadd.f32 0.0, %v966
      %v968 = vpop.f32.mrb[0].mxu0
      %v969 = vpop.f32.mrb[0].mxu0
      %v970 = vadd.f32 0.0, %v969
      %v971 = vpop.f32.mrb[0].mxu0
      %972 = vdwg.mxu0
      %v973 = vadd.f32 %v835, %v943
      %v974 = vadd.f32 %v836, %v946
      %v975 = vadd.f32 %v837, %v951
      %v976 = vadd.f32 %v838, %v954
      %v977 = vadd.f32 %v839, %v959
      %v978 = vadd.f32 %v840, %v962
      %v979 = vadd.f32 %v841, %v967
      %v980 = vadd.f32 %v842, %v970
      %s981 = scalar_lea.vmem %s1, 128
      %v982 = vld [vmem:[%s981] sm:$0xf]
      %v983 = vld [vmem:[%s981 + $0x4] sm:$0xf]
      %v984 = vld [vmem:[%s981 + $0x8] sm:$0xf]
      %v985 = vld [vmem:[%s981 + $0xc] sm:$0xf]
      %v986 = vld [vmem:[%s981 + $0x10] sm:$0xf]
      %v987 = vld [vmem:[%s981 + $0x14] sm:$0xf]
      %v988 = vld [vmem:[%s981 + $0x18] sm:$0xf]
      %v989 = vld [vmem:[%s981 + $0x1c] sm:$0xf]
      %v990 = vld [vmem:[%s981 + $0x20] sm:$0xf]
      %v991 = vld [vmem:[%s981 + $0x24] sm:$0xf]
      %v992 = vld [vmem:[%s981 + $0x28] sm:$0xf]
      %v993 = vld [vmem:[%s981 + $0x2c] sm:$0xf]
      %v994 = vld [vmem:[%s981 + $0x30] sm:$0xf]
      %v995 = vld [vmem:[%s981 + $0x34] sm:$0xf]
      %v996 = vld [vmem:[%s981 + $0x38] sm:$0xf]
      %v997 = vld [vmem:[%s981 + $0x3c] sm:$0xf]
      %v1014 = vunpack.c.l.b16 %v982
      %v1015 = vunpack.c.l.b16 %v983
      %v1016 = vunpack.c.l.b16 %v984
      %v1017 = vunpack.c.l.b16 %v985
      %v1018 = vunpack.c.l.b16 %v986
      %v1019 = vunpack.c.l.b16 %v987
      %v1020 = vunpack.c.l.b16 %v988
      %v1021 = vunpack.c.l.b16 %v989
      %v1022 = vunpack.c.l.b16 %v990
      %v1023 = vunpack.c.l.b16 %v991
      %v1024 = vunpack.c.l.b16 %v992
      %v1025 = vunpack.c.l.b16 %v993
      %v1026 = vunpack.c.l.b16 %v994
      %v1027 = vunpack.c.l.b16 %v995
      %v1028 = vunpack.c.l.b16 %v996
      %v1029 = vunpack.c.l.b16 %v997
      %v1030 = vpack.c.b16 %v1015, %v1014
      %v1031 = vpack.c.b16 %v1017, %v1016
      %v1032 = vpack.c.b16 %v1019, %v1018
      %v1033 = vpack.c.b16 %v1021, %v1020
      %v1034 = vpack.c.b16 %v1023, %v1022
      %v1035 = vpack.c.b16 %v1025, %v1024
      %v1036 = vpack.c.b16 %v1027, %v1026
      %v1037 = vpack.c.b16 %v1029, %v1028
      %1046 = vmatprep.subr.bf16.mxu0 0
      %1047 = vmatpush1.bf16.msra.mxu0 %v1030
      %1048 = vmatprep.subr.bf16.mxu0 0
      %1049 = vmatpush1.bf16.msra.mxu0 %v1031
      %1050 = vmatprep.subr.bf16.mxu0 0
      %1051 = vmatpush1.bf16.msra.mxu0 %v1032
      %1052 = vmatprep.subr.bf16.mxu0 0
      %1053 = vmatpush1.bf16.msra.mxu0 %v1033
      %1054 = vmatprep.subr.bf16.mxu0 0
      %1055 = vmatpush1.bf16.msra.mxu0 %v1034
      %1056 = vmatprep.subr.bf16.mxu0 0
      %1057 = vmatpush1.bf16.msra.mxu0 %v1035
      %1058 = vmatprep.subr.bf16.mxu0 0
      %1059 = vmatpush1.bf16.msra.mxu0 %v1036
      %1060 = vmatprep.subr.bf16.mxu0 0
      %1061 = vmatpush1.bf16.msra.mxu0 %v1037
      %1062 = vmatprep.subr.bf16.mxu0 0
      %1063 = vmatpush1.bf16.msra.mxu0 0
      %1064 = vmatprep.subr.bf16.mxu0 0
      %1065 = vmatpush1.bf16.msra.mxu0 0
      %1066 = vmatprep.subr.bf16.mxu0 0
      %1067 = vmatpush1.bf16.msra.mxu0 0
      %1068 = vmatprep.subr.bf16.mxu0 0
      %1069 = vmatpush1.bf16.msra.mxu0 0
      %1070 = vmatprep.subr.bf16.mxu0 0
      %1071 = vmatpush1.bf16.msra.mxu0 0
      %1072 = vmatprep.subr.bf16.mxu0 0
      %1073 = vmatpush1.bf16.msra.mxu0 0
      %1074 = vmatprep.subr.bf16.mxu0 0
      %1075 = vmatpush1.bf16.msra.mxu0 0
      %1076 = vmatprep.subr.bf16.mxu0 0
      %1077 = vmatpush1.bf16.msra.mxu0 0
      %1078 = vmatprep.mubr.bf16.mxu0 0
      %1079 = vmatmul.mubr.bf16.gmra.mrb[0].mxu0 %v695
      %v1080 = vpop.f32.mrb[0].mxu0
      %v1081 = vadd.f32 0.0, %v1080
      %v1082 = vpop.f32.mrb[0].mxu0
      %v1083 = vpop.f32.mrb[0].mxu0
      %v1084 = vadd.f32 0.0, %v1083
      %v1085 = vpop.f32.mrb[0].mxu0
      %1086 = vmatprep.mubr.bf16.mxu0 0
      %1087 = vmatmul.mubr.bf16.gmra.mrb[0].mxu0 %v696
      %v1088 = vpop.f32.mrb[0].mxu0
      %v1089 = vadd.f32 0.0, %v1088
      %v1090 = vpop.f32.mrb[0].mxu0
      %v1091 = vpop.f32.mrb[0].mxu0
      %v1092 = vadd.f32 0.0, %v1091
      %v1093 = vpop.f32.mrb[0].mxu0
      %1094 = vmatprep.mubr.bf16.mxu0 0
      %1095 = vmatmul.mubr.bf16.gmra.mrb[0].mxu0 %v697
      %v1096 = vpop.f32.mrb[0].mxu0
      %v1097 = vadd.f32 0.0, %v1096
      %v1098 = vpop.f32.mrb[0].mxu0
      %v1099 = vpop.f32.mrb[0].mxu0
      %v1100 = vadd.f32 0.0, %v1099
      %v1101 = vpop.f32.mrb[0].mxu0
      %1102 = vmatprep.mubr.bf16.mxu0 0
      %1103 = vmatmul.mubr.bf16.gmra.mrb[0].mxu0 %v698
      %v1104 = vpop.f32.mrb[0].mxu0
      %v1105 = vadd.f32 0.0, %v1104
      %v1106 = vpop.f32.mrb[0].mxu0
      %v1107 = vpop.f32.mrb[0].mxu0
      %v1108 = vadd.f32 0.0, %v1107
      %v1109 = vpop.f32.mrb[0].mxu0
      %1110 = vdwg.mxu0
      %v1111 = vadd.f32 %v973, %v1081
      %v1112 = vadd.f32 %v974, %v1084
      %v1113 = vadd.f32 %v975, %v1089
      %v1114 = vadd.f32 %v976, %v1092
      %v1115 = vadd.f32 %v977, %v1097
      %v1116 = vadd.f32 %v978, %v1100
      %v1117 = vadd.f32 %v979, %v1105
      %v1118 = vadd.f32 %v980, %v1108
      %v1119 = vmax.f32 %v1111, 0.0
      %v1120 = vmax.f32 %v1112, 0.0
      %v1121 = vmax.f32 %v1113, 0.0
      %v1122 = vmax.f32 %v1114, 0.0
      %v1123 = vmax.f32 %v1115, 0.0
      %v1124 = vmax.f32 %v1116, 0.0
      %v1125 = vmax.f32 %v1117, 0.0
      %v1126 = vmax.f32 %v1118, 0.0
      %v1127 = vpack.c.bf16 %v1120, %v1119
      %v1128 = vpack.c.bf16 %v1122, %v1121
      %v1129 = vpack.c.bf16 %v1124, %v1123
      %v1130 = vpack.c.bf16 %v1126, %v1125
      %v1132 = vsel %vm536, %v472, 0
      %v1135 = vsel %vm536, %v473, 0
      %v1138 = vsel %vm536, %v474, 0
      %v1141 = vsel %vm536, %v475, 0
      %1143 = vmatprep.subr.bf16.mxu0 0
      %1144 = vmatpush1.bf16.msra.mxu0 %v1127
      %1145 = vmatprep.subr.bf16.mxu0 0
      %1146 = vmatpush1.bf16.msra.mxu0 %v1128
      %1147 = vmatprep.subr.bf16.mxu0 0
      %1148 = vmatpush1.bf16.msra.mxu0 %v1129
      %1149 = vmatprep.subr.bf16.mxu0 0
      %1150 = vmatpush1.bf16.msra.mxu0 %v1130
      %1151 = vmatprep.subr.bf16.mxu0 0
      %1152 = vmatpush1.bf16.msra.mxu0 0
      %1153 = vmatprep.subr.bf16.mxu0 0
      %1154 = vmatpush1.bf16.msra.mxu0 0
      %1155 = vmatprep.subr.bf16.mxu0 0
      %1156 = vmatpush1.bf16.msra.mxu0 0
      %1157 = vmatprep.subr.bf16.mxu0 0
      %1158 = vmatpush1.bf16.msra.mxu0 0
      %1159 = vmatprep.subr.bf16.mxu0 0
      %1160 = vmatpush1.bf16.msra.mxu0 0
      %1161 = vmatprep.subr.bf16.mxu0 0
      %1162 = vmatpush1.bf16.msra.mxu0 0
      %1163 = vmatprep.subr.bf16.mxu0 0
      %1164 = vmatpush1.bf16.msra.mxu0 0
      %1165 = vmatprep.subr.bf16.mxu0 0
      %1166 = vmatpush1.bf16.msra.mxu0 0
      %1167 = vmatprep.subr.bf16.mxu0 0
      %1168 = vmatpush1.bf16.msra.mxu0 0
      %1169 = vmatprep.subr.bf16.mxu0 0
      %1170 = vmatpush1.bf16.msra.mxu0 0
      %1171 = vmatprep.subr.bf16.mxu0 0
      %1172 = vmatpush1.bf16.msra.mxu0 0
      %1173 = vmatprep.subr.bf16.mxu0 0
      %1174 = vmatpush1.bf16.msra.mxu0 0
      %1175 = vmatprep.mubr.bf16.mxu0 0
      %1176 = vmatmul.mubr.bf16.gmra.mrb[0].mxu0 %v1132
      %v1177 = vpop.f32.mrb[0].mxu0
      %v1178 = vadd.f32 0.0, %v1177
      %v1179 = vpop.f32.mrb[0].mxu0
      %v1180 = vpop.f32.mrb[0].mxu0
      %v1181 = vadd.f32 0.0, %v1180
      %v1182 = vpop.f32.mrb[0].mxu0
      %1183 = vmatprep.mubr.bf16.mxu0 0
      %1184 = vmatmul.mubr.bf16.gmra.mrb[0].mxu0 %v1135
      %v1185 = vpop.f32.mrb[0].mxu0
      %v1186 = vadd.f32 0.0, %v1185
      %v1187 = vpop.f32.mrb[0].mxu0
      %v1188 = vpop.f32.mrb[0].mxu0
      %v1189 = vadd.f32 0.0, %v1188
      %v1190 = vpop.f32.mrb[0].mxu0
      %1191 = vmatprep.mubr.bf16.mxu0 0
      %1192 = vmatmul.mubr.bf16.gmra.mrb[0].mxu0 %v1138
      %v1193 = vpop.f32.mrb[0].mxu0
      %v1194 = vadd.f32 0.0, %v1193
      %v1195 = vpop.f32.mrb[0].mxu0
      %v1196 = vpop.f32.mrb[0].mxu0
      %v1197 = vadd.f32 0.0, %v1196
      %v1198 = vpop.f32.mrb[0].mxu0
      %1199 = vmatprep.mubr.bf16.mxu0 0
      %1200 = vmatmul.mubr.bf16.gmra.mrb[0].mxu0 %v1141
      %v1201 = vpop.f32.mrb[0].mxu0
      %v1202 = vadd.f32 0.0, %v1201
      %v1203 = vpop.f32.mrb[0].mxu0
      %v1204 = vpop.f32.mrb[0].mxu0
      %v1205 = vadd.f32 0.0, %v1204
      %v1206 = vpop.f32.mrb[0].mxu0
      %1207 = vdwg.mxu0
      %v1208 = vpack.c.bf16 %v1181, %v1178
      %v1209 = vpack.c.bf16 %v1189, %v1186
      %v1210 = vpack.c.bf16 %v1197, %v1194
      %v1211 = vpack.c.bf16 %v1205, %v1202
      %v1213 = vsel %vm536, %v532, 0
      %v1216 = vsel %vm536, %v533, 0
      %v1219 = vsel %vm536, %v534, 0
      %v1222 = vsel %vm536, %v535, 0
      %1224 = vmatprep.subr.bf16.mxu0 0
      %1225 = vmatpush1.bf16.msra.mxu0 %v1127
      %1226 = vmatprep.subr.bf16.mxu0 0
      %1227 = vmatpush1.bf16.msra.mxu0 %v1128
      %1228 = vmatprep.subr.bf16.mxu0 0
      %1229 = vmatpush1.bf16.msra.mxu0 %v1129
      %1230 = vmatprep.subr.bf16.mxu0 0
      %1231 = vmatpush1.bf16.msra.mxu0 %v1130
      %1232 = vmatprep.subr.bf16.mxu0 0
      %1233 = vmatpush1.bf16.msra.mxu0 0
      %1234 = vmatprep.subr.bf16.mxu0 0
      %1235 = vmatpush1.bf16.msra.mxu0 0
      %1236 = vmatprep.subr.bf16.mxu0 0
      %1237 = vmatpush1.bf16.msra.mxu0 0
      %1238 = vmatprep.subr.bf16.mxu0 0
      %1239 = vmatpush1.bf16.msra.mxu0 0
      %1240 = vmatprep.subr.bf16.mxu0 0
      %1241 = vmatpush1.bf16.msra.mxu0 0
      %1242 = vmatprep.subr.bf16.mxu0 0
      %1243 = vmatpush1.bf16.msra.mxu0 0
      %1244 = vmatprep.subr.bf16.mxu0 0
      %1245 = vmatpush1.bf16.msra.mxu0 0
      %1246 = vmatprep.subr.bf16.mxu0 0
      %1247 = vmatpush1.bf16.msra.mxu0 0
      %1248 = vmatprep.subr.bf16.mxu0 0
      %1249 = vmatpush1.bf16.msra.mxu0 0
      %1250 = vmatprep.subr.bf16.mxu0 0
      %1251 = vmatpush1.bf16.msra.mxu0 0
      %1252 = vmatprep.subr.bf16.mxu0 0
      %1253 = vmatpush1.bf16.msra.mxu0 0
      %1254 = vmatprep.subr.bf16.mxu0 0
      %1255 = vmatpush1.bf16.msra.mxu0 0
      %1256 = vmatprep.mubr.bf16.mxu0 0
      %1257 = vmatmul.mubr.bf16.gmra.mrb[0].mxu0 %v1213
      %v1258 = vpop.f32.mrb[0].mxu0
      %v1259 = vadd.f32 0.0, %v1258
      %v1260 = vpop.f32.mrb[0].mxu0
      %v1261 = vpop.f32.mrb[0].mxu0
      %v1262 = vadd.f32 0.0, %v1261
      %v1263 = vpop.f32.mrb[0].mxu0
      %1264 = vmatprep.mubr.bf16.mxu0 0
      %1265 = vmatmul.mubr.bf16.gmra.mrb[0].mxu0 %v1216
      %v1266 = vpop.f32.mrb[0].mxu0
      %v1267 = vadd.f32 0.0, %v1266
      %v1268 = vpop.f32.mrb[0].mxu0
      %v1269 = vpop.f32.mrb[0].mxu0
      %v1270 = vadd.f32 0.0, %v1269
      %v1271 = vpop.f32.mrb[0].mxu0
      %1272 = vmatprep.mubr.bf16.mxu0 0
      %1273 = vmatmul.mubr.bf16.gmra.mrb[0].mxu0 %v1219
      %v1274 = vpop.f32.mrb[0].mxu0
      %v1275 = vadd.f32 0.0, %v1274
      %v1276 = vpop.f32.mrb[0].mxu0
      %v1277 = vpop.f32.mrb[0].mxu0
      %v1278 = vadd.f32 0.0, %v1277
      %v1279 = vpop.f32.mrb[0].mxu0
      %1280 = vmatprep.mubr.bf16.mxu0 0
      %1281 = vmatmul.mubr.bf16.gmra.mrb[0].mxu0 %v1222
      %v1282 = vpop.f32.mrb[0].mxu0
      %v1283 = vadd.f32 0.0, %v1282
      %v1284 = vpop.f32.mrb[0].mxu0
      %v1285 = vpop.f32.mrb[0].mxu0
      %v1286 = vadd.f32 0.0, %v1285
      %v1287 = vpop.f32.mrb[0].mxu0
      %1288 = vdwg.mxu0
      %v1289 = vpack.c.bf16 %v1262, %v1259
      %v1290 = vpack.c.bf16 %v1270, %v1267
      %v1291 = vpack.c.bf16 %v1278, %v1275
      %v1292 = vpack.c.bf16 %v1286, %v1283
      %v1293 = vld [vmem:[%s4] sm:$0x1]
      %v1294 = vld [vmem:[%s3] sm:$0xf]
      %v1295 = vld [vmem:[%s3 + $0x4] sm:$0xf]
      %v1296 = vld [vmem:[%s3 + $0x8] sm:$0xf]
      %v1297 = vld [vmem:[%s3 + $0xc] sm:$0xf]
      %v1298 = vld [vmem:[%s3 + $0x10] sm:$0xf]
      %v1299 = vld [vmem:[%s3 + $0x14] sm:$0xf]
      %v1300 = vld [vmem:[%s3 + $0x18] sm:$0xf]
      %v1301 = vld [vmem:[%s3 + $0x1c] sm:$0xf]
      %v1302 = vld [vmem:[%s3 + $0x20] sm:$0xf]
      %v1303 = vld [vmem:[%s3 + $0x24] sm:$0xf]
      %v1304 = vld [vmem:[%s3 + $0x28] sm:$0xf]
      %v1305 = vld [vmem:[%s3 + $0x2c] sm:$0xf]
      %v1306 = vld [vmem:[%s3 + $0x30] sm:$0xf]
      %v1307 = vld [vmem:[%s3 + $0x34] sm:$0xf]
      %v1308 = vld [vmem:[%s3 + $0x38] sm:$0xf]
      %v1309 = vld [vmem:[%s3 + $0x3c] sm:$0xf]
      %v1326 = vunpack.c.l.b16 %v1294
      %v1327 = vunpack.c.l.b16 %v1295
      %v1328 = vunpack.c.l.b16 %v1296
      %v1329 = vunpack.c.l.b16 %v1297
      %v1330 = vunpack.c.l.b16 %v1298
      %v1331 = vunpack.c.l.b16 %v1299
      %v1332 = vunpack.c.l.b16 %v1300
      %v1333 = vunpack.c.l.b16 %v1301
      %v1334 = vunpack.c.l.b16 %v1302
      %v1335 = vunpack.c.l.b16 %v1303
      %v1336 = vunpack.c.l.b16 %v1304
      %v1337 = vunpack.c.l.b16 %v1305
      %v1338 = vunpack.c.l.b16 %v1306
      %v1339 = vunpack.c.l.b16 %v1307
      %v1340 = vunpack.c.l.b16 %v1308
      %v1341 = vunpack.c.l.b16 %v1309
      %v1342 = vpack.c.b16 %v1327, %v1326
      %v1343 = vpack.c.b16 %v1329, %v1328
      %v1344 = vpack.c.b16 %v1331, %v1330
      %v1345 = vpack.c.b16 %v1333, %v1332
      %v1346 = vpack.c.b16 %v1335, %v1334
      %v1347 = vpack.c.b16 %v1337, %v1336
      %v1348 = vpack.c.b16 %v1339, %v1338
      %v1349 = vpack.c.b16 %v1341, %v1340
      %1358 = vmatprep.subr.bf16.mxu0 0
      %1359 = vmatpush1.bf16.msra.mxu0 %v1342
      %1360 = vmatprep.subr.bf16.mxu0 0
      %1361 = vmatpush1.bf16.msra.mxu0 %v1343
      %1362 = vmatprep.subr.bf16.mxu0 0
      %1363 = vmatpush1.bf16.msra.mxu0 %v1344
      %1364 = vmatprep.subr.bf16.mxu0 0
      %1365 = vmatpush1.bf16.msra.mxu0 %v1345
      %1366 = vmatprep.subr.bf16.mxu0 0
      %1367 = vmatpush1.bf16.msra.mxu0 %v1346
      %1368 = vmatprep.subr.bf16.mxu0 0
      %1369 = vmatpush1.bf16.msra.mxu0 %v1347
      %1370 = vmatprep.subr.bf16.mxu0 0
      %1371 = vmatpush1.bf16.msra.mxu0 %v1348
      %1372 = vmatprep.subr.bf16.mxu0 0
      %1373 = vmatpush1.bf16.msra.mxu0 %v1349
      %1374 = vmatprep.subr.bf16.mxu0 0
      %1375 = vmatpush1.bf16.msra.mxu0 0
      %1376 = vmatprep.subr.bf16.mxu0 0
      %1377 = vmatpush1.bf16.msra.mxu0 0
      %1378 = vmatprep.subr.bf16.mxu0 0
      %1379 = vmatpush1.bf16.msra.mxu0 0
      %1380 = vmatprep.subr.bf16.mxu0 0
      %1381 = vmatpush1.bf16.msra.mxu0 0
      %1382 = vmatprep.subr.bf16.mxu0 0
      %1383 = vmatpush1.bf16.msra.mxu0 0
      %1384 = vmatprep.subr.bf16.mxu0 0
      %1385 = vmatpush1.bf16.msra.mxu0 0
      %1386 = vmatprep.subr.bf16.mxu0 0
      %1387 = vmatpush1.bf16.msra.mxu0 0
      %1388 = vmatprep.subr.bf16.mxu0 0
      %1389 = vmatpush1.bf16.msra.mxu0 0
      %1390 = vmatprep.mubr.bf16.mxu0 0
      %1391 = vmatmul.mubr.bf16.gmra.mrb[0].mxu0 %v1208
      %v1392 = vpop.f32.mrb[0].mxu0
      %v1393 = vadd.f32 0.0, %v1392
      %v1394 = vpop.f32.mrb[0].mxu0
      %v1395 = vpop.f32.mrb[0].mxu0
      %v1396 = vadd.f32 0.0, %v1395
      %v1397 = vpop.f32.mrb[0].mxu0
      %1398 = vmatprep.mubr.bf16.mxu0 0
      %1399 = vmatmul.mubr.bf16.gmra.mrb[0].mxu0 %v1209
      %v1400 = vpop.f32.mrb[0].mxu0
      %v1401 = vadd.f32 0.0, %v1400
      %v1402 = vpop.f32.mrb[0].mxu0
      %v1403 = vpop.f32.mrb[0].mxu0
      %v1404 = vadd.f32 0.0, %v1403
      %v1405 = vpop.f32.mrb[0].mxu0
      %1406 = vmatprep.mubr.bf16.mxu0 0
      %1407 = vmatmul.mubr.bf16.gmra.mrb[0].mxu0 %v1210
      %v1408 = vpop.f32.mrb[0].mxu0
      %v1409 = vadd.f32 0.0, %v1408
      %v1410 = vpop.f32.mrb[0].mxu0
      %v1411 = vpop.f32.mrb[0].mxu0
      %v1412 = vadd.f32 0.0, %v1411
      %v1413 = vpop.f32.mrb[0].mxu0
      %1414 = vmatprep.mubr.bf16.mxu0 0
      %1415 = vmatmul.mubr.bf16.gmra.mrb[0].mxu0 %v1211
      %v1416 = vpop.f32.mrb[0].mxu0
      %v1417 = vadd.f32 0.0, %v1416
      %v1418 = vpop.f32.mrb[0].mxu0
      %v1419 = vpop.f32.mrb[0].mxu0
      %v1420 = vadd.f32 0.0, %v1419
      %v1421 = vpop.f32.mrb[0].mxu0
      %1422 = vdwg.mxu0
      %v1424 = vlaneseq
      %v1425 = vshrl.u32 %v1424, 7
      %v1426 = vsub.s32 0, %v1425
      %v1427 = vrot.slane %v1293, %v1426
      %v1429 = vadd.f32 %v1427, %v1393
      %v1430 = vadd.f32 %v1427, %v1396
      %v1431 = vadd.f32 %v1427, %v1401
      %v1432 = vadd.f32 %v1427, %v1404
      %v1433 = vadd.f32 %v1427, %v1409
      %v1434 = vadd.f32 %v1427, %v1412
      %v1435 = vadd.f32 %v1427, %v1417
      %v1436 = vadd.f32 %v1427, %v1420
      %s1437 = scalar_lea.vmem %s3, 64
      %v1438 = vld [vmem:[%s1437] sm:$0xf]
      %v1439 = vld [vmem:[%s1437 + $0x4] sm:$0xf]
      %v1440 = vld [vmem:[%s1437 + $0x8] sm:$0xf]
      %v1441 = vld [vmem:[%s1437 + $0xc] sm:$0xf]
      %v1442 = vld [vmem:[%s1437 + $0x10] sm:$0xf]
      %v1443 = vld [vmem:[%s1437 + $0x14] sm:$0xf]
      %v1444 = vld [vmem:[%s1437 + $0x18] sm:$0xf]
      %v1445 = vld [vmem:[%s1437 + $0x1c] sm:$0xf]
      %v1446 = vld [vmem:[%s1437 + $0x20] sm:$0xf]
      %v1447 = vld [vmem:[%s1437 + $0x24] sm:$0xf]
      %v1448 = vld [vmem:[%s1437 + $0x28] sm:$0xf]
      %v1449 = vld [vmem:[%s1437 + $0x2c] sm:$0xf]
      %v1450 = vld [vmem:[%s1437 + $0x30] sm:$0xf]
      %v1451 = vld [vmem:[%s1437 + $0x34] sm:$0xf]
      %v1452 = vld [vmem:[%s1437 + $0x38] sm:$0xf]
      %v1453 = vld [vmem:[%s1437 + $0x3c] sm:$0xf]
      %v1470 = vunpack.c.l.b16 %v1438
      %v1471 = vunpack.c.l.b16 %v1439
      %v1472 = vunpack.c.l.b16 %v1440
      %v1473 = vunpack.c.l.b16 %v1441
      %v1474 = vunpack.c.l.b16 %v1442
      %v1475 = vunpack.c.l.b16 %v1443
      %v1476 = vunpack.c.l.b16 %v1444
      %v1477 = vunpack.c.l.b16 %v1445
      %v1478 = vunpack.c.l.b16 %v1446
      %v1479 = vunpack.c.l.b16 %v1447
      %v1480 = vunpack.c.l.b16 %v1448
      %v1481 = vunpack.c.l.b16 %v1449
      %v1482 = vunpack.c.l.b16 %v1450
      %v1483 = vunpack.c.l.b16 %v1451
      %v1484 = vunpack.c.l.b16 %v1452
      %v1485 = vunpack.c.l.b16 %v1453
      %v1486 = vpack.c.b16 %v1471, %v1470
      %v1487 = vpack.c.b16 %v1473, %v1472
      %v1488 = vpack.c.b16 %v1475, %v1474
      %v1489 = vpack.c.b16 %v1477, %v1476
      %v1490 = vpack.c.b16 %v1479, %v1478
      %v1491 = vpack.c.b16 %v1481, %v1480
      %v1492 = vpack.c.b16 %v1483, %v1482
      %v1493 = vpack.c.b16 %v1485, %v1484
      %1502 = vmatprep.subr.bf16.mxu0 0
      %1503 = vmatpush1.bf16.msra.mxu0 %v1486
      %1504 = vmatprep.subr.bf16.mxu0 0
      %1505 = vmatpush1.bf16.msra.mxu0 %v1487
      %1506 = vmatprep.subr.bf16.mxu0 0
      %1507 = vmatpush1.bf16.msra.mxu0 %v1488
      %1508 = vmatprep.subr.bf16.mxu0 0
      %1509 = vmatpush1.bf16.msra.mxu0 %v1489
      %1510 = vmatprep.subr.bf16.mxu0 0
      %1511 = vmatpush1.bf16.msra.mxu0 %v1490
      %1512 = vmatprep.subr.bf16.mxu0 0
      %1513 = vmatpush1.bf16.msra.mxu0 %v1491
      %1514 = vmatprep.subr.bf16.mxu0 0
      %1515 = vmatpush1.bf16.msra.mxu0 %v1492
      %1516 = vmatprep.subr.bf16.mxu0 0
      %1517 = vmatpush1.bf16.msra.mxu0 %v1493
      %1518 = vmatprep.subr.bf16.mxu0 0
      %1519 = vmatpush1.bf16.msra.mxu0 0
      %1520 = vmatprep.subr.bf16.mxu0 0
      %1521 = vmatpush1.bf16.msra.mxu0 0
      %1522 = vmatprep.subr.bf16.mxu0 0
      %1523 = vmatpush1.bf16.msra.mxu0 0
      %1524 = vmatprep.subr.bf16.mxu0 0
      %1525 = vmatpush1.bf16.msra.mxu0 0
      %1526 = vmatprep.subr.bf16.mxu0 0
      %1527 = vmatpush1.bf16.msra.mxu0 0
      %1528 = vmatprep.subr.bf16.mxu0 0
      %1529 = vmatpush1.bf16.msra.mxu0 0
      %1530 = vmatprep.subr.bf16.mxu0 0
      %1531 = vmatpush1.bf16.msra.mxu0 0
      %1532 = vmatprep.subr.bf16.mxu0 0
      %1533 = vmatpush1.bf16.msra.mxu0 0
      %1534 = vmatprep.mubr.bf16.mxu0 0
      %1535 = vmatmul.mubr.bf16.gmra.mrb[0].mxu0 %v1127
      %v1536 = vpop.f32.mrb[0].mxu0
      %v1537 = vadd.f32 0.0, %v1536
      %v1538 = vpop.f32.mrb[0].mxu0
      %v1539 = vpop.f32.mrb[0].mxu0
      %v1540 = vadd.f32 0.0, %v1539
      %v1541 = vpop.f32.mrb[0].mxu0
      %1542 = vmatprep.mubr.bf16.mxu0 0
      %1543 = vmatmul.mubr.bf16.gmra.mrb[0].mxu0 %v1128
      %v1544 = vpop.f32.mrb[0].mxu0
      %v1545 = vadd.f32 0.0, %v1544
      %v1546 = vpop.f32.mrb[0].mxu0
      %v1547 = vpop.f32.mrb[0].mxu0
      %v1548 = vadd.f32 0.0, %v1547
      %v1549 = vpop.f32.mrb[0].mxu0
      %1550 = vmatprep.mubr.bf16.mxu0 0
      %1551 = vmatmul.mubr.bf16.gmra.mrb[0].mxu0 %v1129
      %v1552 = vpop.f32.mrb[0].mxu0
      %v1553 = vadd.f32 0.0, %v1552
      %v1554 = vpop.f32.mrb[0].mxu0
      %v1555 = vpop.f32.mrb[0].mxu0
      %v1556 = vadd.f32 0.0, %v1555
      %v1557 = vpop.f32.mrb[0].mxu0
      %1558 = vmatprep.mubr.bf16.mxu0 0
      %1559 = vmatmul.mubr.bf16.gmra.mrb[0].mxu0 %v1130
      %v1560 = vpop.f32.mrb[0].mxu0
      %v1561 = vadd.f32 0.0, %v1560
      %v1562 = vpop.f32.mrb[0].mxu0
      %v1563 = vpop.f32.mrb[0].mxu0
      %v1564 = vadd.f32 0.0, %v1563
      %v1565 = vpop.f32.mrb[0].mxu0
      %1566 = vdwg.mxu0
      %v1567 = vadd.f32 %v1429, %v1537
      %v1568 = vadd.f32 %v1430, %v1540
      %v1569 = vadd.f32 %v1431, %v1545
      %v1570 = vadd.f32 %v1432, %v1548
      %v1571 = vadd.f32 %v1433, %v1553
      %v1572 = vadd.f32 %v1434, %v1556
      %v1573 = vadd.f32 %v1435, %v1561
      %v1574 = vadd.f32 %v1436, %v1564
      %s1575 = scalar_lea.vmem %s3, 128
      %v1576 = vld [vmem:[%s1575] sm:$0xf]
      %v1577 = vld [vmem:[%s1575 + $0x4] sm:$0xf]
      %v1578 = vld [vmem:[%s1575 + $0x8] sm:$0xf]
      %v1579 = vld [vmem:[%s1575 + $0xc] sm:$0xf]
      %v1580 = vld [vmem:[%s1575 + $0x10] sm:$0xf]
      %v1581 = vld [vmem:[%s1575 + $0x14] sm:$0xf]
      %v1582 = vld [vmem:[%s1575 + $0x18] sm:$0xf]
      %v1583 = vld [vmem:[%s1575 + $0x1c] sm:$0xf]
      %v1584 = vld [vmem:[%s1575 + $0x20] sm:$0xf]
      %v1585 = vld [vmem:[%s1575 + $0x24] sm:$0xf]
      %v1586 = vld [vmem:[%s1575 + $0x28] sm:$0xf]
      %v1587 = vld [vmem:[%s1575 + $0x2c] sm:$0xf]
      %v1588 = vld [vmem:[%s1575 + $0x30] sm:$0xf]
      %v1589 = vld [vmem:[%s1575 + $0x34] sm:$0xf]
      %v1590 = vld [vmem:[%s1575 + $0x38] sm:$0xf]
      %v1591 = vld [vmem:[%s1575 + $0x3c] sm:$0xf]
      %v1608 = vunpack.c.l.b16 %v1576
      %v1609 = vunpack.c.l.b16 %v1577
      %v1610 = vunpack.c.l.b16 %v1578
      %v1611 = vunpack.c.l.b16 %v1579
      %v1612 = vunpack.c.l.b16 %v1580
      %v1613 = vunpack.c.l.b16 %v1581
      %v1614 = vunpack.c.l.b16 %v1582
      %v1615 = vunpack.c.l.b16 %v1583
      %v1616 = vunpack.c.l.b16 %v1584
      %v1617 = vunpack.c.l.b16 %v1585
      %v1618 = vunpack.c.l.b16 %v1586
      %v1619 = vunpack.c.l.b16 %v1587
      %v1620 = vunpack.c.l.b16 %v1588
      %v1621 = vunpack.c.l.b16 %v1589
      %v1622 = vunpack.c.l.b16 %v1590
      %v1623 = vunpack.c.l.b16 %v1591
      %v1624 = vpack.c.b16 %v1609, %v1608
      %v1625 = vpack.c.b16 %v1611, %v1610
      %v1626 = vpack.c.b16 %v1613, %v1612
      %v1627 = vpack.c.b16 %v1615, %v1614
      %v1628 = vpack.c.b16 %v1617, %v1616
      %v1629 = vpack.c.b16 %v1619, %v1618
      %v1630 = vpack.c.b16 %v1621, %v1620
      %v1631 = vpack.c.b16 %v1623, %v1622
      %1640 = vmatprep.subr.bf16.mxu0 0
      %1641 = vmatpush1.bf16.msra.mxu0 %v1624
      %1642 = vmatprep.subr.bf16.mxu0 0
      %1643 = vmatpush1.bf16.msra.mxu0 %v1625
      %1644 = vmatprep.subr.bf16.mxu0 0
      %1645 = vmatpush1.bf16.msra.mxu0 %v1626
      %1646 = vmatprep.subr.bf16.mxu0 0
      %1647 = vmatpush1.bf16.msra.mxu0 %v1627
      %1648 = vmatprep.subr.bf16.mxu0 0
      %1649 = vmatpush1.bf16.msra.mxu0 %v1628
      %1650 = vmatprep.subr.bf16.mxu0 0
      %1651 = vmatpush1.bf16.msra.mxu0 %v1629
      %1652 = vmatprep.subr.bf16.mxu0 0
      %1653 = vmatpush1.bf16.msra.mxu0 %v1630
      %1654 = vmatprep.subr.bf16.mxu0 0
      %1655 = vmatpush1.bf16.msra.mxu0 %v1631
      %1656 = vmatprep.subr.bf16.mxu0 0
      %1657 = vmatpush1.bf16.msra.mxu0 0
      %1658 = vmatprep.subr.bf16.mxu0 0
      %1659 = vmatpush1.bf16.msra.mxu0 0
      %1660 = vmatprep.subr.bf16.mxu0 0
      %1661 = vmatpush1.bf16.msra.mxu0 0
      %1662 = vmatprep.subr.bf16.mxu0 0
      %1663 = vmatpush1.bf16.msra.mxu0 0
      %1664 = vmatprep.subr.bf16.mxu0 0
      %1665 = vmatpush1.bf16.msra.mxu0 0
      %1666 = vmatprep.subr.bf16.mxu0 0
      %1667 = vmatpush1.bf16.msra.mxu0 0
      %1668 = vmatprep.subr.bf16.mxu0 0
      %1669 = vmatpush1.bf16.msra.mxu0 0
      %1670 = vmatprep.subr.bf16.mxu0 0
      %1671 = vmatpush1.bf16.msra.mxu0 0
      %1672 = vmatprep.mubr.bf16.mxu0 0
      %1673 = vmatmul.mubr.bf16.gmra.mrb[0].mxu0 %v1289
      %v1674 = vpop.f32.mrb[0].mxu0
      %v1675 = vadd.f32 0.0, %v1674
      %v1676 = vpop.f32.mrb[0].mxu0
      %v1677 = vpop.f32.mrb[0].mxu0
      %v1678 = vadd.f32 0.0, %v1677
      %v1679 = vpop.f32.mrb[0].mxu0
      %1680 = vmatprep.mubr.bf16.mxu0 0
      %1681 = vmatmul.mubr.bf16.gmra.mrb[0].mxu0 %v1290
      %v1682 = vpop.f32.mrb[0].mxu0
      %v1683 = vadd.f32 0.0, %v1682
      %v1684 = vpop.f32.mrb[0].mxu0
      %v1685 = vpop.f32.mrb[0].mxu0
      %v1686 = vadd.f32 0.0, %v1685
      %v1687 = vpop.f32.mrb[0].mxu0
      %1688 = vmatprep.mubr.bf16.mxu0 0
      %1689 = vmatmul.mubr.bf16.gmra.mrb[0].mxu0 %v1291
      %v1690 = vpop.f32.mrb[0].mxu0
      %v1691 = vadd.f32 0.0, %v1690
      %v1692 = vpop.f32.mrb[0].mxu0
      %v1693 = vpop.f32.mrb[0].mxu0
      %v1694 = vadd.f32 0.0, %v1693
      %v1695 = vpop.f32.mrb[0].mxu0
      %1696 = vmatprep.mubr.bf16.mxu0 0
      %1697 = vmatmul.mubr.bf16.gmra.mrb[0].mxu0 %v1292
      %v1698 = vpop.f32.mrb[0].mxu0
      %v1699 = vadd.f32 0.0, %v1698
      %v1700 = vpop.f32.mrb[0].mxu0
      %v1701 = vpop.f32.mrb[0].mxu0
      %v1702 = vadd.f32 0.0, %v1701
      %v1703 = vpop.f32.mrb[0].mxu0
      %1704 = vdwg.mxu0
      %v1705 = vadd.f32 %v1567, %v1675
      %v1706 = vadd.f32 %v1568, %v1678
      %v1707 = vadd.f32 %v1569, %v1683
      %v1708 = vadd.f32 %v1570, %v1686
      %v1709 = vadd.f32 %v1571, %v1691
      %v1710 = vadd.f32 %v1572, %v1694
      %v1711 = vadd.f32 %v1573, %v1699
      %v1712 = vadd.f32 %v1574, %v1702
      %v1713 = vmax.f32 %v1705, 0.0
      %v1714 = vmax.f32 %v1706, 0.0
      %v1715 = vmax.f32 %v1707, 0.0
      %v1716 = vmax.f32 %v1708, 0.0
      %v1717 = vmax.f32 %v1709, 0.0
      %v1718 = vmax.f32 %v1710, 0.0
      %v1719 = vmax.f32 %v1711, 0.0
      %v1720 = vmax.f32 %v1712, 0.0
      %v1721 = vpack.c.bf16 %v1714, %v1713
      %v1722 = vpack.c.bf16 %v1716, %v1715
      %v1723 = vpack.c.bf16 %v1718, %v1717
      %v1724 = vpack.c.bf16 %v1720, %v1719
      %1725 = vmatprep.subr.bf16.mxu0 0
      %1726 = vmatpush1.bf16.msra.mxu0 %v1721
      %1727 = vmatprep.subr.bf16.mxu0 0
      %1728 = vmatpush1.bf16.msra.mxu0 %v1722
      %1729 = vmatprep.subr.bf16.mxu0 0
      %1730 = vmatpush1.bf16.msra.mxu0 %v1723
      %1731 = vmatprep.subr.bf16.mxu0 0
      %1732 = vmatpush1.bf16.msra.mxu0 %v1724
      %1733 = vmatprep.subr.bf16.mxu0 0
      %1734 = vmatpush1.bf16.msra.mxu0 0
      %1735 = vmatprep.subr.bf16.mxu0 0
      %1736 = vmatpush1.bf16.msra.mxu0 0
      %1737 = vmatprep.subr.bf16.mxu0 0
      %1738 = vmatpush1.bf16.msra.mxu0 0
      %1739 = vmatprep.subr.bf16.mxu0 0
      %1740 = vmatpush1.bf16.msra.mxu0 0
      %1741 = vmatprep.subr.bf16.mxu0 0
      %1742 = vmatpush1.bf16.msra.mxu0 0
      %1743 = vmatprep.subr.bf16.mxu0 0
      %1744 = vmatpush1.bf16.msra.mxu0 0
      %1745 = vmatprep.subr.bf16.mxu0 0
      %1746 = vmatpush1.bf16.msra.mxu0 0
      %1747 = vmatprep.subr.bf16.mxu0 0
      %1748 = vmatpush1.bf16.msra.mxu0 0
      %1749 = vmatprep.subr.bf16.mxu0 0
      %1750 = vmatpush1.bf16.msra.mxu0 0
      %1751 = vmatprep.subr.bf16.mxu0 0
      %1752 = vmatpush1.bf16.msra.mxu0 0
      %1753 = vmatprep.subr.bf16.mxu0 0
      %1754 = vmatpush1.bf16.msra.mxu0 0
      %1755 = vmatprep.subr.bf16.mxu0 0
      %1756 = vmatpush1.bf16.msra.mxu0 0
      %1757 = vmatprep.mubr.bf16.mxu0 0
      %1758 = vmatmul.mubr.bf16.gmra.mrb[0].mxu0 %v538
      %v1759 = vpop.f32.mrb[0].mxu0
      %v1760 = vadd.f32 0.0, %v1759
      %v1761 = vpop.f32.mrb[0].mxu0
      %v1762 = vpop.f32.mrb[0].mxu0
      %v1763 = vadd.f32 0.0, %v1762
      %v1764 = vpop.f32.mrb[0].mxu0
      %1765 = vmatprep.mubr.bf16.mxu0 0
      %1766 = vmatmul.mubr.bf16.gmra.mrb[0].mxu0 %v541
      %v1767 = vpop.f32.mrb[0].mxu0
      %v1768 = vadd.f32 0.0, %v1767
      %v1769 = vpop.f32.mrb[0].mxu0
      %v1770 = vpop.f32.mrb[0].mxu0
      %v1771 = vadd.f32 0.0, %v1770
      %v1772 = vpop.f32.mrb[0].mxu0
      %1773 = vmatprep.mubr.bf16.mxu0 0
      %1774 = vmatmul.mubr.bf16.gmra.mrb[0].mxu0 %v544
      %v1775 = vpop.f32.mrb[0].mxu0
      %v1776 = vadd.f32 0.0, %v1775
      %v1777 = vpop.f32.mrb[0].mxu0
      %v1778 = vpop.f32.mrb[0].mxu0
      %v1779 = vadd.f32 0.0, %v1778
      %v1780 = vpop.f32.mrb[0].mxu0
      %1781 = vmatprep.mubr.bf16.mxu0 0
      %1782 = vmatmul.mubr.bf16.gmra.mrb[0].mxu0 %v547
      %v1783 = vpop.f32.mrb[0].mxu0
      %v1784 = vadd.f32 0.0, %v1783
      %v1785 = vpop.f32.mrb[0].mxu0
      %v1786 = vpop.f32.mrb[0].mxu0
      %v1787 = vadd.f32 0.0, %v1786
      %v1788 = vpop.f32.mrb[0].mxu0
      %1789 = vdwg.mxu0
      %v1790 = vpack.c.bf16 %v1763, %v1760
      %v1791 = vpack.c.bf16 %v1771, %v1768
      %v1792 = vpack.c.bf16 %v1779, %v1776
      %v1793 = vpack.c.bf16 %v1787, %v1784
      %1794 = vmatprep.subr.bf16.mxu0 0
      %1795 = vmatpush1.bf16.msra.mxu0 %v1721
      %1796 = vmatprep.subr.bf16.mxu0 0
      %1797 = vmatpush1.bf16.msra.mxu0 %v1722
      %1798 = vmatprep.subr.bf16.mxu0 0
      %1799 = vmatpush1.bf16.msra.mxu0 %v1723
      %1800 = vmatprep.subr.bf16.mxu0 0
      %1801 = vmatpush1.bf16.msra.mxu0 %v1724
      %1802 = vmatprep.subr.bf16.mxu0 0
      %1803 = vmatpush1.bf16.msra.mxu0 0
      %1804 = vmatprep.subr.bf16.mxu0 0
      %1805 = vmatpush1.bf16.msra.mxu0 0
      %1806 = vmatprep.subr.bf16.mxu0 0
      %1807 = vmatpush1.bf16.msra.mxu0 0
      %1808 = vmatprep.subr.bf16.mxu0 0
      %1809 = vmatpush1.bf16.msra.mxu0 0
      %1810 = vmatprep.subr.bf16.mxu0 0
      %1811 = vmatpush1.bf16.msra.mxu0 0
      %1812 = vmatprep.subr.bf16.mxu0 0
      %1813 = vmatpush1.bf16.msra.mxu0 0
      %1814 = vmatprep.subr.bf16.mxu0 0
      %1815 = vmatpush1.bf16.msra.mxu0 0
      %1816 = vmatprep.subr.bf16.mxu0 0
      %1817 = vmatpush1.bf16.msra.mxu0 0
      %1818 = vmatprep.subr.bf16.mxu0 0
      %1819 = vmatpush1.bf16.msra.mxu0 0
      %1820 = vmatprep.subr.bf16.mxu0 0
      %1821 = vmatpush1.bf16.msra.mxu0 0
      %1822 = vmatprep.subr.bf16.mxu0 0
      %1823 = vmatpush1.bf16.msra.mxu0 0
      %1824 = vmatprep.subr.bf16.mxu0 0
      %1825 = vmatpush1.bf16.msra.mxu0 0
      %1826 = vmatprep.mubr.bf16.mxu0 0
      %1827 = vmatmul.mubr.bf16.gmra.mrb[0].mxu0 %v619
      %v1828 = vpop.f32.mrb[0].mxu0
      %v1829 = vadd.f32 0.0, %v1828
      %v1830 = vpop.f32.mrb[0].mxu0
      %v1831 = vpop.f32.mrb[0].mxu0
      %v1832 = vadd.f32 0.0, %v1831
      %v1833 = vpop.f32.mrb[0].mxu0
      %1834 = vmatprep.mubr.bf16.mxu0 0
      %1835 = vmatmul.mubr.bf16.gmra.mrb[0].mxu0 %v622
      %v1836 = vpop.f32.mrb[0].mxu0
      %v1837 = vadd.f32 0.0, %v1836
      %v1838 = vpop.f32.mrb[0].mxu0
      %v1839 = vpop.f32.mrb[0].mxu0
      %v1840 = vadd.f32 0.0, %v1839
      %v1841 = vpop.f32.mrb[0].mxu0
      %1842 = vmatprep.mubr.bf16.mxu0 0
      %1843 = vmatmul.mubr.bf16.gmra.mrb[0].mxu0 %v625
      %v1844 = vpop.f32.mrb[0].mxu0
      %v1845 = vadd.f32 0.0, %v1844
      %v1846 = vpop.f32.mrb[0].mxu0
      %v1847 = vpop.f32.mrb[0].mxu0
      %v1848 = vadd.f32 0.0, %v1847
      %v1849 = vpop.f32.mrb[0].mxu0
      %1850 = vmatprep.mubr.bf16.mxu0 0
      %1851 = vmatmul.mubr.bf16.gmra.mrb[0].mxu0 %v628
      %v1852 = vpop.f32.mrb[0].mxu0
      %v1853 = vadd.f32 0.0, %v1852
      %v1854 = vpop.f32.mrb[0].mxu0
      %v1855 = vpop.f32.mrb[0].mxu0
      %v1856 = vadd.f32 0.0, %v1855
      %v1857 = vpop.f32.mrb[0].mxu0
      %1858 = vdwg.mxu0
      %v1859 = vpack.c.bf16 %v1832, %v1829
      %v1860 = vpack.c.bf16 %v1840, %v1837
      %v1861 = vpack.c.bf16 %v1848, %v1845
      %v1862 = vpack.c.bf16 %v1856, %v1853
      %v1863 = vld [vmem:[%s6] sm:$0x1]
      %v1864 = vld [vmem:[%s5] sm:$0xf]
      %v1865 = vld [vmem:[%s5 + $0x4] sm:$0xf]
      %v1866 = vld [vmem:[%s5 + $0x8] sm:$0xf]
      %v1867 = vld [vmem:[%s5 + $0xc] sm:$0xf]
      %v1868 = vld [vmem:[%s5 + $0x10] sm:$0xf]
      %v1869 = vld [vmem:[%s5 + $0x14] sm:$0xf]
      %v1870 = vld [vmem:[%s5 + $0x18] sm:$0xf]
      %v1871 = vld [vmem:[%s5 + $0x1c] sm:$0xf]
      %v1872 = vld [vmem:[%s5 + $0x20] sm:$0xf]
      %v1873 = vld [vmem:[%s5 + $0x24] sm:$0xf]
      %v1874 = vld [vmem:[%s5 + $0x28] sm:$0xf]
      %v1875 = vld [vmem:[%s5 + $0x2c] sm:$0xf]
      %v1876 = vld [vmem:[%s5 + $0x30] sm:$0xf]
      %v1877 = vld [vmem:[%s5 + $0x34] sm:$0xf]
      %v1878 = vld [vmem:[%s5 + $0x38] sm:$0xf]
      %v1879 = vld [vmem:[%s5 + $0x3c] sm:$0xf]
      %v1896 = vunpack.c.l.b16 %v1864
      %v1897 = vunpack.c.l.b16 %v1865
      %v1898 = vunpack.c.l.b16 %v1866
      %v1899 = vunpack.c.l.b16 %v1867
      %v1900 = vunpack.c.l.b16 %v1868
      %v1901 = vunpack.c.l.b16 %v1869
      %v1902 = vunpack.c.l.b16 %v1870
      %v1903 = vunpack.c.l.b16 %v1871
      %v1904 = vunpack.c.l.b16 %v1872
      %v1905 = vunpack.c.l.b16 %v1873
      %v1906 = vunpack.c.l.b16 %v1874
      %v1907 = vunpack.c.l.b16 %v1875
      %v1908 = vunpack.c.l.b16 %v1876
      %v1909 = vunpack.c.l.b16 %v1877
      %v1910 = vunpack.c.l.b16 %v1878
      %v1911 = vunpack.c.l.b16 %v1879
      %v1912 = vpack.c.b16 %v1897, %v1896
      %v1913 = vpack.c.b16 %v1899, %v1898
      %v1914 = vpack.c.b16 %v1901, %v1900
      %v1915 = vpack.c.b16 %v1903, %v1902
      %v1916 = vpack.c.b16 %v1905, %v1904
      %v1917 = vpack.c.b16 %v1907, %v1906
      %v1918 = vpack.c.b16 %v1909, %v1908
      %v1919 = vpack.c.b16 %v1911, %v1910
      %1928 = vmatprep.subr.bf16.mxu0 0
      %1929 = vmatpush1.bf16.msra.mxu0 %v1912
      %1930 = vmatprep.subr.bf16.mxu0 0
      %1931 = vmatpush1.bf16.msra.mxu0 %v1913
      %1932 = vmatprep.subr.bf16.mxu0 0
      %1933 = vmatpush1.bf16.msra.mxu0 %v1914
      %1934 = vmatprep.subr.bf16.mxu0 0
      %1935 = vmatpush1.bf16.msra.mxu0 %v1915
      %1936 = vmatprep.subr.bf16.mxu0 0
      %1937 = vmatpush1.bf16.msra.mxu0 %v1916
      %1938 = vmatprep.subr.bf16.mxu0 0
      %1939 = vmatpush1.bf16.msra.mxu0 %v1917
      %1940 = vmatprep.subr.bf16.mxu0 0
      %1941 = vmatpush1.bf16.msra.mxu0 %v1918
      %1942 = vmatprep.subr.bf16.mxu0 0
      %1943 = vmatpush1.bf16.msra.mxu0 %v1919
      %1944 = vmatprep.subr.bf16.mxu0 0
      %1945 = vmatpush1.bf16.msra.mxu0 0
      %1946 = vmatprep.subr.bf16.mxu0 0
      %1947 = vmatpush1.bf16.msra.mxu0 0
      %1948 = vmatprep.subr.bf16.mxu0 0
      %1949 = vmatpush1.bf16.msra.mxu0 0
      %1950 = vmatprep.subr.bf16.mxu0 0
      %1951 = vmatpush1.bf16.msra.mxu0 0
      %1952 = vmatprep.subr.bf16.mxu0 0
      %1953 = vmatpush1.bf16.msra.mxu0 0
      %1954 = vmatprep.subr.bf16.mxu0 0
      %1955 = vmatpush1.bf16.msra.mxu0 0
      %1956 = vmatprep.subr.bf16.mxu0 0
      %1957 = vmatpush1.bf16.msra.mxu0 0
      %1958 = vmatprep.subr.bf16.mxu0 0
      %1959 = vmatpush1.bf16.msra.mxu0 0
      %1960 = vmatprep.mubr.bf16.mxu0 0
      %1961 = vmatmul.mubr.bf16.gmra.mrb[0].mxu0 %v1790
      %v1962 = vpop.f32.mrb[0].mxu0
      %v1963 = vadd.f32 0.0, %v1962
      %v1964 = vpop.f32.mrb[0].mxu0
      %v1965 = vpop.f32.mrb[0].mxu0
      %v1966 = vadd.f32 0.0, %v1965
      %v1967 = vpop.f32.mrb[0].mxu0
      %1968 = vmatprep.mubr.bf16.mxu0 0
      %1969 = vmatmul.mubr.bf16.gmra.mrb[0].mxu0 %v1791
      %v1970 = vpop.f32.mrb[0].mxu0
      %v1971 = vadd.f32 0.0, %v1970
      %v1972 = vpop.f32.mrb[0].mxu0
      %v1973 = vpop.f32.mrb[0].mxu0
      %v1974 = vadd.f32 0.0, %v1973
      %v1975 = vpop.f32.mrb[0].mxu0
      %1976 = vmatprep.mubr.bf16.mxu0 0
      %1977 = vmatmul.mubr.bf16.gmra.mrb[0].mxu0 %v1792
      %v1978 = vpop.f32.mrb[0].mxu0
      %v1979 = vadd.f32 0.0, %v1978
      %v1980 = vpop.f32.mrb[0].mxu0
      %v1981 = vpop.f32.mrb[0].mxu0
      %v1982 = vadd.f32 0.0, %v1981
      %v1983 = vpop.f32.mrb[0].mxu0
      %1984 = vmatprep.mubr.bf16.mxu0 0
      %1985 = vmatmul.mubr.bf16.gmra.mrb[0].mxu0 %v1793
      %v1986 = vpop.f32.mrb[0].mxu0
      %v1987 = vadd.f32 0.0, %v1986
      %v1988 = vpop.f32.mrb[0].mxu0
      %v1989 = vpop.f32.mrb[0].mxu0
      %v1990 = vadd.f32 0.0, %v1989
      %v1991 = vpop.f32.mrb[0].mxu0
      %1992 = vdwg.mxu0
      %v1994 = vlaneseq
      %v1995 = vshrl.u32 %v1994, 7
      %v1996 = vsub.s32 0, %v1995
      %v1997 = vrot.slane %v1863, %v1996
      %v1999 = vadd.f32 %v1997, %v1963
      %v2000 = vadd.f32 %v1997, %v1966
      %v2001 = vadd.f32 %v1997, %v1971
      %v2002 = vadd.f32 %v1997, %v1974
      %v2003 = vadd.f32 %v1997, %v1979
      %v2004 = vadd.f32 %v1997, %v1982
      %v2005 = vadd.f32 %v1997, %v1987
      %v2006 = vadd.f32 %v1997, %v1990
      %s2007 = scalar_lea.vmem %s5, 64
      %v2008 = vld [vmem:[%s2007] sm:$0xf]
      %v2009 = vld [vmem:[%s2007 + $0x4] sm:$0xf]
      %v2010 = vld [vmem:[%s2007 + $0x8] sm:$0xf]
      %v2011 = vld [vmem:[%s2007 + $0xc] sm:$0xf]
      %v2012 = vld [vmem:[%s2007 + $0x10] sm:$0xf]
      %v2013 = vld [vmem:[%s2007 + $0x14] sm:$0xf]
      %v2014 = vld [vmem:[%s2007 + $0x18] sm:$0xf]
      %v2015 = vld [vmem:[%s2007 + $0x1c] sm:$0xf]
      %v2016 = vld [vmem:[%s2007 + $0x20] sm:$0xf]
      %v2017 = vld [vmem:[%s2007 + $0x24] sm:$0xf]
      %v2018 = vld [vmem:[%s2007 + $0x28] sm:$0xf]
      %v2019 = vld [vmem:[%s2007 + $0x2c] sm:$0xf]
      %v2020 = vld [vmem:[%s2007 + $0x30] sm:$0xf]
      %v2021 = vld [vmem:[%s2007 + $0x34] sm:$0xf]
      %v2022 = vld [vmem:[%s2007 + $0x38] sm:$0xf]
      %v2023 = vld [vmem:[%s2007 + $0x3c] sm:$0xf]
      %v2040 = vunpack.c.l.b16 %v2008
      %v2041 = vunpack.c.l.b16 %v2009
      %v2042 = vunpack.c.l.b16 %v2010
      %v2043 = vunpack.c.l.b16 %v2011
      %v2044 = vunpack.c.l.b16 %v2012
      %v2045 = vunpack.c.l.b16 %v2013
      %v2046 = vunpack.c.l.b16 %v2014
      %v2047 = vunpack.c.l.b16 %v2015
      %v2048 = vunpack.c.l.b16 %v2016
      %v2049 = vunpack.c.l.b16 %v2017
      %v2050 = vunpack.c.l.b16 %v2018
      %v2051 = vunpack.c.l.b16 %v2019
      %v2052 = vunpack.c.l.b16 %v2020
      %v2053 = vunpack.c.l.b16 %v2021
      %v2054 = vunpack.c.l.b16 %v2022
      %v2055 = vunpack.c.l.b16 %v2023
      %v2056 = vpack.c.b16 %v2041, %v2040
      %v2057 = vpack.c.b16 %v2043, %v2042
      %v2058 = vpack.c.b16 %v2045, %v2044
      %v2059 = vpack.c.b16 %v2047, %v2046
      %v2060 = vpack.c.b16 %v2049, %v2048
      %v2061 = vpack.c.b16 %v2051, %v2050
      %v2062 = vpack.c.b16 %v2053, %v2052
      %v2063 = vpack.c.b16 %v2055, %v2054
      %2072 = vmatprep.subr.bf16.mxu0 0
      %2073 = vmatpush1.bf16.msra.mxu0 %v2056
      %2074 = vmatprep.subr.bf16.mxu0 0
      %2075 = vmatpush1.bf16.msra.mxu0 %v2057
      %2076 = vmatprep.subr.bf16.mxu0 0
      %2077 = vmatpush1.bf16.msra.mxu0 %v2058
      %2078 = vmatprep.subr.bf16.mxu0 0
      %2079 = vmatpush1.bf16.msra.mxu0 %v2059
      %2080 = vmatprep.subr.bf16.mxu0 0
      %2081 = vmatpush1.bf16.msra.mxu0 %v2060
      %2082 = vmatprep.subr.bf16.mxu0 0
      %2083 = vmatpush1.bf16.msra.mxu0 %v2061
      %2084 = vmatprep.subr.bf16.mxu0 0
      %2085 = vmatpush1.bf16.msra.mxu0 %v2062
      %2086 = vmatprep.subr.bf16.mxu0 0
      %2087 = vmatpush1.bf16.msra.mxu0 %v2063
      %2088 = vmatprep.subr.bf16.mxu0 0
      %2089 = vmatpush1.bf16.msra.mxu0 0
      %2090 = vmatprep.subr.bf16.mxu0 0
      %2091 = vmatpush1.bf16.msra.mxu0 0
      %2092 = vmatprep.subr.bf16.mxu0 0
      %2093 = vmatpush1.bf16.msra.mxu0 0
      %2094 = vmatprep.subr.bf16.mxu0 0
      %2095 = vmatpush1.bf16.msra.mxu0 0
      %2096 = vmatprep.subr.bf16.mxu0 0
      %2097 = vmatpush1.bf16.msra.mxu0 0
      %2098 = vmatprep.subr.bf16.mxu0 0
      %2099 = vmatpush1.bf16.msra.mxu0 0
      %2100 = vmatprep.subr.bf16.mxu0 0
      %2101 = vmatpush1.bf16.msra.mxu0 0
      %2102 = vmatprep.subr.bf16.mxu0 0
      %2103 = vmatpush1.bf16.msra.mxu0 0
      %2104 = vmatprep.mubr.bf16.mxu0 0
      %2105 = vmatmul.mubr.bf16.gmra.mrb[0].mxu0 %v1721
      %v2106 = vpop.f32.mrb[0].mxu0
      %v2107 = vadd.f32 0.0, %v2106
      %v2108 = vpop.f32.mrb[0].mxu0
      %v2109 = vpop.f32.mrb[0].mxu0
      %v2110 = vadd.f32 0.0, %v2109
      %v2111 = vpop.f32.mrb[0].mxu0
      %2112 = vmatprep.mubr.bf16.mxu0 0
      %2113 = vmatmul.mubr.bf16.gmra.mrb[0].mxu0 %v1722
      %v2114 = vpop.f32.mrb[0].mxu0
      %v2115 = vadd.f32 0.0, %v2114
      %v2116 = vpop.f32.mrb[0].mxu0
      %v2117 = vpop.f32.mrb[0].mxu0
      %v2118 = vadd.f32 0.0, %v2117
      %v2119 = vpop.f32.mrb[0].mxu0
      %2120 = vmatprep.mubr.bf16.mxu0 0
      %2121 = vmatmul.mubr.bf16.gmra.mrb[0].mxu0 %v1723
      %v2122 = vpop.f32.mrb[0].mxu0
      %v2123 = vadd.f32 0.0, %v2122
      %v2124 = vpop.f32.mrb[0].mxu0
      %v2125 = vpop.f32.mrb[0].mxu0
      %v2126 = vadd.f32 0.0, %v2125
      %v2127 = vpop.f32.mrb[0].mxu0
      %2128 = vmatprep.mubr.bf16.mxu0 0
      %2129 = vmatmul.mubr.bf16.gmra.mrb[0].mxu0 %v1724
      %v2130 = vpop.f32.mrb[0].mxu0
      %v2131 = vadd.f32 0.0, %v2130
      %v2132 = vpop.f32.mrb[0].mxu0
      %v2133 = vpop.f32.mrb[0].mxu0
      %v2134 = vadd.f32 0.0, %v2133
      %v2135 = vpop.f32.mrb[0].mxu0
      %2136 = vdwg.mxu0
      %v2137 = vadd.f32 %v1999, %v2107
      %v2138 = vadd.f32 %v2000, %v2110
      %v2139 = vadd.f32 %v2001, %v2115
      %v2140 = vadd.f32 %v2002, %v2118
      %v2141 = vadd.f32 %v2003, %v2123
      %v2142 = vadd.f32 %v2004, %v2126
      %v2143 = vadd.f32 %v2005, %v2131
      %v2144 = vadd.f32 %v2006, %v2134
      %s2145 = scalar_lea.vmem %s5, 128
      %v2146 = vld [vmem:[%s2145] sm:$0xf]
      %v2147 = vld [vmem:[%s2145 + $0x4] sm:$0xf]
      %v2148 = vld [vmem:[%s2145 + $0x8] sm:$0xf]
      %v2149 = vld [vmem:[%s2145 + $0xc] sm:$0xf]
      %v2150 = vld [vmem:[%s2145 + $0x10] sm:$0xf]
      %v2151 = vld [vmem:[%s2145 + $0x14] sm:$0xf]
      %v2152 = vld [vmem:[%s2145 + $0x18] sm:$0xf]
      %v2153 = vld [vmem:[%s2145 + $0x1c] sm:$0xf]
      %v2154 = vld [vmem:[%s2145 + $0x20] sm:$0xf]
      %v2155 = vld [vmem:[%s2145 + $0x24] sm:$0xf]
      %v2156 = vld [vmem:[%s2145 + $0x28] sm:$0xf]
      %v2157 = vld [vmem:[%s2145 + $0x2c] sm:$0xf]
      %v2158 = vld [vmem:[%s2145 + $0x30] sm:$0xf]
      %v2159 = vld [vmem:[%s2145 + $0x34] sm:$0xf]
      %v2160 = vld [vmem:[%s2145 + $0x38] sm:$0xf]
      %v2161 = vld [vmem:[%s2145 + $0x3c] sm:$0xf]
      %v2178 = vunpack.c.l.b16 %v2146
      %v2179 = vunpack.c.l.b16 %v2147
      %v2180 = vunpack.c.l.b16 %v2148
      %v2181 = vunpack.c.l.b16 %v2149
      %v2182 = vunpack.c.l.b16 %v2150
      %v2183 = vunpack.c.l.b16 %v2151
      %v2184 = vunpack.c.l.b16 %v2152
      %v2185 = vunpack.c.l.b16 %v2153
      %v2186 = vunpack.c.l.b16 %v2154
      %v2187 = vunpack.c.l.b16 %v2155
      %v2188 = vunpack.c.l.b16 %v2156
      %v2189 = vunpack.c.l.b16 %v2157
      %v2190 = vunpack.c.l.b16 %v2158
      %v2191 = vunpack.c.l.b16 %v2159
      %v2192 = vunpack.c.l.b16 %v2160
      %v2193 = vunpack.c.l.b16 %v2161
      %v2194 = vpack.c.b16 %v2179, %v2178
      %v2195 = vpack.c.b16 %v2181, %v2180
      %v2196 = vpack.c.b16 %v2183, %v2182
      %v2197 = vpack.c.b16 %v2185, %v2184
      %v2198 = vpack.c.b16 %v2187, %v2186
      %v2199 = vpack.c.b16 %v2189, %v2188
      %v2200 = vpack.c.b16 %v2191, %v2190
      %v2201 = vpack.c.b16 %v2193, %v2192
      %2210 = vmatprep.subr.bf16.mxu0 0
      %2211 = vmatpush1.bf16.msra.mxu0 %v2194
      %2212 = vmatprep.subr.bf16.mxu0 0
      %2213 = vmatpush1.bf16.msra.mxu0 %v2195
      %2214 = vmatprep.subr.bf16.mxu0 0
      %2215 = vmatpush1.bf16.msra.mxu0 %v2196
      %2216 = vmatprep.subr.bf16.mxu0 0
      %2217 = vmatpush1.bf16.msra.mxu0 %v2197
      %2218 = vmatprep.subr.bf16.mxu0 0
      %2219 = vmatpush1.bf16.msra.mxu0 %v2198
      %2220 = vmatprep.subr.bf16.mxu0 0
      %2221 = vmatpush1.bf16.msra.mxu0 %v2199
      %2222 = vmatprep.subr.bf16.mxu0 0
      %2223 = vmatpush1.bf16.msra.mxu0 %v2200
      %2224 = vmatprep.subr.bf16.mxu0 0
      %2225 = vmatpush1.bf16.msra.mxu0 %v2201
      %2226 = vmatprep.subr.bf16.mxu0 0
      %2227 = vmatpush1.bf16.msra.mxu0 0
      %2228 = vmatprep.subr.bf16.mxu0 0
      %2229 = vmatpush1.bf16.msra.mxu0 0
      %2230 = vmatprep.subr.bf16.mxu0 0
      %2231 = vmatpush1.bf16.msra.mxu0 0
      %2232 = vmatprep.subr.bf16.mxu0 0
      %2233 = vmatpush1.bf16.msra.mxu0 0
      %2234 = vmatprep.subr.bf16.mxu0 0
      %2235 = vmatpush1.bf16.msra.mxu0 0
      %2236 = vmatprep.subr.bf16.mxu0 0
      %2237 = vmatpush1.bf16.msra.mxu0 0
      %2238 = vmatprep.subr.bf16.mxu0 0
      %2239 = vmatpush1.bf16.msra.mxu0 0
      %2240 = vmatprep.subr.bf16.mxu0 0
      %2241 = vmatpush1.bf16.msra.mxu0 0
      %2242 = vmatprep.mubr.bf16.mxu0 0
      %2243 = vmatmul.mubr.bf16.gmra.mrb[0].mxu0 %v1859
      %v2244 = vpop.f32.mrb[0].mxu0
      %v2245 = vadd.f32 0.0, %v2244
      %v2246 = vpop.f32.mrb[0].mxu0
      %v2247 = vpop.f32.mrb[0].mxu0
      %v2248 = vadd.f32 0.0, %v2247
      %v2249 = vpop.f32.mrb[0].mxu0
      %2250 = vmatprep.mubr.bf16.mxu0 0
      %2251 = vmatmul.mubr.bf16.gmra.mrb[0].mxu0 %v1860
      %v2252 = vpop.f32.mrb[0].mxu0
      %v2253 = vadd.f32 0.0, %v2252
      %v2254 = vpop.f32.mrb[0].mxu0
      %v2255 = vpop.f32.mrb[0].mxu0
      %v2256 = vadd.f32 0.0, %v2255
      %v2257 = vpop.f32.mrb[0].mxu0
      %2258 = vmatprep.mubr.bf16.mxu0 0
      %2259 = vmatmul.mubr.bf16.gmra.mrb[0].mxu0 %v1861
      %v2260 = vpop.f32.mrb[0].mxu0
      %v2261 = vadd.f32 0.0, %v2260
      %v2262 = vpop.f32.mrb[0].mxu0
      %v2263 = vpop.f32.mrb[0].mxu0
      %v2264 = vadd.f32 0.0, %v2263
      %v2265 = vpop.f32.mrb[0].mxu0
      %2266 = vmatprep.mubr.bf16.mxu0 0
      %2267 = vmatmul.mubr.bf16.gmra.mrb[0].mxu0 %v1862
      %v2268 = vpop.f32.mrb[0].mxu0
      %v2269 = vadd.f32 0.0, %v2268
      %v2270 = vpop.f32.mrb[0].mxu0
      %v2271 = vpop.f32.mrb[0].mxu0
      %v2272 = vadd.f32 0.0, %v2271
      %v2273 = vpop.f32.mrb[0].mxu0
      %2274 = vdwg.mxu0
      %v2275 = vadd.f32 %v2137, %v2245
      %v2276 = vadd.f32 %v2138, %v2248
      %v2277 = vadd.f32 %v2139, %v2253
      %v2278 = vadd.f32 %v2140, %v2256
      %v2279 = vadd.f32 %v2141, %v2261
      %v2280 = vadd.f32 %v2142, %v2264
      %v2281 = vadd.f32 %v2143, %v2269
      %v2282 = vadd.f32 %v2144, %v2272
      %v2283 = vmax.f32 %v2275, 0.0
      %v2284 = vmax.f32 %v2276, 0.0
      %v2285 = vmax.f32 %v2277, 0.0
      %v2286 = vmax.f32 %v2278, 0.0
      %v2287 = vmax.f32 %v2279, 0.0
      %v2288 = vmax.f32 %v2280, 0.0
      %v2289 = vmax.f32 %v2281, 0.0
      %v2290 = vmax.f32 %v2282, 0.0
      %v2291 = vpack.c.bf16 %v2284, %v2283
      %v2292 = vpack.c.bf16 %v2286, %v2285
      %v2293 = vpack.c.bf16 %v2288, %v2287
      %v2294 = vpack.c.bf16 %v2290, %v2289
      %2295 = vmatprep.subr.bf16.mxu0 0
      %2296 = vmatpush1.bf16.msra.mxu0 %v2291
      %2297 = vmatprep.subr.bf16.mxu0 0
      %2298 = vmatpush1.bf16.msra.mxu0 %v2292
      %2299 = vmatprep.subr.bf16.mxu0 0
      %2300 = vmatpush1.bf16.msra.mxu0 %v2293
      %2301 = vmatprep.subr.bf16.mxu0 0
      %2302 = vmatpush1.bf16.msra.mxu0 %v2294
      %2303 = vmatprep.subr.bf16.mxu0 0
      %2304 = vmatpush1.bf16.msra.mxu0 0
      %2305 = vmatprep.subr.bf16.mxu0 0
      %2306 = vmatpush1.bf16.msra.mxu0 0
      %2307 = vmatprep.subr.bf16.mxu0 0
      %2308 = vmatpush1.bf16.msra.mxu0 0
      %2309 = vmatprep.subr.bf16.mxu0 0
      %2310 = vmatpush1.bf16.msra.mxu0 0
      %2311 = vmatprep.subr.bf16.mxu0 0
      %2312 = vmatpush1.bf16.msra.mxu0 0
      %2313 = vmatprep.subr.bf16.mxu0 0
      %2314 = vmatpush1.bf16.msra.mxu0 0
      %2315 = vmatprep.subr.bf16.mxu0 0
      %2316 = vmatpush1.bf16.msra.mxu0 0
      %2317 = vmatprep.subr.bf16.mxu0 0
      %2318 = vmatpush1.bf16.msra.mxu0 0
      %2319 = vmatprep.subr.bf16.mxu0 0
      %2320 = vmatpush1.bf16.msra.mxu0 0
      %2321 = vmatprep.subr.bf16.mxu0 0
      %2322 = vmatpush1.bf16.msra.mxu0 0
      %2323 = vmatprep.subr.bf16.mxu0 0
      %2324 = vmatpush1.bf16.msra.mxu0 0
      %2325 = vmatprep.subr.bf16.mxu0 0
      %2326 = vmatpush1.bf16.msra.mxu0 0
      %2327 = vmatprep.mubr.bf16.mxu0 0
      %2328 = vmatmul.mubr.bf16.gmra.mrb[0].mxu0 %v1132
      %v2329 = vpop.f32.mrb[0].mxu0
      %v2330 = vadd.f32 0.0, %v2329
      %v2331 = vpop.f32.mrb[0].mxu0
      %v2332 = vpop.f32.mrb[0].mxu0
      %v2333 = vadd.f32 0.0, %v2332
      %v2334 = vpop.f32.mrb[0].mxu0
      %2335 = vmatprep.mubr.bf16.mxu0 0
      %2336 = vmatmul.mubr.bf16.gmra.mrb[0].mxu0 %v1135
      %v2337 = vpop.f32.mrb[0].mxu0
      %v2338 = vadd.f32 0.0, %v2337
      %v2339 = vpop.f32.mrb[0].mxu0
      %v2340 = vpop.f32.mrb[0].mxu0
      %v2341 = vadd.f32 0.0, %v2340
      %v2342 = vpop.f32.mrb[0].mxu0
      %2343 = vmatprep.mubr.bf16.mxu0 0
      %2344 = vmatmul.mubr.bf16.gmra.mrb[0].mxu0 %v1138
      %v2345 = vpop.f32.mrb[0].mxu0
      %v2346 = vadd.f32 0.0, %v2345
      %v2347 = vpop.f32.mrb[0].mxu0
      %v2348 = vpop.f32.mrb[0].mxu0
      %v2349 = vadd.f32 0.0, %v2348
      %v2350 = vpop.f32.mrb[0].mxu0
      %2351 = vmatprep.mubr.bf16.mxu0 0
      %2352 = vmatmul.mubr.bf16.gmra.mrb[0].mxu0 %v1141
      %v2353 = vpop.f32.mrb[0].mxu0
      %v2354 = vadd.f32 0.0, %v2353
      %v2355 = vpop.f32.mrb[0].mxu0
      %v2356 = vpop.f32.mrb[0].mxu0
      %v2357 = vadd.f32 0.0, %v2356
      %v2358 = vpop.f32.mrb[0].mxu0
      %2359 = vdwg.mxu0
      %v2360 = vpack.c.bf16 %v2333, %v2330
      %v2361 = vpack.c.bf16 %v2341, %v2338
      %v2362 = vpack.c.bf16 %v2349, %v2346
      %v2363 = vpack.c.bf16 %v2357, %v2354
      %2364 = vmatprep.subr.bf16.mxu0 0
      %2365 = vmatpush1.bf16.msra.mxu0 %v2291
      %2366 = vmatprep.subr.bf16.mxu0 0
      %2367 = vmatpush1.bf16.msra.mxu0 %v2292
      %2368 = vmatprep.subr.bf16.mxu0 0
      %2369 = vmatpush1.bf16.msra.mxu0 %v2293
      %2370 = vmatprep.subr.bf16.mxu0 0
      %2371 = vmatpush1.bf16.msra.mxu0 %v2294
      %2372 = vmatprep.subr.bf16.mxu0 0
      %2373 = vmatpush1.bf16.msra.mxu0 0
      %2374 = vmatprep.subr.bf16.mxu0 0
      %2375 = vmatpush1.bf16.msra.mxu0 0
      %2376 = vmatprep.subr.bf16.mxu0 0
      %2377 = vmatpush1.bf16.msra.mxu0 0
      %2378 = vmatprep.subr.bf16.mxu0 0
      %2379 = vmatpush1.bf16.msra.mxu0 0
      %2380 = vmatprep.subr.bf16.mxu0 0
      %2381 = vmatpush1.bf16.msra.mxu0 0
      %2382 = vmatprep.subr.bf16.mxu0 0
      %2383 = vmatpush1.bf16.msra.mxu0 0
      %2384 = vmatprep.subr.bf16.mxu0 0
      %2385 = vmatpush1.bf16.msra.mxu0 0
      %2386 = vmatprep.subr.bf16.mxu0 0
      %2387 = vmatpush1.bf16.msra.mxu0 0
      %2388 = vmatprep.subr.bf16.mxu0 0
      %2389 = vmatpush1.bf16.msra.mxu0 0
      %2390 = vmatprep.subr.bf16.mxu0 0
      %2391 = vmatpush1.bf16.msra.mxu0 0
      %2392 = vmatprep.subr.bf16.mxu0 0
      %2393 = vmatpush1.bf16.msra.mxu0 0
      %2394 = vmatprep.subr.bf16.mxu0 0
      %2395 = vmatpush1.bf16.msra.mxu0 0
      %2396 = vmatprep.mubr.bf16.mxu0 0
      %2397 = vmatmul.mubr.bf16.gmra.mrb[0].mxu0 %v1213
      %v2398 = vpop.f32.mrb[0].mxu0
      %v2399 = vadd.f32 0.0, %v2398
      %v2400 = vpop.f32.mrb[0].mxu0
      %v2401 = vpop.f32.mrb[0].mxu0
      %v2402 = vadd.f32 0.0, %v2401
      %v2403 = vpop.f32.mrb[0].mxu0
      %2404 = vmatprep.mubr.bf16.mxu0 0
      %2405 = vmatmul.mubr.bf16.gmra.mrb[0].mxu0 %v1216
      %v2406 = vpop.f32.mrb[0].mxu0
      %v2407 = vadd.f32 0.0, %v2406
      %v2408 = vpop.f32.mrb[0].mxu0
      %v2409 = vpop.f32.mrb[0].mxu0
      %v2410 = vadd.f32 0.0, %v2409
      %v2411 = vpop.f32.mrb[0].mxu0
      %2412 = vmatprep.mubr.bf16.mxu0 0
      %2413 = vmatmul.mubr.bf16.gmra.mrb[0].mxu0 %v1219
      %v2414 = vpop.f32.mrb[0].mxu0
      %v2415 = vadd.f32 0.0, %v2414
      %v2416 = vpop.f32.mrb[0].mxu0
      %v2417 = vpop.f32.mrb[0].mxu0
      %v2418 = vadd.f32 0.0, %v2417
      %v2419 = vpop.f32.mrb[0].mxu0
      %2420 = vmatprep.mubr.bf16.mxu0 0
      %2421 = vmatmul.mubr.bf16.gmra.mrb[0].mxu0 %v1222
      %v2422 = vpop.f32.mrb[0].mxu0
      %v2423 = vadd.f32 0.0, %v2422
      %v2424 = vpop.f32.mrb[0].mxu0
      %v2425 = vpop.f32.mrb[0].mxu0
      %v2426 = vadd.f32 0.0, %v2425
      %v2427 = vpop.f32.mrb[0].mxu0
      %2428 = vdwg.mxu0
      %v2429 = vpack.c.bf16 %v2402, %v2399
      %v2430 = vpack.c.bf16 %v2410, %v2407
      %v2431 = vpack.c.bf16 %v2418, %v2415
      %v2432 = vpack.c.bf16 %v2426, %v2423
      %v2433 = vld [vmem:[%s8] sm:$0x1]
      %v2434 = vld [vmem:[%s7] sm:$0xf]
      %v2435 = vld [vmem:[%s7 + $0x4] sm:$0xf]
      %v2436 = vld [vmem:[%s7 + $0x8] sm:$0xf]
      %v2437 = vld [vmem:[%s7 + $0xc] sm:$0xf]
      %v2438 = vld [vmem:[%s7 + $0x10] sm:$0xf]
      %v2439 = vld [vmem:[%s7 + $0x14] sm:$0xf]
      %v2440 = vld [vmem:[%s7 + $0x18] sm:$0xf]
      %v2441 = vld [vmem:[%s7 + $0x1c] sm:$0xf]
      %v2442 = vld [vmem:[%s7 + $0x20] sm:$0xf]
      %v2443 = vld [vmem:[%s7 + $0x24] sm:$0xf]
      %v2444 = vld [vmem:[%s7 + $0x28] sm:$0xf]
      %v2445 = vld [vmem:[%s7 + $0x2c] sm:$0xf]
      %v2446 = vld [vmem:[%s7 + $0x30] sm:$0xf]
      %v2447 = vld [vmem:[%s7 + $0x34] sm:$0xf]
      %v2448 = vld [vmem:[%s7 + $0x38] sm:$0xf]
      %v2449 = vld [vmem:[%s7 + $0x3c] sm:$0xf]
      %v2466 = vunpack.c.l.b16 %v2434
      %v2467 = vunpack.c.l.b16 %v2435
      %v2468 = vunpack.c.l.b16 %v2436
      %v2469 = vunpack.c.l.b16 %v2437
      %v2470 = vunpack.c.l.b16 %v2438
      %v2471 = vunpack.c.l.b16 %v2439
      %v2472 = vunpack.c.l.b16 %v2440
      %v2473 = vunpack.c.l.b16 %v2441
      %v2474 = vunpack.c.l.b16 %v2442
      %v2475 = vunpack.c.l.b16 %v2443
      %v2476 = vunpack.c.l.b16 %v2444
      %v2477 = vunpack.c.l.b16 %v2445
      %v2478 = vunpack.c.l.b16 %v2446
      %v2479 = vunpack.c.l.b16 %v2447
      %v2480 = vunpack.c.l.b16 %v2448
      %v2481 = vunpack.c.l.b16 %v2449
      %v2482 = vpack.c.b16 %v2467, %v2466
      %v2483 = vpack.c.b16 %v2469, %v2468
      %v2484 = vpack.c.b16 %v2471, %v2470
      %v2485 = vpack.c.b16 %v2473, %v2472
      %v2486 = vpack.c.b16 %v2475, %v2474
      %v2487 = vpack.c.b16 %v2477, %v2476
      %v2488 = vpack.c.b16 %v2479, %v2478
      %v2489 = vpack.c.b16 %v2481, %v2480
      %2498 = vmatprep.subr.bf16.mxu0 0
      %2499 = vmatpush1.bf16.msra.mxu0 %v2482
      %2500 = vmatprep.subr.bf16.mxu0 0
      %2501 = vmatpush1.bf16.msra.mxu0 %v2483
      %2502 = vmatprep.subr.bf16.mxu0 0
      %2503 = vmatpush1.bf16.msra.mxu0 %v2484
      %2504 = vmatprep.subr.bf16.mxu0 0
      %2505 = vmatpush1.bf16.msra.mxu0 %v2485
      %2506 = vmatprep.subr.bf16.mxu0 0
      %2507 = vmatpush1.bf16.msra.mxu0 %v2486
      %2508 = vmatprep.subr.bf16.mxu0 0
      %2509 = vmatpush1.bf16.msra.mxu0 %v2487
      %2510 = vmatprep.subr.bf16.mxu0 0
      %2511 = vmatpush1.bf16.msra.mxu0 %v2488
      %2512 = vmatprep.subr.bf16.mxu0 0
      %2513 = vmatpush1.bf16.msra.mxu0 %v2489
      %2514 = vmatprep.subr.bf16.mxu0 0
      %2515 = vmatpush1.bf16.msra.mxu0 0
      %2516 = vmatprep.subr.bf16.mxu0 0
      %2517 = vmatpush1.bf16.msra.mxu0 0
      %2518 = vmatprep.subr.bf16.mxu0 0
      %2519 = vmatpush1.bf16.msra.mxu0 0
      %2520 = vmatprep.subr.bf16.mxu0 0
      %2521 = vmatpush1.bf16.msra.mxu0 0
      %2522 = vmatprep.subr.bf16.mxu0 0
      %2523 = vmatpush1.bf16.msra.mxu0 0
      %2524 = vmatprep.subr.bf16.mxu0 0
      %2525 = vmatpush1.bf16.msra.mxu0 0
      %2526 = vmatprep.subr.bf16.mxu0 0
      %2527 = vmatpush1.bf16.msra.mxu0 0
      %2528 = vmatprep.subr.bf16.mxu0 0
      %2529 = vmatpush1.bf16.msra.mxu0 0
      %2530 = vmatprep.mubr.bf16.mxu0 0
      %2531 = vmatmul.mubr.bf16.gmra.mrb[0].mxu0 %v2360
      %v2532 = vpop.f32.mrb[0].mxu0
      %v2533 = vadd.f32 0.0, %v2532
      %v2534 = vpop.f32.mrb[0].mxu0
      %v2535 = vpop.f32.mrb[0].mxu0
      %v2536 = vadd.f32 0.0, %v2535
      %v2537 = vpop.f32.mrb[0].mxu0
      %2538 = vmatprep.mubr.bf16.mxu0 0
      %2539 = vmatmul.mubr.bf16.gmra.mrb[0].mxu0 %v2361
      %v2540 = vpop.f32.mrb[0].mxu0
      %v2541 = vadd.f32 0.0, %v2540
      %v2542 = vpop.f32.mrb[0].mxu0
      %v2543 = vpop.f32.mrb[0].mxu0
      %v2544 = vadd.f32 0.0, %v2543
      %v2545 = vpop.f32.mrb[0].mxu0
      %2546 = vmatprep.mubr.bf16.mxu0 0
      %2547 = vmatmul.mubr.bf16.gmra.mrb[0].mxu0 %v2362
      %v2548 = vpop.f32.mrb[0].mxu0
      %v2549 = vadd.f32 0.0, %v2548
      %v2550 = vpop.f32.mrb[0].mxu0
      %v2551 = vpop.f32.mrb[0].mxu0
      %v2552 = vadd.f32 0.0, %v2551
      %v2553 = vpop.f32.mrb[0].mxu0
      %2554 = vmatprep.mubr.bf16.mxu0 0
      %2555 = vmatmul.mubr.bf16.gmra.mrb[0].mxu0 %v2363
      %v2556 = vpop.f32.mrb[0].mxu0
      %v2557 = vadd.f32 0.0, %v2556
      %v2558 = vpop.f32.mrb[0].mxu0
      %v2559 = vpop.f32.mrb[0].mxu0
      %v2560 = vadd.f32 0.0, %v2559
      %v2561 = vpop.f32.mrb[0].mxu0
      %2562 = vdwg.mxu0
      %v2564 = vlaneseq
      %v2565 = vshrl.u32 %v2564, 7
      %v2566 = vsub.s32 0, %v2565
      %v2567 = vrot.slane %v2433, %v2566
      %v2569 = vadd.f32 %v2567, %v2533
      %v2570 = vadd.f32 %v2567, %v2536
      %v2571 = vadd.f32 %v2567, %v2541
      %v2572 = vadd.f32 %v2567, %v2544
      %v2573 = vadd.f32 %v2567, %v2549
      %v2574 = vadd.f32 %v2567, %v2552
      %v2575 = vadd.f32 %v2567, %v2557
      %v2576 = vadd.f32 %v2567, %v2560
      %s2577 = scalar_lea.vmem %s7, 64
      %v2578 = vld [vmem:[%s2577] sm:$0xf]
      %v2579 = vld [vmem:[%s2577 + $0x4] sm:$0xf]
      %v2580 = vld [vmem:[%s2577 + $0x8] sm:$0xf]
      %v2581 = vld [vmem:[%s2577 + $0xc] sm:$0xf]
      %v2582 = vld [vmem:[%s2577 + $0x10] sm:$0xf]
      %v2583 = vld [vmem:[%s2577 + $0x14] sm:$0xf]
      %v2584 = vld [vmem:[%s2577 + $0x18] sm:$0xf]
      %v2585 = vld [vmem:[%s2577 + $0x1c] sm:$0xf]
      %v2586 = vld [vmem:[%s2577 + $0x20] sm:$0xf]
      %v2587 = vld [vmem:[%s2577 + $0x24] sm:$0xf]
      %v2588 = vld [vmem:[%s2577 + $0x28] sm:$0xf]
      %v2589 = vld [vmem:[%s2577 + $0x2c] sm:$0xf]
      %v2590 = vld [vmem:[%s2577 + $0x30] sm:$0xf]
      %v2591 = vld [vmem:[%s2577 + $0x34] sm:$0xf]
      %v2592 = vld [vmem:[%s2577 + $0x38] sm:$0xf]
      %v2593 = vld [vmem:[%s2577 + $0x3c] sm:$0xf]
      %v2610 = vunpack.c.l.b16 %v2578
      %v2611 = vunpack.c.l.b16 %v2579
      %v2612 = vunpack.c.l.b16 %v2580
      %v2613 = vunpack.c.l.b16 %v2581
      %v2614 = vunpack.c.l.b16 %v2582
      %v2615 = vunpack.c.l.b16 %v2583
      %v2616 = vunpack.c.l.b16 %v2584
      %v2617 = vunpack.c.l.b16 %v2585
      %v2618 = vunpack.c.l.b16 %v2586
      %v2619 = vunpack.c.l.b16 %v2587
      %v2620 = vunpack.c.l.b16 %v2588
      %v2621 = vunpack.c.l.b16 %v2589
      %v2622 = vunpack.c.l.b16 %v2590
      %v2623 = vunpack.c.l.b16 %v2591
      %v2624 = vunpack.c.l.b16 %v2592
      %v2625 = vunpack.c.l.b16 %v2593
      %v2626 = vpack.c.b16 %v2611, %v2610
      %v2627 = vpack.c.b16 %v2613, %v2612
      %v2628 = vpack.c.b16 %v2615, %v2614
      %v2629 = vpack.c.b16 %v2617, %v2616
      %v2630 = vpack.c.b16 %v2619, %v2618
      %v2631 = vpack.c.b16 %v2621, %v2620
      %v2632 = vpack.c.b16 %v2623, %v2622
      %v2633 = vpack.c.b16 %v2625, %v2624
      %2642 = vmatprep.subr.bf16.mxu0 0
      %2643 = vmatpush1.bf16.msra.mxu0 %v2626
      %2644 = vmatprep.subr.bf16.mxu0 0
      %2645 = vmatpush1.bf16.msra.mxu0 %v2627
      %2646 = vmatprep.subr.bf16.mxu0 0
      %2647 = vmatpush1.bf16.msra.mxu0 %v2628
      %2648 = vmatprep.subr.bf16.mxu0 0
      %2649 = vmatpush1.bf16.msra.mxu0 %v2629
      %2650 = vmatprep.subr.bf16.mxu0 0
      %2651 = vmatpush1.bf16.msra.mxu0 %v2630
      %2652 = vmatprep.subr.bf16.mxu0 0
      %2653 = vmatpush1.bf16.msra.mxu0 %v2631
      %2654 = vmatprep.subr.bf16.mxu0 0
      %2655 = vmatpush1.bf16.msra.mxu0 %v2632
      %2656 = vmatprep.subr.bf16.mxu0 0
      %2657 = vmatpush1.bf16.msra.mxu0 %v2633
      %2658 = vmatprep.subr.bf16.mxu0 0
      %2659 = vmatpush1.bf16.msra.mxu0 0
      %2660 = vmatprep.subr.bf16.mxu0 0
      %2661 = vmatpush1.bf16.msra.mxu0 0
      %2662 = vmatprep.subr.bf16.mxu0 0
      %2663 = vmatpush1.bf16.msra.mxu0 0
      %2664 = vmatprep.subr.bf16.mxu0 0
      %2665 = vmatpush1.bf16.msra.mxu0 0
      %2666 = vmatprep.subr.bf16.mxu0 0
      %2667 = vmatpush1.bf16.msra.mxu0 0
      %2668 = vmatprep.subr.bf16.mxu0 0
      %2669 = vmatpush1.bf16.msra.mxu0 0
      %2670 = vmatprep.subr.bf16.mxu0 0
      %2671 = vmatpush1.bf16.msra.mxu0 0
      %2672 = vmatprep.subr.bf16.mxu0 0
      %2673 = vmatpush1.bf16.msra.mxu0 0
      %2674 = vmatprep.mubr.bf16.mxu0 0
      %2675 = vmatmul.mubr.bf16.gmra.mrb[0].mxu0 %v2291
      %v2676 = vpop.f32.mrb[0].mxu0
      %v2677 = vadd.f32 0.0, %v2676
      %v2678 = vpop.f32.mrb[0].mxu0
      %v2679 = vpop.f32.mrb[0].mxu0
      %v2680 = vadd.f32 0.0, %v2679
      %v2681 = vpop.f32.mrb[0].mxu0
      %2682 = vmatprep.mubr.bf16.mxu0 0
      %2683 = vmatmul.mubr.bf16.gmra.mrb[0].mxu0 %v2292
      %v2684 = vpop.f32.mrb[0].mxu0
      %v2685 = vadd.f32 0.0, %v2684
      %v2686 = vpop.f32.mrb[0].mxu0
      %v2687 = vpop.f32.mrb[0].mxu0
      %v2688 = vadd.f32 0.0, %v2687
      %v2689 = vpop.f32.mrb[0].mxu0
      %2690 = vmatprep.mubr.bf16.mxu0 0
      %2691 = vmatmul.mubr.bf16.gmra.mrb[0].mxu0 %v2293
      %v2692 = vpop.f32.mrb[0].mxu0
      %v2693 = vadd.f32 0.0, %v2692
      %v2694 = vpop.f32.mrb[0].mxu0
      %v2695 = vpop.f32.mrb[0].mxu0
      %v2696 = vadd.f32 0.0, %v2695
      %v2697 = vpop.f32.mrb[0].mxu0
      %2698 = vmatprep.mubr.bf16.mxu0 0
      %2699 = vmatmul.mubr.bf16.gmra.mrb[0].mxu0 %v2294
      %v2700 = vpop.f32.mrb[0].mxu0
      %v2701 = vadd.f32 0.0, %v2700
      %v2702 = vpop.f32.mrb[0].mxu0
      %v2703 = vpop.f32.mrb[0].mxu0
      %v2704 = vadd.f32 0.0, %v2703
      %v2705 = vpop.f32.mrb[0].mxu0
      %2706 = vdwg.mxu0
      %v2707 = vadd.f32 %v2569, %v2677
      %v2708 = vadd.f32 %v2570, %v2680
      %v2709 = vadd.f32 %v2571, %v2685
      %v2710 = vadd.f32 %v2572, %v2688
      %v2711 = vadd.f32 %v2573, %v2693
      %v2712 = vadd.f32 %v2574, %v2696
      %v2713 = vadd.f32 %v2575, %v2701
      %v2714 = vadd.f32 %v2576, %v2704
      %s2715 = scalar_lea.vmem %s7, 128
      %v2716 = vld [vmem:[%s2715] sm:$0xf]
      %v2717 = vld [vmem:[%s2715 + $0x4] sm:$0xf]
      %v2718 = vld [vmem:[%s2715 + $0x8] sm:$0xf]
      %v2719 = vld [vmem:[%s2715 + $0xc] sm:$0xf]
      %v2720 = vld [vmem:[%s2715 + $0x10] sm:$0xf]
      %v2721 = vld [vmem:[%s2715 + $0x14] sm:$0xf]
      %v2722 = vld [vmem:[%s2715 + $0x18] sm:$0xf]
      %v2723 = vld [vmem:[%s2715 + $0x1c] sm:$0xf]
      %v2724 = vld [vmem:[%s2715 + $0x20] sm:$0xf]
      %v2725 = vld [vmem:[%s2715 + $0x24] sm:$0xf]
      %v2726 = vld [vmem:[%s2715 + $0x28] sm:$0xf]
      %v2727 = vld [vmem:[%s2715 + $0x2c] sm:$0xf]
      %v2728 = vld [vmem:[%s2715 + $0x30] sm:$0xf]
      %v2729 = vld [vmem:[%s2715 + $0x34] sm:$0xf]
      %v2730 = vld [vmem:[%s2715 + $0x38] sm:$0xf]
      %v2731 = vld [vmem:[%s2715 + $0x3c] sm:$0xf]
      %v2748 = vunpack.c.l.b16 %v2716
      %v2749 = vunpack.c.l.b16 %v2717
      %v2750 = vunpack.c.l.b16 %v2718
      %v2751 = vunpack.c.l.b16 %v2719
      %v2752 = vunpack.c.l.b16 %v2720
      %v2753 = vunpack.c.l.b16 %v2721
      %v2754 = vunpack.c.l.b16 %v2722
      %v2755 = vunpack.c.l.b16 %v2723
      %v2756 = vunpack.c.l.b16 %v2724
      %v2757 = vunpack.c.l.b16 %v2725
      %v2758 = vunpack.c.l.b16 %v2726
      %v2759 = vunpack.c.l.b16 %v2727
      %v2760 = vunpack.c.l.b16 %v2728
      %v2761 = vunpack.c.l.b16 %v2729
      %v2762 = vunpack.c.l.b16 %v2730
      %v2763 = vunpack.c.l.b16 %v2731
      %v2764 = vpack.c.b16 %v2749, %v2748
      %v2765 = vpack.c.b16 %v2751, %v2750
      %v2766 = vpack.c.b16 %v2753, %v2752
      %v2767 = vpack.c.b16 %v2755, %v2754
      %v2768 = vpack.c.b16 %v2757, %v2756
      %v2769 = vpack.c.b16 %v2759, %v2758
      %v2770 = vpack.c.b16 %v2761, %v2760
      %v2771 = vpack.c.b16 %v2763, %v2762
      %2780 = vmatprep.subr.bf16.mxu0 0
      %2781 = vmatpush1.bf16.msra.mxu0 %v2764
      %2782 = vmatprep.subr.bf16.mxu0 0
      %2783 = vmatpush1.bf16.msra.mxu0 %v2765
      %2784 = vmatprep.subr.bf16.mxu0 0
      %2785 = vmatpush1.bf16.msra.mxu0 %v2766
      %2786 = vmatprep.subr.bf16.mxu0 0
      %2787 = vmatpush1.bf16.msra.mxu0 %v2767
      %2788 = vmatprep.subr.bf16.mxu0 0
      %2789 = vmatpush1.bf16.msra.mxu0 %v2768
      %2790 = vmatprep.subr.bf16.mxu0 0
      %2791 = vmatpush1.bf16.msra.mxu0 %v2769
      %2792 = vmatprep.subr.bf16.mxu0 0
      %2793 = vmatpush1.bf16.msra.mxu0 %v2770
      %2794 = vmatprep.subr.bf16.mxu0 0
      %2795 = vmatpush1.bf16.msra.mxu0 %v2771
      %2796 = vmatprep.subr.bf16.mxu0 0
      %2797 = vmatpush1.bf16.msra.mxu0 0
      %2798 = vmatprep.subr.bf16.mxu0 0
      %2799 = vmatpush1.bf16.msra.mxu0 0
      %2800 = vmatprep.subr.bf16.mxu0 0
      %2801 = vmatpush1.bf16.msra.mxu0 0
      %2802 = vmatprep.subr.bf16.mxu0 0
      %2803 = vmatpush1.bf16.msra.mxu0 0
      %2804 = vmatprep.subr.bf16.mxu0 0
      %2805 = vmatpush1.bf16.msra.mxu0 0
      %2806 = vmatprep.subr.bf16.mxu0 0
      %2807 = vmatpush1.bf16.msra.mxu0 0
      %2808 = vmatprep.subr.bf16.mxu0 0
      %2809 = vmatpush1.bf16.msra.mxu0 0
      %2810 = vmatprep.subr.bf16.mxu0 0
      %2811 = vmatpush1.bf16.msra.mxu0 0
      %2812 = vmatprep.mubr.bf16.mxu0 0
      %2813 = vmatmul.mubr.bf16.gmra.mrb[0].mxu0 %v2429
      %v2814 = vpop.f32.mrb[0].mxu0
      %v2815 = vadd.f32 0.0, %v2814
      %v2816 = vpop.f32.mrb[0].mxu0
      %v2817 = vpop.f32.mrb[0].mxu0
      %v2818 = vadd.f32 0.0, %v2817
      %v2819 = vpop.f32.mrb[0].mxu0
      %2820 = vmatprep.mubr.bf16.mxu0 0
      %2821 = vmatmul.mubr.bf16.gmra.mrb[0].mxu0 %v2430
      %v2822 = vpop.f32.mrb[0].mxu0
      %v2823 = vadd.f32 0.0, %v2822
      %v2824 = vpop.f32.mrb[0].mxu0
      %v2825 = vpop.f32.mrb[0].mxu0
      %v2826 = vadd.f32 0.0, %v2825
      %v2827 = vpop.f32.mrb[0].mxu0
      %2828 = vmatprep.mubr.bf16.mxu0 0
      %2829 = vmatmul.mubr.bf16.gmra.mrb[0].mxu0 %v2431
      %v2830 = vpop.f32.mrb[0].mxu0
      %v2831 = vadd.f32 0.0, %v2830
      %v2832 = vpop.f32.mrb[0].mxu0
      %v2833 = vpop.f32.mrb[0].mxu0
      %v2834 = vadd.f32 0.0, %v2833
      %v2835 = vpop.f32.mrb[0].mxu0
      %2836 = vmatprep.mubr.bf16.mxu0 0
      %2837 = vmatmul.mubr.bf16.gmra.mrb[0].mxu0 %v2432
      %v2838 = vpop.f32.mrb[0].mxu0
      %v2839 = vadd.f32 0.0, %v2838
      %v2840 = vpop.f32.mrb[0].mxu0
      %v2841 = vpop.f32.mrb[0].mxu0
      %v2842 = vadd.f32 0.0, %v2841
      %v2843 = vpop.f32.mrb[0].mxu0
      %2844 = vdwg.mxu0
      %v2845 = vadd.f32 %v2707, %v2815
      %v2846 = vadd.f32 %v2708, %v2818
      %v2847 = vadd.f32 %v2709, %v2823
      %v2848 = vadd.f32 %v2710, %v2826
      %v2849 = vadd.f32 %v2711, %v2831
      %v2850 = vadd.f32 %v2712, %v2834
      %v2851 = vadd.f32 %v2713, %v2839
      %v2852 = vadd.f32 %v2714, %v2842
      %v2853 = vadd.f32 %v2845, %v337
      %v2854 = vadd.f32 %v2846, %v338
      %v2855 = vadd.f32 %v2847, %v339
      %v2856 = vadd.f32 %v2848, %v340
      %v2857 = vadd.f32 %v2849, %v341
      %v2858 = vadd.f32 %v2850, %v342
      %v2859 = vadd.f32 %v2851, %v343
      %v2860 = vadd.f32 %v2852, %v344
      %v2861 = vmax.f32 %v2853, 0.0
      %v2862 = vmax.f32 %v2854, 0.0
      %v2863 = vmax.f32 %v2855, 0.0
      %v2864 = vmax.f32 %v2856, 0.0
      %v2865 = vmax.f32 %v2857, 0.0
      %v2866 = vmax.f32 %v2858, 0.0
      %v2867 = vmax.f32 %v2859, 0.0
      %v2868 = vmax.f32 %v2860, 0.0
      %2869 = vst [vmem:[%s334] sm:$0xff] %v2861
      %2870 = vst [vmem:[%s334 + $0x8] sm:$0xff] %v2862
      %2871 = vst [vmem:[%s334 + $0x10] sm:$0xff] %v2863
      %2872 = vst [vmem:[%s334 + $0x18] sm:$0xff] %v2864
      %2873 = vst [vmem:[%s334 + $0x20] sm:$0xff] %v2865
      %2874 = vst [vmem:[%s334 + $0x28] sm:$0xff] %v2866
      %2875 = vst [vmem:[%s334 + $0x30] sm:$0xff] %v2867
      %2876 = vst [vmem:[%s334 + $0x38] sm:$0xff] %v2868
      %s2877 = smul.u32 8, %s20
      %p2878 = scmp.lt.s32.totalorder %s2877, 15
      %s2879 = scalar_select %p2878, %s2877, 15
      %s2880 = smul.addr %s2879, 8
      %s2881 = scalar_lea.vmem %s9, %s2880
      // Predicated region
      $region57: #{decoder_forward.8} parent=55 // pred_check
        %p2882 = pneg %p232
      $region58: #{decoder_forward.8} parent=55 // pred_check_branch
        %2884 = sbr.rel (%p2882) target = $region60
      $region59: #{decoder_forward.8} parent=55 // pred_region
        %s2885 = smul.u32 8, %s20
      $region60: #{decoder_forward.8} parent=55 // pred_fallthru
        _
    $region56: #{decoder_forward.8} parent=5 // pred_fallthru
      _
    %p2886 = scmp.le.s32.totalorder 2, %s15
    // Predicated region
    $region61: #{decoder_forward.8} parent=5 // pred_check
      %p2887 = pneg %p2886
    $region62: #{decoder_forward.8} parent=5 // pred_check_branch
      %2889 = sbr.rel (%p2887) target = $region64
    $region63: #{decoder_forward.8} parent=5 // pred_region
      %s2890 = ssub.s32 %s15, 2
      // Predicated region
      $region65: #{decoder_forward.8} parent=63 // pred_check
        %p2891 = pneg %p238
      $region66: #{decoder_forward.8} parent=63 // pred_check_branch
        %2893 = sbr.rel (%p2891) target = $region68
      $region67: #{decoder_forward.8} parent=63 // pred_region
        %s2894 = smul.u32 8, %s21
        %p2895 = scmp.lt.s32.totalorder %s2894, 15
        %s2896 = scalar_select %p2895, %s2894, 15
        %s2897 = smul.addr %s2896, 8
        %s2898 = scalar_lea.vmem %s9, %s2897
      $region68: #{decoder_forward.8} parent=63 // pred_fallthru
        _
    $region64: #{decoder_forward.8} parent=5 // pred_fallthru
      _
  $region6: #{decoder_forward.8} parent=0 // loop_footer
    %s19 = sadd.s32 1, %s15
  $region7: #{decoder_forward.8} parent=0 // loop_footer_branch
    %14 = sbr.rel target = $region3
  $region8: #{decoder_forward.8} parent=0 // loop_exit
    _

// kernel: tile.23
$region0: #{tile.23}
  #allocation0 [shape = 's32[1]{0}', space=sflag, size = 0x4, scoped, tag = 'scoped memory for tile.23']
  %s0 = inlined_call_operand.vmem [shape: f32[16], index: 0, kind: input, shape index: {}]
  %s1 = inlined_call_operand.vmem [shape: f32[4,16], index: 1, kind: output, shape index: {}]
  // Predicated region
  $region2: #{tile.23} parent=0 // pred_check
    _
  $region3: #{tile.23} parent=0 // pred_check_branch
    %3 = sbr.rel (0) target = $region5
  $region4: #{tile.23} parent=0 // pred_region
    _
  $region5: #{tile.23} parent=0 // pred_fallthru
    _
  %v4 = vld [vmem:[%s0] ss:$0 sm:$0xff]
  %5 = vst [vmem:[%s1] sm:$0xf] %v4

// kernel: tile.24
$region0: #{tile.24}
  %s0 = inlined_call_operand.vmem [shape: f32[4,16], index: 0, kind: input, shape index: {}]
  %s1 = inlined_call_operand.vmem [shape: f32[1,64], index: 1, kind: output, shape index: {}]
  $region1: #{tile.24} parent=0
    #allocation0 [shape = 'u8[4096]{0}', space=vmem, size = 0x1000, scoped, tag = 'scoped mem for output reshape']
    #allocation1 [shape = 'u8[4096]{0}', space=vmem, size = 0x1000, scoped, tag = 'scoped mem for input reshape']
    %s3 = sshllo.u32 0, 4
    %v4 = vld [vmem:[%s0] sm:%s3]
    %5 = vst [vmem:[#allocation1] sm:%s3] %v4
    %v6 = vld [vmem:[#allocation1] sm:$0x1]
    %vm7 = vcmask 130048
    %8 = vst.msk [vmem:[#allocation0] sm:$0x1] %vm7, %v6
    %s9 = scalar_lea.vmem [#allocation1], 3
    %v10 = vld [vmem:[%s9] sm:$0x1]
    %11 = vrot.lane.b32.xlu0 %v10, 48
    %v12 = vpop.permute.xlu0 %11
    %vm13 = vcmask 523648
    %14 = vst.msk [vmem:[#allocation0] sm:$0x1] %vm13, %v12
    %s15 = scalar_lea.vmem [#allocation1], 2
    %v16 = vld [vmem:[%s15] sm:$0x1]
    %17 = vrot.lane.b32.xlu0 %v16, 32
    %v18 = vpop.permute.xlu0 %17
    %vm19 = vcmask 392448
    %20 = vst.msk [vmem:[#allocation0] sm:$0x1] %vm19, %v18
    %s21 = scalar_lea.vmem [#allocation1], 1
    %v22 = vld [vmem:[%s21] sm:$0x1]
    %23 = vrot.lane.b32.xlu0 %v22, 16
    %v24 = vpop.permute.xlu0 %23
    %vm25 = vcmask 261248
    %26 = vst.msk [vmem:[#allocation0] sm:$0x1] %vm25, %v24
    %s28 = sshllo.u32 0, 1
    %v30 = vld [vmem:[#allocation0] sm:%s28]
    %s31 = sshllo.u32 0, 1
    %32 = vst [vmem:[%s1] sm:%s31] %v30

// kernel: decoder_forward.10
$region0: #{decoder_forward.10}
  #allocation0 [shape = 'u32[]', space=smem, size = 0x4, offset = 0x4, fixed_abs, tag = 'smem constant byte address 0x4 - core index']
  #allocation1 [shape = 'u32[144,128]{1,0:T(1,128)}', space=vmem, size = 0x12000, scoped, tag = 'internal scratch']
  %s0 = inlined_call_operand.vmem [shape: bf16[128,512], index: 0, kind: input, shape index: {}]
  %s1 = inlined_call_operand.vmem [shape: bf16[512,128], index: 1, kind: input, shape index: {}]
  %s2 = inlined_call_operand.vmem [shape: f32[1,128], index: 2, kind: input, shape index: {}]
  %s3 = inlined_call_operand.vmem [shape: f32[128,128], index: 3, kind: output, shape index: {}]
  %s4 = sld [smem:[#allocation0]]
  $region22: #{decoder_forward.10} parent=0
    _
  %s6 = ssub.s32 1, %s4
  %s7 = scalar_select 0, %s6, %s4
  // Predicated region
  $region2: #{decoder_forward.10} parent=0 // pred_check
    _
  $region3: #{decoder_forward.10} parent=0 // pred_check_branch
    %9 = sbr.rel (0) target = $region5
  $region4: #{decoder_forward.10} parent=0 // pred_region
    _
  $region5: #{decoder_forward.10} parent=0 // pred_fallthru
    _
  // Predicated region
  $region6: #{decoder_forward.10} parent=0 // pred_check
    _
  $region7: #{decoder_forward.10} parent=0 // pred_check_branch
    %11 = sbr.rel (0) target = $region9
  $region8: #{decoder_forward.10} parent=0 // pred_region
    _
  $region9: #{decoder_forward.10} parent=0 // pred_fallthru
    _
  // Predicated region
  $region10: #{decoder_forward.10} parent=0 // pred_check
    _
  $region11: #{decoder_forward.10} parent=0 // pred_check_branch
    %13 = sbr.rel (0) target = $region13
  $region12: #{decoder_forward.10} parent=0 // pred_region
    _
  $region13: #{decoder_forward.10} parent=0 // pred_fallthru
    _
  %v15 = vld [vmem:[%s0] sm:$0xff]
  %v16 = vld [vmem:[%s0 + $0x8] sm:$0xff]
  %v17 = vld [vmem:[%s0 + $0x10] sm:$0xff]
  %v18 = vld [vmem:[%s0 + $0x18] sm:$0xff]
  %v19 = vld [vmem:[%s0 + $0x20] sm:$0xff]
  %v20 = vld [vmem:[%s0 + $0x28] sm:$0xff]
  %v21 = vld [vmem:[%s0 + $0x30] sm:$0xff]
  %v22 = vld [vmem:[%s0 + $0x38] sm:$0xff]
  %v23 = vld [vmem:[%s0 + $0x40] sm:$0xff]
  %v24 = vld [vmem:[%s0 + $0x48] sm:$0xff]
  %v25 = vld [vmem:[%s0 + $0x50] sm:$0xff]
  %v26 = vld [vmem:[%s0 + $0x58] sm:$0xff]
  %v27 = vld [vmem:[%s0 + $0x60] sm:$0xff]
  %v28 = vld [vmem:[%s0 + $0x68] sm:$0xff]
  %v29 = vld [vmem:[%s0 + $0x70] sm:$0xff]
  %v30 = vld [vmem:[%s0 + $0x78] sm:$0xff]
  %v31 = vld [vmem:[%s0 + $0x80] sm:$0xff]
  %v32 = vld [vmem:[%s0 + $0x88] sm:$0xff]
  %v33 = vld [vmem:[%s0 + $0x90] sm:$0xff]
  %v34 = vld [vmem:[%s0 + $0x98] sm:$0xff]
  %v35 = vld [vmem:[%s0 + $0xa0] sm:$0xff]
  %v36 = vld [vmem:[%s0 + $0xa8] sm:$0xff]
  %v37 = vld [vmem:[%s0 + $0xb0] sm:$0xff]
  %v38 = vld [vmem:[%s0 + $0xb8] sm:$0xff]
  %v39 = vld [vmem:[%s0 + $0xc0] sm:$0xff]
  %v40 = vld [vmem:[%s0 + $0xc8] sm:$0xff]
  %v41 = vld [vmem:[%s0 + $0xd0] sm:$0xff]
  %v42 = vld [vmem:[%s0 + $0xd8] sm:$0xff]
  %v43 = vld [vmem:[%s0 + $0xe0] sm:$0xff]
  %v44 = vld [vmem:[%s0 + $0xe8] sm:$0xff]
  %v45 = vld [vmem:[%s0 + $0xf0] sm:$0xff]
  %v46 = vld [vmem:[%s0 + $0xf8] sm:$0xff]
  %v47 = vld [vmem:[%s1] sm:$0xf]
  %v48 = vld [vmem:[%s1 + $0x4] sm:$0xf]
  %v49 = vld [vmem:[%s1 + $0x8] sm:$0xf]
  %v50 = vld [vmem:[%s1 + $0xc] sm:$0xf]
  %v51 = vld [vmem:[%s1 + $0x10] sm:$0xf]
  %v52 = vld [vmem:[%s1 + $0x14] sm:$0xf]
  %v53 = vld [vmem:[%s1 + $0x18] sm:$0xf]
  %v54 = vld [vmem:[%s1 + $0x1c] sm:$0xf]
  %v55 = vld [vmem:[%s1 + $0x20] sm:$0xf]
  %v56 = vld [vmem:[%s1 + $0x24] sm:$0xf]
  %v57 = vld [vmem:[%s1 + $0x28] sm:$0xf]
  %v58 = vld [vmem:[%s1 + $0x2c] sm:$0xf]
  %v59 = vld [vmem:[%s1 + $0x30] sm:$0xf]
  %v60 = vld [vmem:[%s1 + $0x34] sm:$0xf]
  %v61 = vld [vmem:[%s1 + $0x38] sm:$0xf]
  %v62 = vld [vmem:[%s1 + $0x3c] sm:$0xf]
  %v63 = vld [vmem:[%s1 + $0x40] sm:$0xf]
  %v64 = vld [vmem:[%s1 + $0x44] sm:$0xf]
  %v65 = vld [vmem:[%s1 + $0x48] sm:$0xf]
  %v66 = vld [vmem:[%s1 + $0x4c] sm:$0xf]
  %v67 = vld [vmem:[%s1 + $0x50] sm:$0xf]
  %v68 = vld [vmem:[%s1 + $0x54] sm:$0xf]
  %v69 = vld [vmem:[%s1 + $0x58] sm:$0xf]
  %v70 = vld [vmem:[%s1 + $0x5c] sm:$0xf]
  %v71 = vld [vmem:[%s1 + $0x60] sm:$0xf]
  %v72 = vld [vmem:[%s1 + $0x64] sm:$0xf]
  %v73 = vld [vmem:[%s1 + $0x68] sm:$0xf]
  %v74 = vld [vmem:[%s1 + $0x6c] sm:$0xf]
  %v75 = vld [vmem:[%s1 + $0x70] sm:$0xf]
  %v76 = vld [vmem:[%s1 + $0x74] sm:$0xf]
  %v77 = vld [vmem:[%s1 + $0x78] sm:$0xf]
  %v78 = vld [vmem:[%s1 + $0x7c] sm:$0xf]
  %v79 = vld [vmem:[%s1 + $0x80] sm:$0xf]
  %v80 = vld [vmem:[%s1 + $0x84] sm:$0xf]
  %v81 = vld [vmem:[%s1 + $0x88] sm:$0xf]
  %v82 = vld [vmem:[%s1 + $0x8c] sm:$0xf]
  %v83 = vld [vmem:[%s1 + $0x90] sm:$0xf]
  %v84 = vld [vmem:[%s1 + $0x94] sm:$0xf]
  %v85 = vld [vmem:[%s1 + $0x98] sm:$0xf]
  %v86 = vld [vmem:[%s1 + $0x9c] sm:$0xf]
  %v87 = vld [vmem:[%s1 + $0xa0] sm:$0xf]
  %v88 = vld [vmem:[%s1 + $0xa4] sm:$0xf]
  %v89 = vld [vmem:[%s1 + $0xa8] sm:$0xf]
  %v90 = vld [vmem:[%s1 + $0xac] sm:$0xf]
  %v91 = vld [vmem:[%s1 + $0xb0] sm:$0xf]
  %v92 = vld [vmem:[%s1 + $0xb4] sm:$0xf]
  %v93 = vld [vmem:[%s1 + $0xb8] sm:$0xf]
  %v94 = vld [vmem:[%s1 + $0xbc] sm:$0xf]
  %v95 = vld [vmem:[%s1 + $0xc0] sm:$0xf]
  %v96 = vld [vmem:[%s1 + $0xc4] sm:$0xf]
  %v97 = vld [vmem:[%s1 + $0xc8] sm:$0xf]
  %v98 = vld [vmem:[%s1 + $0xcc] sm:$0xf]
  %v99 = vld [vmem:[%s1 + $0xd0] sm:$0xf]
  %v100 = vld [vmem:[%s1 + $0xd4] sm:$0xf]
  %v101 = vld [vmem:[%s1 + $0xd8] sm:$0xf]
  %v102 = vld [vmem:[%s1 + $0xdc] sm:$0xf]
  %v103 = vld [vmem:[%s1 + $0xe0] sm:$0xf]
  %v104 = vld [vmem:[%s1 + $0xe4] sm:$0xf]
  %v105 = vld [vmem:[%s1 + $0xe8] sm:$0xf]
  %v106 = vld [vmem:[%s1 + $0xec] sm:$0xf]
  %v107 = vld [vmem:[%s1 + $0xf0] sm:$0xf]
  %v108 = vld [vmem:[%s1 + $0xf4] sm:$0xf]
  %v109 = vld [vmem:[%s1 + $0xf8] sm:$0xf]
  %v110 = vld [vmem:[%s1 + $0xfc] sm:$0xf]
  %v111 = vld [vmem:[%s2] sm:$0x1]
  %v113 = vlaneseq
  %v114 = vshrl.u32 %v113, 7
  %v115 = vsub.s32 0, %v114
  %v116 = vrot.slane %v111, %v115
  %v150 = vunpack.c.l.b16 %v15
  %v151 = vunpack.c.h.b16 %v15
  %v152 = vunpack.c.l.b16 %v16
  %v153 = vunpack.c.h.b16 %v16
  %v154 = vunpack.c.l.b16 %v17
  %v155 = vunpack.c.h.b16 %v17
  %v156 = vunpack.c.l.b16 %v18
  %v157 = vunpack.c.h.b16 %v18
  %v158 = vunpack.c.l.b16 %v19
  %v159 = vunpack.c.h.b16 %v19
  %v160 = vunpack.c.l.b16 %v20
  %v161 = vunpack.c.h.b16 %v20
  %v162 = vunpack.c.l.b16 %v21
  %v163 = vunpack.c.h.b16 %v21
  %v164 = vunpack.c.l.b16 %v22
  %v165 = vunpack.c.h.b16 %v22
  %v166 = vunpack.c.l.b16 %v23
  %v167 = vunpack.c.h.b16 %v23
  %v168 = vunpack.c.l.b16 %v24
  %v169 = vunpack.c.h.b16 %v24
  %v170 = vunpack.c.l.b16 %v25
  %v171 = vunpack.c.h.b16 %v25
  %v172 = vunpack.c.l.b16 %v26
  %v173 = vunpack.c.h.b16 %v26
  %v174 = vunpack.c.l.b16 %v27
  %v175 = vunpack.c.h.b16 %v27
  %v176 = vunpack.c.l.b16 %v28
  %v177 = vunpack.c.h.b16 %v28
  %v178 = vunpack.c.l.b16 %v29
  %v179 = vunpack.c.h.b16 %v29
  %v180 = vunpack.c.l.b16 %v30
  %v181 = vunpack.c.h.b16 %v30
  %v182 = vunpack.c.l.b16 %v31
  %v183 = vunpack.c.h.b16 %v31
  %v184 = vunpack.c.l.b16 %v32
  %v185 = vunpack.c.h.b16 %v32
  %v186 = vunpack.c.l.b16 %v33
  %v187 = vunpack.c.h.b16 %v33
  %v188 = vunpack.c.l.b16 %v34
  %v189 = vunpack.c.h.b16 %v34
  %v190 = vunpack.c.l.b16 %v35
  %v191 = vunpack.c.h.b16 %v35
  %v192 = vunpack.c.l.b16 %v36
  %v193 = vunpack.c.h.b16 %v36
  %v194 = vunpack.c.l.b16 %v37
  %v195 = vunpack.c.h.b16 %v37
  %v196 = vunpack.c.l.b16 %v38
  %v197 = vunpack.c.h.b16 %v38
  %v198 = vunpack.c.l.b16 %v39
  %v199 = vunpack.c.h.b16 %v39
  %v200 = vunpack.c.l.b16 %v40
  %v201 = vunpack.c.h.b16 %v40
  %v202 = vunpack.c.l.b16 %v41
  %v203 = vunpack.c.h.b16 %v41
  %v204 = vunpack.c.l.b16 %v42
  %v205 = vunpack.c.h.b16 %v42
  %v206 = vunpack.c.l.b16 %v43
  %v207 = vunpack.c.h.b16 %v43
  %v208 = vunpack.c.l.b16 %v44
  %v209 = vunpack.c.h.b16 %v44
  %v210 = vunpack.c.l.b16 %v45
  %v211 = vunpack.c.h.b16 %v45
  %v212 = vunpack.c.l.b16 %v46
  %v213 = vunpack.c.h.b16 %v46
  %v214 = vpack.c.b16 %v154, %v150
  %v215 = vpack.c.b16 %v155, %v151
  %v216 = vpack.c.b16 %v156, %v152
  %v217 = vpack.c.b16 %v157, %v153
  %v218 = vpack.c.b16 %v162, %v158
  %v219 = vpack.c.b16 %v163, %v159
  %v220 = vpack.c.b16 %v164, %v160
  %v221 = vpack.c.b16 %v165, %v161
  %v222 = vpack.c.b16 %v170, %v166
  %v223 = vpack.c.b16 %v171, %v167
  %v224 = vpack.c.b16 %v172, %v168
  %v225 = vpack.c.b16 %v173, %v169
  %v226 = vpack.c.b16 %v178, %v174
  %v227 = vpack.c.b16 %v179, %v175
  %v228 = vpack.c.b16 %v180, %v176
  %v229 = vpack.c.b16 %v181, %v177
  %v230 = vpack.c.b16 %v186, %v182
  %v231 = vpack.c.b16 %v187, %v183
  %v232 = vpack.c.b16 %v188, %v184
  %v233 = vpack.c.b16 %v189, %v185
  %v234 = vpack.c.b16 %v194, %v190
  %v235 = vpack.c.b16 %v195, %v191
  %v236 = vpack.c.b16 %v196, %v192
  %v237 = vpack.c.b16 %v197, %v193
  %v238 = vpack.c.b16 %v202, %v198
  %v239 = vpack.c.b16 %v203, %v199
  %v240 = vpack.c.b16 %v204, %v200
  %v241 = vpack.c.b16 %v205, %v201
  %v242 = vpack.c.b16 %v210, %v206
  %v243 = vpack.c.b16 %v211, %v207
  %v244 = vpack.c.b16 %v212, %v208
  %v245 = vpack.c.b16 %v213, %v209
  %v342 = vunpack.c.l.b16 %v47
  %v343 = vunpack.c.l.b16 %v48
  %v344 = vunpack.c.l.b16 %v49
  %v345 = vunpack.c.l.b16 %v50
  %v346 = vunpack.c.l.b16 %v51
  %v347 = vunpack.c.l.b16 %v52
  %v348 = vunpack.c.l.b16 %v53
  %v349 = vunpack.c.l.b16 %v54
  %v350 = vunpack.c.l.b16 %v55
  %v351 = vunpack.c.l.b16 %v56
  %v352 = vunpack.c.l.b16 %v57
  %v353 = vunpack.c.l.b16 %v58
  %v354 = vunpack.c.l.b16 %v59
  %v355 = vunpack.c.l.b16 %v60
  %v356 = vunpack.c.l.b16 %v61
  %v357 = vunpack.c.l.b16 %v62
  %v358 = vunpack.c.l.b16 %v63
  %v359 = vunpack.c.l.b16 %v64
  %v360 = vunpack.c.l.b16 %v65
  %v361 = vunpack.c.l.b16 %v66
  %v362 = vunpack.c.l.b16 %v67
  %v363 = vunpack.c.l.b16 %v68
  %v364 = vunpack.c.l.b16 %v69
  %v365 = vunpack.c.l.b16 %v70
  %v366 = vunpack.c.l.b16 %v71
  %v367 = vunpack.c.l.b16 %v72
  %v368 = vunpack.c.l.b16 %v73
  %v369 = vunpack.c.l.b16 %v74
  %v370 = vunpack.c.l.b16 %v75
  %v371 = vunpack.c.l.b16 %v76
  %v372 = vunpack.c.l.b16 %v77
  %v373 = vunpack.c.l.b16 %v78
  %v374 = vunpack.c.l.b16 %v79
  %v375 = vunpack.c.l.b16 %v80
  %v376 = vunpack.c.l.b16 %v81
  %v377 = vunpack.c.l.b16 %v82
  %v378 = vunpack.c.l.b16 %v83
  %v379 = vunpack.c.l.b16 %v84
  %v380 = vunpack.c.l.b16 %v85
  %v381 = vunpack.c.l.b16 %v86
  %v382 = vunpack.c.l.b16 %v87
  %v383 = vunpack.c.l.b16 %v88
  %v384 = vunpack.c.l.b16 %v89
  %v385 = vunpack.c.l.b16 %v90
  %v386 = vunpack.c.l.b16 %v91
  %v387 = vunpack.c.l.b16 %v92
  %v388 = vunpack.c.l.b16 %v93
  %v389 = vunpack.c.l.b16 %v94
  %v390 = vunpack.c.l.b16 %v95
  %v391 = vunpack.c.l.b16 %v96
  %v392 = vunpack.c.l.b16 %v97
  %v393 = vunpack.c.l.b16 %v98
  %v394 = vunpack.c.l.b16 %v99
  %v395 = vunpack.c.l.b16 %v100
  %v396 = vunpack.c.l.b16 %v101
  %v397 = vunpack.c.l.b16 %v102
  %v398 = vunpack.c.l.b16 %v103
  %v399 = vunpack.c.l.b16 %v104
  %v400 = vunpack.c.l.b16 %v105
  %v401 = vunpack.c.l.b16 %v106
  %v402 = vunpack.c.l.b16 %v107
  %v403 = vunpack.c.l.b16 %v108
  %v404 = vunpack.c.l.b16 %v109
  %v405 = vunpack.c.l.b16 %v110
  %v406 = vpack.c.b16 %v343, %v342
  %v407 = vpack.c.b16 %v345, %v344
  %v408 = vpack.c.b16 %v347, %v346
  %v409 = vpack.c.b16 %v349, %v348
  %v410 = vpack.c.b16 %v351, %v350
  %v411 = vpack.c.b16 %v353, %v352
  %v412 = vpack.c.b16 %v355, %v354
  %v413 = vpack.c.b16 %v357, %v356
  %v414 = vpack.c.b16 %v359, %v358
  %v415 = vpack.c.b16 %v361, %v360
  %v416 = vpack.c.b16 %v363, %v362
  %v417 = vpack.c.b16 %v365, %v364
  %v418 = vpack.c.b16 %v367, %v366
  %v419 = vpack.c.b16 %v369, %v368
  %v420 = vpack.c.b16 %v371, %v370
  %v421 = vpack.c.b16 %v373, %v372
  %v422 = vpack.c.b16 %v375, %v374
  %v423 = vpack.c.b16 %v377, %v376
  %v424 = vpack.c.b16 %v379, %v378
  %v425 = vpack.c.b16 %v381, %v380
  %v426 = vpack.c.b16 %v383, %v382
  %v427 = vpack.c.b16 %v385, %v384
  %v428 = vpack.c.b16 %v387, %v386
  %v429 = vpack.c.b16 %v389, %v388
  %v430 = vpack.c.b16 %v391, %v390
  %v431 = vpack.c.b16 %v393, %v392
  %v432 = vpack.c.b16 %v395, %v394
  %v433 = vpack.c.b16 %v397, %v396
  %v434 = vpack.c.b16 %v399, %v398
  %v435 = vpack.c.b16 %v401, %v400
  %v436 = vpack.c.b16 %v403, %v402
  %v437 = vpack.c.b16 %v405, %v404
  %470 = vmatprep.subr.bf16.mxu0 0
  %471 = vmatpush1.bf16.msra.mxu0 %v406
  %472 = vmatprep.subr.bf16.mxu0 0
  %473 = vmatpush1.bf16.msra.mxu0 %v407
  %474 = vmatprep.subr.bf16.mxu0 0
  %475 = vmatpush1.bf16.msra.mxu0 %v408
  %476 = vmatprep.subr.bf16.mxu0 0
  %477 = vmatpush1.bf16.msra.mxu0 %v409
  %478 = vmatprep.subr.bf16.mxu0 0
  %479 = vmatpush1.bf16.msra.mxu0 %v410
  %480 = vmatprep.subr.bf16.mxu0 0
  %481 = vmatpush1.bf16.msra.mxu0 %v411
  %482 = vmatprep.subr.bf16.mxu0 0
  %483 = vmatpush1.bf16.msra.mxu0 %v412
  %484 = vmatprep.subr.bf16.mxu0 0
  %485 = vmatpush1.bf16.msra.mxu0 %v413
  %486 = vmatprep.subr.bf16.mxu0 0
  %487 = vmatpush1.bf16.msra.mxu0 %v414
  %488 = vmatprep.subr.bf16.mxu0 0
  %489 = vmatpush1.bf16.msra.mxu0 %v415
  %490 = vmatprep.subr.bf16.mxu0 0
  %491 = vmatpush1.bf16.msra.mxu0 %v416
  %492 = vmatprep.subr.bf16.mxu0 0
  %493 = vmatpush1.bf16.msra.mxu0 %v417
  %494 = vmatprep.subr.bf16.mxu0 0
  %495 = vmatpush1.bf16.msra.mxu0 %v418
  %496 = vmatprep.subr.bf16.mxu0 0
  %497 = vmatpush1.bf16.msra.mxu0 %v419
  %498 = vmatprep.subr.bf16.mxu0 0
  %499 = vmatpush1.bf16.msra.mxu0 %v420
  %500 = vmatprep.subr.bf16.mxu0 0
  %501 = vmatpush1.bf16.msra.mxu0 %v421
  %502 = vmatprep.mubr.bf16.mxu0 %v215
  %503 = vmatmul.mubr.bf16.gmra.mrb[0].mxu0 %v214
  %v504 = vpop.f32.mrb[0].mxu0
  %v505 = vadd.f32 %v116, %v504
  %v506 = vpop.f32.mrb[0].mxu0
  %v507 = vpop.f32.mrb[0].mxu0
  %v508 = vadd.f32 %v116, %v507
  %v509 = vpop.f32.mrb[0].mxu0
  %510 = vmatprep.mubr.bf16.mxu0 %v219
  %511 = vmatmul.mubr.bf16.gmra.mrb[0].mxu0 %v218
  %v512 = vpop.f32.mrb[0].mxu0
  %v513 = vadd.f32 %v116, %v512
  %v514 = vpop.f32.mrb[0].mxu0
  %v515 = vpop.f32.mrb[0].mxu0
  %v516 = vadd.f32 %v116, %v515
  %v517 = vpop.f32.mrb[0].mxu0
  %518 = vmatprep.mubr.bf16.mxu0 %v223
  %519 = vmatmul.mubr.bf16.gmra.mrb[0].mxu0 %v222
  %v520 = vpop.f32.mrb[0].mxu0
  %v521 = vadd.f32 %v116, %v520
  %v522 = vpop.f32.mrb[0].mxu0
  %v523 = vpop.f32.mrb[0].mxu0
  %v524 = vadd.f32 %v116, %v523
  %v525 = vpop.f32.mrb[0].mxu0
  %526 = vmatprep.mubr.bf16.mxu0 %v227
  %527 = vmatmul.mubr.bf16.gmra.mrb[0].mxu0 %v226
  %v528 = vpop.f32.mrb[0].mxu0
  %v529 = vadd.f32 %v116, %v528
  %v530 = vpop.f32.mrb[0].mxu0
  %v531 = vpop.f32.mrb[0].mxu0
  %v532 = vadd.f32 %v116, %v531
  %v533 = vpop.f32.mrb[0].mxu0
  %534 = vmatprep.mubr.bf16.mxu0 %v231
  %535 = vmatmul.mubr.bf16.gmra.mrb[0].mxu0 %v230
  %v536 = vpop.f32.mrb[0].mxu0
  %v537 = vadd.f32 %v116, %v536
  %v538 = vpop.f32.mrb[0].mxu0
  %v539 = vpop.f32.mrb[0].mxu0
  %v540 = vadd.f32 %v116, %v539
  %v541 = vpop.f32.mrb[0].mxu0
  %542 = vmatprep.mubr.bf16.mxu0 %v235
  %543 = vmatmul.mubr.bf16.gmra.mrb[0].mxu0 %v234
  %v544 = vpop.f32.mrb[0].mxu0
  %v545 = vadd.f32 %v116, %v544
  %v546 = vpop.f32.mrb[0].mxu0
  %v547 = vpop.f32.mrb[0].mxu0
  %v548 = vadd.f32 %v116, %v547
  %v549 = vpop.f32.mrb[0].mxu0
  %550 = vmatprep.mubr.bf16.mxu0 %v239
  %551 = vmatmul.mubr.bf16.gmra.mrb[0].mxu0 %v238
  %v552 = vpop.f32.mrb[0].mxu0
  %v553 = vadd.f32 %v116, %v552
  %v554 = vpop.f32.mrb[0].mxu0
  %v555 = vpop.f32.mrb[0].mxu0
  %v556 = vadd.f32 %v116, %v555
  %v557 = vpop.f32.mrb[0].mxu0
  %558 = vmatprep.mubr.bf16.mxu0 %v243
  %559 = vmatmul.mubr.bf16.gmra.mrb[0].mxu0 %v242
  %v560 = vpop.f32.mrb[0].mxu0
  %v561 = vadd.f32 %v116, %v560
  %v562 = vpop.f32.mrb[0].mxu0
  %v563 = vpop.f32.mrb[0].mxu0
  %v564 = vadd.f32 %v116, %v563
  %v565 = vpop.f32.mrb[0].mxu0
  %566 = vdwg.mxu0
  %567 = vmatprep.subr.bf16.mxu0 0
  %568 = vmatpush1.bf16.msra.mxu0 %v422
  %569 = vmatprep.subr.bf16.mxu0 0
  %570 = vmatpush1.bf16.msra.mxu0 %v423
  %571 = vmatprep.subr.bf16.mxu0 0
  %572 = vmatpush1.bf16.msra.mxu0 %v424
  %573 = vmatprep.subr.bf16.mxu0 0
  %574 = vmatpush1.bf16.msra.mxu0 %v425
  %575 = vmatprep.subr.bf16.mxu0 0
  %576 = vmatpush1.bf16.msra.mxu0 %v426
  %577 = vmatprep.subr.bf16.mxu0 0
  %578 = vmatpush1.bf16.msra.mxu0 %v427
  %579 = vmatprep.subr.bf16.mxu0 0
  %580 = vmatpush1.bf16.msra.mxu0 %v428
  %581 = vmatprep.subr.bf16.mxu0 0
  %582 = vmatpush1.bf16.msra.mxu0 %v429
  %583 = vmatprep.subr.bf16.mxu0 0
  %584 = vmatpush1.bf16.msra.mxu0 %v430
  %585 = vmatprep.subr.bf16.mxu0 0
  %586 = vmatpush1.bf16.msra.mxu0 %v431
  %587 = vmatprep.subr.bf16.mxu0 0
  %588 = vmatpush1.bf16.msra.mxu0 %v432
  %589 = vmatprep.subr.bf16.mxu0 0
  %590 = vmatpush1.bf16.msra.mxu0 %v433
  %591 = vmatprep.subr.bf16.mxu0 0
  %592 = vmatpush1.bf16.msra.mxu0 %v434
  %593 = vmatprep.subr.bf16.mxu0 0
  %594 = vmatpush1.bf16.msra.mxu0 %v435
  %595 = vmatprep.subr.bf16.mxu0 0
  %596 = vmatpush1.bf16.msra.mxu0 %v436
  %597 = vmatprep.subr.bf16.mxu0 0
  %598 = vmatpush1.bf16.msra.mxu0 %v437
  %599 = vmatprep.mubr.bf16.mxu0 %v217
  %600 = vmatmul.mubr.bf16.gmra.mrb[0].mxu0 %v216
  %v601 = vpop.f32.mrb[0].mxu0
  %v602 = vadd.f32 %v505, %v601
  %v603 = vpop.f32.mrb[0].mxu0
  %v604 = vpop.f32.mrb[0].mxu0
  %v605 = vadd.f32 %v508, %v604
  %v606 = vpop.f32.mrb[0].mxu0
  %607 = vmatprep.mubr.bf16.mxu0 %v221
  %608 = vmatmul.mubr.bf16.gmra.mrb[0].mxu0 %v220
  %v609 = vpop.f32.mrb[0].mxu0
  %v610 = vadd.f32 %v513, %v609
  %v611 = vpop.f32.mrb[0].mxu0
  %v612 = vpop.f32.mrb[0].mxu0
  %v613 = vadd.f32 %v516, %v612
  %v614 = vpop.f32.mrb[0].mxu0
  %615 = vmatprep.mubr.bf16.mxu0 %v225
  %616 = vmatmul.mubr.bf16.gmra.mrb[0].mxu0 %v224
  %v617 = vpop.f32.mrb[0].mxu0
  %v618 = vadd.f32 %v521, %v617
  %v619 = vpop.f32.mrb[0].mxu0
  %v620 = vpop.f32.mrb[0].mxu0
  %v621 = vadd.f32 %v524, %v620
  %v622 = vpop.f32.mrb[0].mxu0
  %623 = vmatprep.mubr.bf16.mxu0 %v229
  %624 = vmatmul.mubr.bf16.gmra.mrb[0].mxu0 %v228
  %v625 = vpop.f32.mrb[0].mxu0
  %v626 = vadd.f32 %v529, %v625
  %v627 = vpop.f32.mrb[0].mxu0
  %v628 = vpop.f32.mrb[0].mxu0
  %v629 = vadd.f32 %v532, %v628
  %v630 = vpop.f32.mrb[0].mxu0
  %631 = vmatprep.mubr.bf16.mxu0 %v233
  %632 = vmatmul.mubr.bf16.gmra.mrb[0].mxu0 %v232
  %v633 = vpop.f32.mrb[0].mxu0
  %v634 = vadd.f32 %v537, %v633
  %v635 = vpop.f32.mrb[0].mxu0
  %v636 = vpop.f32.mrb[0].mxu0
  %v637 = vadd.f32 %v540, %v636
  %v638 = vpop.f32.mrb[0].mxu0
  %639 = vmatprep.mubr.bf16.mxu0 %v237
  %640 = vmatmul.mubr.bf16.gmra.mrb[0].mxu0 %v236
  %v641 = vpop.f32.mrb[0].mxu0
  %v642 = vadd.f32 %v545, %v641
  %v643 = vpop.f32.mrb[0].mxu0
  %v644 = vpop.f32.mrb[0].mxu0
  %v645 = vadd.f32 %v548, %v644
  %v646 = vpop.f32.mrb[0].mxu0
  %647 = vmatprep.mubr.bf16.mxu0 %v241
  %648 = vmatmul.mubr.bf16.gmra.mrb[0].mxu0 %v240
  %v649 = vpop.f32.mrb[0].mxu0
  %v650 = vadd.f32 %v553, %v649
  %v651 = vpop.f32.mrb[0].mxu0
  %v652 = vpop.f32.mrb[0].mxu0
  %v653 = vadd.f32 %v556, %v652
  %v654 = vpop.f32.mrb[0].mxu0
  %655 = vmatprep.mubr.bf16.mxu0 %v245
  %656 = vmatmul.mubr.bf16.gmra.mrb[0].mxu0 %v244
  %v657 = vpop.f32.mrb[0].mxu0
  %v658 = vadd.f32 %v561, %v657
  %v659 = vpop.f32.mrb[0].mxu0
  %v660 = vpop.f32.mrb[0].mxu0
  %v661 = vadd.f32 %v564, %v660
  %v662 = vpop.f32.mrb[0].mxu0
  %663 = vdwg.mxu0
  %v664 = vmax.f32 %v602, 0.0
  %v665 = vmax.f32 %v605, 0.0
  %v666 = vmax.f32 %v610, 0.0
  %v667 = vmax.f32 %v613, 0.0
  %v668 = vmax.f32 %v618, 0.0
  %v669 = vmax.f32 %v621, 0.0
  %v670 = vmax.f32 %v626, 0.0
  %v671 = vmax.f32 %v629, 0.0
  %v672 = vmax.f32 %v634, 0.0
  %v673 = vmax.f32 %v637, 0.0
  %v674 = vmax.f32 %v642, 0.0
  %v675 = vmax.f32 %v645, 0.0
  %v676 = vmax.f32 %v650, 0.0
  %v677 = vmax.f32 %v653, 0.0
  %v678 = vmax.f32 %v658, 0.0
  %v679 = vmax.f32 %v661, 0.0
  %680 = vst [vmem:[%s3] sm:$0xff] %v664
  %681 = vst [vmem:[%s3 + $0x8] sm:$0xff] %v665
  %682 = vst [vmem:[%s3 + $0x10] sm:$0xff] %v666
  %683 = vst [vmem:[%s3 + $0x18] sm:$0xff] %v667
  %684 = vst [vmem:[%s3 + $0x20] sm:$0xff] %v668
  %685 = vst [vmem:[%s3 + $0x28] sm:$0xff] %v669
  %686 = vst [vmem:[%s3 + $0x30] sm:$0xff] %v670
  %687 = vst [vmem:[%s3 + $0x38] sm:$0xff] %v671
  %688 = vst [vmem:[%s3 + $0x40] sm:$0xff] %v672
  %689 = vst [vmem:[%s3 + $0x48] sm:$0xff] %v673
  %690 = vst [vmem:[%s3 + $0x50] sm:$0xff] %v674
  %691 = vst [vmem:[%s3 + $0x58] sm:$0xff] %v675
  %692 = vst [vmem:[%s3 + $0x60] sm:$0xff] %v676
  %693 = vst [vmem:[%s3 + $0x68] sm:$0xff] %v677
  %694 = vst [vmem:[%s3 + $0x70] sm:$0xff] %v678
  %695 = vst [vmem:[%s3 + $0x78] sm:$0xff] %v679
  // Predicated region
  $region14: #{decoder_forward.10} parent=0 // pred_check
    _
  $region15: #{decoder_forward.10} parent=0 // pred_check_branch
    %697 = sbr.rel (0) target = $region17
  $region16: #{decoder_forward.10} parent=0 // pred_region
    _
  $region17: #{decoder_forward.10} parent=0 // pred_fallthru
    _
  // Predicated region
  $region18: #{decoder_forward.10} parent=0 // pred_check
    _
  $region19: #{decoder_forward.10} parent=0 // pred_check_branch
    %699 = sbr.rel (0) target = $region21
  $region20: #{decoder_forward.10} parent=0 // pred_region
    _
  $region21: #{decoder_forward.10} parent=0 // pred_fallthru
    _

// kernel: tile.28
$region0: #{tile.28}
  #allocation0 [shape = 's32[1]{0}', space=sflag, size = 0x4, scoped, tag = 'scoped memory for tile.28']
  %s0 = inlined_call_operand.vmem [shape: f32[5], index: 0, kind: input, shape index: {}]
  %s1 = inlined_call_operand.vmem [shape: f32[4,5], index: 1, kind: output, shape index: {}]
  // Predicated region
  $region2: #{tile.28} parent=0 // pred_check
    _
  $region3: #{tile.28} parent=0 // pred_check_branch
    %3 = sbr.rel (0) target = $region5
  $region4: #{tile.28} parent=0 // pred_region
    _
  $region5: #{tile.28} parent=0 // pred_fallthru
    _
  %v4 = vld [vmem:[%s0] ss:$0 sm:$0xff]
  %5 = vst [vmem:[%s1] sm:$0xf] %v4

// kernel: tile.29
$region0: #{tile.29}
  %s0 = inlined_call_operand.vmem [shape: f32[4,5], index: 0, kind: input, shape index: {}]
  %s1 = inlined_call_operand.vmem [shape: f32[1,20], index: 1, kind: output, shape index: {}]
  $region1: #{tile.29} parent=0
    #allocation0 [shape = 'u8[4096]{0}', space=vmem, size = 0x1000, scoped, tag = 'scoped mem for output reshape']
    #allocation1 [shape = 'u8[4096]{0}', space=vmem, size = 0x1000, scoped, tag = 'scoped mem for input reshape']
    %s3 = sshllo.u32 0, 4
    %v4 = vld [vmem:[%s0] sm:%s3]
    %5 = vst [vmem:[#allocation1] sm:%s3] %v4
    %v6 = vld [vmem:[#allocation1] sm:$0x1]
    %vm7 = vcmask 39936
    %8 = vst.msk [vmem:[#allocation0] sm:$0x1] %vm7, %v6
    %s9 = scalar_lea.vmem [#allocation1], 3
    %v10 = vld [vmem:[%s9] sm:$0x1]
    %11 = vrot.lane.b32.xlu0 %v10, 15
    %v12 = vpop.permute.xlu0 %11
    %vm13 = vcmask 162936
    %14 = vst.msk [vmem:[#allocation0] sm:$0x1] %vm13, %v12
    %s15 = scalar_lea.vmem [#allocation1], 2
    %v16 = vld [vmem:[%s15] sm:$0x1]
    %17 = vrot.lane.b32.xlu0 %v16, 10
    %v18 = vpop.permute.xlu0 %17
    %vm19 = vcmask 121936
    %20 = vst.msk [vmem:[#allocation0] sm:$0x1] %vm19, %v18
    %s21 = scalar_lea.vmem [#allocation1], 1
    %v22 = vld [vmem:[%s21] sm:$0x1]
    %23 = vrot.lane.b32.xlu0 %v22, 5
    %v24 = vpop.permute.xlu0 %23
    %vm25 = vcmask 80936
    %26 = vst.msk [vmem:[#allocation0] sm:$0x1] %vm25, %v24
    %s28 = sshllo.u32 0, 1
    %v30 = vld [vmem:[#allocation0] sm:%s28]
    %s31 = sshllo.u32 0, 1
    %32 = vst [vmem:[%s1] sm:%s31] %v30

// kernel: decoder_forward.13
$region0: #{decoder_forward.13}
  #allocation0 [shape = 'u32[]', space=smem, size = 0x4, offset = 0x4, fixed_abs, tag = 'smem constant byte address 0x4 - core index']
  #allocation1 [shape = 'u32[144,128]{1,0:T(1,128)}', space=vmem, size = 0x12000, scoped, tag = 'internal scratch']
  %s0 = inlined_call_operand.vmem [shape: bf16[512,128], index: 0, kind: input, shape index: {}]
  %s1 = inlined_call_operand.vmem [shape: bf16[128,128], index: 1, kind: input, shape index: {}]
  %s2 = inlined_call_operand.vmem [shape: f32[1,128], index: 2, kind: input, shape index: {}]
  %s3 = inlined_call_operand.vmem [shape: f32[512,128], index: 3, kind: output, shape index: {}]
  %s4 = sld [smem:[#allocation0]]
  $region45: #{decoder_forward.13} parent=0
    _
  %s6 = ssub.s32 1, %s4
  %s7 = scalar_select 0, %s6, %s4
  loop: start=0, step=1, limit=4
  $region2: #{decoder_forward.13} parent=0 // loop_pre_header
    _
  $region3: #{decoder_forward.13} parent=0 // loop_header
    %s9 = sphi 0, %s13
    %p10 = scmp.ge.s32.totalorder %s9, 4
    %s19 = sphi 0, %s21
    %s22 = sphi 0, %s19
    %s23 = sphi 0, %s22
    %s39 = sphi 0, %s23
    %s43 = sphi 0, %s43
    %s45 = sphi 0, %s43
    %s46 = sphi 0, %s45
    %s60 = sphi 0, %s46
    %s64 = sphi 0, %s64
    %s66 = sphi 0, %s64
    %s67 = sphi 0, %s66
    %s81 = sphi 0, %s67
    %s87 = sphi 0, %s89
    %s90 = sphi 0, %s87
    %s91 = sphi 0, %s90
    %s107 = sphi 0, %s91
  $region4: #{decoder_forward.13} parent=0 // loop_header_branch
    %12 = sbr.rel (%p10) target = $region8
  $region5: #{decoder_forward.13} parent=0 // loop_body
    %s14 = ssub.s32 %s9, 1
    %s15 = ssub.s32 %s9, 2
    %s16 = sadd.s32 %s9, 1
    %s17 = ssub.s32 %s9, %s16
    %p18 = scmp.eq.s32.totalorder %s17, 0
    %s20 = sadd.s32 %s19, 1
    %s21 = scalar_select %p18, %s19, %s20
    %p24 = pneg %p18
    %p25 = scmp.eq.s32.totalorder %s9, 1
    %p26 = por %p24, %p25
    %p27 = scmp.ne.s32.totalorder %s19, %s22
    %p28 = scmp.eq.s32.totalorder %s9, 0
    %p29 = por %p27, %p28
    %p30 = scmp.ne.s32.totalorder %s19, %s22
    %p31 = scmp.eq.s32.totalorder %s14, 1
    %p32 = por %p30, %p31
    %p33 = scmp.ne.s32.totalorder %s22, %s23
    %p34 = scmp.eq.s32.totalorder %s14, 0
    %p35 = por %p33, %p34
    %p36 = scmp.ne.s32.totalorder %s22, %s23
    %p37 = scmp.eq.s32.totalorder %s15, 1
    %p38 = por %p36, %p37
    %p40 = scmp.ne.s32.totalorder %s23, %s39
    %p41 = scmp.eq.s32.totalorder %s15, 0
    %p42 = por %p40, %p41
    %s44 = sadd.s32 %s43, 1
    %p47 = scmp.eq.s32.totalorder %s9, 1
    %p48 = scmp.ne.s32.totalorder %s43, %s45
    %p49 = scmp.eq.s32.totalorder %s9, 0
    %p50 = por %p48, %p49
    %p51 = scmp.ne.s32.totalorder %s43, %s45
    %p52 = scmp.eq.s32.totalorder %s14, 1
    %p53 = por %p51, %p52
    %p54 = scmp.ne.s32.totalorder %s45, %s46
    %p55 = scmp.eq.s32.totalorder %s14, 0
    %p56 = por %p54, %p55
    %p57 = scmp.ne.s32.totalorder %s45, %s46
    %p58 = scmp.eq.s32.totalorder %s15, 1
    %p59 = por %p57, %p58
    %p61 = scmp.ne.s32.totalorder %s46, %s60
    %p62 = scmp.eq.s32.totalorder %s15, 0
    %p63 = por %p61, %p62
    %s65 = sadd.s32 %s64, 1
    %p68 = scmp.eq.s32.totalorder %s9, 1
    %p69 = scmp.ne.s32.totalorder %s64, %s66
    %p70 = scmp.eq.s32.totalorder %s9, 0
    %p71 = por %p69, %p70
    %p72 = scmp.ne.s32.totalorder %s64, %s66
    %p73 = scmp.eq.s32.totalorder %s14, 1
    %p74 = por %p72, %p73
    %p75 = scmp.ne.s32.totalorder %s66, %s67
    %p76 = scmp.eq.s32.totalorder %s14, 0
    %p77 = por %p75, %p76
    %p78 = scmp.ne.s32.totalorder %s66, %s67
    %p79 = scmp.eq.s32.totalorder %s15, 1
    %p80 = por %p78, %p79
    %p82 = scmp.ne.s32.totalorder %s67, %s81
    %p83 = scmp.eq.s32.totalorder %s15, 0
    %p84 = por %p82, %p83
    %s85 = ssub.s32 %s9, %s16
    %p86 = scmp.eq.s32.totalorder %s85, 0
    %s88 = sadd.s32 %s87, 1
    %s89 = scalar_select %p86, %s87, %s88
    %p92 = pneg %p86
    %p93 = scmp.eq.s32.totalorder %s9, 1
    %p94 = por %p92, %p93
    %p95 = scmp.ne.s32.totalorder %s87, %s90
    %p96 = scmp.eq.s32.totalorder %s9, 0
    %p97 = por %p95, %p96
    %p98 = scmp.ne.s32.totalorder %s87, %s90
    %p99 = scmp.eq.s32.totalorder %s14, 1
    %p100 = por %p98, %p99
    %p101 = scmp.ne.s32.totalorder %s90, %s91
    %p102 = scmp.eq.s32.totalorder %s14, 0
    %p103 = por %p101, %p102
    %p104 = scmp.ne.s32.totalorder %s90, %s91
    %p105 = scmp.eq.s32.totalorder %s15, 1
    %p106 = por %p104, %p105
    %p108 = scmp.ne.s32.totalorder %s91, %s107
    %p109 = scmp.eq.s32.totalorder %s15, 0
    %p110 = por %p108, %p109
    %p111 = scmp.le.s32.totalorder 1, %s9
    %p112 = scmp.lt.s32.totalorder %s9, 3
    %p113 = pnand %p111, %p112
    %p114 = pneg %p113
    // Predicated region
    $region9: #{decoder_forward.13} parent=5 // pred_check
      _
    $region10: #{decoder_forward.13} parent=5 // pred_check_branch
      %116 = sbr.rel (%p113) target = $region12
    $region11: #{decoder_forward.13} parent=5 // pred_region
      %s117 = ssub.s32 %s9, 1
      // Predicated region
      $region13: #{decoder_forward.13} parent=11 // pred_check
        %p118 = pneg %p56
      $region14: #{decoder_forward.13} parent=11 // pred_check_branch
        %120 = sbr.rel (%p118) target = $region16
      $region15: #{decoder_forward.13} parent=11 // pred_region
        _
      $region16: #{decoder_forward.13} parent=11 // pred_fallthru
        _
      // Predicated region
      $region17: #{decoder_forward.13} parent=11 // pred_check
        %p121 = pneg %p77
      $region18: #{decoder_forward.13} parent=11 // pred_check_branch
        %123 = sbr.rel (%p121) target = $region20
      $region19: #{decoder_forward.13} parent=11 // pred_region
        _
      $region20: #{decoder_forward.13} parent=11 // pred_fallthru
        _
    $region12: #{decoder_forward.13} parent=5 // pred_fallthru
      _
    %p124 = scmp.lt.s32.totalorder %s9, 2
    // Predicated region
    $region21: #{decoder_forward.13} parent=5 // pred_check
      %p125 = pneg %p124
    $region22: #{decoder_forward.13} parent=5 // pred_check_branch
      %127 = sbr.rel (%p125) target = $region24
    $region23: #{decoder_forward.13} parent=5 // pred_region
      // Predicated region
      $region25: #{decoder_forward.13} parent=23 // pred_check
        %p128 = pneg %p29
      $region26: #{decoder_forward.13} parent=23 // pred_check_branch
        %130 = sbr.rel (%p128) target = $region28
      $region27: #{decoder_forward.13} parent=23 // pred_region
        %s131 = smul.u32 32, %s9
        %p132 = scmp.lt.s32.totalorder %s131, 63
        %s133 = scalar_select %p132, %s131, 63
        %s134 = smul.addr %s133, 4
        %s135 = scalar_lea.vmem %s0, %s134
        %s136 = smul.u32 32, %s9
      $region28: #{decoder_forward.13} parent=23 // pred_fallthru
        _
    $region24: #{decoder_forward.13} parent=5 // pred_fallthru
      _
    %p137 = scmp.le.s32.totalorder 1, %s9
    %p138 = scmp.lt.s32.totalorder %s9, 3
    %p139 = pnand %p137, %p138
    %p140 = pneg %p139
    // Predicated region
    $region29: #{decoder_forward.13} parent=5 // pred_check
      _
    $region30: #{decoder_forward.13} parent=5 // pred_check_branch
      %142 = sbr.rel (%p139) target = $region32
    $region31: #{decoder_forward.13} parent=5 // pred_region
      %s143 = ssub.s32 %s9, 1
      %s144 = smul.u32 32, %s14
      %p145 = scmp.lt.s32.totalorder %s144, 63
      %s146 = scalar_select %p145, %s144, 63
      %s147 = smul.addr %s146, 4
      %s148 = scalar_lea.vmem %s0, %s147
      %p149 = pneg %p35
      %p150 = pneg %p32
      %p151 = pneg %p56
      %p152 = pneg %p53
      %p153 = pneg %p77
      %p154 = pneg %p74
      %p155 = pneg %p103
      %p156 = pneg %p100
      %s157 = smul.u32 32, %s14
      %p158 = scmp.lt.s32.totalorder %s157, 63
      %s159 = scalar_select %p158, %s157, 63
      %s160 = smul.addr %s159, 8
      %s161 = scalar_lea.vmem %s3, %s160
      %s162 = smul.u32 32, %s14
      %p163 = scmp.lt.s32.totalorder %s162, 63
      %s164 = scalar_select %p163, %s162, 63
      %s165 = smul.addr %s164, 4
      %s166 = scalar_lea.vmem %s0, %s165
      %s167 = smul.u32 32, %s14
      %s168 = smul.u32 32, %s14
      %p169 = scmp.lt.s32.totalorder %s168, 63
      %s170 = scalar_select %p169, %s168, 63
      %s171 = smul.addr %s170, 8
      %s172 = scalar_lea.vmem %s3, %s171
      %s173 = smul.u32 32, %s14
      %v175 = vld [vmem:[%s166] sm:$0xf]
      %v176 = vld [vmem:[%s166 + $0x4] sm:$0xf]
      %v177 = vld [vmem:[%s166 + $0x8] sm:$0xf]
      %v178 = vld [vmem:[%s166 + $0xc] sm:$0xf]
      %v179 = vld [vmem:[%s166 + $0x10] sm:$0xf]
      %v180 = vld [vmem:[%s166 + $0x14] sm:$0xf]
      %v181 = vld [vmem:[%s166 + $0x18] sm:$0xf]
      %v182 = vld [vmem:[%s166 + $0x1c] sm:$0xf]
      %v183 = vld [vmem:[%s166 + $0x20] sm:$0xf]
      %v184 = vld [vmem:[%s166 + $0x24] sm:$0xf]
      %v185 = vld [vmem:[%s166 + $0x28] sm:$0xf]
      %v186 = vld [vmem:[%s166 + $0x2c] sm:$0xf]
      %v187 = vld [vmem:[%s166 + $0x30] sm:$0xf]
      %v188 = vld [vmem:[%s166 + $0x34] sm:$0xf]
      %v189 = vld [vmem:[%s166 + $0x38] sm:$0xf]
      %v190 = vld [vmem:[%s166 + $0x3c] sm:$0xf]
      %v191 = vld [vmem:[%s166 + $0x40] sm:$0xf]
      %v192 = vld [vmem:[%s166 + $0x44] sm:$0xf]
      %v193 = vld [vmem:[%s166 + $0x48] sm:$0xf]
      %v194 = vld [vmem:[%s166 + $0x4c] sm:$0xf]
      %v195 = vld [vmem:[%s166 + $0x50] sm:$0xf]
      %v196 = vld [vmem:[%s166 + $0x54] sm:$0xf]
      %v197 = vld [vmem:[%s166 + $0x58] sm:$0xf]
      %v198 = vld [vmem:[%s166 + $0x5c] sm:$0xf]
      %v199 = vld [vmem:[%s166 + $0x60] sm:$0xf]
      %v200 = vld [vmem:[%s166 + $0x64] sm:$0xf]
      %v201 = vld [vmem:[%s166 + $0x68] sm:$0xf]
      %v202 = vld [vmem:[%s166 + $0x6c] sm:$0xf]
      %v203 = vld [vmem:[%s166 + $0x70] sm:$0xf]
      %v204 = vld [vmem:[%s166 + $0x74] sm:$0xf]
      %v205 = vld [vmem:[%s166 + $0x78] sm:$0xf]
      %v206 = vld [vmem:[%s166 + $0x7c] sm:$0xf]
      %v207 = vld [vmem:[%s1] sm:$0xf]
      %v208 = vld [vmem:[%s1 + $0x4] sm:$0xf]
      %v209 = vld [vmem:[%s1 + $0x8] sm:$0xf]
      %v210 = vld [vmem:[%s1 + $0xc] sm:$0xf]
      %v211 = vld [vmem:[%s1 + $0x10] sm:$0xf]
      %v212 = vld [vmem:[%s1 + $0x14] sm:$0xf]
      %v213 = vld [vmem:[%s1 + $0x18] sm:$0xf]
      %v214 = vld [vmem:[%s1 + $0x1c] sm:$0xf]
      %v215 = vld [vmem:[%s1 + $0x20] sm:$0xf]
      %v216 = vld [vmem:[%s1 + $0x24] sm:$0xf]
      %v217 = vld [vmem:[%s1 + $0x28] sm:$0xf]
      %v218 = vld [vmem:[%s1 + $0x2c] sm:$0xf]
      %v219 = vld [vmem:[%s1 + $0x30] sm:$0xf]
      %v220 = vld [vmem:[%s1 + $0x34] sm:$0xf]
      %v221 = vld [vmem:[%s1 + $0x38] sm:$0xf]
      %v222 = vld [vmem:[%s1 + $0x3c] sm:$0xf]
      %v223 = vld [vmem:[%s2] sm:$0x1]
      %v225 = vlaneseq
      %v226 = vshrl.u32 %v225, 7
      %v227 = vsub.s32 0, %v226
      %v228 = vrot.slane %v223, %v227
      %v262 = vunpack.c.l.b16 %v175
      %v263 = vunpack.c.l.b16 %v176
      %v264 = vunpack.c.l.b16 %v177
      %v265 = vunpack.c.l.b16 %v178
      %v266 = vunpack.c.l.b16 %v179
      %v267 = vunpack.c.l.b16 %v180
      %v268 = vunpack.c.l.b16 %v181
      %v269 = vunpack.c.l.b16 %v182
      %v270 = vunpack.c.l.b16 %v183
      %v271 = vunpack.c.l.b16 %v184
      %v272 = vunpack.c.l.b16 %v185
      %v273 = vunpack.c.l.b16 %v186
      %v274 = vunpack.c.l.b16 %v187
      %v275 = vunpack.c.l.b16 %v188
      %v276 = vunpack.c.l.b16 %v189
      %v277 = vunpack.c.l.b16 %v190
      %v278 = vunpack.c.l.b16 %v191
      %v279 = vunpack.c.l.b16 %v192
      %v280 = vunpack.c.l.b16 %v193
      %v281 = vunpack.c.l.b16 %v194
      %v282 = vunpack.c.l.b16 %v195
      %v283 = vunpack.c.l.b16 %v196
      %v284 = vunpack.c.l.b16 %v197
      %v285 = vunpack.c.l.b16 %v198
      %v286 = vunpack.c.l.b16 %v199
      %v287 = vunpack.c.l.b16 %v200
      %v288 = vunpack.c.l.b16 %v201
      %v289 = vunpack.c.l.b16 %v202
      %v290 = vunpack.c.l.b16 %v203
      %v291 = vunpack.c.l.b16 %v204
      %v292 = vunpack.c.l.b16 %v205
      %v293 = vunpack.c.l.b16 %v206
      %v294 = vpack.c.b16 %v263, %v262
      %v295 = vpack.c.b16 %v265, %v264
      %v296 = vpack.c.b16 %v267, %v266
      %v297 = vpack.c.b16 %v269, %v268
      %v298 = vpack.c.b16 %v271, %v270
      %v299 = vpack.c.b16 %v273, %v272
      %v300 = vpack.c.b16 %v275, %v274
      %v301 = vpack.c.b16 %v277, %v276
      %v302 = vpack.c.b16 %v279, %v278
      %v303 = vpack.c.b16 %v281, %v280
      %v304 = vpack.c.b16 %v283, %v282
      %v305 = vpack.c.b16 %v285, %v284
      %v306 = vpack.c.b16 %v287, %v286
      %v307 = vpack.c.b16 %v289, %v288
      %v308 = vpack.c.b16 %v291, %v290
      %v309 = vpack.c.b16 %v293, %v292
      %v342 = vunpack.c.l.b16 %v207
      %v343 = vunpack.c.l.b16 %v208
      %v344 = vunpack.c.l.b16 %v209
      %v345 = vunpack.c.l.b16 %v210
      %v346 = vunpack.c.l.b16 %v211
      %v347 = vunpack.c.l.b16 %v212
      %v348 = vunpack.c.l.b16 %v213
      %v349 = vunpack.c.l.b16 %v214
      %v350 = vunpack.c.l.b16 %v215
      %v351 = vunpack.c.l.b16 %v216
      %v352 = vunpack.c.l.b16 %v217
      %v353 = vunpack.c.l.b16 %v218
      %v354 = vunpack.c.l.b16 %v219
      %v355 = vunpack.c.l.b16 %v220
      %v356 = vunpack.c.l.b16 %v221
      %v357 = vunpack.c.l.b16 %v222
      %v358 = vpack.c.b16 %v343, %v342
      %v359 = vpack.c.b16 %v345, %v344
      %v360 = vpack.c.b16 %v347, %v346
      %v361 = vpack.c.b16 %v349, %v348
      %v362 = vpack.c.b16 %v351, %v350
      %v363 = vpack.c.b16 %v353, %v352
      %v364 = vpack.c.b16 %v355, %v354
      %v365 = vpack.c.b16 %v357, %v356
      %374 = vmatprep.subr.bf16.mxu0 0
      %375 = vmatpush1.bf16.msra.mxu0 %v358
      %376 = vmatprep.subr.bf16.mxu0 0
      %377 = vmatpush1.bf16.msra.mxu0 %v359
      %378 = vmatprep.subr.bf16.mxu0 0
      %379 = vmatpush1.bf16.msra.mxu0 %v360
      %380 = vmatprep.subr.bf16.mxu0 0
      %381 = vmatpush1.bf16.msra.mxu0 %v361
      %382 = vmatprep.subr.bf16.mxu0 0
      %383 = vmatpush1.bf16.msra.mxu0 %v362
      %384 = vmatprep.subr.bf16.mxu0 0
      %385 = vmatpush1.bf16.msra.mxu0 %v363
      %386 = vmatprep.subr.bf16.mxu0 0
      %387 = vmatpush1.bf16.msra.mxu0 %v364
      %388 = vmatprep.subr.bf16.mxu0 0
      %389 = vmatpush1.bf16.msra.mxu0 %v365
      %390 = vmatprep.subr.bf16.mxu0 0
      %391 = vmatpush1.bf16.msra.mxu0 0
      %392 = vmatprep.subr.bf16.mxu0 0
      %393 = vmatpush1.bf16.msra.mxu0 0
      %394 = vmatprep.subr.bf16.mxu0 0
      %395 = vmatpush1.bf16.msra.mxu0 0
      %396 = vmatprep.subr.bf16.mxu0 0
      %397 = vmatpush1.bf16.msra.mxu0 0
      %398 = vmatprep.subr.bf16.mxu0 0
      %399 = vmatpush1.bf16.msra.mxu0 0
      %400 = vmatprep.subr.bf16.mxu0 0
      %401 = vmatpush1.bf16.msra.mxu0 0
      %402 = vmatprep.subr.bf16.mxu0 0
      %403 = vmatpush1.bf16.msra.mxu0 0
      %404 = vmatprep.subr.bf16.mxu0 0
      %405 = vmatpush1.bf16.msra.mxu0 0
      %406 = vmatprep.mubr.bf16.mxu0 0
      %407 = vmatmul.mubr.bf16.gmra.mrb[0].mxu0 %v294
      %v408 = vpop.f32.mrb[0].mxu0
      %v409 = vadd.f32 %v228, %v408
      %v410 = vpop.f32.mrb[0].mxu0
      %v411 = vpop.f32.mrb[0].mxu0
      %v412 = vadd.f32 %v228, %v411
      %v413 = vpop.f32.mrb[0].mxu0
      %414 = vmatprep.mubr.bf16.mxu0 0
      %415 = vmatmul.mubr.bf16.gmra.mrb[0].mxu0 %v295
      %v416 = vpop.f32.mrb[0].mxu0
      %v417 = vadd.f32 %v228, %v416
      %v418 = vpop.f32.mrb[0].mxu0
      %v419 = vpop.f32.mrb[0].mxu0
      %v420 = vadd.f32 %v228, %v419
      %v421 = vpop.f32.mrb[0].mxu0
      %422 = vmatprep.mubr.bf16.mxu0 0
      %423 = vmatmul.mubr.bf16.gmra.mrb[0].mxu0 %v296
      %v424 = vpop.f32.mrb[0].mxu0
      %v425 = vadd.f32 %v228, %v424
      %v426 = vpop.f32.mrb[0].mxu0
      %v427 = vpop.f32.mrb[0].mxu0
      %v428 = vadd.f32 %v228, %v427
      %v429 = vpop.f32.mrb[0].mxu0
      %430 = vmatprep.mubr.bf16.mxu0 0
      %431 = vmatmul.mubr.bf16.gmra.mrb[0].mxu0 %v297
      %v432 = vpop.f32.mrb[0].mxu0
      %v433 = vadd.f32 %v228, %v432
      %v434 = vpop.f32.mrb[0].mxu0
      %v435 = vpop.f32.mrb[0].mxu0
      %v436 = vadd.f32 %v228, %v435
      %v437 = vpop.f32.mrb[0].mxu0
      %438 = vmatprep.mubr.bf16.mxu0 0
      %439 = vmatmul.mubr.bf16.gmra.mrb[0].mxu0 %v298
      %v440 = vpop.f32.mrb[0].mxu0
      %v441 = vadd.f32 %v228, %v440
      %v442 = vpop.f32.mrb[0].mxu0
      %v443 = vpop.f32.mrb[0].mxu0
      %v444 = vadd.f32 %v228, %v443
      %v445 = vpop.f32.mrb[0].mxu0
      %446 = vmatprep.mubr.bf16.mxu0 0
      %447 = vmatmul.mubr.bf16.gmra.mrb[0].mxu0 %v299
      %v448 = vpop.f32.mrb[0].mxu0
      %v449 = vadd.f32 %v228, %v448
      %v450 = vpop.f32.mrb[0].mxu0
      %v451 = vpop.f32.mrb[0].mxu0
      %v452 = vadd.f32 %v228, %v451
      %v453 = vpop.f32.mrb[0].mxu0
      %454 = vmatprep.mubr.bf16.mxu0 0
      %455 = vmatmul.mubr.bf16.gmra.mrb[0].mxu0 %v300
      %v456 = vpop.f32.mrb[0].mxu0
      %v457 = vadd.f32 %v228, %v456
      %v458 = vpop.f32.mrb[0].mxu0
      %v459 = vpop.f32.mrb[0].mxu0
      %v460 = vadd.f32 %v228, %v459
      %v461 = vpop.f32.mrb[0].mxu0
      %462 = vmatprep.mubr.bf16.mxu0 0
      %463 = vmatmul.mubr.bf16.gmra.mrb[0].mxu0 %v301
      %v464 = vpop.f32.mrb[0].mxu0
      %v465 = vadd.f32 %v228, %v464
      %v466 = vpop.f32.mrb[0].mxu0
      %v467 = vpop.f32.mrb[0].mxu0
      %v468 = vadd.f32 %v228, %v467
      %v469 = vpop.f32.mrb[0].mxu0
      %470 = vmatprep.mubr.bf16.mxu0 0
      %471 = vmatmul.mubr.bf16.gmra.mrb[0].mxu0 %v302
      %v472 = vpop.f32.mrb[0].mxu0
      %v473 = vadd.f32 %v228, %v472
      %v474 = vpop.f32.mrb[0].mxu0
      %v475 = vpop.f32.mrb[0].mxu0
      %v476 = vadd.f32 %v228, %v475
      %v477 = vpop.f32.mrb[0].mxu0
      %478 = vmatprep.mubr.bf16.mxu0 0
      %479 = vmatmul.mubr.bf16.gmra.mrb[0].mxu0 %v303
      %v480 = vpop.f32.mrb[0].mxu0
      %v481 = vadd.f32 %v228, %v480
      %v482 = vpop.f32.mrb[0].mxu0
      %v483 = vpop.f32.mrb[0].mxu0
      %v484 = vadd.f32 %v228, %v483
      %v485 = vpop.f32.mrb[0].mxu0
      %486 = vmatprep.mubr.bf16.mxu0 0
      %487 = vmatmul.mubr.bf16.gmra.mrb[0].mxu0 %v304
      %v488 = vpop.f32.mrb[0].mxu0
      %v489 = vadd.f32 %v228, %v488
      %v490 = vpop.f32.mrb[0].mxu0
      %v491 = vpop.f32.mrb[0].mxu0
      %v492 = vadd.f32 %v228, %v491
      %v493 = vpop.f32.mrb[0].mxu0
      %494 = vmatprep.mubr.bf16.mxu0 0
      %495 = vmatmul.mubr.bf16.gmra.mrb[0].mxu0 %v305
      %v496 = vpop.f32.mrb[0].mxu0
      %v497 = vadd.f32 %v228, %v496
      %v498 = vpop.f32.mrb[0].mxu0
      %v499 = vpop.f32.mrb[0].mxu0
      %v500 = vadd.f32 %v228, %v499
      %v501 = vpop.f32.mrb[0].mxu0
      %502 = vmatprep.mubr.bf16.mxu0 0
      %503 = vmatmul.mubr.bf16.gmra.mrb[0].mxu0 %v306
      %v504 = vpop.f32.mrb[0].mxu0
      %v505 = vadd.f32 %v228, %v504
      %v506 = vpop.f32.mrb[0].mxu0
      %v507 = vpop.f32.mrb[0].mxu0
      %v508 = vadd.f32 %v228, %v507
      %v509 = vpop.f32.mrb[0].mxu0
      %510 = vmatprep.mubr.bf16.mxu0 0
      %511 = vmatmul.mubr.bf16.gmra.mrb[0].mxu0 %v307
      %v512 = vpop.f32.mrb[0].mxu0
      %v513 = vadd.f32 %v228, %v512
      %v514 = vpop.f32.mrb[0].mxu0
      %v515 = vpop.f32.mrb[0].mxu0
      %v516 = vadd.f32 %v228, %v515
      %v517 = vpop.f32.mrb[0].mxu0
      %518 = vmatprep.mubr.bf16.mxu0 0
      %519 = vmatmul.mubr.bf16.gmra.mrb[0].mxu0 %v308
      %v520 = vpop.f32.mrb[0].mxu0
      %v521 = vadd.f32 %v228, %v520
      %v522 = vpop.f32.mrb[0].mxu0
      %v523 = vpop.f32.mrb[0].mxu0
      %v524 = vadd.f32 %v228, %v523
      %v525 = vpop.f32.mrb[0].mxu0
      %526 = vmatprep.mubr.bf16.mxu0 0
      %527 = vmatmul.mubr.bf16.gmra.mrb[0].mxu0 %v309
      %v528 = vpop.f32.mrb[0].mxu0
      %v529 = vadd.f32 %v228, %v528
      %v530 = vpop.f32.mrb[0].mxu0
      %v531 = vpop.f32.mrb[0].mxu0
      %v532 = vadd.f32 %v228, %v531
      %v533 = vpop.f32.mrb[0].mxu0
      %534 = vdwg.mxu0
      %535 = vst [vmem:[%s172] sm:$0xff] %v409
      %536 = vst [vmem:[%s172 + $0x8] sm:$0xff] %v412
      %537 = vst [vmem:[%s172 + $0x10] sm:$0xff] %v417
      %538 = vst [vmem:[%s172 + $0x18] sm:$0xff] %v420
      %539 = vst [vmem:[%s172 + $0x20] sm:$0xff] %v425
      %540 = vst [vmem:[%s172 + $0x28] sm:$0xff] %v428
      %541 = vst [vmem:[%s172 + $0x30] sm:$0xff] %v433
      %542 = vst [vmem:[%s172 + $0x38] sm:$0xff] %v436
      %543 = vst [vmem:[%s172 + $0x40] sm:$0xff] %v441
      %544 = vst [vmem:[%s172 + $0x48] sm:$0xff] %v444
      %545 = vst [vmem:[%s172 + $0x50] sm:$0xff] %v449
      %546 = vst [vmem:[%s172 + $0x58] sm:$0xff] %v452
      %547 = vst [vmem:[%s172 + $0x60] sm:$0xff] %v457
      %548 = vst [vmem:[%s172 + $0x68] sm:$0xff] %v460
      %549 = vst [vmem:[%s172 + $0x70] sm:$0xff] %v465
      %550 = vst [vmem:[%s172 + $0x78] sm:$0xff] %v468
      %551 = vst [vmem:[%s172 + $0x80] sm:$0xff] %v473
      %552 = vst [vmem:[%s172 + $0x88] sm:$0xff] %v476
      %553 = vst [vmem:[%s172 + $0x90] sm:$0xff] %v481
      %554 = vst [vmem:[%s172 + $0x98] sm:$0xff] %v484
      %555 = vst [vmem:[%s172 + $0xa0] sm:$0xff] %v489
      %556 = vst [vmem:[%s172 + $0xa8] sm:$0xff] %v492
      %557 = vst [vmem:[%s172 + $0xb0] sm:$0xff] %v497
      %558 = vst [vmem:[%s172 + $0xb8] sm:$0xff] %v500
      %559 = vst [vmem:[%s172 + $0xc0] sm:$0xff] %v505
      %560 = vst [vmem:[%s172 + $0xc8] sm:$0xff] %v508
      %561 = vst [vmem:[%s172 + $0xd0] sm:$0xff] %v513
      %562 = vst [vmem:[%s172 + $0xd8] sm:$0xff] %v516
      %563 = vst [vmem:[%s172 + $0xe0] sm:$0xff] %v521
      %564 = vst [vmem:[%s172 + $0xe8] sm:$0xff] %v524
      %565 = vst [vmem:[%s172 + $0xf0] sm:$0xff] %v529
      %566 = vst [vmem:[%s172 + $0xf8] sm:$0xff] %v532
      %s567 = smul.u32 32, %s14
      %p568 = scmp.lt.s32.totalorder %s567, 63
      %s569 = scalar_select %p568, %s567, 63
      %s570 = smul.addr %s569, 8
      %s571 = scalar_lea.vmem %s3, %s570
      // Predicated region
      $region33: #{decoder_forward.13} parent=31 // pred_check
        %p572 = pneg %p100
      $region34: #{decoder_forward.13} parent=31 // pred_check_branch
        %574 = sbr.rel (%p572) target = $region36
      $region35: #{decoder_forward.13} parent=31 // pred_region
        %s575 = smul.u32 32, %s14
      $region36: #{decoder_forward.13} parent=31 // pred_fallthru
        _
    $region32: #{decoder_forward.13} parent=5 // pred_fallthru
      _
    %p576 = scmp.le.s32.totalorder 2, %s9
    // Predicated region
    $region37: #{decoder_forward.13} parent=5 // pred_check
      %p577 = pneg %p576
    $region38: #{decoder_forward.13} parent=5 // pred_check_branch
      %579 = sbr.rel (%p577) target = $region40
    $region39: #{decoder_forward.13} parent=5 // pred_region
      %s580 = ssub.s32 %s9, 2
      // Predicated region
      $region41: #{decoder_forward.13} parent=39 // pred_check
        %p581 = pneg %p106
      $region42: #{decoder_forward.13} parent=39 // pred_check_branch
        %583 = sbr.rel (%p581) target = $region44
      $region43: #{decoder_forward.13} parent=39 // pred_region
        %s584 = smul.u32 32, %s15
        %p585 = scmp.lt.s32.totalorder %s584, 63
        %s586 = scalar_select %p585, %s584, 63
        %s587 = smul.addr %s586, 8
        %s588 = scalar_lea.vmem %s3, %s587
      $region44: #{decoder_forward.13} parent=39 // pred_fallthru
        _
    $region40: #{decoder_forward.13} parent=5 // pred_fallthru
      _
  $region6: #{decoder_forward.13} parent=0 // loop_footer
    %s13 = sadd.s32 1, %s9
  $region7: #{decoder_forward.13} parent=0 // loop_footer_branch
    %8 = sbr.rel target = $region3
  $region8: #{decoder_forward.13} parent=0 // loop_exit
    _

// kernel: decoder_forward.11
$region0: #{decoder_forward.11}
  #allocation0 [shape = 'u32[]', space=smem, size = 0x4, offset = 0x4, fixed_abs, tag = 'smem constant byte address 0x4 - core index']
  #allocation1 [shape = 'u32[144,128]{1,0:T(1,128)}', space=vmem, size = 0x12000, scoped, tag = 'internal scratch']
  %s0 = inlined_call_operand.vmem [shape: f32[512,128], index: 0, kind: input, shape index: {}]
  %s1 = inlined_call_operand.vmem [shape: bf16[3,128,128], index: 1, kind: input, shape index: {}]
  %s2 = inlined_call_operand.vmem [shape: f32[1,128], index: 2, kind: input, shape index: {}]
  %s3 = inlined_call_operand.vmem [shape: bf16[3,128,128], index: 3, kind: input, shape index: {}]
  %s4 = inlined_call_operand.vmem [shape: f32[1,128], index: 4, kind: input, shape index: {}]
  %s5 = inlined_call_operand.vmem [shape: bf16[3,128,128], index: 5, kind: input, shape index: {}]
  %s6 = inlined_call_operand.vmem [shape: f32[1,128], index: 6, kind: input, shape index: {}]
  %s7 = inlined_call_operand.vmem [shape: bf16[3,128,128], index: 7, kind: input, shape index: {}]
  %s8 = inlined_call_operand.vmem [shape: f32[1,128], index: 8, kind: input, shape index: {}]
  %s9 = inlined_call_operand.vmem [shape: f32[512,128], index: 9, kind: output, shape index: {}]
  %s10 = sld [smem:[#allocation0]]
  $region69: #{decoder_forward.11} parent=0
    _
  %s12 = ssub.s32 1, %s10
  %s13 = scalar_select 0, %s12, %s10
  loop: start=0, step=1, limit=4
  $region2: #{decoder_forward.11} parent=0 // loop_pre_header
    _
  $region3: #{decoder_forward.11} parent=0 // loop_header
    %s15 = sphi 0, %s19
    %p16 = scmp.ge.s32.totalorder %s15, 4
    %s25 = sphi 0, %s27
    %s28 = sphi 0, %s25
    %s29 = sphi 0, %s28
    %s45 = sphi 0, %s29
    %s49 = sphi 0, %s49
    %s51 = sphi 0, %s49
    %s52 = sphi 0, %s51
    %s66 = sphi 0, %s52
    %s70 = sphi 0, %s70
    %s72 = sphi 0, %s70
    %s73 = sphi 0, %s72
    %s87 = sphi 0, %s73
    %s91 = sphi 0, %s91
    %s93 = sphi 0, %s91
    %s94 = sphi 0, %s93
    %s108 = sphi 0, %s94
    %s112 = sphi 0, %s112
    %s114 = sphi 0, %s112
    %s115 = sphi 0, %s114
    %s129 = sphi 0, %s115
    %s133 = sphi 0, %s133
    %s135 = sphi 0, %s133
    %s136 = sphi 0, %s135
    %s150 = sphi 0, %s136
    %s154 = sphi 0, %s154
    %s156 = sphi 0, %s154
    %s157 = sphi 0, %s156
    %s171 = sphi 0, %s157
    %s175 = sphi 0, %s175
    %s177 = sphi 0, %s175
    %s178 = sphi 0, %s177
    %s192 = sphi 0, %s178
    %s196 = sphi 0, %s196
    %s198 = sphi 0, %s196
    %s199 = sphi 0, %s198
    %s213 = sphi 0, %s199
    %s219 = sphi 0, %s221
    %s222 = sphi 0, %s219
    %s223 = sphi 0, %s222
    %s239 = sphi 0, %s223
  $region4: #{decoder_forward.11} parent=0 // loop_header_branch
    %18 = sbr.rel (%p16) target = $region8
  $region5: #{decoder_forward.11} parent=0 // loop_body
    %s20 = ssub.s32 %s15, 1
    %s21 = ssub.s32 %s15, 2
    %s22 = sadd.s32 %s15, 1
    %s23 = ssub.s32 %s15, %s22
    %p24 = scmp.eq.s32.totalorder %s23, 0
    %s26 = sadd.s32 %s25, 1
    %s27 = scalar_select %p24, %s25, %s26
    %p30 = pneg %p24
    %p31 = scmp.eq.s32.totalorder %s15, 1
    %p32 = por %p30, %p31
    %p33 = scmp.ne.s32.totalorder %s25, %s28
    %p34 = scmp.eq.s32.totalorder %s15, 0
    %p35 = por %p33, %p34
    %p36 = scmp.ne.s32.totalorder %s25, %s28
    %p37 = scmp.eq.s32.totalorder %s20, 1
    %p38 = por %p36, %p37
    %p39 = scmp.ne.s32.totalorder %s28, %s29
    %p40 = scmp.eq.s32.totalorder %s20, 0
    %p41 = por %p39, %p40
    %p42 = scmp.ne.s32.totalorder %s28, %s29
    %p43 = scmp.eq.s32.totalorder %s21, 1
    %p44 = por %p42, %p43
    %p46 = scmp.ne.s32.totalorder %s29, %s45
    %p47 = scmp.eq.s32.totalorder %s21, 0
    %p48 = por %p46, %p47
    %s50 = sadd.s32 %s49, 1
    %p53 = scmp.eq.s32.totalorder %s15, 1
    %p54 = scmp.ne.s32.totalorder %s49, %s51
    %p55 = scmp.eq.s32.totalorder %s15, 0
    %p56 = por %p54, %p55
    %p57 = scmp.ne.s32.totalorder %s49, %s51
    %p58 = scmp.eq.s32.totalorder %s20, 1
    %p59 = por %p57, %p58
    %p60 = scmp.ne.s32.totalorder %s51, %s52
    %p61 = scmp.eq.s32.totalorder %s20, 0
    %p62 = por %p60, %p61
    %p63 = scmp.ne.s32.totalorder %s51, %s52
    %p64 = scmp.eq.s32.totalorder %s21, 1
    %p65 = por %p63, %p64
    %p67 = scmp.ne.s32.totalorder %s52, %s66
    %p68 = scmp.eq.s32.totalorder %s21, 0
    %p69 = por %p67, %p68
    %s71 = sadd.s32 %s70, 1
    %p74 = scmp.eq.s32.totalorder %s15, 1
    %p75 = scmp.ne.s32.totalorder %s70, %s72
    %p76 = scmp.eq.s32.totalorder %s15, 0
    %p77 = por %p75, %p76
    %p78 = scmp.ne.s32.totalorder %s70, %s72
    %p79 = scmp.eq.s32.totalorder %s20, 1
    %p80 = por %p78, %p79
    %p81 = scmp.ne.s32.totalorder %s72, %s73
    %p82 = scmp.eq.s32.totalorder %s20, 0
    %p83 = por %p81, %p82
    %p84 = scmp.ne.s32.totalorder %s72, %s73
    %p85 = scmp.eq.s32.totalorder %s21, 1
    %p86 = por %p84, %p85
    %p88 = scmp.ne.s32.totalorder %s73, %s87
    %p89 = scmp.eq.s32.totalorder %s21, 0
    %p90 = por %p88, %p89
    %s92 = sadd.s32 %s91, 1
    %p95 = scmp.eq.s32.totalorder %s15, 1
    %p96 = scmp.ne.s32.totalorder %s91, %s93
    %p97 = scmp.eq.s32.totalorder %s15, 0
    %p98 = por %p96, %p97
    %p99 = scmp.ne.s32.totalorder %s91, %s93
    %p100 = scmp.eq.s32.totalorder %s20, 1
    %p101 = por %p99, %p100
    %p102 = scmp.ne.s32.totalorder %s93, %s94
    %p103 = scmp.eq.s32.totalorder %s20, 0
    %p104 = por %p102, %p103
    %p105 = scmp.ne.s32.totalorder %s93, %s94
    %p106 = scmp.eq.s32.totalorder %s21, 1
    %p107 = por %p105, %p106
    %p109 = scmp.ne.s32.totalorder %s94, %s108
    %p110 = scmp.eq.s32.totalorder %s21, 0
    %p111 = por %p109, %p110
    %s113 = sadd.s32 %s112, 1
    %p116 = scmp.eq.s32.totalorder %s15, 1
    %p117 = scmp.ne.s32.totalorder %s112, %s114
    %p118 = scmp.eq.s32.totalorder %s15, 0
    %p119 = por %p117, %p118
    %p120 = scmp.ne.s32.totalorder %s112, %s114
    %p121 = scmp.eq.s32.totalorder %s20, 1
    %p122 = por %p120, %p121
    %p123 = scmp.ne.s32.totalorder %s114, %s115
    %p124 = scmp.eq.s32.totalorder %s20, 0
    %p125 = por %p123, %p124
    %p126 = scmp.ne.s32.totalorder %s114, %s115
    %p127 = scmp.eq.s32.totalorder %s21, 1
    %p128 = por %p126, %p127
    %p130 = scmp.ne.s32.totalorder %s115, %s129
    %p131 = scmp.eq.s32.totalorder %s21, 0
    %p132 = por %p130, %p131
    %s134 = sadd.s32 %s133, 1
    %p137 = scmp.eq.s32.totalorder %s15, 1
    %p138 = scmp.ne.s32.totalorder %s133, %s135
    %p139 = scmp.eq.s32.totalorder %s15, 0
    %p140 = por %p138, %p139
    %p141 = scmp.ne.s32.totalorder %s133, %s135
    %p142 = scmp.eq.s32.totalorder %s20, 1
    %p143 = por %p141, %p142
    %p144 = scmp.ne.s32.totalorder %s135, %s136
    %p145 = scmp.eq.s32.totalorder %s20, 0
    %p146 = por %p144, %p145
    %p147 = scmp.ne.s32.totalorder %s135, %s136
    %p148 = scmp.eq.s32.totalorder %s21, 1
    %p149 = por %p147, %p148
    %p151 = scmp.ne.s32.totalorder %s136, %s150
    %p152 = scmp.eq.s32.totalorder %s21, 0
    %p153 = por %p151, %p152
    %s155 = sadd.s32 %s154, 1
    %p158 = scmp.eq.s32.totalorder %s15, 1
    %p159 = scmp.ne.s32.totalorder %s154, %s156
    %p160 = scmp.eq.s32.totalorder %s15, 0
    %p161 = por %p159, %p160
    %p162 = scmp.ne.s32.totalorder %s154, %s156
    %p163 = scmp.eq.s32.totalorder %s20, 1
    %p164 = por %p162, %p163
    %p165 = scmp.ne.s32.totalorder %s156, %s157
    %p166 = scmp.eq.s32.totalorder %s20, 0
    %p167 = por %p165, %p166
    %p168 = scmp.ne.s32.totalorder %s156, %s157
    %p169 = scmp.eq.s32.totalorder %s21, 1
    %p170 = por %p168, %p169
    %p172 = scmp.ne.s32.totalorder %s157, %s171
    %p173 = scmp.eq.s32.totalorder %s21, 0
    %p174 = por %p172, %p173
    %s176 = sadd.s32 %s175, 1
    %p179 = scmp.eq.s32.totalorder %s15, 1
    %p180 = scmp.ne.s32.totalorder %s175, %s177
    %p181 = scmp.eq.s32.totalorder %s15, 0
    %p182 = por %p180, %p181
    %p183 = scmp.ne.s32.totalorder %s175, %s177
    %p184 = scmp.eq.s32.totalorder %s20, 1
    %p185 = por %p183, %p184
    %p186 = scmp.ne.s32.totalorder %s177, %s178
    %p187 = scmp.eq.s32.totalorder %s20, 0
    %p188 = por %p186, %p187
    %p189 = scmp.ne.s32.totalorder %s177, %s178
    %p190 = scmp.eq.s32.totalorder %s21, 1
    %p191 = por %p189, %p190
    %p193 = scmp.ne.s32.totalorder %s178, %s192
    %p194 = scmp.eq.s32.totalorder %s21, 0
    %p195 = por %p193, %p194
    %s197 = sadd.s32 %s196, 1
    %p200 = scmp.eq.s32.totalorder %s15, 1
    %p201 = scmp.ne.s32.totalorder %s196, %s198
    %p202 = scmp.eq.s32.totalorder %s15, 0
    %p203 = por %p201, %p202
    %p204 = scmp.ne.s32.totalorder %s196, %s198
    %p205 = scmp.eq.s32.totalorder %s20, 1
    %p206 = por %p204, %p205
    %p207 = scmp.ne.s32.totalorder %s198, %s199
    %p208 = scmp.eq.s32.totalorder %s20, 0
    %p209 = por %p207, %p208
    %p210 = scmp.ne.s32.totalorder %s198, %s199
    %p211 = scmp.eq.s32.totalorder %s21, 1
    %p212 = por %p210, %p211
    %p214 = scmp.ne.s32.totalorder %s199, %s213
    %p215 = scmp.eq.s32.totalorder %s21, 0
    %p216 = por %p214, %p215
    %s217 = ssub.s32 %s15, %s22
    %p218 = scmp.eq.s32.totalorder %s217, 0
    %s220 = sadd.s32 %s219, 1
    %s221 = scalar_select %p218, %s219, %s220
    %p224 = pneg %p218
    %p225 = scmp.eq.s32.totalorder %s15, 1
    %p226 = por %p224, %p225
    %p227 = scmp.ne.s32.totalorder %s219, %s222
    %p228 = scmp.eq.s32.totalorder %s15, 0
    %p229 = por %p227, %p228
    %p230 = scmp.ne.s32.totalorder %s219, %s222
    %p231 = scmp.eq.s32.totalorder %s20, 1
    %p232 = por %p230, %p231
    %p233 = scmp.ne.s32.totalorder %s222, %s223
    %p234 = scmp.eq.s32.totalorder %s20, 0
    %p235 = por %p233, %p234
    %p236 = scmp.ne.s32.totalorder %s222, %s223
    %p237 = scmp.eq.s32.totalorder %s21, 1
    %p238 = por %p236, %p237
    %p240 = scmp.ne.s32.totalorder %s223, %s239
    %p241 = scmp.eq.s32.totalorder %s21, 0
    %p242 = por %p240, %p241
    %p243 = scmp.le.s32.totalorder 1, %s15
    %p244 = scmp.lt.s32.totalorder %s15, 3
    %p245 = pnand %p243, %p244
    %p246 = pneg %p245
    // Predicated region
    $region9: #{decoder_forward.11} parent=5 // pred_check
      _
    $region10: #{decoder_forward.11} parent=5 // pred_check_branch
      %248 = sbr.rel (%p245) target = $region12
    $region11: #{decoder_forward.11} parent=5 // pred_region
      %s249 = ssub.s32 %s15, 1
      // Predicated region
      $region13: #{decoder_forward.11} parent=11 // pred_check
        %p250 = pneg %p62
      $region14: #{decoder_forward.11} parent=11 // pred_check_branch
        %252 = sbr.rel (%p250) target = $region16
      $region15: #{decoder_forward.11} parent=11 // pred_region
        _
      $region16: #{decoder_forward.11} parent=11 // pred_fallthru
        _
      // Predicated region
      $region17: #{decoder_forward.11} parent=11 // pred_check
        %p253 = pneg %p83
      $region18: #{decoder_forward.11} parent=11 // pred_check_branch
        %255 = sbr.rel (%p253) target = $region20
      $region19: #{decoder_forward.11} parent=11 // pred_region
        _
      $region20: #{decoder_forward.11} parent=11 // pred_fallthru
        _
      // Predicated region
      $region21: #{decoder_forward.11} parent=11 // pred_check
        %p256 = pneg %p104
      $region22: #{decoder_forward.11} parent=11 // pred_check_branch
        %258 = sbr.rel (%p256) target = $region24
      $region23: #{decoder_forward.11} parent=11 // pred_region
        _
      $region24: #{decoder_forward.11} parent=11 // pred_fallthru
        _
      // Predicated region
      $region25: #{decoder_forward.11} parent=11 // pred_check
        %p259 = pneg %p125
      $region26: #{decoder_forward.11} parent=11 // pred_check_branch
        %261 = sbr.rel (%p259) target = $region28
      $region27: #{decoder_forward.11} parent=11 // pred_region
        _
      $region28: #{decoder_forward.11} parent=11 // pred_fallthru
        _
      // Predicated region
      $region29: #{decoder_forward.11} parent=11 // pred_check
        %p262 = pneg %p146
      $region30: #{decoder_forward.11} parent=11 // pred_check_branch
        %264 = sbr.rel (%p262) target = $region32
      $region31: #{decoder_forward.11} parent=11 // pred_region
        _
      $region32: #{decoder_forward.11} parent=11 // pred_fallthru
        _
      // Predicated region
      $region33: #{decoder_forward.11} parent=11 // pred_check
        %p265 = pneg %p167
      $region34: #{decoder_forward.11} parent=11 // pred_check_branch
        %267 = sbr.rel (%p265) target = $region36
      $region35: #{decoder_forward.11} parent=11 // pred_region
        _
      $region36: #{decoder_forward.11} parent=11 // pred_fallthru
        _
      // Predicated region
      $region37: #{decoder_forward.11} parent=11 // pred_check
        %p268 = pneg %p188
      $region38: #{decoder_forward.11} parent=11 // pred_check_branch
        %270 = sbr.rel (%p268) target = $region40
      $region39: #{decoder_forward.11} parent=11 // pred_region
        _
      $region40: #{decoder_forward.11} parent=11 // pred_fallthru
        _
      // Predicated region
      $region41: #{decoder_forward.11} parent=11 // pred_check
        %p271 = pneg %p209
      $region42: #{decoder_forward.11} parent=11 // pred_check_branch
        %273 = sbr.rel (%p271) target = $region44
      $region43: #{decoder_forward.11} parent=11 // pred_region
        _
      $region44: #{decoder_forward.11} parent=11 // pred_fallthru
        _
    $region12: #{decoder_forward.11} parent=5 // pred_fallthru
      _
    %p274 = scmp.lt.s32.totalorder %s15, 2
    // Predicated region
    $region45: #{decoder_forward.11} parent=5 // pred_check
      %p275 = pneg %p274
    $region46: #{decoder_forward.11} parent=5 // pred_check_branch
      %277 = sbr.rel (%p275) target = $region48
    $region47: #{decoder_forward.11} parent=5 // pred_region
      // Predicated region
      $region49: #{decoder_forward.11} parent=47 // pred_check
        %p278 = pneg %p35
      $region50: #{decoder_forward.11} parent=47 // pred_check_branch
        %280 = sbr.rel (%p278) target = $region52
      $region51: #{decoder_forward.11} parent=47 // pred_region
        %s281 = smul.u32 32, %s15
        %p282 = scmp.lt.s32.totalorder %s281, 63
        %s283 = scalar_select %p282, %s281, 63
        %s284 = smul.addr %s283, 8
        %s285 = scalar_lea.vmem %s0, %s284
        %s286 = smul.u32 32, %s15
      $region52: #{decoder_forward.11} parent=47 // pred_fallthru
        _
    $region48: #{decoder_forward.11} parent=5 // pred_fallthru
      _
    %p287 = scmp.le.s32.totalorder 1, %s15
    %p288 = scmp.lt.s32.totalorder %s15, 3
    %p289 = pnand %p287, %p288
    %p290 = pneg %p289
    // Predicated region
    $region53: #{decoder_forward.11} parent=5 // pred_check
      _
    $region54: #{decoder_forward.11} parent=5 // pred_check_branch
      %292 = sbr.rel (%p289) target = $region56
    $region55: #{decoder_forward.11} parent=5 // pred_region
      %s293 = ssub.s32 %s15, 1
      %s294 = smul.u32 32, %s20
      %p295 = scmp.lt.s32.totalorder %s294, 63
      %s296 = scalar_select %p295, %s294, 63
      %s297 = smul.addr %s296, 8
      %s298 = scalar_lea.vmem %s0, %s297
      %p299 = pneg %p41
      %p300 = pneg %p38
      %p301 = pneg %p62
      %p302 = pneg %p59
      %p303 = pneg %p83
      %p304 = pneg %p80
      %p305 = pneg %p104
      %p306 = pneg %p101
      %p307 = pneg %p125
      %p308 = pneg %p122
      %p309 = pneg %p146
      %p310 = pneg %p143
      %p311 = pneg %p167
      %p312 = pneg %p164
      %p313 = pneg %p188
      %p314 = pneg %p185
      %p315 = pneg %p209
      %p316 = pneg %p206
      %p317 = pneg %p235
      %p318 = pneg %p232
      %s319 = smul.u32 32, %s20
      %p320 = scmp.lt.s32.totalorder %s319, 63
      %s321 = scalar_select %p320, %s319, 63
      %s322 = smul.addr %s321, 8
      %s323 = scalar_lea.vmem %s9, %s322
      %s324 = smul.u32 32, %s20
      %p325 = scmp.lt.s32.totalorder %s324, 63
      %s326 = scalar_select %p325, %s324, 63
      %s327 = smul.addr %s326, 8
      %s328 = scalar_lea.vmem %s0, %s327
      %s329 = smul.u32 32, %s20
      %s330 = smul.u32 32, %s20
      %p331 = scmp.lt.s32.totalorder %s330, 63
      %s332 = scalar_select %p331, %s330, 63
      %s333 = smul.addr %s332, 8
      %s334 = scalar_lea.vmem %s9, %s333
      %s335 = smul.u32 32, %s20
      %v337 = vld [vmem:[%s328] sm:$0xff]
      %v338 = vld [vmem:[%s328 + $0x8] sm:$0xff]
      %v339 = vld [vmem:[%s328 + $0x10] sm:$0xff]
      %v340 = vld [vmem:[%s328 + $0x18] sm:$0xff]
      %v341 = vld [vmem:[%s328 + $0x20] sm:$0xff]
      %v342 = vld [vmem:[%s328 + $0x28] sm:$0xff]
      %v343 = vld [vmem:[%s328 + $0x30] sm:$0xff]
      %v344 = vld [vmem:[%s328 + $0x38] sm:$0xff]
      %v345 = vld [vmem:[%s328 + $0x40] sm:$0xff]
      %v346 = vld [vmem:[%s328 + $0x48] sm:$0xff]
      %v347 = vld [vmem:[%s328 + $0x50] sm:$0xff]
      %v348 = vld [vmem:[%s328 + $0x58] sm:$0xff]
      %v349 = vld [vmem:[%s328 + $0x60] sm:$0xff]
      %v350 = vld [vmem:[%s328 + $0x68] sm:$0xff]
      %v351 = vld [vmem:[%s328 + $0x70] sm:$0xff]
      %v352 = vld [vmem:[%s328 + $0x78] sm:$0xff]
      %v353 = vld [vmem:[%s328 + $0x80] sm:$0xff]
      %v354 = vld [vmem:[%s328 + $0x88] sm:$0xff]
      %v355 = vld [vmem:[%s328 + $0x90] sm:$0xff]
      %v356 = vld [vmem:[%s328 + $0x98] sm:$0xff]
      %v357 = vld [vmem:[%s328 + $0xa0] sm:$0xff]
      %v358 = vld [vmem:[%s328 + $0xa8] sm:$0xff]
      %v359 = vld [vmem:[%s328 + $0xb0] sm:$0xff]
      %v360 = vld [vmem:[%s328 + $0xb8] sm:$0xff]
      %v361 = vld [vmem:[%s328 + $0xc0] sm:$0xff]
      %v362 = vld [vmem:[%s328 + $0xc8] sm:$0xff]
      %v363 = vld [vmem:[%s328 + $0xd0] sm:$0xff]
      %v364 = vld [vmem:[%s328 + $0xd8] sm:$0xff]
      %v365 = vld [vmem:[%s328 + $0xe0] sm:$0xff]
      %v366 = vld [vmem:[%s328 + $0xe8] sm:$0xff]
      %v367 = vld [vmem:[%s328 + $0xf0] sm:$0xff]
      %v368 = vld [vmem:[%s328 + $0xf8] sm:$0xff]
      %v369 = vpack.c.bf16 %v338, %v337
      %v370 = vpack.c.bf16 %v340, %v339
      %v371 = vpack.c.bf16 %v342, %v341
      %v372 = vpack.c.bf16 %v344, %v343
      %v373 = vpack.c.bf16 %v346, %v345
      %v374 = vpack.c.bf16 %v348, %v347
      %v375 = vpack.c.bf16 %v350, %v349
      %v376 = vpack.c.bf16 %v352, %v351
      %v377 = vpack.c.bf16 %v354, %v353
      %v378 = vpack.c.bf16 %v356, %v355
      %v379 = vpack.c.bf16 %v358, %v357
      %v380 = vpack.c.bf16 %v360, %v359
      %v381 = vpack.c.bf16 %v362, %v361
      %v382 = vpack.c.bf16 %v364, %v363
      %v383 = vpack.c.bf16 %v366, %v365
      %v384 = vpack.c.bf16 %v368, %v367
      %v385 = vlaneseq
      %v386 = vshrl.u32 %v385, 7
      %v387 = vadd.s32 %v386, 8
      %v388 = vadd.s32 %v386, 16
      %v389 = vadd.s32 %v386, 24
      %v390 = vadd.s32 %v386, 32
      %v391 = vadd.s32 %v386, 40
      %v392 = vadd.s32 %v386, 48
      %v393 = vadd.s32 %v386, 56
      %v394 = vadd.s32 %v386, 64
      %v395 = vadd.s32 %v386, 72
      %v396 = vadd.s32 %v386, 80
      %v397 = vadd.s32 %v386, 88
      %v398 = vadd.s32 %v386, 96
      %v399 = vadd.s32 %v386, 104
      %v400 = vadd.s32 %v386, 112
      %v401 = vadd.s32 %v386, 120
      %v402 = vadd.s32 %v386, 128
      %v403 = vadd.s32 %v386, 136
      %v404 = vadd.s32 %v386, 144
      %v405 = vadd.s32 %v386, 152
      %v406 = vadd.s32 %v386, 160
      %v407 = vadd.s32 %v386, 168
      %v408 = vadd.s32 %v386, 176
      %v409 = vadd.s32 %v386, 184
      %v410 = vadd.s32 %v386, 192
      %v411 = vadd.s32 %v386, 200
      %v412 = vadd.s32 %v386, 208
      %v413 = vadd.s32 %v386, 216
      %v414 = vadd.s32 %v386, 224
      %v415 = vadd.s32 %v386, 232
      %v416 = vadd.s32 %v386, 240
      %v417 = vadd.s32 %v386, 248
      %v418 = vlaneseq
      %v419 = vand.u32 %v418, 127
      %v420 = vadd.s32 %v419, 128
      %v421 = vand.u32 %v386, 15
      %v422 = vand.u32 %v387, 15
      %v423 = vand.u32 %v388, 15
      %v424 = vand.u32 %v389, 15
      %v425 = vand.u32 %v390, 15
      %v426 = vand.u32 %v391, 15
      %v427 = vand.u32 %v392, 15
      %v428 = vand.u32 %v393, 15
      %v429 = vand.u32 %v394, 15
      %v430 = vand.u32 %v395, 15
      %v431 = vand.u32 %v396, 15
      %v432 = vand.u32 %v397, 15
      %v433 = vand.u32 %v398, 15
      %v434 = vand.u32 %v399, 15
      %v435 = vand.u32 %v400, 15
      %v436 = vand.u32 %v401, 15
      %v437 = vand.u32 %v402, 15
      %v438 = vand.u32 %v403, 15
      %v439 = vand.u32 %v404, 15
      %v440 = vand.u32 %v405, 15
      %v441 = vand.u32 %v406, 15
      %v442 = vand.u32 %v407, 15
      %v443 = vand.u32 %v408, 15
      %v444 = vand.u32 %v409, 15
      %v445 = vand.u32 %v410, 15
      %v446 = vand.u32 %v411, 15
      %v447 = vand.u32 %v412, 15
      %v448 = vand.u32 %v413, 15
      %v449 = vand.u32 %v414, 15
      %v450 = vand.u32 %v415, 15
      %v451 = vand.u32 %v416, 15
      %v452 = vand.u32 %v417, 15
      %v453 = vsub.s32 %v419, %v386
      %v454 = vsub.s32 %v420, %v386
      %v455 = vsub.s32 %v419, %v387
      %v456 = vsub.s32 %v420, %v387
      %v457 = vsub.s32 %v419, %v388
      %v458 = vsub.s32 %v420, %v388
      %v459 = vsub.s32 %v419, %v389
      %v460 = vsub.s32 %v420, %v389
      %v461 = vsub.s32 %v419, %v390
      %v462 = vsub.s32 %v420, %v390
      %v463 = vsub.s32 %v419, %v391
      %v464 = vsub.s32 %v420, %v391
      %v465 = vsub.s32 %v419, %v392
      %v466 = vsub.s32 %v420, %v392
      %v467 = vsub.s32 %v419, %v393
      %v468 = vsub.s32 %v420, %v393
      %v469 = vsub.s32 %v419, %v394
      %v470 = vsub.s32 %v420, %v394
      %v471 = vsub.s32 %v419, %v395
      %v472 = vsub.s32 %v420, %v395
      %v473 = vsub.s32 %v419, %v396
      %v474 = vsub.s32 %v420, %v396
      %v475 = vsub.s32 %v419, %v397
      %v476 = vsub.s32 %v420, %v397
      %v477 = vsub.s32 %v419, %v398
      %v478 = vsub.s32 %v420, %v398
      %v479 = vsub.s32 %v419, %v399
      %v480 = vsub.s32 %v420, %v399
      %v481 = vsub.s32 %v419, %v400
      %v482 = vsub.s32 %v420, %v400
      %v483 = vsub.s32 %v419, %v401
      %v484 = vsub.s32 %v420, %v401
      %v485 = vsub.s32 %v419, %v402
      %v486 = vsub.s32 %v420, %v402
      %v487 = vsub.s32 %v419, %v403
      %v488 = vsub.s32 %v420, %v403
      %v489 = vsub.s32 %v419, %v404
      %v490 = vsub.s32 %v420, %v404
      %v491 = vsub.s32 %v419, %v405
      %v492 = vsub.s32 %v420, %v405
      %v493 = vsub.s32 %v419, %v406
      %v494 = vsub.s32 %v420, %v406
      %v495 = vsub.s32 %v419, %v407
      %v496 = vsub.s32 %v420, %v407
      %v497 = vsub.s32 %v419, %v408
      %v498 = vsub.s32 %v420, %v408
      %v499 = vsub.s32 %v419, %v409
      %v500 = vsub.s32 %v420, %v409
      %v501 = vsub.s32 %v419, %v410
      %v502 = vsub.s32 %v420, %v410
      %v503 = vsub.s32 %v419, %v411
      %v504 = vsub.s32 %v420, %v411
      %v505 = vsub.s32 %v419, %v412
      %v506 = vsub.s32 %v420, %v412
      %v507 = vsub.s32 %v419, %v413
      %v508 = vsub.s32 %v420, %v413
      %v509 = vsub.s32 %v419, %v414
      %v510 = vsub.s32 %v420, %v414
      %v511 = vsub.s32 %v419, %v415
      %v512 = vsub.s32 %v420, %v415
      %v513 = vsub.s32 %v419, %v416
      %v514 = vsub.s32 %v420, %v416
      %v515 = vsub.s32 %v419, %v417
      %v516 = vsub.s32 %v420, %v417
      %vm517 = vcmp.eq.s32.totalorder %v453, 4294967280
      %vm518 = vcmp.eq.s32.totalorder %v454, 4294967280
      %vm519 = vcmp.eq.s32.totalorder %v455, 4294967280
      %vm520 = vcmp.eq.s32.totalorder %v456, 4294967280
      %vm521 = vcmp.eq.s32.totalorder %v457, 4294967280
      %vm522 = vcmp.eq.s32.totalorder %v458, 4294967280
      %vm523 = vcmp.eq.s32.totalorder %v459, 4294967280
      %vm524 = vcmp.eq.s32.totalorder %v460, 4294967280
      %vm525 = vcmp.eq.s32.totalorder %v461, 4294967280
      %vm526 = vcmp.eq.s32.totalorder %v462, 4294967280
      %vm527 = vcmp.eq.s32.totalorder %v463, 4294967280
      %vm528 = vcmp.eq.s32.totalorder %v464, 4294967280
      %vm529 = vcmp.eq.s32.totalorder %v465, 4294967280
      %vm530 = vcmp.eq.s32.totalorder %v466, 4294967280
      %vm531 = vcmp.eq.s32.totalorder %v467, 4294967280
      %vm532 = vcmp.eq.s32.totalorder %v468, 4294967280
      %vm533 = vcmp.eq.s32.totalorder %v469, 4294967280
      %vm534 = vcmp.eq.s32.totalorder %v470, 4294967280
      %vm535 = vcmp.eq.s32.totalorder %v471, 4294967280
      %vm536 = vcmp.eq.s32.totalorder %v472, 4294967280
      %vm537 = vcmp.eq.s32.totalorder %v473, 4294967280
      %vm538 = vcmp.eq.s32.totalorder %v474, 4294967280
      %vm539 = vcmp.eq.s32.totalorder %v475, 4294967280
      %vm540 = vcmp.eq.s32.totalorder %v476, 4294967280
      %vm541 = vcmp.eq.s32.totalorder %v477, 4294967280
      %vm542 = vcmp.eq.s32.totalorder %v478, 4294967280
      %vm543 = vcmp.eq.s32.totalorder %v479, 4294967280
      %vm544 = vcmp.eq.s32.totalorder %v480, 4294967280
      %vm545 = vcmp.eq.s32.totalorder %v481, 4294967280
      %vm546 = vcmp.eq.s32.totalorder %v482, 4294967280
      %vm547 = vcmp.eq.s32.totalorder %v483, 4294967280
      %vm548 = vcmp.eq.s32.totalorder %v484, 4294967280
      %vm549 = vcmp.eq.s32.totalorder %v485, 4294967280
      %vm550 = vcmp.eq.s32.totalorder %v486, 4294967280
      %vm551 = vcmp.eq.s32.totalorder %v487, 4294967280
      %vm552 = vcmp.eq.s32.totalorder %v488, 4294967280
      %vm553 = vcmp.eq.s32.totalorder %v489, 4294967280
      %vm554 = vcmp.eq.s32.totalorder %v490, 4294967280
      %vm555 = vcmp.eq.s32.totalorder %v491, 4294967280
      %vm556 = vcmp.eq.s32.totalorder %v492, 4294967280
      %vm557 = vcmp.eq.s32.totalorder %v493, 4294967280
      %vm558 = vcmp.eq.s32.totalorder %v494, 4294967280
      %vm559 = vcmp.eq.s32.totalorder %v495, 4294967280
      %vm560 = vcmp.eq.s32.totalorder %v496, 4294967280
      %vm561 = vcmp.eq.s32.totalorder %v497, 4294967280
      %vm562 = vcmp.eq.s32.totalorder %v498, 4294967280
      %vm563 = vcmp.eq.s32.totalorder %v499, 4294967280
      %vm564 = vcmp.eq.s32.totalorder %v500, 4294967280
      %vm565 = vcmp.eq.s32.totalorder %v501, 4294967280
      %vm566 = vcmp.eq.s32.totalorder %v502, 4294967280
      %vm567 = vcmp.eq.s32.totalorder %v503, 4294967280
      %vm568 = vcmp.eq.s32.totalorder %v504, 4294967280
      %vm569 = vcmp.eq.s32.totalorder %v505, 4294967280
      %vm570 = vcmp.eq.s32.totalorder %v506, 4294967280
      %vm571 = vcmp.eq.s32.totalorder %v507, 4294967280
      %vm572 = vcmp.eq.s32.totalorder %v508, 4294967280
      %vm573 = vcmp.eq.s32.totalorder %v509, 4294967280
      %vm574 = vcmp.eq.s32.totalorder %v510, 4294967280
      %vm575 = vcmp.eq.s32.totalorder %v511, 4294967280
      %vm576 = vcmp.eq.s32.totalorder %v512, 4294967280
      %vm577 = vcmp.eq.s32.totalorder %v513, 4294967280
      %vm578 = vcmp.eq.s32.totalorder %v514, 4294967280
      %vm579 = vcmp.eq.s32.totalorder %v515, 4294967280
      %vm580 = vcmp.eq.s32.totalorder %v516, 4294967280
      %v581 = vsel %vm517, 1.0, 0.0
      %v582 = vsel %vm518, 1.0, 0.0
      %v583 = vsel %vm519, 1.0, 0.0
      %v584 = vsel %vm520, 1.0, 0.0
      %v585 = vsel %vm521, 1.0, 0.0
      %v586 = vsel %vm522, 1.0, 0.0
      %v587 = vsel %vm523, 1.0, 0.0
      %v588 = vsel %vm524, 1.0, 0.0
      %v589 = vsel %vm525, 1.0, 0.0
      %v590 = vsel %vm526, 1.0, 0.0
      %v591 = vsel %vm527, 1.0, 0.0
      %v592 = vsel %vm528, 1.0, 0.0
      %v593 = vsel %vm529, 1.0, 0.0
      %v594 = vsel %vm530, 1.0, 0.0
      %v595 = vsel %vm531, 1.0, 0.0
      %v596 = vsel %vm532, 1.0, 0.0
      %v597 = vsel %vm533, 1.0, 0.0
      %v598 = vsel %vm534, 1.0, 0.0
      %v599 = vsel %vm535, 1.0, 0.0
      %v600 = vsel %vm536, 1.0, 0.0
      %v601 = vsel %vm537, 1.0, 0.0
      %v602 = vsel %vm538, 1.0, 0.0
      %v603 = vsel %vm539, 1.0, 0.0
      %v604 = vsel %vm540, 1.0, 0.0
      %v605 = vsel %vm541, 1.0, 0.0
      %v606 = vsel %vm542, 1.0, 0.0
      %v607 = vsel %vm543, 1.0, 0.0
      %v608 = vsel %vm544, 1.0, 0.0
      %v609 = vsel %vm545, 1.0, 0.0
      %v610 = vsel %vm546, 1.0, 0.0
      %v611 = vsel %vm547, 1.0, 0.0
      %v612 = vsel %vm548, 1.0, 0.0
      %v613 = vsel %vm549, 1.0, 0.0
      %v614 = vsel %vm550, 1.0, 0.0
      %v615 = vsel %vm551, 1.0, 0.0
      %v616 = vsel %vm552, 1.0, 0.0
      %v617 = vsel %vm553, 1.0, 0.0
      %v618 = vsel %vm554, 1.0, 0.0
      %v619 = vsel %vm555, 1.0, 0.0
      %v620 = vsel %vm556, 1.0, 0.0
      %v621 = vsel %vm557, 1.0, 0.0
      %v622 = vsel %vm558, 1.0, 0.0
      %v623 = vsel %vm559, 1.0, 0.0
      %v624 = vsel %vm560, 1.0, 0.0
      %v625 = vsel %vm561, 1.0, 0.0
      %v626 = vsel %vm562, 1.0, 0.0
      %v627 = vsel %vm563, 1.0, 0.0
      %v628 = vsel %vm564, 1.0, 0.0
      %v629 = vsel %vm565, 1.0, 0.0
      %v630 = vsel %vm566, 1.0, 0.0
      %v631 = vsel %vm567, 1.0, 0.0
      %v632 = vsel %vm568, 1.0, 0.0
      %v633 = vsel %vm569, 1.0, 0.0
      %v634 = vsel %vm570, 1.0, 0.0
      %v635 = vsel %vm571, 1.0, 0.0
      %v636 = vsel %vm572, 1.0, 0.0
      %v637 = vsel %vm573, 1.0, 0.0
      %v638 = vsel %vm574, 1.0, 0.0
      %v639 = vsel %vm575, 1.0, 0.0
      %v640 = vsel %vm576, 1.0, 0.0
      %v641 = vsel %vm577, 1.0, 0.0
      %v642 = vsel %vm578, 1.0, 0.0
      %v643 = vsel %vm579, 1.0, 0.0
      %v644 = vsel %vm580, 1.0, 0.0
      %v645 = vpack.c.bf16 %v583, %v581
      %v646 = vpack.c.bf16 %v584, %v582
      %v647 = vpack.c.bf16 %v587, %v585
      %v648 = vpack.c.bf16 %v588, %v586
      %v649 = vpack.c.bf16 %v591, %v589
      %v650 = vpack.c.bf16 %v592, %v590
      %v651 = vpack.c.bf16 %v595, %v593
      %v652 = vpack.c.bf16 %v596, %v594
      %v653 = vpack.c.bf16 %v599, %v597
      %v654 = vpack.c.bf16 %v600, %v598
      %v655 = vpack.c.bf16 %v603, %v601
      %v656 = vpack.c.bf16 %v604, %v602
      %v657 = vpack.c.bf16 %v607, %v605
      %v658 = vpack.c.bf16 %v608, %v606
      %v659 = vpack.c.bf16 %v611, %v609
      %v660 = vpack.c.bf16 %v612, %v610
      %v661 = vpack.c.bf16 %v615, %v613
      %v662 = vpack.c.bf16 %v616, %v614
      %v663 = vpack.c.bf16 %v619, %v617
      %v664 = vpack.c.bf16 %v620, %v618
      %v665 = vpack.c.bf16 %v623, %v621
      %v666 = vpack.c.bf16 %v624, %v622
      %v667 = vpack.c.bf16 %v627, %v625
      %v668 = vpack.c.bf16 %v628, %v626
      %v669 = vpack.c.bf16 %v631, %v629
      %v670 = vpack.c.bf16 %v632, %v630
      %v671 = vpack.c.bf16 %v635, %v633
      %v672 = vpack.c.bf16 %v636, %v634
      %v673 = vpack.c.bf16 %v639, %v637
      %v674 = vpack.c.bf16 %v640, %v638
      %v675 = vpack.c.bf16 %v643, %v641
      %v676 = vpack.c.bf16 %v644, %v642
      %vm677 = vcmp.eq.s32.totalorder %v453, 16
      %vm678 = vcmp.eq.s32.totalorder %v454, 16
      %vm679 = vcmp.eq.s32.totalorder %v455, 16
      %vm680 = vcmp.eq.s32.totalorder %v456, 16
      %vm681 = vcmp.eq.s32.totalorder %v457, 16
      %vm682 = vcmp.eq.s32.totalorder %v458, 16
      %vm683 = vcmp.eq.s32.totalorder %v459, 16
      %vm684 = vcmp.eq.s32.totalorder %v460, 16
      %vm685 = vcmp.eq.s32.totalorder %v461, 16
      %vm686 = vcmp.eq.s32.totalorder %v462, 16
      %vm687 = vcmp.eq.s32.totalorder %v463, 16
      %vm688 = vcmp.eq.s32.totalorder %v464, 16
      %vm689 = vcmp.eq.s32.totalorder %v465, 16
      %vm690 = vcmp.eq.s32.totalorder %v466, 16
      %vm691 = vcmp.eq.s32.totalorder %v467, 16
      %vm692 = vcmp.eq.s32.totalorder %v468, 16
      %vm693 = vcmp.eq.s32.totalorder %v469, 16
      %vm694 = vcmp.eq.s32.totalorder %v470, 16
      %vm695 = vcmp.eq.s32.totalorder %v471, 16
      %vm696 = vcmp.eq.s32.totalorder %v472, 16
      %vm697 = vcmp.eq.s32.totalorder %v473, 16
      %vm698 = vcmp.eq.s32.totalorder %v474, 16
      %vm699 = vcmp.eq.s32.totalorder %v475, 16
      %vm700 = vcmp.eq.s32.totalorder %v476, 16
      %vm701 = vcmp.eq.s32.totalorder %v477, 16
      %vm702 = vcmp.eq.s32.totalorder %v478, 16
      %vm703 = vcmp.eq.s32.totalorder %v479, 16
      %vm704 = vcmp.eq.s32.totalorder %v480, 16
      %vm705 = vcmp.eq.s32.totalorder %v481, 16
      %vm706 = vcmp.eq.s32.totalorder %v482, 16
      %vm707 = vcmp.eq.s32.totalorder %v483, 16
      %vm708 = vcmp.eq.s32.totalorder %v484, 16
      %vm709 = vcmp.eq.s32.totalorder %v485, 16
      %vm710 = vcmp.eq.s32.totalorder %v486, 16
      %vm711 = vcmp.eq.s32.totalorder %v487, 16
      %vm712 = vcmp.eq.s32.totalorder %v488, 16
      %vm713 = vcmp.eq.s32.totalorder %v489, 16
      %vm714 = vcmp.eq.s32.totalorder %v490, 16
      %vm715 = vcmp.eq.s32.totalorder %v491, 16
      %vm716 = vcmp.eq.s32.totalorder %v492, 16
      %vm717 = vcmp.eq.s32.totalorder %v493, 16
      %vm718 = vcmp.eq.s32.totalorder %v494, 16
      %vm719 = vcmp.eq.s32.totalorder %v495, 16
      %vm720 = vcmp.eq.s32.totalorder %v496, 16
      %vm721 = vcmp.eq.s32.totalorder %v497, 16
      %vm722 = vcmp.eq.s32.totalorder %v498, 16
      %vm723 = vcmp.eq.s32.totalorder %v499, 16
      %vm724 = vcmp.eq.s32.totalorder %v500, 16
      %vm725 = vcmp.eq.s32.totalorder %v501, 16
      %vm726 = vcmp.eq.s32.totalorder %v502, 16
      %vm727 = vcmp.eq.s32.totalorder %v503, 16
      %vm728 = vcmp.eq.s32.totalorder %v504, 16
      %vm729 = vcmp.eq.s32.totalorder %v505, 16
      %vm730 = vcmp.eq.s32.totalorder %v506, 16
      %vm731 = vcmp.eq.s32.totalorder %v507, 16
      %vm732 = vcmp.eq.s32.totalorder %v508, 16
      %vm733 = vcmp.eq.s32.totalorder %v509, 16
      %vm734 = vcmp.eq.s32.totalorder %v510, 16
      %vm735 = vcmp.eq.s32.totalorder %v511, 16
      %vm736 = vcmp.eq.s32.totalorder %v512, 16
      %vm737 = vcmp.eq.s32.totalorder %v513, 16
      %vm738 = vcmp.eq.s32.totalorder %v514, 16
      %vm739 = vcmp.eq.s32.totalorder %v515, 16
      %vm740 = vcmp.eq.s32.totalorder %v516, 16
      %v741 = vsel %vm677, 1.0, 0.0
      %v742 = vsel %vm678, 1.0, 0.0
      %v743 = vsel %vm679, 1.0, 0.0
      %v744 = vsel %vm680, 1.0, 0.0
      %v745 = vsel %vm681, 1.0, 0.0
      %v746 = vsel %vm682, 1.0, 0.0
      %v747 = vsel %vm683, 1.0, 0.0
      %v748 = vsel %vm684, 1.0, 0.0
      %v749 = vsel %vm685, 1.0, 0.0
      %v750 = vsel %vm686, 1.0, 0.0
      %v751 = vsel %vm687, 1.0, 0.0
      %v752 = vsel %vm688, 1.0, 0.0
      %v753 = vsel %vm689, 1.0, 0.0
      %v754 = vsel %vm690, 1.0, 0.0
      %v755 = vsel %vm691, 1.0, 0.0
      %v756 = vsel %vm692, 1.0, 0.0
      %v757 = vsel %vm693, 1.0, 0.0
      %v758 = vsel %vm694, 1.0, 0.0
      %v759 = vsel %vm695, 1.0, 0.0
      %v760 = vsel %vm696, 1.0, 0.0
      %v761 = vsel %vm697, 1.0, 0.0
      %v762 = vsel %vm698, 1.0, 0.0
      %v763 = vsel %vm699, 1.0, 0.0
      %v764 = vsel %vm700, 1.0, 0.0
      %v765 = vsel %vm701, 1.0, 0.0
      %v766 = vsel %vm702, 1.0, 0.0
      %v767 = vsel %vm703, 1.0, 0.0
      %v768 = vsel %vm704, 1.0, 0.0
      %v769 = vsel %vm705, 1.0, 0.0
      %v770 = vsel %vm706, 1.0, 0.0
      %v771 = vsel %vm707, 1.0, 0.0
      %v772 = vsel %vm708, 1.0, 0.0
      %v773 = vsel %vm709, 1.0, 0.0
      %v774 = vsel %vm710, 1.0, 0.0
      %v775 = vsel %vm711, 1.0, 0.0
      %v776 = vsel %vm712, 1.0, 0.0
      %v777 = vsel %vm713, 1.0, 0.0
      %v778 = vsel %vm714, 1.0, 0.0
      %v779 = vsel %vm715, 1.0, 0.0
      %v780 = vsel %vm716, 1.0, 0.0
      %v781 = vsel %vm717, 1.0, 0.0
      %v782 = vsel %vm718, 1.0, 0.0
      %v783 = vsel %vm719, 1.0, 0.0
      %v784 = vsel %vm720, 1.0, 0.0
      %v785 = vsel %vm721, 1.0, 0.0
      %v786 = vsel %vm722, 1.0, 0.0
      %v787 = vsel %vm723, 1.0, 0.0
      %v788 = vsel %vm724, 1.0, 0.0
      %v789 = vsel %vm725, 1.0, 0.0
      %v790 = vsel %vm726, 1.0, 0.0
      %v791 = vsel %vm727, 1.0, 0.0
      %v792 = vsel %vm728, 1.0, 0.0
      %v793 = vsel %vm729, 1.0, 0.0
      %v794 = vsel %vm730, 1.0, 0.0
      %v795 = vsel %vm731, 1.0, 0.0
      %v796 = vsel %vm732, 1.0, 0.0
      %v797 = vsel %vm733, 1.0, 0.0
      %v798 = vsel %vm734, 1.0, 0.0
      %v799 = vsel %vm735, 1.0, 0.0
      %v800 = vsel %vm736, 1.0, 0.0
      %v801 = vsel %vm737, 1.0, 0.0
      %v802 = vsel %vm738, 1.0, 0.0
      %v803 = vsel %vm739, 1.0, 0.0
      %v804 = vsel %vm740, 1.0, 0.0
      %v805 = vpack.c.bf16 %v743, %v741
      %v806 = vpack.c.bf16 %v744, %v742
      %v807 = vpack.c.bf16 %v747, %v745
      %v808 = vpack.c.bf16 %v748, %v746
      %v809 = vpack.c.bf16 %v751, %v749
      %v810 = vpack.c.bf16 %v752, %v750
      %v811 = vpack.c.bf16 %v755, %v753
      %v812 = vpack.c.bf16 %v756, %v754
      %v813 = vpack.c.bf16 %v759, %v757
      %v814 = vpack.c.bf16 %v760, %v758
      %v815 = vpack.c.bf16 %v763, %v761
      %v816 = vpack.c.bf16 %v764, %v762
      %v817 = vpack.c.bf16 %v767, %v765
      %v818 = vpack.c.bf16 %v768, %v766
      %v819 = vpack.c.bf16 %v771, %v769
      %v820 = vpack.c.bf16 %v772, %v770
      %v821 = vpack.c.bf16 %v775, %v773
      %v822 = vpack.c.bf16 %v776, %v774
      %v823 = vpack.c.bf16 %v779, %v777
      %v824 = vpack.c.bf16 %v780, %v778
      %v825 = vpack.c.bf16 %v783, %v781
      %v826 = vpack.c.bf16 %v784, %v782
      %v827 = vpack.c.bf16 %v787, %v785
      %v828 = vpack.c.bf16 %v788, %v786
      %v829 = vpack.c.bf16 %v791, %v789
      %v830 = vpack.c.bf16 %v792, %v790
      %v831 = vpack.c.bf16 %v795, %v793
      %v832 = vpack.c.bf16 %v796, %v794
      %v833 = vpack.c.bf16 %v799, %v797
      %v834 = vpack.c.bf16 %v800, %v798
      %v835 = vpack.c.bf16 %v803, %v801
      %v836 = vpack.c.bf16 %v804, %v802
      %vm837 = vcmp.eq.s32.totalorder %v453, 4294967295
      %vm838 = vcmp.eq.s32.totalorder %v454, 4294967295
      %vm839 = vcmp.eq.s32.totalorder %v455, 4294967295
      %vm840 = vcmp.eq.s32.totalorder %v456, 4294967295
      %vm841 = vcmp.eq.s32.totalorder %v457, 4294967295
      %vm842 = vcmp.eq.s32.totalorder %v458, 4294967295
      %vm843 = vcmp.eq.s32.totalorder %v459, 4294967295
      %vm844 = vcmp.eq.s32.totalorder %v460, 4294967295
      %vm845 = vcmp.eq.s32.totalorder %v461, 4294967295
      %vm846 = vcmp.eq.s32.totalorder %v462, 4294967295
      %vm847 = vcmp.eq.s32.totalorder %v463, 4294967295
      %vm848 = vcmp.eq.s32.totalorder %v464, 4294967295
      %vm849 = vcmp.eq.s32.totalorder %v465, 4294967295
      %vm850 = vcmp.eq.s32.totalorder %v466, 4294967295
      %vm851 = vcmp.eq.s32.totalorder %v467, 4294967295
      %vm852 = vcmp.eq.s32.totalorder %v468, 4294967295
      %vm853 = vcmp.eq.s32.totalorder %v469, 4294967295
      %vm854 = vcmp.eq.s32.totalorder %v470, 4294967295
      %vm855 = vcmp.eq.s32.totalorder %v471, 4294967295
      %vm856 = vcmp.eq.s32.totalorder %v472, 4294967295
      %vm857 = vcmp.eq.s32.totalorder %v473, 4294967295
      %vm858 = vcmp.eq.s32.totalorder %v474, 4294967295
      %vm859 = vcmp.eq.s32.totalorder %v475, 4294967295
      %vm860 = vcmp.eq.s32.totalorder %v476, 4294967295
      %vm861 = vcmp.eq.s32.totalorder %v477, 4294967295
      %vm862 = vcmp.eq.s32.totalorder %v478, 4294967295
      %vm863 = vcmp.eq.s32.totalorder %v479, 4294967295
      %vm864 = vcmp.eq.s32.totalorder %v480, 4294967295
      %vm865 = vcmp.eq.s32.totalorder %v481, 4294967295
      %vm866 = vcmp.eq.s32.totalorder %v482, 4294967295
      %vm867 = vcmp.eq.s32.totalorder %v483, 4294967295
      %vm868 = vcmp.eq.s32.totalorder %v484, 4294967295
      %vm869 = vcmp.eq.s32.totalorder %v485, 4294967295
      %vm870 = vcmp.eq.s32.totalorder %v486, 4294967295
      %vm871 = vcmp.eq.s32.totalorder %v487, 4294967295
      %vm872 = vcmp.eq.s32.totalorder %v488, 4294967295
      %vm873 = vcmp.eq.s32.totalorder %v489, 4294967295
      %vm874 = vcmp.eq.s32.totalorder %v490, 4294967295
      %vm875 = vcmp.eq.s32.totalorder %v491, 4294967295
      %vm876 = vcmp.eq.s32.totalorder %v492, 4294967295
      %vm877 = vcmp.eq.s32.totalorder %v493, 4294967295
      %vm878 = vcmp.eq.s32.totalorder %v494, 4294967295
      %vm879 = vcmp.eq.s32.totalorder %v495, 4294967295
      %vm880 = vcmp.eq.s32.totalorder %v496, 4294967295
      %vm881 = vcmp.eq.s32.totalorder %v497, 4294967295
      %vm882 = vcmp.eq.s32.totalorder %v498, 4294967295
      %vm883 = vcmp.eq.s32.totalorder %v499, 4294967295
      %vm884 = vcmp.eq.s32.totalorder %v500, 4294967295
      %vm885 = vcmp.eq.s32.totalorder %v501, 4294967295
      %vm886 = vcmp.eq.s32.totalorder %v502, 4294967295
      %vm887 = vcmp.eq.s32.totalorder %v503, 4294967295
      %vm888 = vcmp.eq.s32.totalorder %v504, 4294967295
      %vm889 = vcmp.eq.s32.totalorder %v505, 4294967295
      %vm890 = vcmp.eq.s32.totalorder %v506, 4294967295
      %vm891 = vcmp.eq.s32.totalorder %v507, 4294967295
      %vm892 = vcmp.eq.s32.totalorder %v508, 4294967295
      %vm893 = vcmp.eq.s32.totalorder %v509, 4294967295
      %vm894 = vcmp.eq.s32.totalorder %v510, 4294967295
      %vm895 = vcmp.eq.s32.totalorder %v511, 4294967295
      %vm896 = vcmp.eq.s32.totalorder %v512, 4294967295
      %vm897 = vcmp.eq.s32.totalorder %v513, 4294967295
      %vm898 = vcmp.eq.s32.totalorder %v514, 4294967295
      %vm899 = vcmp.eq.s32.totalorder %v515, 4294967295
      %vm900 = vcmp.eq.s32.totalorder %v516, 4294967295
      %v901 = vadd.s32 %v421, 4294967295
      %v902 = vadd.s32 %v422, 4294967295
      %v903 = vadd.s32 %v423, 4294967295
      %v904 = vadd.s32 %v424, 4294967295
      %v905 = vadd.s32 %v425, 4294967295
      %v906 = vadd.s32 %v426, 4294967295
      %v907 = vadd.s32 %v427, 4294967295
      %v908 = vadd.s32 %v428, 4294967295
      %v909 = vadd.s32 %v429, 4294967295
      %v910 = vadd.s32 %v430, 4294967295
      %v911 = vadd.s32 %v431, 4294967295
      %v912 = vadd.s32 %v432, 4294967295
      %v913 = vadd.s32 %v433, 4294967295
      %v914 = vadd.s32 %v434, 4294967295
      %v915 = vadd.s32 %v435, 4294967295
      %v916 = vadd.s32 %v436, 4294967295
      %v917 = vadd.s32 %v437, 4294967295
      %v918 = vadd.s32 %v438, 4294967295
      %v919 = vadd.s32 %v439, 4294967295
      %v920 = vadd.s32 %v440, 4294967295
      %v921 = vadd.s32 %v441, 4294967295
      %v922 = vadd.s32 %v442, 4294967295
      %v923 = vadd.s32 %v443, 4294967295
      %v924 = vadd.s32 %v444, 4294967295
      %v925 = vadd.s32 %v445, 4294967295
      %v926 = vadd.s32 %v446, 4294967295
      %v927 = vadd.s32 %v447, 4294967295
      %v928 = vadd.s32 %v448, 4294967295
      %v929 = vadd.s32 %v449, 4294967295
      %v930 = vadd.s32 %v450, 4294967295
      %v931 = vadd.s32 %v451, 4294967295
      %v932 = vadd.s32 %v452, 4294967295
      %vm933 = vcmp.ge.s32.totalorder %v901, 0
      %vm934 = vcmp.ge.s32.totalorder %v902, 0
      %vm935 = vcmp.ge.s32.totalorder %v903, 0
      %vm936 = vcmp.ge.s32.totalorder %v904, 0
      %vm937 = vcmp.ge.s32.totalorder %v905, 0
      %vm938 = vcmp.ge.s32.totalorder %v906, 0
      %vm939 = vcmp.ge.s32.totalorder %v907, 0
      %vm940 = vcmp.ge.s32.totalorder %v908, 0
      %vm941 = vcmp.ge.s32.totalorder %v909, 0
      %vm942 = vcmp.ge.s32.totalorder %v910, 0
      %vm943 = vcmp.ge.s32.totalorder %v911, 0
      %vm944 = vcmp.ge.s32.totalorder %v912, 0
      %vm945 = vcmp.ge.s32.totalorder %v913, 0
      %vm946 = vcmp.ge.s32.totalorder %v914, 0
      %vm947 = vcmp.ge.s32.totalorder %v915, 0
      %vm948 = vcmp.ge.s32.totalorder %v916, 0
      %vm949 = vcmp.ge.s32.totalorder %v917, 0
      %vm950 = vcmp.ge.s32.totalorder %v918, 0
      %vm951 = vcmp.ge.s32.totalorder %v919, 0
      %vm952 = vcmp.ge.s32.totalorder %v920, 0
      %vm953 = vcmp.ge.s32.totalorder %v921, 0
      %vm954 = vcmp.ge.s32.totalorder %v922, 0
      %vm955 = vcmp.ge.s32.totalorder %v923, 0
      %vm956 = vcmp.ge.s32.totalorder %v924, 0
      %vm957 = vcmp.ge.s32.totalorder %v925, 0
      %vm958 = vcmp.ge.s32.totalorder %v926, 0
      %vm959 = vcmp.ge.s32.totalorder %v927, 0
      %vm960 = vcmp.ge.s32.totalorder %v928, 0
      %vm961 = vcmp.ge.s32.totalorder %v929, 0
      %vm962 = vcmp.ge.s32.totalorder %v930, 0
      %vm963 = vcmp.ge.s32.totalorder %v931, 0
      %vm964 = vcmp.ge.s32.totalorder %v932, 0
      %vm965 = vmand %vm837, %vm933
      %vm966 = vmand %vm838, %vm933
      %vm967 = vmand %vm839, %vm934
      %vm968 = vmand %vm840, %vm934
      %vm969 = vmand %vm841, %vm935
      %vm970 = vmand %vm842, %vm935
      %vm971 = vmand %vm843, %vm936
      %vm972 = vmand %vm844, %vm936
      %vm973 = vmand %vm845, %vm937
      %vm974 = vmand %vm846, %vm937
      %vm975 = vmand %vm847, %vm938
      %vm976 = vmand %vm848, %vm938
      %vm977 = vmand %vm849, %vm939
      %vm978 = vmand %vm850, %vm939
      %vm979 = vmand %vm851, %vm940
      %vm980 = vmand %vm852, %vm940
      %vm981 = vmand %vm853, %vm941
      %vm982 = vmand %vm854, %vm941
      %vm983 = vmand %vm855, %vm942
      %vm984 = vmand %vm856, %vm942
      %vm985 = vmand %vm857, %vm943
      %vm986 = vmand %vm858, %vm943
      %vm987 = vmand %vm859, %vm944
      %vm988 = vmand %vm860, %vm944
      %vm989 = vmand %vm861, %vm945
      %vm990 = vmand %vm862, %vm945
      %vm991 = vmand %vm863, %vm946
      %vm992 = vmand %vm864, %vm946
      %vm993 = vmand %vm865, %vm947
      %vm994 = vmand %vm866, %vm947
      %vm995 = vmand %vm867, %vm948
      %vm996 = vmand %vm868, %vm948
      %vm997 = vmand %vm869, %vm949
      %vm998 = vmand %vm870, %vm949
      %vm999 = vmand %vm871, %vm950
      %vm1000 = vmand %vm872, %vm950
      %vm1001 = vmand %vm873, %vm951
      %vm1002 = vmand %vm874, %vm951
      %vm1003 = vmand %vm875, %vm952
      %vm1004 = vmand %vm876, %vm952
      %vm1005 = vmand %vm877, %vm953
      %vm1006 = vmand %vm878, %vm953
      %vm1007 = vmand %vm879, %vm954
      %vm1008 = vmand %vm880, %vm954
      %vm1009 = vmand %vm881, %vm955
      %vm1010 = vmand %vm882, %vm955
      %vm1011 = vmand %vm883, %vm956
      %vm1012 = vmand %vm884, %vm956
      %vm1013 = vmand %vm885, %vm957
      %vm1014 = vmand %vm886, %vm957
      %vm1015 = vmand %vm887, %vm958
      %vm1016 = vmand %vm888, %vm958
      %vm1017 = vmand %vm889, %vm959
      %vm1018 = vmand %vm890, %vm959
      %vm1019 = vmand %vm891, %vm960
      %vm1020 = vmand %vm892, %vm960
      %vm1021 = vmand %vm893, %vm961
      %vm1022 = vmand %vm894, %vm961
      %vm1023 = vmand %vm895, %vm962
      %vm1024 = vmand %vm896, %vm962
      %vm1025 = vmand %vm897, %vm963
      %vm1026 = vmand %vm898, %vm963
      %vm1027 = vmand %vm899, %vm964
      %vm1028 = vmand %vm900, %vm964
      %vm1029 = vcmp.lt.s32.totalorder %v901, 16
      %vm1030 = vcmp.lt.s32.totalorder %v902, 16
      %vm1031 = vcmp.lt.s32.totalorder %v903, 16
      %vm1032 = vcmp.lt.s32.totalorder %v904, 16
      %vm1033 = vcmp.lt.s32.totalorder %v905, 16
      %vm1034 = vcmp.lt.s32.totalorder %v906, 16
      %vm1035 = vcmp.lt.s32.totalorder %v907, 16
      %vm1036 = vcmp.lt.s32.totalorder %v908, 16
      %vm1037 = vcmp.lt.s32.totalorder %v909, 16
      %vm1038 = vcmp.lt.s32.totalorder %v910, 16
      %vm1039 = vcmp.lt.s32.totalorder %v911, 16
      %vm1040 = vcmp.lt.s32.totalorder %v912, 16
      %vm1041 = vcmp.lt.s32.totalorder %v913, 16
      %vm1042 = vcmp.lt.s32.totalorder %v914, 16
      %vm1043 = vcmp.lt.s32.totalorder %v915, 16
      %vm1044 = vcmp.lt.s32.totalorder %v916, 16
      %vm1045 = vcmp.lt.s32.totalorder %v917, 16
      %vm1046 = vcmp.lt.s32.totalorder %v918, 16
      %vm1047 = vcmp.lt.s32.totalorder %v919, 16
      %vm1048 = vcmp.lt.s32.totalorder %v920, 16
      %vm1049 = vcmp.lt.s32.totalorder %v921, 16
      %vm1050 = vcmp.lt.s32.totalorder %v922, 16
      %vm1051 = vcmp.lt.s32.totalorder %v923, 16
      %vm1052 = vcmp.lt.s32.totalorder %v924, 16
      %vm1053 = vcmp.lt.s32.totalorder %v925, 16
      %vm1054 = vcmp.lt.s32.totalorder %v926, 16
      %vm1055 = vcmp.lt.s32.totalorder %v927, 16
      %vm1056 = vcmp.lt.s32.totalorder %v928, 16
      %vm1057 = vcmp.lt.s32.totalorder %v929, 16
      %vm1058 = vcmp.lt.s32.totalorder %v930, 16
      %vm1059 = vcmp.lt.s32.totalorder %v931, 16
      %vm1060 = vcmp.lt.s32.totalorder %v932, 16
      %vm1061 = vmand %vm965, %vm1029
      %vm1062 = vmand %vm966, %vm1029
      %vm1063 = vmand %vm967, %vm1030
      %vm1064 = vmand %vm968, %vm1030
      %vm1065 = vmand %vm969, %vm1031
      %vm1066 = vmand %vm970, %vm1031
      %vm1067 = vmand %vm971, %vm1032
      %vm1068 = vmand %vm972, %vm1032
      %vm1069 = vmand %vm973, %vm1033
      %vm1070 = vmand %vm974, %vm1033
      %vm1071 = vmand %vm975, %vm1034
      %vm1072 = vmand %vm976, %vm1034
      %vm1073 = vmand %vm977, %vm1035
      %vm1074 = vmand %vm978, %vm1035
      %vm1075 = vmand %vm979, %vm1036
      %vm1076 = vmand %vm980, %vm1036
      %vm1077 = vmand %vm981, %vm1037
      %vm1078 = vmand %vm982, %vm1037
      %vm1079 = vmand %vm983, %vm1038
      %vm1080 = vmand %vm984, %vm1038
      %vm1081 = vmand %vm985, %vm1039
      %vm1082 = vmand %vm986, %vm1039
      %vm1083 = vmand %vm987, %vm1040
      %vm1084 = vmand %vm988, %vm1040
      %vm1085 = vmand %vm989, %vm1041
      %vm1086 = vmand %vm990, %vm1041
      %vm1087 = vmand %vm991, %vm1042
      %vm1088 = vmand %vm992, %vm1042
      %vm1089 = vmand %vm993, %vm1043
      %vm1090 = vmand %vm994, %vm1043
      %vm1091 = vmand %vm995, %vm1044
      %vm1092 = vmand %vm996, %vm1044
      %vm1093 = vmand %vm997, %vm1045
      %vm1094 = vmand %vm998, %vm1045
      %vm1095 = vmand %vm999, %vm1046
      %vm1096 = vmand %vm1000, %vm1046
      %vm1097 = vmand %vm1001, %vm1047
      %vm1098 = vmand %vm1002, %vm1047
      %vm1099 = vmand %vm1003, %vm1048
      %vm1100 = vmand %vm1004, %vm1048
      %vm1101 = vmand %vm1005, %vm1049
      %vm1102 = vmand %vm1006, %vm1049
      %vm1103 = vmand %vm1007, %vm1050
      %vm1104 = vmand %vm1008, %vm1050
      %vm1105 = vmand %vm1009, %vm1051
      %vm1106 = vmand %vm1010, %vm1051
      %vm1107 = vmand %vm1011, %vm1052
      %vm1108 = vmand %vm1012, %vm1052
      %vm1109 = vmand %vm1013, %vm1053
      %vm1110 = vmand %vm1014, %vm1053
      %vm1111 = vmand %vm1015, %vm1054
      %vm1112 = vmand %vm1016, %vm1054
      %vm1113 = vmand %vm1017, %vm1055
      %vm1114 = vmand %vm1018, %vm1055
      %vm1115 = vmand %vm1019, %vm1056
      %vm1116 = vmand %vm1020, %vm1056
      %vm1117 = vmand %vm1021, %vm1057
      %vm1118 = vmand %vm1022, %vm1057
      %vm1119 = vmand %vm1023, %vm1058
      %vm1120 = vmand %vm1024, %vm1058
      %vm1121 = vmand %vm1025, %vm1059
      %vm1122 = vmand %vm1026, %vm1059
      %vm1123 = vmand %vm1027, %vm1060
      %vm1124 = vmand %vm1028, %vm1060
      %v1125 = vsel %vm1061, 1.0, 0.0
      %v1126 = vsel %vm1062, 1.0, 0.0
      %v1127 = vsel %vm1063, 1.0, 0.0
      %v1128 = vsel %vm1064, 1.0, 0.0
      %v1129 = vsel %vm1065, 1.0, 0.0
      %v1130 = vsel %vm1066, 1.0, 0.0
      %v1131 = vsel %vm1067, 1.0, 0.0
      %v1132 = vsel %vm1068, 1.0, 0.0
      %v1133 = vsel %vm1069, 1.0, 0.0
      %v1134 = vsel %vm1070, 1.0, 0.0
      %v1135 = vsel %vm1071, 1.0, 0.0
      %v1136 = vsel %vm1072, 1.0, 0.0
      %v1137 = vsel %vm1073, 1.0, 0.0
      %v1138 = vsel %vm1074, 1.0, 0.0
      %v1139 = vsel %vm1075, 1.0, 0.0
      %v1140 = vsel %vm1076, 1.0, 0.0
      %v1141 = vsel %vm1077, 1.0, 0.0
      %v1142 = vsel %vm1078, 1.0, 0.0
      %v1143 = vsel %vm1079, 1.0, 0.0
      %v1144 = vsel %vm1080, 1.0, 0.0
      %v1145 = vsel %vm1081, 1.0, 0.0
      %v1146 = vsel %vm1082, 1.0, 0.0
      %v1147 = vsel %vm1083, 1.0, 0.0
      %v1148 = vsel %vm1084, 1.0, 0.0
      %v1149 = vsel %vm1085, 1.0, 0.0
      %v1150 = vsel %vm1086, 1.0, 0.0
      %v1151 = vsel %vm1087, 1.0, 0.0
      %v1152 = vsel %vm1088, 1.0, 0.0
      %v1153 = vsel %vm1089, 1.0, 0.0
      %v1154 = vsel %vm1090, 1.0, 0.0
      %v1155 = vsel %vm1091, 1.0, 0.0
      %v1156 = vsel %vm1092, 1.0, 0.0
      %v1157 = vsel %vm1093, 1.0, 0.0
      %v1158 = vsel %vm1094, 1.0, 0.0
      %v1159 = vsel %vm1095, 1.0, 0.0
      %v1160 = vsel %vm1096, 1.0, 0.0
      %v1161 = vsel %vm1097, 1.0, 0.0
      %v1162 = vsel %vm1098, 1.0, 0.0
      %v1163 = vsel %vm1099, 1.0, 0.0
      %v1164 = vsel %vm1100, 1.0, 0.0
      %v1165 = vsel %vm1101, 1.0, 0.0
      %v1166 = vsel %vm1102, 1.0, 0.0
      %v1167 = vsel %vm1103, 1.0, 0.0
      %v1168 = vsel %vm1104, 1.0, 0.0
      %v1169 = vsel %vm1105, 1.0, 0.0
      %v1170 = vsel %vm1106, 1.0, 0.0
      %v1171 = vsel %vm1107, 1.0, 0.0
      %v1172 = vsel %vm1108, 1.0, 0.0
      %v1173 = vsel %vm1109, 1.0, 0.0
      %v1174 = vsel %vm1110, 1.0, 0.0
      %v1175 = vsel %vm1111, 1.0, 0.0
      %v1176 = vsel %vm1112, 1.0, 0.0
      %v1177 = vsel %vm1113, 1.0, 0.0
      %v1178 = vsel %vm1114, 1.0, 0.0
      %v1179 = vsel %vm1115, 1.0, 0.0
      %v1180 = vsel %vm1116, 1.0, 0.0
      %v1181 = vsel %vm1117, 1.0, 0.0
      %v1182 = vsel %vm1118, 1.0, 0.0
      %v1183 = vsel %vm1119, 1.0, 0.0
      %v1184 = vsel %vm1120, 1.0, 0.0
      %v1185 = vsel %vm1121, 1.0, 0.0
      %v1186 = vsel %vm1122, 1.0, 0.0
      %v1187 = vsel %vm1123, 1.0, 0.0
      %v1188 = vsel %vm1124, 1.0, 0.0
      %v1189 = vpack.c.bf16 %v1127, %v1125
      %v1190 = vpack.c.bf16 %v1128, %v1126
      %v1191 = vpack.c.bf16 %v1131, %v1129
      %v1192 = vpack.c.bf16 %v1132, %v1130
      %v1193 = vpack.c.bf16 %v1135, %v1133
      %v1194 = vpack.c.bf16 %v1136, %v1134
      %v1195 = vpack.c.bf16 %v1139, %v1137
      %v1196 = vpack.c.bf16 %v1140, %v1138
      %v1197 = vpack.c.bf16 %v1143, %v1141
      %v1198 = vpack.c.bf16 %v1144, %v1142
      %v1199 = vpack.c.bf16 %v1147, %v1145
      %v1200 = vpack.c.bf16 %v1148, %v1146
      %v1201 = vpack.c.bf16 %v1151, %v1149
      %v1202 = vpack.c.bf16 %v1152, %v1150
      %v1203 = vpack.c.bf16 %v1155, %v1153
      %v1204 = vpack.c.bf16 %v1156, %v1154
      %v1205 = vpack.c.bf16 %v1159, %v1157
      %v1206 = vpack.c.bf16 %v1160, %v1158
      %v1207 = vpack.c.bf16 %v1163, %v1161
      %v1208 = vpack.c.bf16 %v1164, %v1162
      %v1209 = vpack.c.bf16 %v1167, %v1165
      %v1210 = vpack.c.bf16 %v1168, %v1166
      %v1211 = vpack.c.bf16 %v1171, %v1169
      %v1212 = vpack.c.bf16 %v1172, %v1170
      %v1213 = vpack.c.bf16 %v1175, %v1173
      %v1214 = vpack.c.bf16 %v1176, %v1174
      %v1215 = vpack.c.bf16 %v1179, %v1177
      %v1216 = vpack.c.bf16 %v1180, %v1178
      %v1217 = vpack.c.bf16 %v1183, %v1181
      %v1218 = vpack.c.bf16 %v1184, %v1182
      %v1219 = vpack.c.bf16 %v1187, %v1185
      %v1220 = vpack.c.bf16 %v1188, %v1186
      %vm1221 = vcmp.eq.s32.totalorder %v453, 1
      %vm1222 = vcmp.eq.s32.totalorder %v454, 1
      %vm1223 = vcmp.eq.s32.totalorder %v455, 1
      %vm1224 = vcmp.eq.s32.totalorder %v456, 1
      %vm1225 = vcmp.eq.s32.totalorder %v457, 1
      %vm1226 = vcmp.eq.s32.totalorder %v458, 1
      %vm1227 = vcmp.eq.s32.totalorder %v459, 1
      %vm1228 = vcmp.eq.s32.totalorder %v460, 1
      %vm1229 = vcmp.eq.s32.totalorder %v461, 1
      %vm1230 = vcmp.eq.s32.totalorder %v462, 1
      %vm1231 = vcmp.eq.s32.totalorder %v463, 1
      %vm1232 = vcmp.eq.s32.totalorder %v464, 1
      %vm1233 = vcmp.eq.s32.totalorder %v465, 1
      %vm1234 = vcmp.eq.s32.totalorder %v466, 1
      %vm1235 = vcmp.eq.s32.totalorder %v467, 1
      %vm1236 = vcmp.eq.s32.totalorder %v468, 1
      %vm1237 = vcmp.eq.s32.totalorder %v469, 1
      %vm1238 = vcmp.eq.s32.totalorder %v470, 1
      %vm1239 = vcmp.eq.s32.totalorder %v471, 1
      %vm1240 = vcmp.eq.s32.totalorder %v472, 1
      %vm1241 = vcmp.eq.s32.totalorder %v473, 1
      %vm1242 = vcmp.eq.s32.totalorder %v474, 1
      %vm1243 = vcmp.eq.s32.totalorder %v475, 1
      %vm1244 = vcmp.eq.s32.totalorder %v476, 1
      %vm1245 = vcmp.eq.s32.totalorder %v477, 1
      %vm1246 = vcmp.eq.s32.totalorder %v478, 1
      %vm1247 = vcmp.eq.s32.totalorder %v479, 1
      %vm1248 = vcmp.eq.s32.totalorder %v480, 1
      %vm1249 = vcmp.eq.s32.totalorder %v481, 1
      %vm1250 = vcmp.eq.s32.totalorder %v482, 1
      %vm1251 = vcmp.eq.s32.totalorder %v483, 1
      %vm1252 = vcmp.eq.s32.totalorder %v484, 1
      %vm1253 = vcmp.eq.s32.totalorder %v485, 1
      %vm1254 = vcmp.eq.s32.totalorder %v486, 1
      %vm1255 = vcmp.eq.s32.totalorder %v487, 1
      %vm1256 = vcmp.eq.s32.totalorder %v488, 1
      %vm1257 = vcmp.eq.s32.totalorder %v489, 1
      %vm1258 = vcmp.eq.s32.totalorder %v490, 1
      %vm1259 = vcmp.eq.s32.totalorder %v491, 1
      %vm1260 = vcmp.eq.s32.totalorder %v492, 1
      %vm1261 = vcmp.eq.s32.totalorder %v493, 1
      %vm1262 = vcmp.eq.s32.totalorder %v494, 1
      %vm1263 = vcmp.eq.s32.totalorder %v495, 1
      %vm1264 = vcmp.eq.s32.totalorder %v496, 1
      %vm1265 = vcmp.eq.s32.totalorder %v497, 1
      %vm1266 = vcmp.eq.s32.totalorder %v498, 1
      %vm1267 = vcmp.eq.s32.totalorder %v499, 1
      %vm1268 = vcmp.eq.s32.totalorder %v500, 1
      %vm1269 = vcmp.eq.s32.totalorder %v501, 1
      %vm1270 = vcmp.eq.s32.totalorder %v502, 1
      %vm1271 = vcmp.eq.s32.totalorder %v503, 1
      %vm1272 = vcmp.eq.s32.totalorder %v504, 1
      %vm1273 = vcmp.eq.s32.totalorder %v505, 1
      %vm1274 = vcmp.eq.s32.totalorder %v506, 1
      %vm1275 = vcmp.eq.s32.totalorder %v507, 1
      %vm1276 = vcmp.eq.s32.totalorder %v508, 1
      %vm1277 = vcmp.eq.s32.totalorder %v509, 1
      %vm1278 = vcmp.eq.s32.totalorder %v510, 1
      %vm1279 = vcmp.eq.s32.totalorder %v511, 1
      %vm1280 = vcmp.eq.s32.totalorder %v512, 1
      %vm1281 = vcmp.eq.s32.totalorder %v513, 1
      %vm1282 = vcmp.eq.s32.totalorder %v514, 1
      %vm1283 = vcmp.eq.s32.totalorder %v515, 1
      %vm1284 = vcmp.eq.s32.totalorder %v516, 1
      %v1285 = vadd.s32 %v421, 1
      %v1286 = vadd.s32 %v422, 1
      %v1287 = vadd.s32 %v423, 1
      %v1288 = vadd.s32 %v424, 1
      %v1289 = vadd.s32 %v425, 1
      %v1290 = vadd.s32 %v426, 1
      %v1291 = vadd.s32 %v427, 1
      %v1292 = vadd.s32 %v428, 1
      %v1293 = vadd.s32 %v429, 1
      %v1294 = vadd.s32 %v430, 1
      %v1295 = vadd.s32 %v431, 1
      %v1296 = vadd.s32 %v432, 1
      %v1297 = vadd.s32 %v433, 1
      %v1298 = vadd.s32 %v434, 1
      %v1299 = vadd.s32 %v435, 1
      %v1300 = vadd.s32 %v436, 1
      %v1301 = vadd.s32 %v437, 1
      %v1302 = vadd.s32 %v438, 1
      %v1303 = vadd.s32 %v439, 1
      %v1304 = vadd.s32 %v440, 1
      %v1305 = vadd.s32 %v441, 1
      %v1306 = vadd.s32 %v442, 1
      %v1307 = vadd.s32 %v443, 1
      %v1308 = vadd.s32 %v444, 1
      %v1309 = vadd.s32 %v445, 1
      %v1310 = vadd.s32 %v446, 1
      %v1311 = vadd.s32 %v447, 1
      %v1312 = vadd.s32 %v448, 1
      %v1313 = vadd.s32 %v449, 1
      %v1314 = vadd.s32 %v450, 1
      %v1315 = vadd.s32 %v451, 1
      %v1316 = vadd.s32 %v452, 1
      %vm1317 = vcmp.ge.s32.totalorder %v1285, 0
      %vm1318 = vcmp.ge.s32.totalorder %v1286, 0
      %vm1319 = vcmp.ge.s32.totalorder %v1287, 0
      %vm1320 = vcmp.ge.s32.totalorder %v1288, 0
      %vm1321 = vcmp.ge.s32.totalorder %v1289, 0
      %vm1322 = vcmp.ge.s32.totalorder %v1290, 0
      %vm1323 = vcmp.ge.s32.totalorder %v1291, 0
      %vm1324 = vcmp.ge.s32.totalorder %v1292, 0
      %vm1325 = vcmp.ge.s32.totalorder %v1293, 0
      %vm1326 = vcmp.ge.s32.totalorder %v1294, 0
      %vm1327 = vcmp.ge.s32.totalorder %v1295, 0
      %vm1328 = vcmp.ge.s32.totalorder %v1296, 0
      %vm1329 = vcmp.ge.s32.totalorder %v1297, 0
      %vm1330 = vcmp.ge.s32.totalorder %v1298, 0
      %vm1331 = vcmp.ge.s32.totalorder %v1299, 0
      %vm1332 = vcmp.ge.s32.totalorder %v1300, 0
      %vm1333 = vcmp.ge.s32.totalorder %v1301, 0
      %vm1334 = vcmp.ge.s32.totalorder %v1302, 0
      %vm1335 = vcmp.ge.s32.totalorder %v1303, 0
      %vm1336 = vcmp.ge.s32.totalorder %v1304, 0
      %vm1337 = vcmp.ge.s32.totalorder %v1305, 0
      %vm1338 = vcmp.ge.s32.totalorder %v1306, 0
      %vm1339 = vcmp.ge.s32.totalorder %v1307, 0
      %vm1340 = vcmp.ge.s32.totalorder %v1308, 0
      %vm1341 = vcmp.ge.s32.totalorder %v1309, 0
      %vm1342 = vcmp.ge.s32.totalorder %v1310, 0
      %vm1343 = vcmp.ge.s32.totalorder %v1311, 0
      %vm1344 = vcmp.ge.s32.totalorder %v1312, 0
      %vm1345 = vcmp.ge.s32.totalorder %v1313, 0
      %vm1346 = vcmp.ge.s32.totalorder %v1314, 0
      %vm1347 = vcmp.ge.s32.totalorder %v1315, 0
      %vm1348 = vcmp.ge.s32.totalorder %v1316, 0
      %vm1349 = vmand %vm1221, %vm1317
      %vm1350 = vmand %vm1222, %vm1317
      %vm1351 = vmand %vm1223, %vm1318
      %vm1352 = vmand %vm1224, %vm1318
      %vm1353 = vmand %vm1225, %vm1319
      %vm1354 = vmand %vm1226, %vm1319
      %vm1355 = vmand %vm1227, %vm1320
      %vm1356 = vmand %vm1228, %vm1320
      %vm1357 = vmand %vm1229, %vm1321
      %vm1358 = vmand %vm1230, %vm1321
      %vm1359 = vmand %vm1231, %vm1322
      %vm1360 = vmand %vm1232, %vm1322
      %vm1361 = vmand %vm1233, %vm1323
      %vm1362 = vmand %vm1234, %vm1323
      %vm1363 = vmand %vm1235, %vm1324
      %vm1364 = vmand %vm1236, %vm1324
      %vm1365 = vmand %vm1237, %vm1325
      %vm1366 = vmand %vm1238, %vm1325
      %vm1367 = vmand %vm1239, %vm1326
      %vm1368 = vmand %vm1240, %vm1326
      %vm1369 = vmand %vm1241, %vm1327
      %vm1370 = vmand %vm1242, %vm1327
      %vm1371 = vmand %vm1243, %vm1328
      %vm1372 = vmand %vm1244, %vm1328
      %vm1373 = vmand %vm1245, %vm1329
      %vm1374 = vmand %vm1246, %vm1329
      %vm1375 = vmand %vm1247, %vm1330
      %vm1376 = vmand %vm1248, %vm1330
      %vm1377 = vmand %vm1249, %vm1331
      %vm1378 = vmand %vm1250, %vm1331
      %vm1379 = vmand %vm1251, %vm1332
      %vm1380 = vmand %vm1252, %vm1332
      %vm1381 = vmand %vm1253, %vm1333
      %vm1382 = vmand %vm1254, %vm1333
      %vm1383 = vmand %vm1255, %vm1334
      %vm1384 = vmand %vm1256, %vm1334
      %vm1385 = vmand %vm1257, %vm1335
      %vm1386 = vmand %vm1258, %vm1335
      %vm1387 = vmand %vm1259, %vm1336
      %vm1388 = vmand %vm1260, %vm1336
      %vm1389 = vmand %vm1261, %vm1337
      %vm1390 = vmand %vm1262, %vm1337
      %vm1391 = vmand %vm1263, %vm1338
      %vm1392 = vmand %vm1264, %vm1338
      %vm1393 = vmand %vm1265, %vm1339
      %vm1394 = vmand %vm1266, %vm1339
      %vm1395 = vmand %vm1267, %vm1340
      %vm1396 = vmand %vm1268, %vm1340
      %vm1397 = vmand %vm1269, %vm1341
      %vm1398 = vmand %vm1270, %vm1341
      %vm1399 = vmand %vm1271, %vm1342
      %vm1400 = vmand %vm1272, %vm1342
      %vm1401 = vmand %vm1273, %vm1343
      %vm1402 = vmand %vm1274, %vm1343
      %vm1403 = vmand %vm1275, %vm1344
      %vm1404 = vmand %vm1276, %vm1344
      %vm1405 = vmand %vm1277, %vm1345
      %vm1406 = vmand %vm1278, %vm1345
      %vm1407 = vmand %vm1279, %vm1346
      %vm1408 = vmand %vm1280, %vm1346
      %vm1409 = vmand %vm1281, %vm1347
      %vm1410 = vmand %vm1282, %vm1347
      %vm1411 = vmand %vm1283, %vm1348
      %vm1412 = vmand %vm1284, %vm1348
      %vm1413 = vcmp.lt.s32.totalorder %v1285, 16
      %vm1414 = vcmp.lt.s32.totalorder %v1286, 16
      %vm1415 = vcmp.lt.s32.totalorder %v1287, 16
      %vm1416 = vcmp.lt.s32.totalorder %v1288, 16
      %vm1417 = vcmp.lt.s32.totalorder %v1289, 16
      %vm1418 = vcmp.lt.s32.totalorder %v1290, 16
      %vm1419 = vcmp.lt.s32.totalorder %v1291, 16
      %vm1420 = vcmp.lt.s32.totalorder %v1292, 16
      %vm1421 = vcmp.lt.s32.totalorder %v1293, 16
      %vm1422 = vcmp.lt.s32.totalorder %v1294, 16
      %vm1423 = vcmp.lt.s32.totalorder %v1295, 16
      %vm1424 = vcmp.lt.s32.totalorder %v1296, 16
      %vm1425 = vcmp.lt.s32.totalorder %v1297, 16
      %vm1426 = vcmp.lt.s32.totalorder %v1298, 16
      %vm1427 = vcmp.lt.s32.totalorder %v1299, 16
      %vm1428 = vcmp.lt.s32.totalorder %v1300, 16
      %vm1429 = vcmp.lt.s32.totalorder %v1301, 16
      %vm1430 = vcmp.lt.s32.totalorder %v1302, 16
      %vm1431 = vcmp.lt.s32.totalorder %v1303, 16
      %vm1432 = vcmp.lt.s32.totalorder %v1304, 16
      %vm1433 = vcmp.lt.s32.totalorder %v1305, 16
      %vm1434 = vcmp.lt.s32.totalorder %v1306, 16
      %vm1435 = vcmp.lt.s32.totalorder %v1307, 16
      %vm1436 = vcmp.lt.s32.totalorder %v1308, 16
      %vm1437 = vcmp.lt.s32.totalorder %v1309, 16
      %vm1438 = vcmp.lt.s32.totalorder %v1310, 16
      %vm1439 = vcmp.lt.s32.totalorder %v1311, 16
      %vm1440 = vcmp.lt.s32.totalorder %v1312, 16
      %vm1441 = vcmp.lt.s32.totalorder %v1313, 16
      %vm1442 = vcmp.lt.s32.totalorder %v1314, 16
      %vm1443 = vcmp.lt.s32.totalorder %v1315, 16
      %vm1444 = vcmp.lt.s32.totalorder %v1316, 16
      %vm1445 = vmand %vm1349, %vm1413
      %vm1446 = vmand %vm1350, %vm1413
      %vm1447 = vmand %vm1351, %vm1414
      %vm1448 = vmand %vm1352, %vm1414
      %vm1449 = vmand %vm1353, %vm1415
      %vm1450 = vmand %vm1354, %vm1415
      %vm1451 = vmand %vm1355, %vm1416
      %vm1452 = vmand %vm1356, %vm1416
      %vm1453 = vmand %vm1357, %vm1417
      %vm1454 = vmand %vm1358, %vm1417
      %vm1455 = vmand %vm1359, %vm1418
      %vm1456 = vmand %vm1360, %vm1418
      %vm1457 = vmand %vm1361, %vm1419
      %vm1458 = vmand %vm1362, %vm1419
      %vm1459 = vmand %vm1363, %vm1420
      %vm1460 = vmand %vm1364, %vm1420
      %vm1461 = vmand %vm1365, %vm1421
      %vm1462 = vmand %vm1366, %vm1421
      %vm1463 = vmand %vm1367, %vm1422
      %vm1464 = vmand %vm1368, %vm1422
      %vm1465 = vmand %vm1369, %vm1423
      %vm1466 = vmand %vm1370, %vm1423
      %vm1467 = vmand %vm1371, %vm1424
      %vm1468 = vmand %vm1372, %vm1424
      %vm1469 = vmand %vm1373, %vm1425
      %vm1470 = vmand %vm1374, %vm1425
      %vm1471 = vmand %vm1375, %vm1426
      %vm1472 = vmand %vm1376, %vm1426
      %vm1473 = vmand %vm1377, %vm1427
      %vm1474 = vmand %vm1378, %vm1427
      %vm1475 = vmand %vm1379, %vm1428
      %vm1476 = vmand %vm1380, %vm1428
      %vm1477 = vmand %vm1381, %vm1429
      %vm1478 = vmand %vm1382, %vm1429
      %vm1479 = vmand %vm1383, %vm1430
      %vm1480 = vmand %vm1384, %vm1430
      %vm1481 = vmand %vm1385, %vm1431
      %vm1482 = vmand %vm1386, %vm1431
      %vm1483 = vmand %vm1387, %vm1432
      %vm1484 = vmand %vm1388, %vm1432
      %vm1485 = vmand %vm1389, %vm1433
      %vm1486 = vmand %vm1390, %vm1433
      %vm1487 = vmand %vm1391, %vm1434
      %vm1488 = vmand %vm1392, %vm1434
      %vm1489 = vmand %vm1393, %vm1435
      %vm1490 = vmand %vm1394, %vm1435
      %vm1491 = vmand %vm1395, %vm1436
      %vm1492 = vmand %vm1396, %vm1436
      %vm1493 = vmand %vm1397, %vm1437
      %vm1494 = vmand %vm1398, %vm1437
      %vm1495 = vmand %vm1399, %vm1438
      %vm1496 = vmand %vm1400, %vm1438
      %vm1497 = vmand %vm1401, %vm1439
      %vm1498 = vmand %vm1402, %vm1439
      %vm1499 = vmand %vm1403, %vm1440
      %vm1500 = vmand %vm1404, %vm1440
      %vm1501 = vmand %vm1405, %vm1441
      %vm1502 = vmand %vm1406, %vm1441
      %vm1503 = vmand %vm1407, %vm1442
      %vm1504 = vmand %vm1408, %vm1442
      %vm1505 = vmand %vm1409, %vm1443
      %vm1506 = vmand %vm1410, %vm1443
      %vm1507 = vmand %vm1411, %vm1444
      %vm1508 = vmand %vm1412, %vm1444
      %v1509 = vsel %vm1445, 1.0, 0.0
      %v1510 = vsel %vm1446, 1.0, 0.0
      %v1511 = vsel %vm1447, 1.0, 0.0
      %v1512 = vsel %vm1448, 1.0, 0.0
      %v1513 = vsel %vm1449, 1.0, 0.0
      %v1514 = vsel %vm1450, 1.0, 0.0
      %v1515 = vsel %vm1451, 1.0, 0.0
      %v1516 = vsel %vm1452, 1.0, 0.0
      %v1517 = vsel %vm1453, 1.0, 0.0
      %v1518 = vsel %vm1454, 1.0, 0.0
      %v1519 = vsel %vm1455, 1.0, 0.0
      %v1520 = vsel %vm1456, 1.0, 0.0
      %v1521 = vsel %vm1457, 1.0, 0.0
      %v1522 = vsel %vm1458, 1.0, 0.0
      %v1523 = vsel %vm1459, 1.0, 0.0
      %v1524 = vsel %vm1460, 1.0, 0.0
      %v1525 = vsel %vm1461, 1.0, 0.0
      %v1526 = vsel %vm1462, 1.0, 0.0
      %v1527 = vsel %vm1463, 1.0, 0.0
      %v1528 = vsel %vm1464, 1.0, 0.0
      %v1529 = vsel %vm1465, 1.0, 0.0
      %v1530 = vsel %vm1466, 1.0, 0.0
      %v1531 = vsel %vm1467, 1.0, 0.0
      %v1532 = vsel %vm1468, 1.0, 0.0
      %v1533 = vsel %vm1469, 1.0, 0.0
      %v1534 = vsel %vm1470, 1.0, 0.0
      %v1535 = vsel %vm1471, 1.0, 0.0
      %v1536 = vsel %vm1472, 1.0, 0.0
      %v1537 = vsel %vm1473, 1.0, 0.0
      %v1538 = vsel %vm1474, 1.0, 0.0
      %v1539 = vsel %vm1475, 1.0, 0.0
      %v1540 = vsel %vm1476, 1.0, 0.0
      %v1541 = vsel %vm1477, 1.0, 0.0
      %v1542 = vsel %vm1478, 1.0, 0.0
      %v1543 = vsel %vm1479, 1.0, 0.0
      %v1544 = vsel %vm1480, 1.0, 0.0
      %v1545 = vsel %vm1481, 1.0, 0.0
      %v1546 = vsel %vm1482, 1.0, 0.0
      %v1547 = vsel %vm1483, 1.0, 0.0
      %v1548 = vsel %vm1484, 1.0, 0.0
      %v1549 = vsel %vm1485, 1.0, 0.0
      %v1550 = vsel %vm1486, 1.0, 0.0
      %v1551 = vsel %vm1487, 1.0, 0.0
      %v1552 = vsel %vm1488, 1.0, 0.0
      %v1553 = vsel %vm1489, 1.0, 0.0
      %v1554 = vsel %vm1490, 1.0, 0.0
      %v1555 = vsel %vm1491, 1.0, 0.0
      %v1556 = vsel %vm1492, 1.0, 0.0
      %v1557 = vsel %vm1493, 1.0, 0.0
      %v1558 = vsel %vm1494, 1.0, 0.0
      %v1559 = vsel %vm1495, 1.0, 0.0
      %v1560 = vsel %vm1496, 1.0, 0.0
      %v1561 = vsel %vm1497, 1.0, 0.0
      %v1562 = vsel %vm1498, 1.0, 0.0
      %v1563 = vsel %vm1499, 1.0, 0.0
      %v1564 = vsel %vm1500, 1.0, 0.0
      %v1565 = vsel %vm1501, 1.0, 0.0
      %v1566 = vsel %vm1502, 1.0, 0.0
      %v1567 = vsel %vm1503, 1.0, 0.0
      %v1568 = vsel %vm1504, 1.0, 0.0
      %v1569 = vsel %vm1505, 1.0, 0.0
      %v1570 = vsel %vm1506, 1.0, 0.0
      %v1571 = vsel %vm1507, 1.0, 0.0
      %v1572 = vsel %vm1508, 1.0, 0.0
      %v1573 = vpack.c.bf16 %v1511, %v1509
      %v1574 = vpack.c.bf16 %v1512, %v1510
      %v1575 = vpack.c.bf16 %v1515, %v1513
      %v1576 = vpack.c.bf16 %v1516, %v1514
      %v1577 = vpack.c.bf16 %v1519, %v1517
      %v1578 = vpack.c.bf16 %v1520, %v1518
      %v1579 = vpack.c.bf16 %v1523, %v1521
      %v1580 = vpack.c.bf16 %v1524, %v1522
      %v1581 = vpack.c.bf16 %v1527, %v1525
      %v1582 = vpack.c.bf16 %v1528, %v1526
      %v1583 = vpack.c.bf16 %v1531, %v1529
      %v1584 = vpack.c.bf16 %v1532, %v1530
      %v1585 = vpack.c.bf16 %v1535, %v1533
      %v1586 = vpack.c.bf16 %v1536, %v1534
      %v1587 = vpack.c.bf16 %v1539, %v1537
      %v1588 = vpack.c.bf16 %v1540, %v1538
      %v1589 = vpack.c.bf16 %v1543, %v1541
      %v1590 = vpack.c.bf16 %v1544, %v1542
      %v1591 = vpack.c.bf16 %v1547, %v1545
      %v1592 = vpack.c.bf16 %v1548, %v1546
      %v1593 = vpack.c.bf16 %v1551, %v1549
      %v1594 = vpack.c.bf16 %v1552, %v1550
      %v1595 = vpack.c.bf16 %v1555, %v1553
      %v1596 = vpack.c.bf16 %v1556, %v1554
      %v1597 = vpack.c.bf16 %v1559, %v1557
      %v1598 = vpack.c.bf16 %v1560, %v1558
      %v1599 = vpack.c.bf16 %v1563, %v1561
      %v1600 = vpack.c.bf16 %v1564, %v1562
      %v1601 = vpack.c.bf16 %v1567, %v1565
      %v1602 = vpack.c.bf16 %v1568, %v1566
      %v1603 = vpack.c.bf16 %v1571, %v1569
      %v1604 = vpack.c.bf16 %v1572, %v1570
      %1605 = vmatprep.subr.bf16.mxu0 0
      %1606 = vmatpush1.bf16.msra.mxu0 %v369
      %1607 = vmatprep.subr.bf16.mxu0 0
      %1608 = vmatpush1.bf16.msra.mxu0 %v370
      %1609 = vmatprep.subr.bf16.mxu0 0
      %1610 = vmatpush1.bf16.msra.mxu0 %v371
      %1611 = vmatprep.subr.bf16.mxu0 0
      %1612 = vmatpush1.bf16.msra.mxu0 %v372
      %1613 = vmatprep.subr.bf16.mxu0 0
      %1614 = vmatpush1.bf16.msra.mxu0 %v373
      %1615 = vmatprep.subr.bf16.mxu0 0
      %1616 = vmatpush1.bf16.msra.mxu0 %v374
      %1617 = vmatprep.subr.bf16.mxu0 0
      %1618 = vmatpush1.bf16.msra.mxu0 %v375
      %1619 = vmatprep.subr.bf16.mxu0 0
      %1620 = vmatpush1.bf16.msra.mxu0 %v376
      %1621 = vmatprep.subr.bf16.mxu0 0
      %1622 = vmatpush1.bf16.msra.mxu0 %v377
      %1623 = vmatprep.subr.bf16.mxu0 0
      %1624 = vmatpush1.bf16.msra.mxu0 %v378
      %1625 = vmatprep.subr.bf16.mxu0 0
      %1626 = vmatpush1.bf16.msra.mxu0 %v379
      %1627 = vmatprep.subr.bf16.mxu0 0
      %1628 = vmatpush1.bf16.msra.mxu0 %v380
      %1629 = vmatprep.subr.bf16.mxu0 0
      %1630 = vmatpush1.bf16.msra.mxu0 %v381
      %1631 = vmatprep.subr.bf16.mxu0 0
      %1632 = vmatpush1.bf16.msra.mxu0 %v382
      %1633 = vmatprep.subr.bf16.mxu0 0
      %1634 = vmatpush1.bf16.msra.mxu0 %v383
      %1635 = vmatprep.subr.bf16.mxu0 0
      %1636 = vmatpush1.bf16.msra.mxu0 %v384
      %1637 = vmatprep.mubr.bf16.mxu0 %v646
      %1638 = vmatmul.mubr.bf16.gmra.mrb[0].mxu0 %v645
      %v1639 = vpop.f32.mrb[0].mxu0
      %v1640 = vadd.f32 0.0, %v1639
      %v1641 = vpop.f32.mrb[0].mxu0
      %v1642 = vpop.f32.mrb[0].mxu0
      %v1643 = vadd.f32 0.0, %v1642
      %v1644 = vpop.f32.mrb[0].mxu0
      %1645 = vmatprep.mubr.bf16.mxu0 %v648
      %1646 = vmatmul.mubr.bf16.gmra.mrb[0].mxu0 %v647
      %v1647 = vpop.f32.mrb[0].mxu0
      %v1648 = vadd.f32 0.0, %v1647
      %v1649 = vpop.f32.mrb[0].mxu0
      %v1650 = vpop.f32.mrb[0].mxu0
      %v1651 = vadd.f32 0.0, %v1650
      %v1652 = vpop.f32.mrb[0].mxu0
      %1653 = vmatprep.mubr.bf16.mxu0 %v650
      %1654 = vmatmul.mubr.bf16.gmra.mrb[0].mxu0 %v649
      %v1655 = vpop.f32.mrb[0].mxu0
      %v1656 = vadd.f32 0.0, %v1655
      %v1657 = vpop.f32.mrb[0].mxu0
      %v1658 = vpop.f32.mrb[0].mxu0
      %v1659 = vadd.f32 0.0, %v1658
      %v1660 = vpop.f32.mrb[0].mxu0
      %1661 = vmatprep.mubr.bf16.mxu0 %v652
      %1662 = vmatmul.mubr.bf16.gmra.mrb[0].mxu0 %v651
      %v1663 = vpop.f32.mrb[0].mxu0
      %v1664 = vadd.f32 0.0, %v1663
      %v1665 = vpop.f32.mrb[0].mxu0
      %v1666 = vpop.f32.mrb[0].mxu0
      %v1667 = vadd.f32 0.0, %v1666
      %v1668 = vpop.f32.mrb[0].mxu0
      %1669 = vmatprep.mubr.bf16.mxu0 %v654
      %1670 = vmatmul.mubr.bf16.gmra.mrb[0].mxu0 %v653
      %v1671 = vpop.f32.mrb[0].mxu0
      %v1672 = vadd.f32 0.0, %v1671
      %v1673 = vpop.f32.mrb[0].mxu0
      %v1674 = vpop.f32.mrb[0].mxu0
      %v1675 = vadd.f32 0.0, %v1674
      %v1676 = vpop.f32.mrb[0].mxu0
      %1677 = vmatprep.mubr.bf16.mxu0 %v656
      %1678 = vmatmul.mubr.bf16.gmra.mrb[0].mxu0 %v655
      %v1679 = vpop.f32.mrb[0].mxu0
      %v1680 = vadd.f32 0.0, %v1679
      %v1681 = vpop.f32.mrb[0].mxu0
      %v1682 = vpop.f32.mrb[0].mxu0
      %v1683 = vadd.f32 0.0, %v1682
      %v1684 = vpop.f32.mrb[0].mxu0
      %1685 = vmatprep.mubr.bf16.mxu0 %v658
      %1686 = vmatmul.mubr.bf16.gmra.mrb[0].mxu0 %v657
      %v1687 = vpop.f32.mrb[0].mxu0
      %v1688 = vadd.f32 0.0, %v1687
      %v1689 = vpop.f32.mrb[0].mxu0
      %v1690 = vpop.f32.mrb[0].mxu0
      %v1691 = vadd.f32 0.0, %v1690
      %v1692 = vpop.f32.mrb[0].mxu0
      %1693 = vmatprep.mubr.bf16.mxu0 %v660
      %1694 = vmatmul.mubr.bf16.gmra.mrb[0].mxu0 %v659
      %v1695 = vpop.f32.mrb[0].mxu0
      %v1696 = vadd.f32 0.0, %v1695
      %v1697 = vpop.f32.mrb[0].mxu0
      %v1698 = vpop.f32.mrb[0].mxu0
      %v1699 = vadd.f32 0.0, %v1698
      %v1700 = vpop.f32.mrb[0].mxu0
      %1701 = vmatprep.mubr.bf16.mxu0 %v662
      %1702 = vmatmul.mubr.bf16.gmra.mrb[0].mxu0 %v661
      %v1703 = vpop.f32.mrb[0].mxu0
      %v1704 = vadd.f32 0.0, %v1703
      %v1705 = vpop.f32.mrb[0].mxu0
      %v1706 = vpop.f32.mrb[0].mxu0
      %v1707 = vadd.f32 0.0, %v1706
      %v1708 = vpop.f32.mrb[0].mxu0
      %1709 = vmatprep.mubr.bf16.mxu0 %v664
      %1710 = vmatmul.mubr.bf16.gmra.mrb[0].mxu0 %v663
      %v1711 = vpop.f32.mrb[0].mxu0
      %v1712 = vadd.f32 0.0, %v1711
      %v1713 = vpop.f32.mrb[0].mxu0
      %v1714 = vpop.f32.mrb[0].mxu0
      %v1715 = vadd.f32 0.0, %v1714
      %v1716 = vpop.f32.mrb[0].mxu0
      %1717 = vmatprep.mubr.bf16.mxu0 %v666
      %1718 = vmatmul.mubr.bf16.gmra.mrb[0].mxu0 %v665
      %v1719 = vpop.f32.mrb[0].mxu0
      %v1720 = vadd.f32 0.0, %v1719
      %v1721 = vpop.f32.mrb[0].mxu0
      %v1722 = vpop.f32.mrb[0].mxu0
      %v1723 = vadd.f32 0.0, %v1722
      %v1724 = vpop.f32.mrb[0].mxu0
      %1725 = vmatprep.mubr.bf16.mxu0 %v668
      %1726 = vmatmul.mubr.bf16.gmra.mrb[0].mxu0 %v667
      %v1727 = vpop.f32.mrb[0].mxu0
      %v1728 = vadd.f32 0.0, %v1727
      %v1729 = vpop.f32.mrb[0].mxu0
      %v1730 = vpop.f32.mrb[0].mxu0
      %v1731 = vadd.f32 0.0, %v1730
      %v1732 = vpop.f32.mrb[0].mxu0
      %1733 = vmatprep.mubr.bf16.mxu0 %v670
      %1734 = vmatmul.mubr.bf16.gmra.mrb[0].mxu0 %v669
      %v1735 = vpop.f32.mrb[0].mxu0
      %v1736 = vadd.f32 0.0, %v1735
      %v1737 = vpop.f32.mrb[0].mxu0
      %v1738 = vpop.f32.mrb[0].mxu0
      %v1739 = vadd.f32 0.0, %v1738
      %v1740 = vpop.f32.mrb[0].mxu0
      %1741 = vmatprep.mubr.bf16.mxu0 %v672
      %1742 = vmatmul.mubr.bf16.gmra.mrb[0].mxu0 %v671
      %v1743 = vpop.f32.mrb[0].mxu0
      %v1744 = vadd.f32 0.0, %v1743
      %v1745 = vpop.f32.mrb[0].mxu0
      %v1746 = vpop.f32.mrb[0].mxu0
      %v1747 = vadd.f32 0.0, %v1746
      %v1748 = vpop.f32.mrb[0].mxu0
      %1749 = vmatprep.mubr.bf16.mxu0 %v674
      %1750 = vmatmul.mubr.bf16.gmra.mrb[0].mxu0 %v673
      %v1751 = vpop.f32.mrb[0].mxu0
      %v1752 = vadd.f32 0.0, %v1751
      %v1753 = vpop.f32.mrb[0].mxu0
      %v1754 = vpop.f32.mrb[0].mxu0
      %v1755 = vadd.f32 0.0, %v1754
      %v1756 = vpop.f32.mrb[0].mxu0
      %1757 = vmatprep.mubr.bf16.mxu0 %v676
      %1758 = vmatmul.mubr.bf16.gmra.mrb[0].mxu0 %v675
      %v1759 = vpop.f32.mrb[0].mxu0
      %v1760 = vadd.f32 0.0, %v1759
      %v1761 = vpop.f32.mrb[0].mxu0
      %v1762 = vpop.f32.mrb[0].mxu0
      %v1763 = vadd.f32 0.0, %v1762
      %v1764 = vpop.f32.mrb[0].mxu0
      %1765 = vdwg.mxu0
      %v1766 = vpack.c.bf16 %v1643, %v1640
      %v1767 = vpack.c.bf16 %v1651, %v1648
      %v1768 = vpack.c.bf16 %v1659, %v1656
      %v1769 = vpack.c.bf16 %v1667, %v1664
      %v1770 = vpack.c.bf16 %v1675, %v1672
      %v1771 = vpack.c.bf16 %v1683, %v1680
      %v1772 = vpack.c.bf16 %v1691, %v1688
      %v1773 = vpack.c.bf16 %v1699, %v1696
      %v1774 = vpack.c.bf16 %v1707, %v1704
      %v1775 = vpack.c.bf16 %v1715, %v1712
      %v1776 = vpack.c.bf16 %v1723, %v1720
      %v1777 = vpack.c.bf16 %v1731, %v1728
      %v1778 = vpack.c.bf16 %v1739, %v1736
      %v1779 = vpack.c.bf16 %v1747, %v1744
      %v1780 = vpack.c.bf16 %v1755, %v1752
      %v1781 = vpack.c.bf16 %v1763, %v1760
      %1782 = vmatprep.subr.bf16.mxu0 0
      %1783 = vmatpush1.bf16.msra.mxu0 %v369
      %1784 = vmatprep.subr.bf16.mxu0 0
      %1785 = vmatpush1.bf16.msra.mxu0 %v370
      %1786 = vmatprep.subr.bf16.mxu0 0
      %1787 = vmatpush1.bf16.msra.mxu0 %v371
      %1788 = vmatprep.subr.bf16.mxu0 0
      %1789 = vmatpush1.bf16.msra.mxu0 %v372
      %1790 = vmatprep.subr.bf16.mxu0 0
      %1791 = vmatpush1.bf16.msra.mxu0 %v373
      %1792 = vmatprep.subr.bf16.mxu0 0
      %1793 = vmatpush1.bf16.msra.mxu0 %v374
      %1794 = vmatprep.subr.bf16.mxu0 0
      %1795 = vmatpush1.bf16.msra.mxu0 %v375
      %1796 = vmatprep.subr.bf16.mxu0 0
      %1797 = vmatpush1.bf16.msra.mxu0 %v376
      %1798 = vmatprep.subr.bf16.mxu0 0
      %1799 = vmatpush1.bf16.msra.mxu0 %v377
      %1800 = vmatprep.subr.bf16.mxu0 0
      %1801 = vmatpush1.bf16.msra.mxu0 %v378
      %1802 = vmatprep.subr.bf16.mxu0 0
      %1803 = vmatpush1.bf16.msra.mxu0 %v379
      %1804 = vmatprep.subr.bf16.mxu0 0
      %1805 = vmatpush1.bf16.msra.mxu0 %v380
      %1806 = vmatprep.subr.bf16.mxu0 0
      %1807 = vmatpush1.bf16.msra.mxu0 %v381
      %1808 = vmatprep.subr.bf16.mxu0 0
      %1809 = vmatpush1.bf16.msra.mxu0 %v382
      %1810 = vmatprep.subr.bf16.mxu0 0
      %1811 = vmatpush1.bf16.msra.mxu0 %v383
      %1812 = vmatprep.subr.bf16.mxu0 0
      %1813 = vmatpush1.bf16.msra.mxu0 %v384
      %1814 = vmatprep.mubr.bf16.mxu0 %v806
      %1815 = vmatmul.mubr.bf16.gmra.mrb[0].mxu0 %v805
      %v1816 = vpop.f32.mrb[0].mxu0
      %v1817 = vadd.f32 0.0, %v1816
      %v1818 = vpop.f32.mrb[0].mxu0
      %v1819 = vpop.f32.mrb[0].mxu0
      %v1820 = vadd.f32 0.0, %v1819
      %v1821 = vpop.f32.mrb[0].mxu0
      %1822 = vmatprep.mubr.bf16.mxu0 %v808
      %1823 = vmatmul.mubr.bf16.gmra.mrb[0].mxu0 %v807
      %v1824 = vpop.f32.mrb[0].mxu0
      %v1825 = vadd.f32 0.0, %v1824
      %v1826 = vpop.f32.mrb[0].mxu0
      %v1827 = vpop.f32.mrb[0].mxu0
      %v1828 = vadd.f32 0.0, %v1827
      %v1829 = vpop.f32.mrb[0].mxu0
      %1830 = vmatprep.mubr.bf16.mxu0 %v810
      %1831 = vmatmul.mubr.bf16.gmra.mrb[0].mxu0 %v809
      %v1832 = vpop.f32.mrb[0].mxu0
      %v1833 = vadd.f32 0.0, %v1832
      %v1834 = vpop.f32.mrb[0].mxu0
      %v1835 = vpop.f32.mrb[0].mxu0
      %v1836 = vadd.f32 0.0, %v1835
      %v1837 = vpop.f32.mrb[0].mxu0
      %1838 = vmatprep.mubr.bf16.mxu0 %v812
      %1839 = vmatmul.mubr.bf16.gmra.mrb[0].mxu0 %v811
      %v1840 = vpop.f32.mrb[0].mxu0
      %v1841 = vadd.f32 0.0, %v1840
      %v1842 = vpop.f32.mrb[0].mxu0
      %v1843 = vpop.f32.mrb[0].mxu0
      %v1844 = vadd.f32 0.0, %v1843
      %v1845 = vpop.f32.mrb[0].mxu0
      %1846 = vmatprep.mubr.bf16.mxu0 %v814
      %1847 = vmatmul.mubr.bf16.gmra.mrb[0].mxu0 %v813
      %v1848 = vpop.f32.mrb[0].mxu0
      %v1849 = vadd.f32 0.0, %v1848
      %v1850 = vpop.f32.mrb[0].mxu0
      %v1851 = vpop.f32.mrb[0].mxu0
      %v1852 = vadd.f32 0.0, %v1851
      %v1853 = vpop.f32.mrb[0].mxu0
      %1854 = vmatprep.mubr.bf16.mxu0 %v816
      %1855 = vmatmul.mubr.bf16.gmra.mrb[0].mxu0 %v815
      %v1856 = vpop.f32.mrb[0].mxu0
      %v1857 = vadd.f32 0.0, %v1856
      %v1858 = vpop.f32.mrb[0].mxu0
      %v1859 = vpop.f32.mrb[0].mxu0
      %v1860 = vadd.f32 0.0, %v1859
      %v1861 = vpop.f32.mrb[0].mxu0
      %1862 = vmatprep.mubr.bf16.mxu0 %v818
      %1863 = vmatmul.mubr.bf16.gmra.mrb[0].mxu0 %v817
      %v1864 = vpop.f32.mrb[0].mxu0
      %v1865 = vadd.f32 0.0, %v1864
      %v1866 = vpop.f32.mrb[0].mxu0
      %v1867 = vpop.f32.mrb[0].mxu0
      %v1868 = vadd.f32 0.0, %v1867
      %v1869 = vpop.f32.mrb[0].mxu0
      %1870 = vmatprep.mubr.bf16.mxu0 %v820
      %1871 = vmatmul.mubr.bf16.gmra.mrb[0].mxu0 %v819
      %v1872 = vpop.f32.mrb[0].mxu0
      %v1873 = vadd.f32 0.0, %v1872
      %v1874 = vpop.f32.mrb[0].mxu0
      %v1875 = vpop.f32.mrb[0].mxu0
      %v1876 = vadd.f32 0.0, %v1875
      %v1877 = vpop.f32.mrb[0].mxu0
      %1878 = vmatprep.mubr.bf16.mxu0 %v822
      %1879 = vmatmul.mubr.bf16.gmra.mrb[0].mxu0 %v821
      %v1880 = vpop.f32.mrb[0].mxu0
      %v1881 = vadd.f32 0.0, %v1880
      %v1882 = vpop.f32.mrb[0].mxu0
      %v1883 = vpop.f32.mrb[0].mxu0
      %v1884 = vadd.f32 0.0, %v1883
      %v1885 = vpop.f32.mrb[0].mxu0
      %1886 = vmatprep.mubr.bf16.mxu0 %v824
      %1887 = vmatmul.mubr.bf16.gmra.mrb[0].mxu0 %v823
      %v1888 = vpop.f32.mrb[0].mxu0
      %v1889 = vadd.f32 0.0, %v1888
      %v1890 = vpop.f32.mrb[0].mxu0
      %v1891 = vpop.f32.mrb[0].mxu0
      %v1892 = vadd.f32 0.0, %v1891
      %v1893 = vpop.f32.mrb[0].mxu0
      %1894 = vmatprep.mubr.bf16.mxu0 %v826
      %1895 = vmatmul.mubr.bf16.gmra.mrb[0].mxu0 %v825
      %v1896 = vpop.f32.mrb[0].mxu0
      %v1897 = vadd.f32 0.0, %v1896
      %v1898 = vpop.f32.mrb[0].mxu0
      %v1899 = vpop.f32.mrb[0].mxu0
      %v1900 = vadd.f32 0.0, %v1899
      %v1901 = vpop.f32.mrb[0].mxu0
      %1902 = vmatprep.mubr.bf16.mxu0 %v828
      %1903 = vmatmul.mubr.bf16.gmra.mrb[0].mxu0 %v827
      %v1904 = vpop.f32.mrb[0].mxu0
      %v1905 = vadd.f32 0.0, %v1904
      %v1906 = vpop.f32.mrb[0].mxu0
      %v1907 = vpop.f32.mrb[0].mxu0
      %v1908 = vadd.f32 0.0, %v1907
      %v1909 = vpop.f32.mrb[0].mxu0
      %1910 = vmatprep.mubr.bf16.mxu0 %v830
      %1911 = vmatmul.mubr.bf16.gmra.mrb[0].mxu0 %v829
      %v1912 = vpop.f32.mrb[0].mxu0
      %v1913 = vadd.f32 0.0, %v1912
      %v1914 = vpop.f32.mrb[0].mxu0
      %v1915 = vpop.f32.mrb[0].mxu0
      %v1916 = vadd.f32 0.0, %v1915
      %v1917 = vpop.f32.mrb[0].mxu0
      %1918 = vmatprep.mubr.bf16.mxu0 %v832
      %1919 = vmatmul.mubr.bf16.gmra.mrb[0].mxu0 %v831
      %v1920 = vpop.f32.mrb[0].mxu0
      %v1921 = vadd.f32 0.0, %v1920
      %v1922 = vpop.f32.mrb[0].mxu0
      %v1923 = vpop.f32.mrb[0].mxu0
      %v1924 = vadd.f32 0.0, %v1923
      %v1925 = vpop.f32.mrb[0].mxu0
      %1926 = vmatprep.mubr.bf16.mxu0 %v834
      %1927 = vmatmul.mubr.bf16.gmra.mrb[0].mxu0 %v833
      %v1928 = vpop.f32.mrb[0].mxu0
      %v1929 = vadd.f32 0.0, %v1928
      %v1930 = vpop.f32.mrb[0].mxu0
      %v1931 = vpop.f32.mrb[0].mxu0
      %v1932 = vadd.f32 0.0, %v1931
      %v1933 = vpop.f32.mrb[0].mxu0
      %1934 = vmatprep.mubr.bf16.mxu0 %v836
      %1935 = vmatmul.mubr.bf16.gmra.mrb[0].mxu0 %v835
      %v1936 = vpop.f32.mrb[0].mxu0
      %v1937 = vadd.f32 0.0, %v1936
      %v1938 = vpop.f32.mrb[0].mxu0
      %v1939 = vpop.f32.mrb[0].mxu0
      %v1940 = vadd.f32 0.0, %v1939
      %v1941 = vpop.f32.mrb[0].mxu0
      %1942 = vdwg.mxu0
      %v1943 = vpack.c.bf16 %v1820, %v1817
      %v1944 = vpack.c.bf16 %v1828, %v1825
      %v1945 = vpack.c.bf16 %v1836, %v1833
      %v1946 = vpack.c.bf16 %v1844, %v1841
      %v1947 = vpack.c.bf16 %v1852, %v1849
      %v1948 = vpack.c.bf16 %v1860, %v1857
      %v1949 = vpack.c.bf16 %v1868, %v1865
      %v1950 = vpack.c.bf16 %v1876, %v1873
      %v1951 = vpack.c.bf16 %v1884, %v1881
      %v1952 = vpack.c.bf16 %v1892, %v1889
      %v1953 = vpack.c.bf16 %v1900, %v1897
      %v1954 = vpack.c.bf16 %v1908, %v1905
      %v1955 = vpack.c.bf16 %v1916, %v1913
      %v1956 = vpack.c.bf16 %v1924, %v1921
      %v1957 = vpack.c.bf16 %v1932, %v1929
      %v1958 = vpack.c.bf16 %v1940, %v1937
      %v1959 = vld [vmem:[%s2] sm:$0x1]
      %v1960 = vld [vmem:[%s1] sm:$0xf]
      %v1961 = vld [vmem:[%s1 + $0x4] sm:$0xf]
      %v1962 = vld [vmem:[%s1 + $0x8] sm:$0xf]
      %v1963 = vld [vmem:[%s1 + $0xc] sm:$0xf]
      %v1964 = vld [vmem:[%s1 + $0x10] sm:$0xf]
      %v1965 = vld [vmem:[%s1 + $0x14] sm:$0xf]
      %v1966 = vld [vmem:[%s1 + $0x18] sm:$0xf]
      %v1967 = vld [vmem:[%s1 + $0x1c] sm:$0xf]
      %v1968 = vld [vmem:[%s1 + $0x20] sm:$0xf]
      %v1969 = vld [vmem:[%s1 + $0x24] sm:$0xf]
      %v1970 = vld [vmem:[%s1 + $0x28] sm:$0xf]
      %v1971 = vld [vmem:[%s1 + $0x2c] sm:$0xf]
      %v1972 = vld [vmem:[%s1 + $0x30] sm:$0xf]
      %v1973 = vld [vmem:[%s1 + $0x34] sm:$0xf]
      %v1974 = vld [vmem:[%s1 + $0x38] sm:$0xf]
      %v1975 = vld [vmem:[%s1 + $0x3c] sm:$0xf]
      %v1992 = vunpack.c.l.b16 %v1960
      %v1993 = vunpack.c.l.b16 %v1961
      %v1994 = vunpack.c.l.b16 %v1962
      %v1995 = vunpack.c.l.b16 %v1963
      %v1996 = vunpack.c.l.b16 %v1964
      %v1997 = vunpack.c.l.b16 %v1965
      %v1998 = vunpack.c.l.b16 %v1966
      %v1999 = vunpack.c.l.b16 %v1967
      %v2000 = vunpack.c.l.b16 %v1968
      %v2001 = vunpack.c.l.b16 %v1969
      %v2002 = vunpack.c.l.b16 %v1970
      %v2003 = vunpack.c.l.b16 %v1971
      %v2004 = vunpack.c.l.b16 %v1972
      %v2005 = vunpack.c.l.b16 %v1973
      %v2006 = vunpack.c.l.b16 %v1974
      %v2007 = vunpack.c.l.b16 %v1975
      %v2008 = vpack.c.b16 %v1993, %v1992
      %v2009 = vpack.c.b16 %v1995, %v1994
      %v2010 = vpack.c.b16 %v1997, %v1996
      %v2011 = vpack.c.b16 %v1999, %v1998
      %v2012 = vpack.c.b16 %v2001, %v2000
      %v2013 = vpack.c.b16 %v2003, %v2002
      %v2014 = vpack.c.b16 %v2005, %v2004
      %v2015 = vpack.c.b16 %v2007, %v2006
      %2024 = vmatprep.subr.bf16.mxu0 0
      %2025 = vmatpush1.bf16.msra.mxu0 %v2008
      %2026 = vmatprep.subr.bf16.mxu0 0
      %2027 = vmatpush1.bf16.msra.mxu0 %v2009
      %2028 = vmatprep.subr.bf16.mxu0 0
      %2029 = vmatpush1.bf16.msra.mxu0 %v2010
      %2030 = vmatprep.subr.bf16.mxu0 0
      %2031 = vmatpush1.bf16.msra.mxu0 %v2011
      %2032 = vmatprep.subr.bf16.mxu0 0
      %2033 = vmatpush1.bf16.msra.mxu0 %v2012
      %2034 = vmatprep.subr.bf16.mxu0 0
      %2035 = vmatpush1.bf16.msra.mxu0 %v2013
      %2036 = vmatprep.subr.bf16.mxu0 0
      %2037 = vmatpush1.bf16.msra.mxu0 %v2014
      %2038 = vmatprep.subr.bf16.mxu0 0
      %2039 = vmatpush1.bf16.msra.mxu0 %v2015
      %2040 = vmatprep.subr.bf16.mxu0 0
      %2041 = vmatpush1.bf16.msra.mxu0 0
      %2042 = vmatprep.subr.bf16.mxu0 0
      %2043 = vmatpush1.bf16.msra.mxu0 0
      %2044 = vmatprep.subr.bf16.mxu0 0
      %2045 = vmatpush1.bf16.msra.mxu0 0
      %2046 = vmatprep.subr.bf16.mxu0 0
      %2047 = vmatpush1.bf16.msra.mxu0 0
      %2048 = vmatprep.subr.bf16.mxu0 0
      %2049 = vmatpush1.bf16.msra.mxu0 0
      %2050 = vmatprep.subr.bf16.mxu0 0
      %2051 = vmatpush1.bf16.msra.mxu0 0
      %2052 = vmatprep.subr.bf16.mxu0 0
      %2053 = vmatpush1.bf16.msra.mxu0 0
      %2054 = vmatprep.subr.bf16.mxu0 0
      %2055 = vmatpush1.bf16.msra.mxu0 0
      %2056 = vmatprep.mubr.bf16.mxu0 0
      %2057 = vmatmul.mubr.bf16.gmra.mrb[0].mxu0 %v1766
      %v2058 = vpop.f32.mrb[0].mxu0
      %v2059 = vadd.f32 0.0, %v2058
      %v2060 = vpop.f32.mrb[0].mxu0
      %v2061 = vpop.f32.mrb[0].mxu0
      %v2062 = vadd.f32 0.0, %v2061
      %v2063 = vpop.f32.mrb[0].mxu0
      %2064 = vmatprep.mubr.bf16.mxu0 0
      %2065 = vmatmul.mubr.bf16.gmra.mrb[0].mxu0 %v1767
      %v2066 = vpop.f32.mrb[0].mxu0
      %v2067 = vadd.f32 0.0, %v2066
      %v2068 = vpop.f32.mrb[0].mxu0
      %v2069 = vpop.f32.mrb[0].mxu0
      %v2070 = vadd.f32 0.0, %v2069
      %v2071 = vpop.f32.mrb[0].mxu0
      %2072 = vmatprep.mubr.bf16.mxu0 0
      %2073 = vmatmul.mubr.bf16.gmra.mrb[0].mxu0 %v1768
      %v2074 = vpop.f32.mrb[0].mxu0
      %v2075 = vadd.f32 0.0, %v2074
      %v2076 = vpop.f32.mrb[0].mxu0
      %v2077 = vpop.f32.mrb[0].mxu0
      %v2078 = vadd.f32 0.0, %v2077
      %v2079 = vpop.f32.mrb[0].mxu0
      %2080 = vmatprep.mubr.bf16.mxu0 0
      %2081 = vmatmul.mubr.bf16.gmra.mrb[0].mxu0 %v1769
      %v2082 = vpop.f32.mrb[0].mxu0
      %v2083 = vadd.f32 0.0, %v2082
      %v2084 = vpop.f32.mrb[0].mxu0
      %v2085 = vpop.f32.mrb[0].mxu0
      %v2086 = vadd.f32 0.0, %v2085
      %v2087 = vpop.f32.mrb[0].mxu0
      %2088 = vmatprep.mubr.bf16.mxu0 0
      %2089 = vmatmul.mubr.bf16.gmra.mrb[0].mxu0 %v1770
      %v2090 = vpop.f32.mrb[0].mxu0
      %v2091 = vadd.f32 0.0, %v2090
      %v2092 = vpop.f32.mrb[0].mxu0
      %v2093 = vpop.f32.mrb[0].mxu0
      %v2094 = vadd.f32 0.0, %v2093
      %v2095 = vpop.f32.mrb[0].mxu0
      %2096 = vmatprep.mubr.bf16.mxu0 0
      %2097 = vmatmul.mubr.bf16.gmra.mrb[0].mxu0 %v1771
      %v2098 = vpop.f32.mrb[0].mxu0
      %v2099 = vadd.f32 0.0, %v2098
      %v2100 = vpop.f32.mrb[0].mxu0
      %v2101 = vpop.f32.mrb[0].mxu0
      %v2102 = vadd.f32 0.0, %v2101
      %v2103 = vpop.f32.mrb[0].mxu0
      %2104 = vmatprep.mubr.bf16.mxu0 0
      %2105 = vmatmul.mubr.bf16.gmra.mrb[0].mxu0 %v1772
      %v2106 = vpop.f32.mrb[0].mxu0
      %v2107 = vadd.f32 0.0, %v2106
      %v2108 = vpop.f32.mrb[0].mxu0
      %v2109 = vpop.f32.mrb[0].mxu0
      %v2110 = vadd.f32 0.0, %v2109
      %v2111 = vpop.f32.mrb[0].mxu0
      %2112 = vmatprep.mubr.bf16.mxu0 0
      %2113 = vmatmul.mubr.bf16.gmra.mrb[0].mxu0 %v1773
      %v2114 = vpop.f32.mrb[0].mxu0
      %v2115 = vadd.f32 0.0, %v2114
      %v2116 = vpop.f32.mrb[0].mxu0
      %v2117 = vpop.f32.mrb[0].mxu0
      %v2118 = vadd.f32 0.0, %v2117
      %v2119 = vpop.f32.mrb[0].mxu0
      %2120 = vmatprep.mubr.bf16.mxu0 0
      %2121 = vmatmul.mubr.bf16.gmra.mrb[0].mxu0 %v1774
      %v2122 = vpop.f32.mrb[0].mxu0
      %v2123 = vadd.f32 0.0, %v2122
      %v2124 = vpop.f32.mrb[0].mxu0
      %v2125 = vpop.f32.mrb[0].mxu0
      %v2126 = vadd.f32 0.0, %v2125
      %v2127 = vpop.f32.mrb[0].mxu0
      %2128 = vmatprep.mubr.bf16.mxu0 0
      %2129 = vmatmul.mubr.bf16.gmra.mrb[0].mxu0 %v1775
      %v2130 = vpop.f32.mrb[0].mxu0
      %v2131 = vadd.f32 0.0, %v2130
      %v2132 = vpop.f32.mrb[0].mxu0
      %v2133 = vpop.f32.mrb[0].mxu0
      %v2134 = vadd.f32 0.0, %v2133
      %v2135 = vpop.f32.mrb[0].mxu0
      %2136 = vmatprep.mubr.bf16.mxu0 0
      %2137 = vmatmul.mubr.bf16.gmra.mrb[0].mxu0 %v1776
      %v2138 = vpop.f32.mrb[0].mxu0
      %v2139 = vadd.f32 0.0, %v2138
      %v2140 = vpop.f32.mrb[0].mxu0
      %v2141 = vpop.f32.mrb[0].mxu0
      %v2142 = vadd.f32 0.0, %v2141
      %v2143 = vpop.f32.mrb[0].mxu0
      %2144 = vmatprep.mubr.bf16.mxu0 0
      %2145 = vmatmul.mubr.bf16.gmra.mrb[0].mxu0 %v1777
      %v2146 = vpop.f32.mrb[0].mxu0
      %v2147 = vadd.f32 0.0, %v2146
      %v2148 = vpop.f32.mrb[0].mxu0
      %v2149 = vpop.f32.mrb[0].mxu0
      %v2150 = vadd.f32 0.0, %v2149
      %v2151 = vpop.f32.mrb[0].mxu0
      %2152 = vmatprep.mubr.bf16.mxu0 0
      %2153 = vmatmul.mubr.bf16.gmra.mrb[0].mxu0 %v1778
      %v2154 = vpop.f32.mrb[0].mxu0
      %v2155 = vadd.f32 0.0, %v2154
      %v2156 = vpop.f32.mrb[0].mxu0
      %v2157 = vpop.f32.mrb[0].mxu0
      %v2158 = vadd.f32 0.0, %v2157
      %v2159 = vpop.f32.mrb[0].mxu0
      %2160 = vmatprep.mubr.bf16.mxu0 0
      %2161 = vmatmul.mubr.bf16.gmra.mrb[0].mxu0 %v1779
      %v2162 = vpop.f32.mrb[0].mxu0
      %v2163 = vadd.f32 0.0, %v2162
      %v2164 = vpop.f32.mrb[0].mxu0
      %v2165 = vpop.f32.mrb[0].mxu0
      %v2166 = vadd.f32 0.0, %v2165
      %v2167 = vpop.f32.mrb[0].mxu0
      %2168 = vmatprep.mubr.bf16.mxu0 0
      %2169 = vmatmul.mubr.bf16.gmra.mrb[0].mxu0 %v1780
      %v2170 = vpop.f32.mrb[0].mxu0
      %v2171 = vadd.f32 0.0, %v2170
      %v2172 = vpop.f32.mrb[0].mxu0
      %v2173 = vpop.f32.mrb[0].mxu0
      %v2174 = vadd.f32 0.0, %v2173
      %v2175 = vpop.f32.mrb[0].mxu0
      %2176 = vmatprep.mubr.bf16.mxu0 0
      %2177 = vmatmul.mubr.bf16.gmra.mrb[0].mxu0 %v1781
      %v2178 = vpop.f32.mrb[0].mxu0
      %v2179 = vadd.f32 0.0, %v2178
      %v2180 = vpop.f32.mrb[0].mxu0
      %v2181 = vpop.f32.mrb[0].mxu0
      %v2182 = vadd.f32 0.0, %v2181
      %v2183 = vpop.f32.mrb[0].mxu0
      %2184 = vdwg.mxu0
      %v2186 = vlaneseq
      %v2187 = vshrl.u32 %v2186, 7
      %v2188 = vsub.s32 0, %v2187
      %v2189 = vrot.slane %v1959, %v2188
      %v2191 = vadd.f32 %v2189, %v2059
      %v2192 = vadd.f32 %v2189, %v2062
      %v2193 = vadd.f32 %v2189, %v2067
      %v2194 = vadd.f32 %v2189, %v2070
      %v2195 = vadd.f32 %v2189, %v2075
      %v2196 = vadd.f32 %v2189, %v2078
      %v2197 = vadd.f32 %v2189, %v2083
      %v2198 = vadd.f32 %v2189, %v2086
      %v2199 = vadd.f32 %v2189, %v2091
      %v2200 = vadd.f32 %v2189, %v2094
      %v2201 = vadd.f32 %v2189, %v2099
      %v2202 = vadd.f32 %v2189, %v2102
      %v2203 = vadd.f32 %v2189, %v2107
      %v2204 = vadd.f32 %v2189, %v2110
      %v2205 = vadd.f32 %v2189, %v2115
      %v2206 = vadd.f32 %v2189, %v2118
      %v2207 = vadd.f32 %v2189, %v2123
      %v2208 = vadd.f32 %v2189, %v2126
      %v2209 = vadd.f32 %v2189, %v2131
      %v2210 = vadd.f32 %v2189, %v2134
      %v2211 = vadd.f32 %v2189, %v2139
      %v2212 = vadd.f32 %v2189, %v2142
      %v2213 = vadd.f32 %v2189, %v2147
      %v2214 = vadd.f32 %v2189, %v2150
      %v2215 = vadd.f32 %v2189, %v2155
      %v2216 = vadd.f32 %v2189, %v2158
      %v2217 = vadd.f32 %v2189, %v2163
      %v2218 = vadd.f32 %v2189, %v2166
      %v2219 = vadd.f32 %v2189, %v2171
      %v2220 = vadd.f32 %v2189, %v2174
      %v2221 = vadd.f32 %v2189, %v2179
      %v2222 = vadd.f32 %v2189, %v2182
      %s2223 = scalar_lea.vmem %s1, 64
      %v2224 = vld [vmem:[%s2223] sm:$0xf]
      %v2225 = vld [vmem:[%s2223 + $0x4] sm:$0xf]
      %v2226 = vld [vmem:[%s2223 + $0x8] sm:$0xf]
      %v2227 = vld [vmem:[%s2223 + $0xc] sm:$0xf]
      %v2228 = vld [vmem:[%s2223 + $0x10] sm:$0xf]
      %v2229 = vld [vmem:[%s2223 + $0x14] sm:$0xf]
      %v2230 = vld [vmem:[%s2223 + $0x18] sm:$0xf]
      %v2231 = vld [vmem:[%s2223 + $0x1c] sm:$0xf]
      %v2232 = vld [vmem:[%s2223 + $0x20] sm:$0xf]
      %v2233 = vld [vmem:[%s2223 + $0x24] sm:$0xf]
      %v2234 = vld [vmem:[%s2223 + $0x28] sm:$0xf]
      %v2235 = vld [vmem:[%s2223 + $0x2c] sm:$0xf]
      %v2236 = vld [vmem:[%s2223 + $0x30] sm:$0xf]
      %v2237 = vld [vmem:[%s2223 + $0x34] sm:$0xf]
      %v2238 = vld [vmem:[%s2223 + $0x38] sm:$0xf]
      %v2239 = vld [vmem:[%s2223 + $0x3c] sm:$0xf]
      %v2256 = vunpack.c.l.b16 %v2224
      %v2257 = vunpack.c.l.b16 %v2225
      %v2258 = vunpack.c.l.b16 %v2226
      %v2259 = vunpack.c.l.b16 %v2227
      %v2260 = vunpack.c.l.b16 %v2228
      %v2261 = vunpack.c.l.b16 %v2229
      %v2262 = vunpack.c.l.b16 %v2230
      %v2263 = vunpack.c.l.b16 %v2231
      %v2264 = vunpack.c.l.b16 %v2232
      %v2265 = vunpack.c.l.b16 %v2233
      %v2266 = vunpack.c.l.b16 %v2234
      %v2267 = vunpack.c.l.b16 %v2235
      %v2268 = vunpack.c.l.b16 %v2236
      %v2269 = vunpack.c.l.b16 %v2237
      %v2270 = vunpack.c.l.b16 %v2238
      %v2271 = vunpack.c.l.b16 %v2239
      %v2272 = vpack.c.b16 %v2257, %v2256
      %v2273 = vpack.c.b16 %v2259, %v2258
      %v2274 = vpack.c.b16 %v2261, %v2260
      %v2275 = vpack.c.b16 %v2263, %v2262
      %v2276 = vpack.c.b16 %v2265, %v2264
      %v2277 = vpack.c.b16 %v2267, %v2266
      %v2278 = vpack.c.b16 %v2269, %v2268
      %v2279 = vpack.c.b16 %v2271, %v2270
      %2288 = vmatprep.subr.bf16.mxu0 0
      %2289 = vmatpush1.bf16.msra.mxu0 %v2272
      %2290 = vmatprep.subr.bf16.mxu0 0
      %2291 = vmatpush1.bf16.msra.mxu0 %v2273
      %2292 = vmatprep.subr.bf16.mxu0 0
      %2293 = vmatpush1.bf16.msra.mxu0 %v2274
      %2294 = vmatprep.subr.bf16.mxu0 0
      %2295 = vmatpush1.bf16.msra.mxu0 %v2275
      %2296 = vmatprep.subr.bf16.mxu0 0
      %2297 = vmatpush1.bf16.msra.mxu0 %v2276
      %2298 = vmatprep.subr.bf16.mxu0 0
      %2299 = vmatpush1.bf16.msra.mxu0 %v2277
      %2300 = vmatprep.subr.bf16.mxu0 0
      %2301 = vmatpush1.bf16.msra.mxu0 %v2278
      %2302 = vmatprep.subr.bf16.mxu0 0
      %2303 = vmatpush1.bf16.msra.mxu0 %v2279
      %2304 = vmatprep.subr.bf16.mxu0 0
      %2305 = vmatpush1.bf16.msra.mxu0 0
      %2306 = vmatprep.subr.bf16.mxu0 0
      %2307 = vmatpush1.bf16.msra.mxu0 0
      %2308 = vmatprep.subr.bf16.mxu0 0
      %2309 = vmatpush1.bf16.msra.mxu0 0
      %2310 = vmatprep.subr.bf16.mxu0 0
      %2311 = vmatpush1.bf16.msra.mxu0 0
      %2312 = vmatprep.subr.bf16.mxu0 0
      %2313 = vmatpush1.bf16.msra.mxu0 0
      %2314 = vmatprep.subr.bf16.mxu0 0
      %2315 = vmatpush1.bf16.msra.mxu0 0
      %2316 = vmatprep.subr.bf16.mxu0 0
      %2317 = vmatpush1.bf16.msra.mxu0 0
      %2318 = vmatprep.subr.bf16.mxu0 0
      %2319 = vmatpush1.bf16.msra.mxu0 0
      %2320 = vmatprep.mubr.bf16.mxu0 0
      %2321 = vmatmul.mubr.bf16.gmra.mrb[0].mxu0 %v369
      %v2322 = vpop.f32.mrb[0].mxu0
      %v2323 = vadd.f32 0.0, %v2322
      %v2324 = vpop.f32.mrb[0].mxu0
      %v2325 = vpop.f32.mrb[0].mxu0
      %v2326 = vadd.f32 0.0, %v2325
      %v2327 = vpop.f32.mrb[0].mxu0
      %2328 = vmatprep.mubr.bf16.mxu0 0
      %2329 = vmatmul.mubr.bf16.gmra.mrb[0].mxu0 %v370
      %v2330 = vpop.f32.mrb[0].mxu0
      %v2331 = vadd.f32 0.0, %v2330
      %v2332 = vpop.f32.mrb[0].mxu0
      %v2333 = vpop.f32.mrb[0].mxu0
      %v2334 = vadd.f32 0.0, %v2333
      %v2335 = vpop.f32.mrb[0].mxu0
      %2336 = vmatprep.mubr.bf16.mxu0 0
      %2337 = vmatmul.mubr.bf16.gmra.mrb[0].mxu0 %v371
      %v2338 = vpop.f32.mrb[0].mxu0
      %v2339 = vadd.f32 0.0, %v2338
      %v2340 = vpop.f32.mrb[0].mxu0
      %v2341 = vpop.f32.mrb[0].mxu0
      %v2342 = vadd.f32 0.0, %v2341
      %v2343 = vpop.f32.mrb[0].mxu0
      %2344 = vmatprep.mubr.bf16.mxu0 0
      %2345 = vmatmul.mubr.bf16.gmra.mrb[0].mxu0 %v372
      %v2346 = vpop.f32.mrb[0].mxu0
      %v2347 = vadd.f32 0.0, %v2346
      %v2348 = vpop.f32.mrb[0].mxu0
      %v2349 = vpop.f32.mrb[0].mxu0
      %v2350 = vadd.f32 0.0, %v2349
      %v2351 = vpop.f32.mrb[0].mxu0
      %2352 = vmatprep.mubr.bf16.mxu0 0
      %2353 = vmatmul.mubr.bf16.gmra.mrb[0].mxu0 %v373
      %v2354 = vpop.f32.mrb[0].mxu0
      %v2355 = vadd.f32 0.0, %v2354
      %v2356 = vpop.f32.mrb[0].mxu0
      %v2357 = vpop.f32.mrb[0].mxu0
      %v2358 = vadd.f32 0.0, %v2357
      %v2359 = vpop.f32.mrb[0].mxu0
      %2360 = vmatprep.mubr.bf16.mxu0 0
      %2361 = vmatmul.mubr.bf16.gmra.mrb[0].mxu0 %v374
      %v2362 = vpop.f32.mrb[0].mxu0
      %v2363 = vadd.f32 0.0, %v2362
      %v2364 = vpop.f32.mrb[0].mxu0
      %v2365 = vpop.f32.mrb[0].mxu0
      %v2366 = vadd.f32 0.0, %v2365
      %v2367 = vpop.f32.mrb[0].mxu0
      %2368 = vmatprep.mubr.bf16.mxu0 0
      %2369 = vmatmul.mubr.bf16.gmra.mrb[0].mxu0 %v375
      %v2370 = vpop.f32.mrb[0].mxu0
      %v2371 = vadd.f32 0.0, %v2370
      %v2372 = vpop.f32.mrb[0].mxu0
      %v2373 = vpop.f32.mrb[0].mxu0
      %v2374 = vadd.f32 0.0, %v2373
      %v2375 = vpop.f32.mrb[0].mxu0
      %2376 = vmatprep.mubr.bf16.mxu0 0
      %2377 = vmatmul.mubr.bf16.gmra.mrb[0].mxu0 %v376
      %v2378 = vpop.f32.mrb[0].mxu0
      %v2379 = vadd.f32 0.0, %v2378
      %v2380 = vpop.f32.mrb[0].mxu0
      %v2381 = vpop.f32.mrb[0].mxu0
      %v2382 = vadd.f32 0.0, %v2381
      %v2383 = vpop.f32.mrb[0].mxu0
      %2384 = vmatprep.mubr.bf16.mxu0 0
      %2385 = vmatmul.mubr.bf16.gmra.mrb[0].mxu0 %v377
      %v2386 = vpop.f32.mrb[0].mxu0
      %v2387 = vadd.f32 0.0, %v2386
      %v2388 = vpop.f32.mrb[0].mxu0
      %v2389 = vpop.f32.mrb[0].mxu0
      %v2390 = vadd.f32 0.0, %v2389
      %v2391 = vpop.f32.mrb[0].mxu0
      %2392 = vmatprep.mubr.bf16.mxu0 0
      %2393 = vmatmul.mubr.bf16.gmra.mrb[0].mxu0 %v378
      %v2394 = vpop.f32.mrb[0].mxu0
      %v2395 = vadd.f32 0.0, %v2394
      %v2396 = vpop.f32.mrb[0].mxu0
      %v2397 = vpop.f32.mrb[0].mxu0
      %v2398 = vadd.f32 0.0, %v2397
      %v2399 = vpop.f32.mrb[0].mxu0
      %2400 = vmatprep.mubr.bf16.mxu0 0
      %2401 = vmatmul.mubr.bf16.gmra.mrb[0].mxu0 %v379
      %v2402 = vpop.f32.mrb[0].mxu0
      %v2403 = vadd.f32 0.0, %v2402
      %v2404 = vpop.f32.mrb[0].mxu0
      %v2405 = vpop.f32.mrb[0].mxu0
      %v2406 = vadd.f32 0.0, %v2405
      %v2407 = vpop.f32.mrb[0].mxu0
      %2408 = vmatprep.mubr.bf16.mxu0 0
      %2409 = vmatmul.mubr.bf16.gmra.mrb[0].mxu0 %v380
      %v2410 = vpop.f32.mrb[0].mxu0
      %v2411 = vadd.f32 0.0, %v2410
      %v2412 = vpop.f32.mrb[0].mxu0
      %v2413 = vpop.f32.mrb[0].mxu0
      %v2414 = vadd.f32 0.0, %v2413
      %v2415 = vpop.f32.mrb[0].mxu0
      %2416 = vmatprep.mubr.bf16.mxu0 0
      %2417 = vmatmul.mubr.bf16.gmra.mrb[0].mxu0 %v381
      %v2418 = vpop.f32.mrb[0].mxu0
      %v2419 = vadd.f32 0.0, %v2418
      %v2420 = vpop.f32.mrb[0].mxu0
      %v2421 = vpop.f32.mrb[0].mxu0
      %v2422 = vadd.f32 0.0, %v2421
      %v2423 = vpop.f32.mrb[0].mxu0
      %2424 = vmatprep.mubr.bf16.mxu0 0
      %2425 = vmatmul.mubr.bf16.gmra.mrb[0].mxu0 %v382
      %v2426 = vpop.f32.mrb[0].mxu0
      %v2427 = vadd.f32 0.0, %v2426
      %v2428 = vpop.f32.mrb[0].mxu0
      %v2429 = vpop.f32.mrb[0].mxu0
      %v2430 = vadd.f32 0.0, %v2429
      %v2431 = vpop.f32.mrb[0].mxu0
      %2432 = vmatprep.mubr.bf16.mxu0 0
      %2433 = vmatmul.mubr.bf16.gmra.mrb[0].mxu0 %v383
      %v2434 = vpop.f32.mrb[0].mxu0
      %v2435 = vadd.f32 0.0, %v2434
      %v2436 = vpop.f32.mrb[0].mxu0
      %v2437 = vpop.f32.mrb[0].mxu0
      %v2438 = vadd.f32 0.0, %v2437
      %v2439 = vpop.f32.mrb[0].mxu0
      %2440 = vmatprep.mubr.bf16.mxu0 0
      %2441 = vmatmul.mubr.bf16.gmra.mrb[0].mxu0 %v384
      %v2442 = vpop.f32.mrb[0].mxu0
      %v2443 = vadd.f32 0.0, %v2442
      %v2444 = vpop.f32.mrb[0].mxu0
      %v2445 = vpop.f32.mrb[0].mxu0
      %v2446 = vadd.f32 0.0, %v2445
      %v2447 = vpop.f32.mrb[0].mxu0
      %2448 = vdwg.mxu0
      %v2449 = vadd.f32 %v2191, %v2323
      %v2450 = vadd.f32 %v2192, %v2326
      %v2451 = vadd.f32 %v2193, %v2331
      %v2452 = vadd.f32 %v2194, %v2334
      %v2453 = vadd.f32 %v2195, %v2339
      %v2454 = vadd.f32 %v2196, %v2342
      %v2455 = vadd.f32 %v2197, %v2347
      %v2456 = vadd.f32 %v2198, %v2350
      %v2457 = vadd.f32 %v2199, %v2355
      %v2458 = vadd.f32 %v2200, %v2358
      %v2459 = vadd.f32 %v2201, %v2363
      %v2460 = vadd.f32 %v2202, %v2366
      %v2461 = vadd.f32 %v2203, %v2371
      %v2462 = vadd.f32 %v2204, %v2374
      %v2463 = vadd.f32 %v2205, %v2379
      %v2464 = vadd.f32 %v2206, %v2382
      %v2465 = vadd.f32 %v2207, %v2387
      %v2466 = vadd.f32 %v2208, %v2390
      %v2467 = vadd.f32 %v2209, %v2395
      %v2468 = vadd.f32 %v2210, %v2398
      %v2469 = vadd.f32 %v2211, %v2403
      %v2470 = vadd.f32 %v2212, %v2406
      %v2471 = vadd.f32 %v2213, %v2411
      %v2472 = vadd.f32 %v2214, %v2414
      %v2473 = vadd.f32 %v2215, %v2419
      %v2474 = vadd.f32 %v2216, %v2422
      %v2475 = vadd.f32 %v2217, %v2427
      %v2476 = vadd.f32 %v2218, %v2430
      %v2477 = vadd.f32 %v2219, %v2435
      %v2478 = vadd.f32 %v2220, %v2438
      %v2479 = vadd.f32 %v2221, %v2443
      %v2480 = vadd.f32 %v2222, %v2446
      %s2481 = scalar_lea.vmem %s1, 128
      %v2482 = vld [vmem:[%s2481] sm:$0xf]
      %v2483 = vld [vmem:[%s2481 + $0x4] sm:$0xf]
      %v2484 = vld [vmem:[%s2481 + $0x8] sm:$0xf]
      %v2485 = vld [vmem:[%s2481 + $0xc] sm:$0xf]
      %v2486 = vld [vmem:[%s2481 + $0x10] sm:$0xf]
      %v2487 = vld [vmem:[%s2481 + $0x14] sm:$0xf]
      %v2488 = vld [vmem:[%s2481 + $0x18] sm:$0xf]
      %v2489 = vld [vmem:[%s2481 + $0x1c] sm:$0xf]
      %v2490 = vld [vmem:[%s2481 + $0x20] sm:$0xf]
      %v2491 = vld [vmem:[%s2481 + $0x24] sm:$0xf]
      %v2492 = vld [vmem:[%s2481 + $0x28] sm:$0xf]
      %v2493 = vld [vmem:[%s2481 + $0x2c] sm:$0xf]
      %v2494 = vld [vmem:[%s2481 + $0x30] sm:$0xf]
      %v2495 = vld [vmem:[%s2481 + $0x34] sm:$0xf]
      %v2496 = vld [vmem:[%s2481 + $0x38] sm:$0xf]
      %v2497 = vld [vmem:[%s2481 + $0x3c] sm:$0xf]
      %v2514 = vunpack.c.l.b16 %v2482
      %v2515 = vunpack.c.l.b16 %v2483
      %v2516 = vunpack.c.l.b16 %v2484
      %v2517 = vunpack.c.l.b16 %v2485
      %v2518 = vunpack.c.l.b16 %v2486
      %v2519 = vunpack.c.l.b16 %v2487
      %v2520 = vunpack.c.l.b16 %v2488
      %v2521 = vunpack.c.l.b16 %v2489
      %v2522 = vunpack.c.l.b16 %v2490
      %v2523 = vunpack.c.l.b16 %v2491
      %v2524 = vunpack.c.l.b16 %v2492
      %v2525 = vunpack.c.l.b16 %v2493
      %v2526 = vunpack.c.l.b16 %v2494
      %v2527 = vunpack.c.l.b16 %v2495
      %v2528 = vunpack.c.l.b16 %v2496
      %v2529 = vunpack.c.l.b16 %v2497
      %v2530 = vpack.c.b16 %v2515, %v2514
      %v2531 = vpack.c.b16 %v2517, %v2516
      %v2532 = vpack.c.b16 %v2519, %v2518
      %v2533 = vpack.c.b16 %v2521, %v2520
      %v2534 = vpack.c.b16 %v2523, %v2522
      %v2535 = vpack.c.b16 %v2525, %v2524
      %v2536 = vpack.c.b16 %v2527, %v2526
      %v2537 = vpack.c.b16 %v2529, %v2528
      %2546 = vmatprep.subr.bf16.mxu0 0
      %2547 = vmatpush1.bf16.msra.mxu0 %v2530
      %2548 = vmatprep.subr.bf16.mxu0 0
      %2549 = vmatpush1.bf16.msra.mxu0 %v2531
      %2550 = vmatprep.subr.bf16.mxu0 0
      %2551 = vmatpush1.bf16.msra.mxu0 %v2532
      %2552 = vmatprep.subr.bf16.mxu0 0
      %2553 = vmatpush1.bf16.msra.mxu0 %v2533
      %2554 = vmatprep.subr.bf16.mxu0 0
      %2555 = vmatpush1.bf16.msra.mxu0 %v2534
      %2556 = vmatprep.subr.bf16.mxu0 0
      %2557 = vmatpush1.bf16.msra.mxu0 %v2535
      %2558 = vmatprep.subr.bf16.mxu0 0
      %2559 = vmatpush1.bf16.msra.mxu0 %v2536
      %2560 = vmatprep.subr.bf16.mxu0 0
      %2561 = vmatpush1.bf16.msra.mxu0 %v2537
      %2562 = vmatprep.subr.bf16.mxu0 0
      %2563 = vmatpush1.bf16.msra.mxu0 0
      %2564 = vmatprep.subr.bf16.mxu0 0
      %2565 = vmatpush1.bf16.msra.mxu0 0
      %2566 = vmatprep.subr.bf16.mxu0 0
      %2567 = vmatpush1.bf16.msra.mxu0 0
      %2568 = vmatprep.subr.bf16.mxu0 0
      %2569 = vmatpush1.bf16.msra.mxu0 0
      %2570 = vmatprep.subr.bf16.mxu0 0
      %2571 = vmatpush1.bf16.msra.mxu0 0
      %2572 = vmatprep.subr.bf16.mxu0 0
      %2573 = vmatpush1.bf16.msra.mxu0 0
      %2574 = vmatprep.subr.bf16.mxu0 0
      %2575 = vmatpush1.bf16.msra.mxu0 0
      %2576 = vmatprep.subr.bf16.mxu0 0
      %2577 = vmatpush1.bf16.msra.mxu0 0
      %2578 = vmatprep.mubr.bf16.mxu0 0
      %2579 = vmatmul.mubr.bf16.gmra.mrb[0].mxu0 %v1943
      %v2580 = vpop.f32.mrb[0].mxu0
      %v2581 = vadd.f32 0.0, %v2580
      %v2582 = vpop.f32.mrb[0].mxu0
      %v2583 = vpop.f32.mrb[0].mxu0
      %v2584 = vadd.f32 0.0, %v2583
      %v2585 = vpop.f32.mrb[0].mxu0
      %2586 = vmatprep.mubr.bf16.mxu0 0
      %2587 = vmatmul.mubr.bf16.gmra.mrb[0].mxu0 %v1944
      %v2588 = vpop.f32.mrb[0].mxu0
      %v2589 = vadd.f32 0.0, %v2588
      %v2590 = vpop.f32.mrb[0].mxu0
      %v2591 = vpop.f32.mrb[0].mxu0
      %v2592 = vadd.f32 0.0, %v2591
      %v2593 = vpop.f32.mrb[0].mxu0
      %2594 = vmatprep.mubr.bf16.mxu0 0
      %2595 = vmatmul.mubr.bf16.gmra.mrb[0].mxu0 %v1945
      %v2596 = vpop.f32.mrb[0].mxu0
      %v2597 = vadd.f32 0.0, %v2596
      %v2598 = vpop.f32.mrb[0].mxu0
      %v2599 = vpop.f32.mrb[0].mxu0
      %v2600 = vadd.f32 0.0, %v2599
      %v2601 = vpop.f32.mrb[0].mxu0
      %2602 = vmatprep.mubr.bf16.mxu0 0
      %2603 = vmatmul.mubr.bf16.gmra.mrb[0].mxu0 %v1946
      %v2604 = vpop.f32.mrb[0].mxu0
      %v2605 = vadd.f32 0.0, %v2604
      %v2606 = vpop.f32.mrb[0].mxu0
      %v2607 = vpop.f32.mrb[0].mxu0
      %v2608 = vadd.f32 0.0, %v2607
      %v2609 = vpop.f32.mrb[0].mxu0
      %2610 = vmatprep.mubr.bf16.mxu0 0
      %2611 = vmatmul.mubr.bf16.gmra.mrb[0].mxu0 %v1947
      %v2612 = vpop.f32.mrb[0].mxu0
      %v2613 = vadd.f32 0.0, %v2612
      %v2614 = vpop.f32.mrb[0].mxu0
      %v2615 = vpop.f32.mrb[0].mxu0
      %v2616 = vadd.f32 0.0, %v2615
      %v2617 = vpop.f32.mrb[0].mxu0
      %2618 = vmatprep.mubr.bf16.mxu0 0
      %2619 = vmatmul.mubr.bf16.gmra.mrb[0].mxu0 %v1948
      %v2620 = vpop.f32.mrb[0].mxu0
      %v2621 = vadd.f32 0.0, %v2620
      %v2622 = vpop.f32.mrb[0].mxu0
      %v2623 = vpop.f32.mrb[0].mxu0
      %v2624 = vadd.f32 0.0, %v2623
      %v2625 = vpop.f32.mrb[0].mxu0
      %2626 = vmatprep.mubr.bf16.mxu0 0
      %2627 = vmatmul.mubr.bf16.gmra.mrb[0].mxu0 %v1949
      %v2628 = vpop.f32.mrb[0].mxu0
      %v2629 = vadd.f32 0.0, %v2628
      %v2630 = vpop.f32.mrb[0].mxu0
      %v2631 = vpop.f32.mrb[0].mxu0
      %v2632 = vadd.f32 0.0, %v2631
      %v2633 = vpop.f32.mrb[0].mxu0
      %2634 = vmatprep.mubr.bf16.mxu0 0
      %2635 = vmatmul.mubr.bf16.gmra.mrb[0].mxu0 %v1950
      %v2636 = vpop.f32.mrb[0].mxu0
      %v2637 = vadd.f32 0.0, %v2636
      %v2638 = vpop.f32.mrb[0].mxu0
      %v2639 = vpop.f32.mrb[0].mxu0
      %v2640 = vadd.f32 0.0, %v2639
      %v2641 = vpop.f32.mrb[0].mxu0
      %2642 = vmatprep.mubr.bf16.mxu0 0
      %2643 = vmatmul.mubr.bf16.gmra.mrb[0].mxu0 %v1951
      %v2644 = vpop.f32.mrb[0].mxu0
      %v2645 = vadd.f32 0.0, %v2644
      %v2646 = vpop.f32.mrb[0].mxu0
      %v2647 = vpop.f32.mrb[0].mxu0
      %v2648 = vadd.f32 0.0, %v2647
      %v2649 = vpop.f32.mrb[0].mxu0
      %2650 = vmatprep.mubr.bf16.mxu0 0
      %2651 = vmatmul.mubr.bf16.gmra.mrb[0].mxu0 %v1952
      %v2652 = vpop.f32.mrb[0].mxu0
      %v2653 = vadd.f32 0.0, %v2652
      %v2654 = vpop.f32.mrb[0].mxu0
      %v2655 = vpop.f32.mrb[0].mxu0
      %v2656 = vadd.f32 0.0, %v2655
      %v2657 = vpop.f32.mrb[0].mxu0
      %2658 = vmatprep.mubr.bf16.mxu0 0
      %2659 = vmatmul.mubr.bf16.gmra.mrb[0].mxu0 %v1953
      %v2660 = vpop.f32.mrb[0].mxu0
      %v2661 = vadd.f32 0.0, %v2660
      %v2662 = vpop.f32.mrb[0].mxu0
      %v2663 = vpop.f32.mrb[0].mxu0
      %v2664 = vadd.f32 0.0, %v2663
      %v2665 = vpop.f32.mrb[0].mxu0
      %2666 = vmatprep.mubr.bf16.mxu0 0
      %2667 = vmatmul.mubr.bf16.gmra.mrb[0].mxu0 %v1954
      %v2668 = vpop.f32.mrb[0].mxu0
      %v2669 = vadd.f32 0.0, %v2668
      %v2670 = vpop.f32.mrb[0].mxu0
      %v2671 = vpop.f32.mrb[0].mxu0
      %v2672 = vadd.f32 0.0, %v2671
      %v2673 = vpop.f32.mrb[0].mxu0
      %2674 = vmatprep.mubr.bf16.mxu0 0
      %2675 = vmatmul.mubr.bf16.gmra.mrb[0].mxu0 %v1955
      %v2676 = vpop.f32.mrb[0].mxu0
      %v2677 = vadd.f32 0.0, %v2676
      %v2678 = vpop.f32.mrb[0].mxu0
      %v2679 = vpop.f32.mrb[0].mxu0
      %v2680 = vadd.f32 0.0, %v2679
      %v2681 = vpop.f32.mrb[0].mxu0
      %2682 = vmatprep.mubr.bf16.mxu0 0
      %2683 = vmatmul.mubr.bf16.gmra.mrb[0].mxu0 %v1956
      %v2684 = vpop.f32.mrb[0].mxu0
      %v2685 = vadd.f32 0.0, %v2684
      %v2686 = vpop.f32.mrb[0].mxu0
      %v2687 = vpop.f32.mrb[0].mxu0
      %v2688 = vadd.f32 0.0, %v2687
      %v2689 = vpop.f32.mrb[0].mxu0
      %2690 = vmatprep.mubr.bf16.mxu0 0
      %2691 = vmatmul.mubr.bf16.gmra.mrb[0].mxu0 %v1957
      %v2692 = vpop.f32.mrb[0].mxu0
      %v2693 = vadd.f32 0.0, %v2692
      %v2694 = vpop.f32.mrb[0].mxu0
      %v2695 = vpop.f32.mrb[0].mxu0
      %v2696 = vadd.f32 0.0, %v2695
      %v2697 = vpop.f32.mrb[0].mxu0
      %2698 = vmatprep.mubr.bf16.mxu0 0
      %2699 = vmatmul.mubr.bf16.gmra.mrb[0].mxu0 %v1958
      %v2700 = vpop.f32.mrb[0].mxu0
      %v2701 = vadd.f32 0.0, %v2700
      %v2702 = vpop.f32.mrb[0].mxu0
      %v2703 = vpop.f32.mrb[0].mxu0
      %v2704 = vadd.f32 0.0, %v2703
      %v2705 = vpop.f32.mrb[0].mxu0
      %2706 = vdwg.mxu0
      %v2707 = vadd.f32 %v2449, %v2581
      %v2708 = vadd.f32 %v2450, %v2584
      %v2709 = vadd.f32 %v2451, %v2589
      %v2710 = vadd.f32 %v2452, %v2592
      %v2711 = vadd.f32 %v2453, %v2597
      %v2712 = vadd.f32 %v2454, %v2600
      %v2713 = vadd.f32 %v2455, %v2605
      %v2714 = vadd.f32 %v2456, %v2608
      %v2715 = vadd.f32 %v2457, %v2613
      %v2716 = vadd.f32 %v2458, %v2616
      %v2717 = vadd.f32 %v2459, %v2621
      %v2718 = vadd.f32 %v2460, %v2624
      %v2719 = vadd.f32 %v2461, %v2629
      %v2720 = vadd.f32 %v2462, %v2632
      %v2721 = vadd.f32 %v2463, %v2637
      %v2722 = vadd.f32 %v2464, %v2640
      %v2723 = vadd.f32 %v2465, %v2645
      %v2724 = vadd.f32 %v2466, %v2648
      %v2725 = vadd.f32 %v2467, %v2653
      %v2726 = vadd.f32 %v2468, %v2656
      %v2727 = vadd.f32 %v2469, %v2661
      %v2728 = vadd.f32 %v2470, %v2664
      %v2729 = vadd.f32 %v2471, %v2669
      %v2730 = vadd.f32 %v2472, %v2672
      %v2731 = vadd.f32 %v2473, %v2677
      %v2732 = vadd.f32 %v2474, %v2680
      %v2733 = vadd.f32 %v2475, %v2685
      %v2734 = vadd.f32 %v2476, %v2688
      %v2735 = vadd.f32 %v2477, %v2693
      %v2736 = vadd.f32 %v2478, %v2696
      %v2737 = vadd.f32 %v2479, %v2701
      %v2738 = vadd.f32 %v2480, %v2704
      %v2739 = vmax.f32 %v2707, 0.0
      %v2740 = vmax.f32 %v2708, 0.0
      %v2741 = vmax.f32 %v2709, 0.0
      %v2742 = vmax.f32 %v2710, 0.0
      %v2743 = vmax.f32 %v2711, 0.0
      %v2744 = vmax.f32 %v2712, 0.0
      %v2745 = vmax.f32 %v2713, 0.0
      %v2746 = vmax.f32 %v2714, 0.0
      %v2747 = vmax.f32 %v2715, 0.0
      %v2748 = vmax.f32 %v2716, 0.0
      %v2749 = vmax.f32 %v2717, 0.0
      %v2750 = vmax.f32 %v2718, 0.0
      %v2751 = vmax.f32 %v2719, 0.0
      %v2752 = vmax.f32 %v2720, 0.0
      %v2753 = vmax.f32 %v2721, 0.0
      %v2754 = vmax.f32 %v2722, 0.0
      %v2755 = vmax.f32 %v2723, 0.0
      %v2756 = vmax.f32 %v2724, 0.0
      %v2757 = vmax.f32 %v2725, 0.0
      %v2758 = vmax.f32 %v2726, 0.0
      %v2759 = vmax.f32 %v2727, 0.0
      %v2760 = vmax.f32 %v2728, 0.0
      %v2761 = vmax.f32 %v2729, 0.0
      %v2762 = vmax.f32 %v2730, 0.0
      %v2763 = vmax.f32 %v2731, 0.0
      %v2764 = vmax.f32 %v2732, 0.0
      %v2765 = vmax.f32 %v2733, 0.0
      %v2766 = vmax.f32 %v2734, 0.0
      %v2767 = vmax.f32 %v2735, 0.0
      %v2768 = vmax.f32 %v2736, 0.0
      %v2769 = vmax.f32 %v2737, 0.0
      %v2770 = vmax.f32 %v2738, 0.0
      %v2771 = vpack.c.bf16 %v2740, %v2739
      %v2772 = vpack.c.bf16 %v2742, %v2741
      %v2773 = vpack.c.bf16 %v2744, %v2743
      %v2774 = vpack.c.bf16 %v2746, %v2745
      %v2775 = vpack.c.bf16 %v2748, %v2747
      %v2776 = vpack.c.bf16 %v2750, %v2749
      %v2777 = vpack.c.bf16 %v2752, %v2751
      %v2778 = vpack.c.bf16 %v2754, %v2753
      %v2779 = vpack.c.bf16 %v2756, %v2755
      %v2780 = vpack.c.bf16 %v2758, %v2757
      %v2781 = vpack.c.bf16 %v2760, %v2759
      %v2782 = vpack.c.bf16 %v2762, %v2761
      %v2783 = vpack.c.bf16 %v2764, %v2763
      %v2784 = vpack.c.bf16 %v2766, %v2765
      %v2785 = vpack.c.bf16 %v2768, %v2767
      %v2786 = vpack.c.bf16 %v2770, %v2769
      %2787 = vmatprep.subr.bf16.mxu0 0
      %2788 = vmatpush1.bf16.msra.mxu0 %v2771
      %2789 = vmatprep.subr.bf16.mxu0 0
      %2790 = vmatpush1.bf16.msra.mxu0 %v2772
      %2791 = vmatprep.subr.bf16.mxu0 0
      %2792 = vmatpush1.bf16.msra.mxu0 %v2773
      %2793 = vmatprep.subr.bf16.mxu0 0
      %2794 = vmatpush1.bf16.msra.mxu0 %v2774
      %2795 = vmatprep.subr.bf16.mxu0 0
      %2796 = vmatpush1.bf16.msra.mxu0 %v2775
      %2797 = vmatprep.subr.bf16.mxu0 0
      %2798 = vmatpush1.bf16.msra.mxu0 %v2776
      %2799 = vmatprep.subr.bf16.mxu0 0
      %2800 = vmatpush1.bf16.msra.mxu0 %v2777
      %2801 = vmatprep.subr.bf16.mxu0 0
      %2802 = vmatpush1.bf16.msra.mxu0 %v2778
      %2803 = vmatprep.subr.bf16.mxu0 0
      %2804 = vmatpush1.bf16.msra.mxu0 %v2779
      %2805 = vmatprep.subr.bf16.mxu0 0
      %2806 = vmatpush1.bf16.msra.mxu0 %v2780
      %2807 = vmatprep.subr.bf16.mxu0 0
      %2808 = vmatpush1.bf16.msra.mxu0 %v2781
      %2809 = vmatprep.subr.bf16.mxu0 0
      %2810 = vmatpush1.bf16.msra.mxu0 %v2782
      %2811 = vmatprep.subr.bf16.mxu0 0
      %2812 = vmatpush1.bf16.msra.mxu0 %v2783
      %2813 = vmatprep.subr.bf16.mxu0 0
      %2814 = vmatpush1.bf16.msra.mxu0 %v2784
      %2815 = vmatprep.subr.bf16.mxu0 0
      %2816 = vmatpush1.bf16.msra.mxu0 %v2785
      %2817 = vmatprep.subr.bf16.mxu0 0
      %2818 = vmatpush1.bf16.msra.mxu0 %v2786
      %2819 = vmatprep.mubr.bf16.mxu0 %v1190
      %2820 = vmatmul.mubr.bf16.gmra.mrb[0].mxu0 %v1189
      %v2821 = vpop.f32.mrb[0].mxu0
      %v2822 = vadd.f32 0.0, %v2821
      %v2823 = vpop.f32.mrb[0].mxu0
      %v2824 = vpop.f32.mrb[0].mxu0
      %v2825 = vadd.f32 0.0, %v2824
      %v2826 = vpop.f32.mrb[0].mxu0
      %2827 = vmatprep.mubr.bf16.mxu0 %v1192
      %2828 = vmatmul.mubr.bf16.gmra.mrb[0].mxu0 %v1191
      %v2829 = vpop.f32.mrb[0].mxu0
      %v2830 = vadd.f32 0.0, %v2829
      %v2831 = vpop.f32.mrb[0].mxu0
      %v2832 = vpop.f32.mrb[0].mxu0
      %v2833 = vadd.f32 0.0, %v2832
      %v2834 = vpop.f32.mrb[0].mxu0
      %2835 = vmatprep.mubr.bf16.mxu0 %v1194
      %2836 = vmatmul.mubr.bf16.gmra.mrb[0].mxu0 %v1193
      %v2837 = vpop.f32.mrb[0].mxu0
      %v2838 = vadd.f32 0.0, %v2837
      %v2839 = vpop.f32.mrb[0].mxu0
      %v2840 = vpop.f32.mrb[0].mxu0
      %v2841 = vadd.f32 0.0, %v2840
      %v2842 = vpop.f32.mrb[0].mxu0
      %2843 = vmatprep.mubr.bf16.mxu0 %v1196
      %2844 = vmatmul.mubr.bf16.gmra.mrb[0].mxu0 %v1195
      %v2845 = vpop.f32.mrb[0].mxu0
      %v2846 = vadd.f32 0.0, %v2845
      %v2847 = vpop.f32.mrb[0].mxu0
      %v2848 = vpop.f32.mrb[0].mxu0
      %v2849 = vadd.f32 0.0, %v2848
      %v2850 = vpop.f32.mrb[0].mxu0
      %2851 = vmatprep.mubr.bf16.mxu0 %v1198
      %2852 = vmatmul.mubr.bf16.gmra.mrb[0].mxu0 %v1197
      %v2853 = vpop.f32.mrb[0].mxu0
      %v2854 = vadd.f32 0.0, %v2853
      %v2855 = vpop.f32.mrb[0].mxu0
      %v2856 = vpop.f32.mrb[0].mxu0
      %v2857 = vadd.f32 0.0, %v2856
      %v2858 = vpop.f32.mrb[0].mxu0
      %2859 = vmatprep.mubr.bf16.mxu0 %v1200
      %2860 = vmatmul.mubr.bf16.gmra.mrb[0].mxu0 %v1199
      %v2861 = vpop.f32.mrb[0].mxu0
      %v2862 = vadd.f32 0.0, %v2861
      %v2863 = vpop.f32.mrb[0].mxu0
      %v2864 = vpop.f32.mrb[0].mxu0
      %v2865 = vadd.f32 0.0, %v2864
      %v2866 = vpop.f32.mrb[0].mxu0
      %2867 = vmatprep.mubr.bf16.mxu0 %v1202
      %2868 = vmatmul.mubr.bf16.gmra.mrb[0].mxu0 %v1201
      %v2869 = vpop.f32.mrb[0].mxu0
      %v2870 = vadd.f32 0.0, %v2869
      %v2871 = vpop.f32.mrb[0].mxu0
      %v2872 = vpop.f32.mrb[0].mxu0
      %v2873 = vadd.f32 0.0, %v2872
      %v2874 = vpop.f32.mrb[0].mxu0
      %2875 = vmatprep.mubr.bf16.mxu0 %v1204
      %2876 = vmatmul.mubr.bf16.gmra.mrb[0].mxu0 %v1203
      %v2877 = vpop.f32.mrb[0].mxu0
      %v2878 = vadd.f32 0.0, %v2877
      %v2879 = vpop.f32.mrb[0].mxu0
      %v2880 = vpop.f32.mrb[0].mxu0
      %v2881 = vadd.f32 0.0, %v2880
      %v2882 = vpop.f32.mrb[0].mxu0
      %2883 = vmatprep.mubr.bf16.mxu0 %v1206
      %2884 = vmatmul.mubr.bf16.gmra.mrb[0].mxu0 %v1205
      %v2885 = vpop.f32.mrb[0].mxu0
      %v2886 = vadd.f32 0.0, %v2885
      %v2887 = vpop.f32.mrb[0].mxu0
      %v2888 = vpop.f32.mrb[0].mxu0
      %v2889 = vadd.f32 0.0, %v2888
      %v2890 = vpop.f32.mrb[0].mxu0
      %2891 = vmatprep.mubr.bf16.mxu0 %v1208
      %2892 = vmatmul.mubr.bf16.gmra.mrb[0].mxu0 %v1207
      %v2893 = vpop.f32.mrb[0].mxu0
      %v2894 = vadd.f32 0.0, %v2893
      %v2895 = vpop.f32.mrb[0].mxu0
      %v2896 = vpop.f32.mrb[0].mxu0
      %v2897 = vadd.f32 0.0, %v2896
      %v2898 = vpop.f32.mrb[0].mxu0
      %2899 = vmatprep.mubr.bf16.mxu0 %v1210
      %2900 = vmatmul.mubr.bf16.gmra.mrb[0].mxu0 %v1209
      %v2901 = vpop.f32.mrb[0].mxu0
      %v2902 = vadd.f32 0.0, %v2901
      %v2903 = vpop.f32.mrb[0].mxu0
      %v2904 = vpop.f32.mrb[0].mxu0
      %v2905 = vadd.f32 0.0, %v2904
      %v2906 = vpop.f32.mrb[0].mxu0
      %2907 = vmatprep.mubr.bf16.mxu0 %v1212
      %2908 = vmatmul.mubr.bf16.gmra.mrb[0].mxu0 %v1211
      %v2909 = vpop.f32.mrb[0].mxu0
      %v2910 = vadd.f32 0.0, %v2909
      %v2911 = vpop.f32.mrb[0].mxu0
      %v2912 = vpop.f32.mrb[0].mxu0
      %v2913 = vadd.f32 0.0, %v2912
      %v2914 = vpop.f32.mrb[0].mxu0
      %2915 = vmatprep.mubr.bf16.mxu0 %v1214
      %2916 = vmatmul.mubr.bf16.gmra.mrb[0].mxu0 %v1213
      %v2917 = vpop.f32.mrb[0].mxu0
      %v2918 = vadd.f32 0.0, %v2917
      %v2919 = vpop.f32.mrb[0].mxu0
      %v2920 = vpop.f32.mrb[0].mxu0
      %v2921 = vadd.f32 0.0, %v2920
      %v2922 = vpop.f32.mrb[0].mxu0
      %2923 = vmatprep.mubr.bf16.mxu0 %v1216
      %2924 = vmatmul.mubr.bf16.gmra.mrb[0].mxu0 %v1215
      %v2925 = vpop.f32.mrb[0].mxu0
      %v2926 = vadd.f32 0.0, %v2925
      %v2927 = vpop.f32.mrb[0].mxu0
      %v2928 = vpop.f32.mrb[0].mxu0
      %v2929 = vadd.f32 0.0, %v2928
      %v2930 = vpop.f32.mrb[0].mxu0
      %2931 = vmatprep.mubr.bf16.mxu0 %v1218
      %2932 = vmatmul.mubr.bf16.gmra.mrb[0].mxu0 %v1217
      %v2933 = vpop.f32.mrb[0].mxu0
      %v2934 = vadd.f32 0.0, %v2933
      %v2935 = vpop.f32.mrb[0].mxu0
      %v2936 = vpop.f32.mrb[0].mxu0
      %v2937 = vadd.f32 0.0, %v2936
      %v2938 = vpop.f32.mrb[0].mxu0
      %2939 = vmatprep.mubr.bf16.mxu0 %v1220
      %2940 = vmatmul.mubr.bf16.gmra.mrb[0].mxu0 %v1219
      %v2941 = vpop.f32.mrb[0].mxu0
      %v2942 = vadd.f32 0.0, %v2941
      %v2943 = vpop.f32.mrb[0].mxu0
      %v2944 = vpop.f32.mrb[0].mxu0
      %v2945 = vadd.f32 0.0, %v2944
      %v2946 = vpop.f32.mrb[0].mxu0
      %2947 = vdwg.mxu0
      %v2948 = vpack.c.bf16 %v2825, %v2822
      %v2949 = vpack.c.bf16 %v2833, %v2830
      %v2950 = vpack.c.bf16 %v2841, %v2838
      %v2951 = vpack.c.bf16 %v2849, %v2846
      %v2952 = vpack.c.bf16 %v2857, %v2854
      %v2953 = vpack.c.bf16 %v2865, %v2862
      %v2954 = vpack.c.bf16 %v2873, %v2870
      %v2955 = vpack.c.bf16 %v2881, %v2878
      %v2956 = vpack.c.bf16 %v2889, %v2886
      %v2957 = vpack.c.bf16 %v2897, %v2894
      %v2958 = vpack.c.bf16 %v2905, %v2902
      %v2959 = vpack.c.bf16 %v2913, %v2910
      %v2960 = vpack.c.bf16 %v2921, %v2918
      %v2961 = vpack.c.bf16 %v2929, %v2926
      %v2962 = vpack.c.bf16 %v2937, %v2934
      %v2963 = vpack.c.bf16 %v2945, %v2942
      %2964 = vmatprep.subr.bf16.mxu0 0
      %2965 = vmatpush1.bf16.msra.mxu0 %v2771
      %2966 = vmatprep.subr.bf16.mxu0 0
      %2967 = vmatpush1.bf16.msra.mxu0 %v2772
      %2968 = vmatprep.subr.bf16.mxu0 0
      %2969 = vmatpush1.bf16.msra.mxu0 %v2773
      %2970 = vmatprep.subr.bf16.mxu0 0
      %2971 = vmatpush1.bf16.msra.mxu0 %v2774
      %2972 = vmatprep.subr.bf16.mxu0 0
      %2973 = vmatpush1.bf16.msra.mxu0 %v2775
      %2974 = vmatprep.subr.bf16.mxu0 0
      %2975 = vmatpush1.bf16.msra.mxu0 %v2776
      %2976 = vmatprep.subr.bf16.mxu0 0
      %2977 = vmatpush1.bf16.msra.mxu0 %v2777
      %2978 = vmatprep.subr.bf16.mxu0 0
      %2979 = vmatpush1.bf16.msra.mxu0 %v2778
      %2980 = vmatprep.subr.bf16.mxu0 0
      %2981 = vmatpush1.bf16.msra.mxu0 %v2779
      %2982 = vmatprep.subr.bf16.mxu0 0
      %2983 = vmatpush1.bf16.msra.mxu0 %v2780
      %2984 = vmatprep.subr.bf16.mxu0 0
      %2985 = vmatpush1.bf16.msra.mxu0 %v2781
      %2986 = vmatprep.subr.bf16.mxu0 0
      %2987 = vmatpush1.bf16.msra.mxu0 %v2782
      %2988 = vmatprep.subr.bf16.mxu0 0
      %2989 = vmatpush1.bf16.msra.mxu0 %v2783
      %2990 = vmatprep.subr.bf16.mxu0 0
      %2991 = vmatpush1.bf16.msra.mxu0 %v2784
      %2992 = vmatprep.subr.bf16.mxu0 0
      %2993 = vmatpush1.bf16.msra.mxu0 %v2785
      %2994 = vmatprep.subr.bf16.mxu0 0
      %2995 = vmatpush1.bf16.msra.mxu0 %v2786
      %2996 = vmatprep.mubr.bf16.mxu0 %v1574
      %2997 = vmatmul.mubr.bf16.gmra.mrb[0].mxu0 %v1573
      %v2998 = vpop.f32.mrb[0].mxu0
      %v2999 = vadd.f32 0.0, %v2998
      %v3000 = vpop.f32.mrb[0].mxu0
      %v3001 = vpop.f32.mrb[0].mxu0
      %v3002 = vadd.f32 0.0, %v3001
      %v3003 = vpop.f32.mrb[0].mxu0
      %3004 = vmatprep.mubr.bf16.mxu0 %v1576
      %3005 = vmatmul.mubr.bf16.gmra.mrb[0].mxu0 %v1575
      %v3006 = vpop.f32.mrb[0].mxu0
      %v3007 = vadd.f32 0.0, %v3006
      %v3008 = vpop.f32.mrb[0].mxu0
      %v3009 = vpop.f32.mrb[0].mxu0
      %v3010 = vadd.f32 0.0, %v3009
      %v3011 = vpop.f32.mrb[0].mxu0
      %3012 = vmatprep.mubr.bf16.mxu0 %v1578
      %3013 = vmatmul.mubr.bf16.gmra.mrb[0].mxu0 %v1577
      %v3014 = vpop.f32.mrb[0].mxu0
      %v3015 = vadd.f32 0.0, %v3014
      %v3016 = vpop.f32.mrb[0].mxu0
      %v3017 = vpop.f32.mrb[0].mxu0
      %v3018 = vadd.f32 0.0, %v3017
      %v3019 = vpop.f32.mrb[0].mxu0
      %3020 = vmatprep.mubr.bf16.mxu0 %v1580
      %3021 = vmatmul.mubr.bf16.gmra.mrb[0].mxu0 %v1579
      %v3022 = vpop.f32.mrb[0].mxu0
      %v3023 = vadd.f32 0.0, %v3022
      %v3024 = vpop.f32.mrb[0].mxu0
      %v3025 = vpop.f32.mrb[0].mxu0
      %v3026 = vadd.f32 0.0, %v3025
      %v3027 = vpop.f32.mrb[0].mxu0
      %3028 = vmatprep.mubr.bf16.mxu0 %v1582
      %3029 = vmatmul.mubr.bf16.gmra.mrb[0].mxu0 %v1581
      %v3030 = vpop.f32.mrb[0].mxu0
      %v3031 = vadd.f32 0.0, %v3030
      %v3032 = vpop.f32.mrb[0].mxu0
      %v3033 = vpop.f32.mrb[0].mxu0
      %v3034 = vadd.f32 0.0, %v3033
      %v3035 = vpop.f32.mrb[0].mxu0
      %3036 = vmatprep.mubr.bf16.mxu0 %v1584
      %3037 = vmatmul.mubr.bf16.gmra.mrb[0].mxu0 %v1583
      %v3038 = vpop.f32.mrb[0].mxu0
      %v3039 = vadd.f32 0.0, %v3038
      %v3040 = vpop.f32.mrb[0].mxu0
      %v3041 = vpop.f32.mrb[0].mxu0
      %v3042 = vadd.f32 0.0, %v3041
      %v3043 = vpop.f32.mrb[0].mxu0
      %3044 = vmatprep.mubr.bf16.mxu0 %v1586
      %3045 = vmatmul.mubr.bf16.gmra.mrb[0].mxu0 %v1585
      %v3046 = vpop.f32.mrb[0].mxu0
      %v3047 = vadd.f32 0.0, %v3046
      %v3048 = vpop.f32.mrb[0].mxu0
      %v3049 = vpop.f32.mrb[0].mxu0
      %v3050 = vadd.f32 0.0, %v3049
      %v3051 = vpop.f32.mrb[0].mxu0
      %3052 = vmatprep.mubr.bf16.mxu0 %v1588
      %3053 = vmatmul.mubr.bf16.gmra.mrb[0].mxu0 %v1587
      %v3054 = vpop.f32.mrb[0].mxu0
      %v3055 = vadd.f32 0.0, %v3054
      %v3056 = vpop.f32.mrb[0].mxu0
      %v3057 = vpop.f32.mrb[0].mxu0
      %v3058 = vadd.f32 0.0, %v3057
      %v3059 = vpop.f32.mrb[0].mxu0
      %3060 = vmatprep.mubr.bf16.mxu0 %v1590
      %3061 = vmatmul.mubr.bf16.gmra.mrb[0].mxu0 %v1589
      %v3062 = vpop.f32.mrb[0].mxu0
      %v3063 = vadd.f32 0.0, %v3062
      %v3064 = vpop.f32.mrb[0].mxu0
      %v3065 = vpop.f32.mrb[0].mxu0
      %v3066 = vadd.f32 0.0, %v3065
      %v3067 = vpop.f32.mrb[0].mxu0
      %3068 = vmatprep.mubr.bf16.mxu0 %v1592
      %3069 = vmatmul.mubr.bf16.gmra.mrb[0].mxu0 %v1591
      %v3070 = vpop.f32.mrb[0].mxu0
      %v3071 = vadd.f32 0.0, %v3070
      %v3072 = vpop.f32.mrb[0].mxu0
      %v3073 = vpop.f32.mrb[0].mxu0
      %v3074 = vadd.f32 0.0, %v3073
      %v3075 = vpop.f32.mrb[0].mxu0
      %3076 = vmatprep.mubr.bf16.mxu0 %v1594
      %3077 = vmatmul.mubr.bf16.gmra.mrb[0].mxu0 %v1593
      %v3078 = vpop.f32.mrb[0].mxu0
      %v3079 = vadd.f32 0.0, %v3078
      %v3080 = vpop.f32.mrb[0].mxu0
      %v3081 = vpop.f32.mrb[0].mxu0
      %v3082 = vadd.f32 0.0, %v3081
      %v3083 = vpop.f32.mrb[0].mxu0
      %3084 = vmatprep.mubr.bf16.mxu0 %v1596
      %3085 = vmatmul.mubr.bf16.gmra.mrb[0].mxu0 %v1595
      %v3086 = vpop.f32.mrb[0].mxu0
      %v3087 = vadd.f32 0.0, %v3086
      %v3088 = vpop.f32.mrb[0].mxu0
      %v3089 = vpop.f32.mrb[0].mxu0
      %v3090 = vadd.f32 0.0, %v3089
      %v3091 = vpop.f32.mrb[0].mxu0
      %3092 = vmatprep.mubr.bf16.mxu0 %v1598
      %3093 = vmatmul.mubr.bf16.gmra.mrb[0].mxu0 %v1597
      %v3094 = vpop.f32.mrb[0].mxu0
      %v3095 = vadd.f32 0.0, %v3094
      %v3096 = vpop.f32.mrb[0].mxu0
      %v3097 = vpop.f32.mrb[0].mxu0
      %v3098 = vadd.f32 0.0, %v3097
      %v3099 = vpop.f32.mrb[0].mxu0
      %3100 = vmatprep.mubr.bf16.mxu0 %v1600
      %3101 = vmatmul.mubr.bf16.gmra.mrb[0].mxu0 %v1599
      %v3102 = vpop.f32.mrb[0].mxu0
      %v3103 = vadd.f32 0.0, %v3102
      %v3104 = vpop.f32.mrb[0].mxu0
      %v3105 = vpop.f32.mrb[0].mxu0
      %v3106 = vadd.f32 0.0, %v3105
      %v3107 = vpop.f32.mrb[0].mxu0
      %3108 = vmatprep.mubr.bf16.mxu0 %v1602
      %3109 = vmatmul.mubr.bf16.gmra.mrb[0].mxu0 %v1601
      %v3110 = vpop.f32.mrb[0].mxu0
      %v3111 = vadd.f32 0.0, %v3110
      %v3112 = vpop.f32.mrb[0].mxu0
      %v3113 = vpop.f32.mrb[0].mxu0
      %v3114 = vadd.f32 0.0, %v3113
      %v3115 = vpop.f32.mrb[0].mxu0
      %3116 = vmatprep.mubr.bf16.mxu0 %v1604
      %3117 = vmatmul.mubr.bf16.gmra.mrb[0].mxu0 %v1603
      %v3118 = vpop.f32.mrb[0].mxu0
      %v3119 = vadd.f32 0.0, %v3118
      %v3120 = vpop.f32.mrb[0].mxu0
      %v3121 = vpop.f32.mrb[0].mxu0
      %v3122 = vadd.f32 0.0, %v3121
      %v3123 = vpop.f32.mrb[0].mxu0
      %3124 = vdwg.mxu0
      %v3125 = vpack.c.bf16 %v3002, %v2999
      %v3126 = vpack.c.bf16 %v3010, %v3007
      %v3127 = vpack.c.bf16 %v3018, %v3015
      %v3128 = vpack.c.bf16 %v3026, %v3023
      %v3129 = vpack.c.bf16 %v3034, %v3031
      %v3130 = vpack.c.bf16 %v3042, %v3039
      %v3131 = vpack.c.bf16 %v3050, %v3047
      %v3132 = vpack.c.bf16 %v3058, %v3055
      %v3133 = vpack.c.bf16 %v3066, %v3063
      %v3134 = vpack.c.bf16 %v3074, %v3071
      %v3135 = vpack.c.bf16 %v3082, %v3079
      %v3136 = vpack.c.bf16 %v3090, %v3087
      %v3137 = vpack.c.bf16 %v3098, %v3095
      %v3138 = vpack.c.bf16 %v3106, %v3103
      %v3139 = vpack.c.bf16 %v3114, %v3111
      %v3140 = vpack.c.bf16 %v3122, %v3119
      %v3141 = vld [vmem:[%s4] sm:$0x1]
      %v3142 = vld [vmem:[%s3] sm:$0xf]
      %v3143 = vld [vmem:[%s3 + $0x4] sm:$0xf]
      %v3144 = vld [vmem:[%s3 + $0x8] sm:$0xf]
      %v3145 = vld [vmem:[%s3 + $0xc] sm:$0xf]
      %v3146 = vld [vmem:[%s3 + $0x10] sm:$0xf]
      %v3147 = vld [vmem:[%s3 + $0x14] sm:$0xf]
      %v3148 = vld [vmem:[%s3 + $0x18] sm:$0xf]
      %v3149 = vld [vmem:[%s3 + $0x1c] sm:$0xf]
      %v3150 = vld [vmem:[%s3 + $0x20] sm:$0xf]
      %v3151 = vld [vmem:[%s3 + $0x24] sm:$0xf]
      %v3152 = vld [vmem:[%s3 + $0x28] sm:$0xf]
      %v3153 = vld [vmem:[%s3 + $0x2c] sm:$0xf]
      %v3154 = vld [vmem:[%s3 + $0x30] sm:$0xf]
      %v3155 = vld [vmem:[%s3 + $0x34] sm:$0xf]
      %v3156 = vld [vmem:[%s3 + $0x38] sm:$0xf]
      %v3157 = vld [vmem:[%s3 + $0x3c] sm:$0xf]
      %v3174 = vunpack.c.l.b16 %v3142
      %v3175 = vunpack.c.l.b16 %v3143
      %v3176 = vunpack.c.l.b16 %v3144
      %v3177 = vunpack.c.l.b16 %v3145
      %v3178 = vunpack.c.l.b16 %v3146
      %v3179 = vunpack.c.l.b16 %v3147
      %v3180 = vunpack.c.l.b16 %v3148
      %v3181 = vunpack.c.l.b16 %v3149
      %v3182 = vunpack.c.l.b16 %v3150
      %v3183 = vunpack.c.l.b16 %v3151
      %v3184 = vunpack.c.l.b16 %v3152
      %v3185 = vunpack.c.l.b16 %v3153
      %v3186 = vunpack.c.l.b16 %v3154
      %v3187 = vunpack.c.l.b16 %v3155
      %v3188 = vunpack.c.l.b16 %v3156
      %v3189 = vunpack.c.l.b16 %v3157
      %v3190 = vpack.c.b16 %v3175, %v3174
      %v3191 = vpack.c.b16 %v3177, %v3176
      %v3192 = vpack.c.b16 %v3179, %v3178
      %v3193 = vpack.c.b16 %v3181, %v3180
      %v3194 = vpack.c.b16 %v3183, %v3182
      %v3195 = vpack.c.b16 %v3185, %v3184
      %v3196 = vpack.c.b16 %v3187, %v3186
      %v3197 = vpack.c.b16 %v3189, %v3188
      %3206 = vmatprep.subr.bf16.mxu0 0
      %3207 = vmatpush1.bf16.msra.mxu0 %v3190
      %3208 = vmatprep.subr.bf16.mxu0 0
      %3209 = vmatpush1.bf16.msra.mxu0 %v3191
      %3210 = vmatprep.subr.bf16.mxu0 0
      %3211 = vmatpush1.bf16.msra.mxu0 %v3192
      %3212 = vmatprep.subr.bf16.mxu0 0
      %3213 = vmatpush1.bf16.msra.mxu0 %v3193
      %3214 = vmatprep.subr.bf16.mxu0 0
      %3215 = vmatpush1.bf16.msra.mxu0 %v3194
      %3216 = vmatprep.subr.bf16.mxu0 0
      %3217 = vmatpush1.bf16.msra.mxu0 %v3195
      %3218 = vmatprep.subr.bf16.mxu0 0
      %3219 = vmatpush1.bf16.msra.mxu0 %v3196
      %3220 = vmatprep.subr.bf16.mxu0 0
      %3221 = vmatpush1.bf16.msra.mxu0 %v3197
      %3222 = vmatprep.subr.bf16.mxu0 0
      %3223 = vmatpush1.bf16.msra.mxu0 0
      %3224 = vmatprep.subr.bf16.mxu0 0
      %3225 = vmatpush1.bf16.msra.mxu0 0
      %3226 = vmatprep.subr.bf16.mxu0 0
      %3227 = vmatpush1.bf16.msra.mxu0 0
      %3228 = vmatprep.subr.bf16.mxu0 0
      %3229 = vmatpush1.bf16.msra.mxu0 0
      %3230 = vmatprep.subr.bf16.mxu0 0
      %3231 = vmatpush1.bf16.msra.mxu0 0
      %3232 = vmatprep.subr.bf16.mxu0 0
      %3233 = vmatpush1.bf16.msra.mxu0 0
      %3234 = vmatprep.subr.bf16.mxu0 0
      %3235 = vmatpush1.bf16.msra.mxu0 0
      %3236 = vmatprep.subr.bf16.mxu0 0
      %3237 = vmatpush1.bf16.msra.mxu0 0
      %3238 = vmatprep.mubr.bf16.mxu0 0
      %3239 = vmatmul.mubr.bf16.gmra.mrb[0].mxu0 %v2948
      %v3240 = vpop.f32.mrb[0].mxu0
      %v3241 = vadd.f32 0.0, %v3240
      %v3242 = vpop.f32.mrb[0].mxu0
      %v3243 = vpop.f32.mrb[0].mxu0
      %v3244 = vadd.f32 0.0, %v3243
      %v3245 = vpop.f32.mrb[0].mxu0
      %3246 = vmatprep.mubr.bf16.mxu0 0
      %3247 = vmatmul.mubr.bf16.gmra.mrb[0].mxu0 %v2949
      %v3248 = vpop.f32.mrb[0].mxu0
      %v3249 = vadd.f32 0.0, %v3248
      %v3250 = vpop.f32.mrb[0].mxu0
      %v3251 = vpop.f32.mrb[0].mxu0
      %v3252 = vadd.f32 0.0, %v3251
      %v3253 = vpop.f32.mrb[0].mxu0
      %3254 = vmatprep.mubr.bf16.mxu0 0
      %3255 = vmatmul.mubr.bf16.gmra.mrb[0].mxu0 %v2950
      %v3256 = vpop.f32.mrb[0].mxu0
      %v3257 = vadd.f32 0.0, %v3256
      %v3258 = vpop.f32.mrb[0].mxu0
      %v3259 = vpop.f32.mrb[0].mxu0
      %v3260 = vadd.f32 0.0, %v3259
      %v3261 = vpop.f32.mrb[0].mxu0
      %3262 = vmatprep.mubr.bf16.mxu0 0
      %3263 = vmatmul.mubr.bf16.gmra.mrb[0].mxu0 %v2951
      %v3264 = vpop.f32.mrb[0].mxu0
      %v3265 = vadd.f32 0.0, %v3264
      %v3266 = vpop.f32.mrb[0].mxu0
      %v3267 = vpop.f32.mrb[0].mxu0
      %v3268 = vadd.f32 0.0, %v3267
      %v3269 = vpop.f32.mrb[0].mxu0
      %3270 = vmatprep.mubr.bf16.mxu0 0
      %3271 = vmatmul.mubr.bf16.gmra.mrb[0].mxu0 %v2952
      %v3272 = vpop.f32.mrb[0].mxu0
      %v3273 = vadd.f32 0.0, %v3272
      %v3274 = vpop.f32.mrb[0].mxu0
      %v3275 = vpop.f32.mrb[0].mxu0
      %v3276 = vadd.f32 0.0, %v3275
      %v3277 = vpop.f32.mrb[0].mxu0
      %3278 = vmatprep.mubr.bf16.mxu0 0
      %3279 = vmatmul.mubr.bf16.gmra.mrb[0].mxu0 %v2953
      %v3280 = vpop.f32.mrb[0].mxu0
      %v3281 = vadd.f32 0.0, %v3280
      %v3282 = vpop.f32.mrb[0].mxu0
      %v3283 = vpop.f32.mrb[0].mxu0
      %v3284 = vadd.f32 0.0, %v3283
      %v3285 = vpop.f32.mrb[0].mxu0
      %3286 = vmatprep.mubr.bf16.mxu0 0
      %3287 = vmatmul.mubr.bf16.gmra.mrb[0].mxu0 %v2954
      %v3288 = vpop.f32.mrb[0].mxu0
      %v3289 = vadd.f32 0.0, %v3288
      %v3290 = vpop.f32.mrb[0].mxu0
      %v3291 = vpop.f32.mrb[0].mxu0
      %v3292 = vadd.f32 0.0, %v3291
      %v3293 = vpop.f32.mrb[0].mxu0
      %3294 = vmatprep.mubr.bf16.mxu0 0
      %3295 = vmatmul.mubr.bf16.gmra.mrb[0].mxu0 %v2955
      %v3296 = vpop.f32.mrb[0].mxu0
      %v3297 = vadd.f32 0.0, %v3296
      %v3298 = vpop.f32.mrb[0].mxu0
      %v3299 = vpop.f32.mrb[0].mxu0
      %v3300 = vadd.f32 0.0, %v3299
      %v3301 = vpop.f32.mrb[0].mxu0
      %3302 = vmatprep.mubr.bf16.mxu0 0
      %3303 = vmatmul.mubr.bf16.gmra.mrb[0].mxu0 %v2956
      %v3304 = vpop.f32.mrb[0].mxu0
      %v3305 = vadd.f32 0.0, %v3304
      %v3306 = vpop.f32.mrb[0].mxu0
      %v3307 = vpop.f32.mrb[0].mxu0
      %v3308 = vadd.f32 0.0, %v3307
      %v3309 = vpop.f32.mrb[0].mxu0
      %3310 = vmatprep.mubr.bf16.mxu0 0
      %3311 = vmatmul.mubr.bf16.gmra.mrb[0].mxu0 %v2957
      %v3312 = vpop.f32.mrb[0].mxu0
      %v3313 = vadd.f32 0.0, %v3312
      %v3314 = vpop.f32.mrb[0].mxu0
      %v3315 = vpop.f32.mrb[0].mxu0
      %v3316 = vadd.f32 0.0, %v3315
      %v3317 = vpop.f32.mrb[0].mxu0
      %3318 = vmatprep.mubr.bf16.mxu0 0
      %3319 = vmatmul.mubr.bf16.gmra.mrb[0].mxu0 %v2958
      %v3320 = vpop.f32.mrb[0].mxu0
      %v3321 = vadd.f32 0.0, %v3320
      %v3322 = vpop.f32.mrb[0].mxu0
      %v3323 = vpop.f32.mrb[0].mxu0
      %v3324 = vadd.f32 0.0, %v3323
      %v3325 = vpop.f32.mrb[0].mxu0
      %3326 = vmatprep.mubr.bf16.mxu0 0
      %3327 = vmatmul.mubr.bf16.gmra.mrb[0].mxu0 %v2959
      %v3328 = vpop.f32.mrb[0].mxu0
      %v3329 = vadd.f32 0.0, %v3328
      %v3330 = vpop.f32.mrb[0].mxu0
      %v3331 = vpop.f32.mrb[0].mxu0
      %v3332 = vadd.f32 0.0, %v3331
      %v3333 = vpop.f32.mrb[0].mxu0
      %3334 = vmatprep.mubr.bf16.mxu0 0
      %3335 = vmatmul.mubr.bf16.gmra.mrb[0].mxu0 %v2960
      %v3336 = vpop.f32.mrb[0].mxu0
      %v3337 = vadd.f32 0.0, %v3336
      %v3338 = vpop.f32.mrb[0].mxu0
      %v3339 = vpop.f32.mrb[0].mxu0
      %v3340 = vadd.f32 0.0, %v3339
      %v3341 = vpop.f32.mrb[0].mxu0
      %3342 = vmatprep.mubr.bf16.mxu0 0
      %3343 = vmatmul.mubr.bf16.gmra.mrb[0].mxu0 %v2961
      %v3344 = vpop.f32.mrb[0].mxu0
      %v3345 = vadd.f32 0.0, %v3344
      %v3346 = vpop.f32.mrb[0].mxu0
      %v3347 = vpop.f32.mrb[0].mxu0
      %v3348 = vadd.f32 0.0, %v3347
      %v3349 = vpop.f32.mrb[0].mxu0
      %3350 = vmatprep.mubr.bf16.mxu0 0
      %3351 = vmatmul.mubr.bf16.gmra.mrb[0].mxu0 %v2962
      %v3352 = vpop.f32.mrb[0].mxu0
      %v3353 = vadd.f32 0.0, %v3352
      %v3354 = vpop.f32.mrb[0].mxu0
      %v3355 = vpop.f32.mrb[0].mxu0
      %v3356 = vadd.f32 0.0, %v3355
      %v3357 = vpop.f32.mrb[0].mxu0
      %3358 = vmatprep.mubr.bf16.mxu0 0
      %3359 = vmatmul.mubr.bf16.gmra.mrb[0].mxu0 %v2963
      %v3360 = vpop.f32.mrb[0].mxu0
      %v3361 = vadd.f32 0.0, %v3360
      %v3362 = vpop.f32.mrb[0].mxu0
      %v3363 = vpop.f32.mrb[0].mxu0
      %v3364 = vadd.f32 0.0, %v3363
      %v3365 = vpop.f32.mrb[0].mxu0
      %3366 = vdwg.mxu0
      %v3368 = vlaneseq
      %v3369 = vshrl.u32 %v3368, 7
      %v3370 = vsub.s32 0, %v3369
      %v3371 = vrot.slane %v3141, %v3370
      %v3373 = vadd.f32 %v3371, %v3241
      %v3374 = vadd.f32 %v3371, %v3244
      %v3375 = vadd.f32 %v3371, %v3249
      %v3376 = vadd.f32 %v3371, %v3252
      %v3377 = vadd.f32 %v3371, %v3257
      %v3378 = vadd.f32 %v3371, %v3260
      %v3379 = vadd.f32 %v3371, %v3265
      %v3380 = vadd.f32 %v3371, %v3268
      %v3381 = vadd.f32 %v3371, %v3273
      %v3382 = vadd.f32 %v3371, %v3276
      %v3383 = vadd.f32 %v3371, %v3281
      %v3384 = vadd.f32 %v3371, %v3284
      %v3385 = vadd.f32 %v3371, %v3289
      %v3386 = vadd.f32 %v3371, %v3292
      %v3387 = vadd.f32 %v3371, %v3297
      %v3388 = vadd.f32 %v3371, %v3300
      %v3389 = vadd.f32 %v3371, %v3305
      %v3390 = vadd.f32 %v3371, %v3308
      %v3391 = vadd.f32 %v3371, %v3313
      %v3392 = vadd.f32 %v3371, %v3316
      %v3393 = vadd.f32 %v3371, %v3321
      %v3394 = vadd.f32 %v3371, %v3324
      %v3395 = vadd.f32 %v3371, %v3329
      %v3396 = vadd.f32 %v3371, %v3332
      %v3397 = vadd.f32 %v3371, %v3337
      %v3398 = vadd.f32 %v3371, %v3340
      %v3399 = vadd.f32 %v3371, %v3345
      %v3400 = vadd.f32 %v3371, %v3348
      %v3401 = vadd.f32 %v3371, %v3353
      %v3402 = vadd.f32 %v3371, %v3356
      %v3403 = vadd.f32 %v3371, %v3361
      %v3404 = vadd.f32 %v3371, %v3364
      %s3405 = scalar_lea.vmem %s3, 64
      %v3406 = vld [vmem:[%s3405] sm:$0xf]
      %v3407 = vld [vmem:[%s3405 + $0x4] sm:$0xf]
      %v3408 = vld [vmem:[%s3405 + $0x8] sm:$0xf]
      %v3409 = vld [vmem:[%s3405 + $0xc] sm:$0xf]
      %v3410 = vld [vmem:[%s3405 + $0x10] sm:$0xf]
      %v3411 = vld [vmem:[%s3405 + $0x14] sm:$0xf]
      %v3412 = vld [vmem:[%s3405 + $0x18] sm:$0xf]
      %v3413 = vld [vmem:[%s3405 + $0x1c] sm:$0xf]
      %v3414 = vld [vmem:[%s3405 + $0x20] sm:$0xf]
      %v3415 = vld [vmem:[%s3405 + $0x24] sm:$0xf]
      %v3416 = vld [vmem:[%s3405 + $0x28] sm:$0xf]
      %v3417 = vld [vmem:[%s3405 + $0x2c] sm:$0xf]
      %v3418 = vld [vmem:[%s3405 + $0x30] sm:$0xf]
      %v3419 = vld [vmem:[%s3405 + $0x34] sm:$0xf]
      %v3420 = vld [vmem:[%s3405 + $0x38] sm:$0xf]
      %v3421 = vld [vmem:[%s3405 + $0x3c] sm:$0xf]
      %v3438 = vunpack.c.l.b16 %v3406
      %v3439 = vunpack.c.l.b16 %v3407
      %v3440 = vunpack.c.l.b16 %v3408
      %v3441 = vunpack.c.l.b16 %v3409
      %v3442 = vunpack.c.l.b16 %v3410
      %v3443 = vunpack.c.l.b16 %v3411
      %v3444 = vunpack.c.l.b16 %v3412
      %v3445 = vunpack.c.l.b16 %v3413
      %v3446 = vunpack.c.l.b16 %v3414
      %v3447 = vunpack.c.l.b16 %v3415
      %v3448 = vunpack.c.l.b16 %v3416
      %v3449 = vunpack.c.l.b16 %v3417
      %v3450 = vunpack.c.l.b16 %v3418
      %v3451 = vunpack.c.l.b16 %v3419
      %v3452 = vunpack.c.l.b16 %v3420
      %v3453 = vunpack.c.l.b16 %v3421
      %v3454 = vpack.c.b16 %v3439, %v3438
      %v3455 = vpack.c.b16 %v3441, %v3440
      %v3456 = vpack.c.b16 %v3443, %v3442
      %v3457 = vpack.c.b16 %v3445, %v3444
      %v3458 = vpack.c.b16 %v3447, %v3446
      %v3459 = vpack.c.b16 %v3449, %v3448
      %v3460 = vpack.c.b16 %v3451, %v3450
      %v3461 = vpack.c.b16 %v3453, %v3452
      %3470 = vmatprep.subr.bf16.mxu0 0
      %3471 = vmatpush1.bf16.msra.mxu0 %v3454
      %3472 = vmatprep.subr.bf16.mxu0 0
      %3473 = vmatpush1.bf16.msra.mxu0 %v3455
      %3474 = vmatprep.subr.bf16.mxu0 0
      %3475 = vmatpush1.bf16.msra.mxu0 %v3456
      %3476 = vmatprep.subr.bf16.mxu0 0
      %3477 = vmatpush1.bf16.msra.mxu0 %v3457
      %3478 = vmatprep.subr.bf16.mxu0 0
      %3479 = vmatpush1.bf16.msra.mxu0 %v3458
      %3480 = vmatprep.subr.bf16.mxu0 0
      %3481 = vmatpush1.bf16.msra.mxu0 %v3459
      %3482 = vmatprep.subr.bf16.mxu0 0
      %3483 = vmatpush1.bf16.msra.mxu0 %v3460
      %3484 = vmatprep.subr.bf16.mxu0 0
      %3485 = vmatpush1.bf16.msra.mxu0 %v3461
      %3486 = vmatprep.subr.bf16.mxu0 0
      %3487 = vmatpush1.bf16.msra.mxu0 0
      %3488 = vmatprep.subr.bf16.mxu0 0
      %3489 = vmatpush1.bf16.msra.mxu0 0
      %3490 = vmatprep.subr.bf16.mxu0 0
      %3491 = vmatpush1.bf16.msra.mxu0 0
      %3492 = vmatprep.subr.bf16.mxu0 0
      %3493 = vmatpush1.bf16.msra.mxu0 0
      %3494 = vmatprep.subr.bf16.mxu0 0
      %3495 = vmatpush1.bf16.msra.mxu0 0
      %3496 = vmatprep.subr.bf16.mxu0 0
      %3497 = vmatpush1.bf16.msra.mxu0 0
      %3498 = vmatprep.subr.bf16.mxu0 0
      %3499 = vmatpush1.bf16.msra.mxu0 0
      %3500 = vmatprep.subr.bf16.mxu0 0
      %3501 = vmatpush1.bf16.msra.mxu0 0
      %3502 = vmatprep.mubr.bf16.mxu0 0
      %3503 = vmatmul.mubr.bf16.gmra.mrb[0].mxu0 %v2771
      %v3504 = vpop.f32.mrb[0].mxu0
      %v3505 = vadd.f32 0.0, %v3504
      %v3506 = vpop.f32.mrb[0].mxu0
      %v3507 = vpop.f32.mrb[0].mxu0
      %v3508 = vadd.f32 0.0, %v3507
      %v3509 = vpop.f32.mrb[0].mxu0
      %3510 = vmatprep.mubr.bf16.mxu0 0
      %3511 = vmatmul.mubr.bf16.gmra.mrb[0].mxu0 %v2772
      %v3512 = vpop.f32.mrb[0].mxu0
      %v3513 = vadd.f32 0.0, %v3512
      %v3514 = vpop.f32.mrb[0].mxu0
      %v3515 = vpop.f32.mrb[0].mxu0
      %v3516 = vadd.f32 0.0, %v3515
      %v3517 = vpop.f32.mrb[0].mxu0
      %3518 = vmatprep.mubr.bf16.mxu0 0
      %3519 = vmatmul.mubr.bf16.gmra.mrb[0].mxu0 %v2773
      %v3520 = vpop.f32.mrb[0].mxu0
      %v3521 = vadd.f32 0.0, %v3520
      %v3522 = vpop.f32.mrb[0].mxu0
      %v3523 = vpop.f32.mrb[0].mxu0
      %v3524 = vadd.f32 0.0, %v3523
      %v3525 = vpop.f32.mrb[0].mxu0
      %3526 = vmatprep.mubr.bf16.mxu0 0
      %3527 = vmatmul.mubr.bf16.gmra.mrb[0].mxu0 %v2774
      %v3528 = vpop.f32.mrb[0].mxu0
      %v3529 = vadd.f32 0.0, %v3528
      %v3530 = vpop.f32.mrb[0].mxu0
      %v3531 = vpop.f32.mrb[0].mxu0
      %v3532 = vadd.f32 0.0, %v3531
      %v3533 = vpop.f32.mrb[0].mxu0
      %3534 = vmatprep.mubr.bf16.mxu0 0
      %3535 = vmatmul.mubr.bf16.gmra.mrb[0].mxu0 %v2775
      %v3536 = vpop.f32.mrb[0].mxu0
      %v3537 = vadd.f32 0.0, %v3536
      %v3538 = vpop.f32.mrb[0].mxu0
      %v3539 = vpop.f32.mrb[0].mxu0
      %v3540 = vadd.f32 0.0, %v3539
      %v3541 = vpop.f32.mrb[0].mxu0
      %3542 = vmatprep.mubr.bf16.mxu0 0
      %3543 = vmatmul.mubr.bf16.gmra.mrb[0].mxu0 %v2776
      %v3544 = vpop.f32.mrb[0].mxu0
      %v3545 = vadd.f32 0.0, %v3544
      %v3546 = vpop.f32.mrb[0].mxu0
      %v3547 = vpop.f32.mrb[0].mxu0
      %v3548 = vadd.f32 0.0, %v3547
      %v3549 = vpop.f32.mrb[0].mxu0
      %3550 = vmatprep.mubr.bf16.mxu0 0
      %3551 = vmatmul.mubr.bf16.gmra.mrb[0].mxu0 %v2777
      %v3552 = vpop.f32.mrb[0].mxu0
      %v3553 = vadd.f32 0.0, %v3552
      %v3554 = vpop.f32.mrb[0].mxu0
      %v3555 = vpop.f32.mrb[0].mxu0
      %v3556 = vadd.f32 0.0, %v3555
      %v3557 = vpop.f32.mrb[0].mxu0
      %3558 = vmatprep.mubr.bf16.mxu0 0
      %3559 = vmatmul.mubr.bf16.gmra.mrb[0].mxu0 %v2778
      %v3560 = vpop.f32.mrb[0].mxu0
      %v3561 = vadd.f32 0.0, %v3560
      %v3562 = vpop.f32.mrb[0].mxu0
      %v3563 = vpop.f32.mrb[0].mxu0
      %v3564 = vadd.f32 0.0, %v3563
      %v3565 = vpop.f32.mrb[0].mxu0
      %3566 = vmatprep.mubr.bf16.mxu0 0
      %3567 = vmatmul.mubr.bf16.gmra.mrb[0].mxu0 %v2779
      %v3568 = vpop.f32.mrb[0].mxu0
      %v3569 = vadd.f32 0.0, %v3568
      %v3570 = vpop.f32.mrb[0].mxu0
      %v3571 = vpop.f32.mrb[0].mxu0
      %v3572 = vadd.f32 0.0, %v3571
      %v3573 = vpop.f32.mrb[0].mxu0
      %3574 = vmatprep.mubr.bf16.mxu0 0
      %3575 = vmatmul.mubr.bf16.gmra.mrb[0].mxu0 %v2780
      %v3576 = vpop.f32.mrb[0].mxu0
      %v3577 = vadd.f32 0.0, %v3576
      %v3578 = vpop.f32.mrb[0].mxu0
      %v3579 = vpop.f32.mrb[0].mxu0
      %v3580 = vadd.f32 0.0, %v3579
      %v3581 = vpop.f32.mrb[0].mxu0
      %3582 = vmatprep.mubr.bf16.mxu0 0
      %3583 = vmatmul.mubr.bf16.gmra.mrb[0].mxu0 %v2781
      %v3584 = vpop.f32.mrb[0].mxu0
      %v3585 = vadd.f32 0.0, %v3584
      %v3586 = vpop.f32.mrb[0].mxu0
      %v3587 = vpop.f32.mrb[0].mxu0
      %v3588 = vadd.f32 0.0, %v3587
      %v3589 = vpop.f32.mrb[0].mxu0
      %3590 = vmatprep.mubr.bf16.mxu0 0
      %3591 = vmatmul.mubr.bf16.gmra.mrb[0].mxu0 %v2782
      %v3592 = vpop.f32.mrb[0].mxu0
      %v3593 = vadd.f32 0.0, %v3592
      %v3594 = vpop.f32.mrb[0].mxu0
      %v3595 = vpop.f32.mrb[0].mxu0
      %v3596 = vadd.f32 0.0, %v3595
      %v3597 = vpop.f32.mrb[0].mxu0
      %3598 = vmatprep.mubr.bf16.mxu0 0
      %3599 = vmatmul.mubr.bf16.gmra.mrb[0].mxu0 %v2783
      %v3600 = vpop.f32.mrb[0].mxu0
      %v3601 = vadd.f32 0.0, %v3600
      %v3602 = vpop.f32.mrb[0].mxu0
      %v3603 = vpop.f32.mrb[0].mxu0
      %v3604 = vadd.f32 0.0, %v3603
      %v3605 = vpop.f32.mrb[0].mxu0
      %3606 = vmatprep.mubr.bf16.mxu0 0
      %3607 = vmatmul.mubr.bf16.gmra.mrb[0].mxu0 %v2784
      %v3608 = vpop.f32.mrb[0].mxu0
      %v3609 = vadd.f32 0.0, %v3608
      %v3610 = vpop.f32.mrb[0].mxu0
      %v3611 = vpop.f32.mrb[0].mxu0
      %v3612 = vadd.f32 0.0, %v3611
      %v3613 = vpop.f32.mrb[0].mxu0
      %3614 = vmatprep.mubr.bf16.mxu0 0
      %3615 = vmatmul.mubr.bf16.gmra.mrb[0].mxu0 %v2785
      %v3616 = vpop.f32.mrb[0].mxu0
      %v3617 = vadd.f32 0.0, %v3616
      %v3618 = vpop.f32.mrb[0].mxu0
      %v3619 = vpop.f32.mrb[0].mxu0
      %v3620 = vadd.f32 0.0, %v3619
      %v3621 = vpop.f32.mrb[0].mxu0
      %3622 = vmatprep.mubr.bf16.mxu0 0
      %3623 = vmatmul.mubr.bf16.gmra.mrb[0].mxu0 %v2786
      %v3624 = vpop.f32.mrb[0].mxu0
      %v3625 = vadd.f32 0.0, %v3624
      %v3626 = vpop.f32.mrb[0].mxu0
      %v3627 = vpop.f32.mrb[0].mxu0
      %v3628 = vadd.f32 0.0, %v3627
      %v3629 = vpop.f32.mrb[0].mxu0
      %3630 = vdwg.mxu0
      %v3631 = vadd.f32 %v3373, %v3505
      %v3632 = vadd.f32 %v3374, %v3508
      %v3633 = vadd.f32 %v3375, %v3513
      %v3634 = vadd.f32 %v3376, %v3516
      %v3635 = vadd.f32 %v3377, %v3521
      %v3636 = vadd.f32 %v3378, %v3524
      %v3637 = vadd.f32 %v3379, %v3529
      %v3638 = vadd.f32 %v3380, %v3532
      %v3639 = vadd.f32 %v3381, %v3537
      %v3640 = vadd.f32 %v3382, %v3540
      %v3641 = vadd.f32 %v3383, %v3545
      %v3642 = vadd.f32 %v3384, %v3548
      %v3643 = vadd.f32 %v3385, %v3553
      %v3644 = vadd.f32 %v3386, %v3556
      %v3645 = vadd.f32 %v3387, %v3561
      %v3646 = vadd.f32 %v3388, %v3564
      %v3647 = vadd.f32 %v3389, %v3569
      %v3648 = vadd.f32 %v3390, %v3572
      %v3649 = vadd.f32 %v3391, %v3577
      %v3650 = vadd.f32 %v3392, %v3580
      %v3651 = vadd.f32 %v3393, %v3585
      %v3652 = vadd.f32 %v3394, %v3588
      %v3653 = vadd.f32 %v3395, %v3593
      %v3654 = vadd.f32 %v3396, %v3596
      %v3655 = vadd.f32 %v3397, %v3601
      %v3656 = vadd.f32 %v3398, %v3604
      %v3657 = vadd.f32 %v3399, %v3609
      %v3658 = vadd.f32 %v3400, %v3612
      %v3659 = vadd.f32 %v3401, %v3617
      %v3660 = vadd.f32 %v3402, %v3620
      %v3661 = vadd.f32 %v3403, %v3625
      %v3662 = vadd.f32 %v3404, %v3628
      %s3663 = scalar_lea.vmem %s3, 128
      %v3664 = vld [vmem:[%s3663] sm:$0xf]
      %v3665 = vld [vmem:[%s3663 + $0x4] sm:$0xf]
      %v3666 = vld [vmem:[%s3663 + $0x8] sm:$0xf]
      %v3667 = vld [vmem:[%s3663 + $0xc] sm:$0xf]
      %v3668 = vld [vmem:[%s3663 + $0x10] sm:$0xf]
      %v3669 = vld [vmem:[%s3663 + $0x14] sm:$0xf]
      %v3670 = vld [vmem:[%s3663 + $0x18] sm:$0xf]
      %v3671 = vld [vmem:[%s3663 + $0x1c] sm:$0xf]
      %v3672 = vld [vmem:[%s3663 + $0x20] sm:$0xf]
      %v3673 = vld [vmem:[%s3663 + $0x24] sm:$0xf]
      %v3674 = vld [vmem:[%s3663 + $0x28] sm:$0xf]
      %v3675 = vld [vmem:[%s3663 + $0x2c] sm:$0xf]
      %v3676 = vld [vmem:[%s3663 + $0x30] sm:$0xf]
      %v3677 = vld [vmem:[%s3663 + $0x34] sm:$0xf]
      %v3678 = vld [vmem:[%s3663 + $0x38] sm:$0xf]
      %v3679 = vld [vmem:[%s3663 + $0x3c] sm:$0xf]
      %v3696 = vunpack.c.l.b16 %v3664
      %v3697 = vunpack.c.l.b16 %v3665
      %v3698 = vunpack.c.l.b16 %v3666
      %v3699 = vunpack.c.l.b16 %v3667
      %v3700 = vunpack.c.l.b16 %v3668
      %v3701 = vunpack.c.l.b16 %v3669
      %v3702 = vunpack.c.l.b16 %v3670
      %v3703 = vunpack.c.l.b16 %v3671
      %v3704 = vunpack.c.l.b16 %v3672
      %v3705 = vunpack.c.l.b16 %v3673
      %v3706 = vunpack.c.l.b16 %v3674
      %v3707 = vunpack.c.l.b16 %v3675
      %v3708 = vunpack.c.l.b16 %v3676
      %v3709 = vunpack.c.l.b16 %v3677
      %v3710 = vunpack.c.l.b16 %v3678
      %v3711 = vunpack.c.l.b16 %v3679
      %v3712 = vpack.c.b16 %v3697, %v3696
      %v3713 = vpack.c.b16 %v3699, %v3698
      %v3714 = vpack.c.b16 %v3701, %v3700
      %v3715 = vpack.c.b16 %v3703, %v3702
      %v3716 = vpack.c.b16 %v3705, %v3704
      %v3717 = vpack.c.b16 %v3707, %v3706
      %v3718 = vpack.c.b16 %v3709, %v3708
      %v3719 = vpack.c.b16 %v3711, %v3710
      %3728 = vmatprep.subr.bf16.mxu0 0
      %3729 = vmatpush1.bf16.msra.mxu0 %v3712
      %3730 = vmatprep.subr.bf16.mxu0 0
      %3731 = vmatpush1.bf16.msra.mxu0 %v3713
      %3732 = vmatprep.subr.bf16.mxu0 0
      %3733 = vmatpush1.bf16.msra.mxu0 %v3714
      %3734 = vmatprep.subr.bf16.mxu0 0
      %3735 = vmatpush1.bf16.msra.mxu0 %v3715
      %3736 = vmatprep.subr.bf16.mxu0 0
      %3737 = vmatpush1.bf16.msra.mxu0 %v3716
      %3738 = vmatprep.subr.bf16.mxu0 0
      %3739 = vmatpush1.bf16.msra.mxu0 %v3717
      %3740 = vmatprep.subr.bf16.mxu0 0
      %3741 = vmatpush1.bf16.msra.mxu0 %v3718
      %3742 = vmatprep.subr.bf16.mxu0 0
      %3743 = vmatpush1.bf16.msra.mxu0 %v3719
      %3744 = vmatprep.subr.bf16.mxu0 0
      %3745 = vmatpush1.bf16.msra.mxu0 0
      %3746 = vmatprep.subr.bf16.mxu0 0
      %3747 = vmatpush1.bf16.msra.mxu0 0
      %3748 = vmatprep.subr.bf16.mxu0 0
      %3749 = vmatpush1.bf16.msra.mxu0 0
      %3750 = vmatprep.subr.bf16.mxu0 0
      %3751 = vmatpush1.bf16.msra.mxu0 0
      %3752 = vmatprep.subr.bf16.mxu0 0
      %3753 = vmatpush1.bf16.msra.mxu0 0
      %3754 = vmatprep.subr.bf16.mxu0 0
      %3755 = vmatpush1.bf16.msra.mxu0 0
      %3756 = vmatprep.subr.bf16.mxu0 0
      %3757 = vmatpush1.bf16.msra.mxu0 0
      %3758 = vmatprep.subr.bf16.mxu0 0
      %3759 = vmatpush1.bf16.msra.mxu0 0
      %3760 = vmatprep.mubr.bf16.mxu0 0
      %3761 = vmatmul.mubr.bf16.gmra.mrb[0].mxu0 %v3125
      %v3762 = vpop.f32.mrb[0].mxu0
      %v3763 = vadd.f32 0.0, %v3762
      %v3764 = vpop.f32.mrb[0].mxu0
      %v3765 = vpop.f32.mrb[0].mxu0
      %v3766 = vadd.f32 0.0, %v3765
      %v3767 = vpop.f32.mrb[0].mxu0
      %3768 = vmatprep.mubr.bf16.mxu0 0
      %3769 = vmatmul.mubr.bf16.gmra.mrb[0].mxu0 %v3126
      %v3770 = vpop.f32.mrb[0].mxu0
      %v3771 = vadd.f32 0.0, %v3770
      %v3772 = vpop.f32.mrb[0].mxu0
      %v3773 = vpop.f32.mrb[0].mxu0
      %v3774 = vadd.f32 0.0, %v3773
      %v3775 = vpop.f32.mrb[0].mxu0
      %3776 = vmatprep.mubr.bf16.mxu0 0
      %3777 = vmatmul.mubr.bf16.gmra.mrb[0].mxu0 %v3127
      %v3778 = vpop.f32.mrb[0].mxu0
      %v3779 = vadd.f32 0.0, %v3778
      %v3780 = vpop.f32.mrb[0].mxu0
      %v3781 = vpop.f32.mrb[0].mxu0
      %v3782 = vadd.f32 0.0, %v3781
      %v3783 = vpop.f32.mrb[0].mxu0
      %3784 = vmatprep.mubr.bf16.mxu0 0
      %3785 = vmatmul.mubr.bf16.gmra.mrb[0].mxu0 %v3128
      %v3786 = vpop.f32.mrb[0].mxu0
      %v3787 = vadd.f32 0.0, %v3786
      %v3788 = vpop.f32.mrb[0].mxu0
      %v3789 = vpop.f32.mrb[0].mxu0
      %v3790 = vadd.f32 0.0, %v3789
      %v3791 = vpop.f32.mrb[0].mxu0
      %3792 = vmatprep.mubr.bf16.mxu0 0
      %3793 = vmatmul.mubr.bf16.gmra.mrb[0].mxu0 %v3129
      %v3794 = vpop.f32.mrb[0].mxu0
      %v3795 = vadd.f32 0.0, %v3794
      %v3796 = vpop.f32.mrb[0].mxu0
      %v3797 = vpop.f32.mrb[0].mxu0
      %v3798 = vadd.f32 0.0, %v3797
      %v3799 = vpop.f32.mrb[0].mxu0
      %3800 = vmatprep.mubr.bf16.mxu0 0
      %3801 = vmatmul.mubr.bf16.gmra.mrb[0].mxu0 %v3130
      %v3802 = vpop.f32.mrb[0].mxu0
      %v3803 = vadd.f32 0.0, %v3802
      %v3804 = vpop.f32.mrb[0].mxu0
      %v3805 = vpop.f32.mrb[0].mxu0
      %v3806 = vadd.f32 0.0, %v3805
      %v3807 = vpop.f32.mrb[0].mxu0
      %3808 = vmatprep.mubr.bf16.mxu0 0
      %3809 = vmatmul.mubr.bf16.gmra.mrb[0].mxu0 %v3131
      %v3810 = vpop.f32.mrb[0].mxu0
      %v3811 = vadd.f32 0.0, %v3810
      %v3812 = vpop.f32.mrb[0].mxu0
      %v3813 = vpop.f32.mrb[0].mxu0
      %v3814 = vadd.f32 0.0, %v3813
      %v3815 = vpop.f32.mrb[0].mxu0
      %3816 = vmatprep.mubr.bf16.mxu0 0
      %3817 = vmatmul.mubr.bf16.gmra.mrb[0].mxu0 %v3132
      %v3818 = vpop.f32.mrb[0].mxu0
      %v3819 = vadd.f32 0.0, %v3818
      %v3820 = vpop.f32.mrb[0].mxu0
      %v3821 = vpop.f32.mrb[0].mxu0
      %v3822 = vadd.f32 0.0, %v3821
      %v3823 = vpop.f32.mrb[0].mxu0
      %3824 = vmatprep.mubr.bf16.mxu0 0
      %3825 = vmatmul.mubr.bf16.gmra.mrb[0].mxu0 %v3133
      %v3826 = vpop.f32.mrb[0].mxu0
      %v3827 = vadd.f32 0.0, %v3826
      %v3828 = vpop.f32.mrb[0].mxu0
      %v3829 = vpop.f32.mrb[0].mxu0
      %v3830 = vadd.f32 0.0, %v3829
      %v3831 = vpop.f32.mrb[0].mxu0
      %3832 = vmatprep.mubr.bf16.mxu0 0
      %3833 = vmatmul.mubr.bf16.gmra.mrb[0].mxu0 %v3134
      %v3834 = vpop.f32.mrb[0].mxu0
      %v3835 = vadd.f32 0.0, %v3834
      %v3836 = vpop.f32.mrb[0].mxu0
      %v3837 = vpop.f32.mrb[0].mxu0
      %v3838 = vadd.f32 0.0, %v3837
      %v3839 = vpop.f32.mrb[0].mxu0
      %3840 = vmatprep.mubr.bf16.mxu0 0
      %3841 = vmatmul.mubr.bf16.gmra.mrb[0].mxu0 %v3135
      %v3842 = vpop.f32.mrb[0].mxu0
      %v3843 = vadd.f32 0.0, %v3842
      %v3844 = vpop.f32.mrb[0].mxu0
      %v3845 = vpop.f32.mrb[0].mxu0
      %v3846 = vadd.f32 0.0, %v3845
      %v3847 = vpop.f32.mrb[0].mxu0
      %3848 = vmatprep.mubr.bf16.mxu0 0
      %3849 = vmatmul.mubr.bf16.gmra.mrb[0].mxu0 %v3136
      %v3850 = vpop.f32.mrb[0].mxu0
      %v3851 = vadd.f32 0.0, %v3850
      %v3852 = vpop.f32.mrb[0].mxu0
      %v3853 = vpop.f32.mrb[0].mxu0
      %v3854 = vadd.f32 0.0, %v3853
      %v3855 = vpop.f32.mrb[0].mxu0
      %3856 = vmatprep.mubr.bf16.mxu0 0
      %3857 = vmatmul.mubr.bf16.gmra.mrb[0].mxu0 %v3137
      %v3858 = vpop.f32.mrb[0].mxu0
      %v3859 = vadd.f32 0.0, %v3858
      %v3860 = vpop.f32.mrb[0].mxu0
      %v3861 = vpop.f32.mrb[0].mxu0
      %v3862 = vadd.f32 0.0, %v3861
      %v3863 = vpop.f32.mrb[0].mxu0
      %3864 = vmatprep.mubr.bf16.mxu0 0
      %3865 = vmatmul.mubr.bf16.gmra.mrb[0].mxu0 %v3138
      %v3866 = vpop.f32.mrb[0].mxu0
      %v3867 = vadd.f32 0.0, %v3866
      %v3868 = vpop.f32.mrb[0].mxu0
      %v3869 = vpop.f32.mrb[0].mxu0
      %v3870 = vadd.f32 0.0, %v3869
      %v3871 = vpop.f32.mrb[0].mxu0
      %3872 = vmatprep.mubr.bf16.mxu0 0
      %3873 = vmatmul.mubr.bf16.gmra.mrb[0].mxu0 %v3139
      %v3874 = vpop.f32.mrb[0].mxu0
      %v3875 = vadd.f32 0.0, %v3874
      %v3876 = vpop.f32.mrb[0].mxu0
      %v3877 = vpop.f32.mrb[0].mxu0
      %v3878 = vadd.f32 0.0, %v3877
      %v3879 = vpop.f32.mrb[0].mxu0
      %3880 = vmatprep.mubr.bf16.mxu0 0
      %3881 = vmatmul.mubr.bf16.gmra.mrb[0].mxu0 %v3140
      %v3882 = vpop.f32.mrb[0].mxu0
      %v3883 = vadd.f32 0.0, %v3882
      %v3884 = vpop.f32.mrb[0].mxu0
      %v3885 = vpop.f32.mrb[0].mxu0
      %v3886 = vadd.f32 0.0, %v3885
      %v3887 = vpop.f32.mrb[0].mxu0
      %3888 = vdwg.mxu0
      %v3889 = vadd.f32 %v3631, %v3763
      %v3890 = vadd.f32 %v3632, %v3766
      %v3891 = vadd.f32 %v3633, %v3771
      %v3892 = vadd.f32 %v3634, %v3774
      %v3893 = vadd.f32 %v3635, %v3779
      %v3894 = vadd.f32 %v3636, %v3782
      %v3895 = vadd.f32 %v3637, %v3787
      %v3896 = vadd.f32 %v3638, %v3790
      %v3897 = vadd.f32 %v3639, %v3795
      %v3898 = vadd.f32 %v3640, %v3798
      %v3899 = vadd.f32 %v3641, %v3803
      %v3900 = vadd.f32 %v3642, %v3806
      %v3901 = vadd.f32 %v3643, %v3811
      %v3902 = vadd.f32 %v3644, %v3814
      %v3903 = vadd.f32 %v3645, %v3819
      %v3904 = vadd.f32 %v3646, %v3822
      %v3905 = vadd.f32 %v3647, %v3827
      %v3906 = vadd.f32 %v3648, %v3830
      %v3907 = vadd.f32 %v3649, %v3835
      %v3908 = vadd.f32 %v3650, %v3838
      %v3909 = vadd.f32 %v3651, %v3843
      %v3910 = vadd.f32 %v3652, %v3846
      %v3911 = vadd.f32 %v3653, %v3851
      %v3912 = vadd.f32 %v3654, %v3854
      %v3913 = vadd.f32 %v3655, %v3859
      %v3914 = vadd.f32 %v3656, %v3862
      %v3915 = vadd.f32 %v3657, %v3867
      %v3916 = vadd.f32 %v3658, %v3870
      %v3917 = vadd.f32 %v3659, %v3875
      %v3918 = vadd.f32 %v3660, %v3878
      %v3919 = vadd.f32 %v3661, %v3883
      %v3920 = vadd.f32 %v3662, %v3886
      %v3921 = vmax.f32 %v3889, 0.0
      %v3922 = vmax.f32 %v3890, 0.0
      %v3923 = vmax.f32 %v3891, 0.0
      %v3924 = vmax.f32 %v3892, 0.0
      %v3925 = vmax.f32 %v3893, 0.0
      %v3926 = vmax.f32 %v3894, 0.0
      %v3927 = vmax.f32 %v3895, 0.0
      %v3928 = vmax.f32 %v3896, 0.0
      %v3929 = vmax.f32 %v3897, 0.0
      %v3930 = vmax.f32 %v3898, 0.0
      %v3931 = vmax.f32 %v3899, 0.0
      %v3932 = vmax.f32 %v3900, 0.0
      %v3933 = vmax.f32 %v3901, 0.0
      %v3934 = vmax.f32 %v3902, 0.0
      %v3935 = vmax.f32 %v3903, 0.0
      %v3936 = vmax.f32 %v3904, 0.0
      %v3937 = vmax.f32 %v3905, 0.0
      %v3938 = vmax.f32 %v3906, 0.0
      %v3939 = vmax.f32 %v3907, 0.0
      %v3940 = vmax.f32 %v3908, 0.0
      %v3941 = vmax.f32 %v3909, 0.0
      %v3942 = vmax.f32 %v3910, 0.0
      %v3943 = vmax.f32 %v3911, 0.0
      %v3944 = vmax.f32 %v3912, 0.0
      %v3945 = vmax.f32 %v3913, 0.0
      %v3946 = vmax.f32 %v3914, 0.0
      %v3947 = vmax.f32 %v3915, 0.0
      %v3948 = vmax.f32 %v3916, 0.0
      %v3949 = vmax.f32 %v3917, 0.0
      %v3950 = vmax.f32 %v3918, 0.0
      %v3951 = vmax.f32 %v3919, 0.0
      %v3952 = vmax.f32 %v3920, 0.0
      %v3953 = vpack.c.bf16 %v3922, %v3921
      %v3954 = vpack.c.bf16 %v3924, %v3923
      %v3955 = vpack.c.bf16 %v3926, %v3925
      %v3956 = vpack.c.bf16 %v3928, %v3927
      %v3957 = vpack.c.bf16 %v3930, %v3929
      %v3958 = vpack.c.bf16 %v3932, %v3931
      %v3959 = vpack.c.bf16 %v3934, %v3933
      %v3960 = vpack.c.bf16 %v3936, %v3935
      %v3961 = vpack.c.bf16 %v3938, %v3937
      %v3962 = vpack.c.bf16 %v3940, %v3939
      %v3963 = vpack.c.bf16 %v3942, %v3941
      %v3964 = vpack.c.bf16 %v3944, %v3943
      %v3965 = vpack.c.bf16 %v3946, %v3945
      %v3966 = vpack.c.bf16 %v3948, %v3947
      %v3967 = vpack.c.bf16 %v3950, %v3949
      %v3968 = vpack.c.bf16 %v3952, %v3951
      %3969 = vmatprep.subr.bf16.mxu0 0
      %3970 = vmatpush1.bf16.msra.mxu0 %v3953
      %3971 = vmatprep.subr.bf16.mxu0 0
      %3972 = vmatpush1.bf16.msra.mxu0 %v3954
      %3973 = vmatprep.subr.bf16.mxu0 0
      %3974 = vmatpush1.bf16.msra.mxu0 %v3955
      %3975 = vmatprep.subr.bf16.mxu0 0
      %3976 = vmatpush1.bf16.msra.mxu0 %v3956
      %3977 = vmatprep.subr.bf16.mxu0 0
      %3978 = vmatpush1.bf16.msra.mxu0 %v3957
      %3979 = vmatprep.subr.bf16.mxu0 0
      %3980 = vmatpush1.bf16.msra.mxu0 %v3958
      %3981 = vmatprep.subr.bf16.mxu0 0
      %3982 = vmatpush1.bf16.msra.mxu0 %v3959
      %3983 = vmatprep.subr.bf16.mxu0 0
      %3984 = vmatpush1.bf16.msra.mxu0 %v3960
      %3985 = vmatprep.subr.bf16.mxu0 0
      %3986 = vmatpush1.bf16.msra.mxu0 %v3961
      %3987 = vmatprep.subr.bf16.mxu0 0
      %3988 = vmatpush1.bf16.msra.mxu0 %v3962
      %3989 = vmatprep.subr.bf16.mxu0 0
      %3990 = vmatpush1.bf16.msra.mxu0 %v3963
      %3991 = vmatprep.subr.bf16.mxu0 0
      %3992 = vmatpush1.bf16.msra.mxu0 %v3964
      %3993 = vmatprep.subr.bf16.mxu0 0
      %3994 = vmatpush1.bf16.msra.mxu0 %v3965
      %3995 = vmatprep.subr.bf16.mxu0 0
      %3996 = vmatpush1.bf16.msra.mxu0 %v3966
      %3997 = vmatprep.subr.bf16.mxu0 0
      %3998 = vmatpush1.bf16.msra.mxu0 %v3967
      %3999 = vmatprep.subr.bf16.mxu0 0
      %4000 = vmatpush1.bf16.msra.mxu0 %v3968
      %4001 = vmatprep.mubr.bf16.mxu0 %v646
      %4002 = vmatmul.mubr.bf16.gmra.mrb[0].mxu0 %v645
      %v4003 = vpop.f32.mrb[0].mxu0
      %v4004 = vadd.f32 0.0, %v4003
      %v4005 = vpop.f32.mrb[0].mxu0
      %v4006 = vpop.f32.mrb[0].mxu0
      %v4007 = vadd.f32 0.0, %v4006
      %v4008 = vpop.f32.mrb[0].mxu0
      %4009 = vmatprep.mubr.bf16.mxu0 %v648
      %4010 = vmatmul.mubr.bf16.gmra.mrb[0].mxu0 %v647
      %v4011 = vpop.f32.mrb[0].mxu0
      %v4012 = vadd.f32 0.0, %v4011
      %v4013 = vpop.f32.mrb[0].mxu0
      %v4014 = vpop.f32.mrb[0].mxu0
      %v4015 = vadd.f32 0.0, %v4014
      %v4016 = vpop.f32.mrb[0].mxu0
      %4017 = vmatprep.mubr.bf16.mxu0 %v650
      %4018 = vmatmul.mubr.bf16.gmra.mrb[0].mxu0 %v649
      %v4019 = vpop.f32.mrb[0].mxu0
      %v4020 = vadd.f32 0.0, %v4019
      %v4021 = vpop.f32.mrb[0].mxu0
      %v4022 = vpop.f32.mrb[0].mxu0
      %v4023 = vadd.f32 0.0, %v4022
      %v4024 = vpop.f32.mrb[0].mxu0
      %4025 = vmatprep.mubr.bf16.mxu0 %v652
      %4026 = vmatmul.mubr.bf16.gmra.mrb[0].mxu0 %v651
      %v4027 = vpop.f32.mrb[0].mxu0
      %v4028 = vadd.f32 0.0, %v4027
      %v4029 = vpop.f32.mrb[0].mxu0
      %v4030 = vpop.f32.mrb[0].mxu0
      %v4031 = vadd.f32 0.0, %v4030
      %v4032 = vpop.f32.mrb[0].mxu0
      %4033 = vmatprep.mubr.bf16.mxu0 %v654
      %4034 = vmatmul.mubr.bf16.gmra.mrb[0].mxu0 %v653
      %v4035 = vpop.f32.mrb[0].mxu0
      %v4036 = vadd.f32 0.0, %v4035
      %v4037 = vpop.f32.mrb[0].mxu0
      %v4038 = vpop.f32.mrb[0].mxu0
      %v4039 = vadd.f32 0.0, %v4038
      %v4040 = vpop.f32.mrb[0].mxu0
      %4041 = vmatprep.mubr.bf16.mxu0 %v656
      %4042 = vmatmul.mubr.bf16.gmra.mrb[0].mxu0 %v655
      %v4043 = vpop.f32.mrb[0].mxu0
      %v4044 = vadd.f32 0.0, %v4043
      %v4045 = vpop.f32.mrb[0].mxu0
      %v4046 = vpop.f32.mrb[0].mxu0
      %v4047 = vadd.f32 0.0, %v4046
      %v4048 = vpop.f32.mrb[0].mxu0
      %4049 = vmatprep.mubr.bf16.mxu0 %v658
      %4050 = vmatmul.mubr.bf16.gmra.mrb[0].mxu0 %v657
      %v4051 = vpop.f32.mrb[0].mxu0
      %v4052 = vadd.f32 0.0, %v4051
      %v4053 = vpop.f32.mrb[0].mxu0
      %v4054 = vpop.f32.mrb[0].mxu0
      %v4055 = vadd.f32 0.0, %v4054
      %v4056 = vpop.f32.mrb[0].mxu0
      %4057 = vmatprep.mubr.bf16.mxu0 %v660
      %4058 = vmatmul.mubr.bf16.gmra.mrb[0].mxu0 %v659
      %v4059 = vpop.f32.mrb[0].mxu0
      %v4060 = vadd.f32 0.0, %v4059
      %v4061 = vpop.f32.mrb[0].mxu0
      %v4062 = vpop.f32.mrb[0].mxu0
      %v4063 = vadd.f32 0.0, %v4062
      %v4064 = vpop.f32.mrb[0].mxu0
      %4065 = vmatprep.mubr.bf16.mxu0 %v662
      %4066 = vmatmul.mubr.bf16.gmra.mrb[0].mxu0 %v661
      %v4067 = vpop.f32.mrb[0].mxu0
      %v4068 = vadd.f32 0.0, %v4067
      %v4069 = vpop.f32.mrb[0].mxu0
      %v4070 = vpop.f32.mrb[0].mxu0
      %v4071 = vadd.f32 0.0, %v4070
      %v4072 = vpop.f32.mrb[0].mxu0
      %4073 = vmatprep.mubr.bf16.mxu0 %v664
      %4074 = vmatmul.mubr.bf16.gmra.mrb[0].mxu0 %v663
      %v4075 = vpop.f32.mrb[0].mxu0
      %v4076 = vadd.f32 0.0, %v4075
      %v4077 = vpop.f32.mrb[0].mxu0
      %v4078 = vpop.f32.mrb[0].mxu0
      %v4079 = vadd.f32 0.0, %v4078
      %v4080 = vpop.f32.mrb[0].mxu0
      %4081 = vmatprep.mubr.bf16.mxu0 %v666
      %4082 = vmatmul.mubr.bf16.gmra.mrb[0].mxu0 %v665
      %v4083 = vpop.f32.mrb[0].mxu0
      %v4084 = vadd.f32 0.0, %v4083
      %v4085 = vpop.f32.mrb[0].mxu0
      %v4086 = vpop.f32.mrb[0].mxu0
      %v4087 = vadd.f32 0.0, %v4086
      %v4088 = vpop.f32.mrb[0].mxu0
      %4089 = vmatprep.mubr.bf16.mxu0 %v668
      %4090 = vmatmul.mubr.bf16.gmra.mrb[0].mxu0 %v667
      %v4091 = vpop.f32.mrb[0].mxu0
      %v4092 = vadd.f32 0.0, %v4091
      %v4093 = vpop.f32.mrb[0].mxu0
      %v4094 = vpop.f32.mrb[0].mxu0
      %v4095 = vadd.f32 0.0, %v4094
      %v4096 = vpop.f32.mrb[0].mxu0
      %4097 = vmatprep.mubr.bf16.mxu0 %v670
      %4098 = vmatmul.mubr.bf16.gmra.mrb[0].mxu0 %v669
      %v4099 = vpop.f32.mrb[0].mxu0
      %v4100 = vadd.f32 0.0, %v4099
      %v4101 = vpop.f32.mrb[0].mxu0
      %v4102 = vpop.f32.mrb[0].mxu0
      %v4103 = vadd.f32 0.0, %v4102
      %v4104 = vpop.f32.mrb[0].mxu0
      %4105 = vmatprep.mubr.bf16.mxu0 %v672
      %4106 = vmatmul.mubr.bf16.gmra.mrb[0].mxu0 %v671
      %v4107 = vpop.f32.mrb[0].mxu0
      %v4108 = vadd.f32 0.0, %v4107
      %v4109 = vpop.f32.mrb[0].mxu0
      %v4110 = vpop.f32.mrb[0].mxu0
      %v4111 = vadd.f32 0.0, %v4110
      %v4112 = vpop.f32.mrb[0].mxu0
      %4113 = vmatprep.mubr.bf16.mxu0 %v674
      %4114 = vmatmul.mubr.bf16.gmra.mrb[0].mxu0 %v673
      %v4115 = vpop.f32.mrb[0].mxu0
      %v4116 = vadd.f32 0.0, %v4115
      %v4117 = vpop.f32.mrb[0].mxu0
      %v4118 = vpop.f32.mrb[0].mxu0
      %v4119 = vadd.f32 0.0, %v4118
      %v4120 = vpop.f32.mrb[0].mxu0
      %4121 = vmatprep.mubr.bf16.mxu0 %v676
      %4122 = vmatmul.mubr.bf16.gmra.mrb[0].mxu0 %v675
      %v4123 = vpop.f32.mrb[0].mxu0
      %v4124 = vadd.f32 0.0, %v4123
      %v4125 = vpop.f32.mrb[0].mxu0
      %v4126 = vpop.f32.mrb[0].mxu0
      %v4127 = vadd.f32 0.0, %v4126
      %v4128 = vpop.f32.mrb[0].mxu0
      %4129 = vdwg.mxu0
      %v4130 = vpack.c.bf16 %v4007, %v4004
      %v4131 = vpack.c.bf16 %v4015, %v4012
      %v4132 = vpack.c.bf16 %v4023, %v4020
      %v4133 = vpack.c.bf16 %v4031, %v4028
      %v4134 = vpack.c.bf16 %v4039, %v4036
      %v4135 = vpack.c.bf16 %v4047, %v4044
      %v4136 = vpack.c.bf16 %v4055, %v4052
      %v4137 = vpack.c.bf16 %v4063, %v4060
      %v4138 = vpack.c.bf16 %v4071, %v4068
      %v4139 = vpack.c.bf16 %v4079, %v4076
      %v4140 = vpack.c.bf16 %v4087, %v4084
      %v4141 = vpack.c.bf16 %v4095, %v4092
      %v4142 = vpack.c.bf16 %v4103, %v4100
      %v4143 = vpack.c.bf16 %v4111, %v4108
      %v4144 = vpack.c.bf16 %v4119, %v4116
      %v4145 = vpack.c.bf16 %v4127, %v4124
      %4146 = vmatprep.subr.bf16.mxu0 0
      %4147 = vmatpush1.bf16.msra.mxu0 %v3953
      %4148 = vmatprep.subr.bf16.mxu0 0
      %4149 = vmatpush1.bf16.msra.mxu0 %v3954
      %4150 = vmatprep.subr.bf16.mxu0 0
      %4151 = vmatpush1.bf16.msra.mxu0 %v3955
      %4152 = vmatprep.subr.bf16.mxu0 0
      %4153 = vmatpush1.bf16.msra.mxu0 %v3956
      %4154 = vmatprep.subr.bf16.mxu0 0
      %4155 = vmatpush1.bf16.msra.mxu0 %v3957
      %4156 = vmatprep.subr.bf16.mxu0 0
      %4157 = vmatpush1.bf16.msra.mxu0 %v3958
      %4158 = vmatprep.subr.bf16.mxu0 0
      %4159 = vmatpush1.bf16.msra.mxu0 %v3959
      %4160 = vmatprep.subr.bf16.mxu0 0
      %4161 = vmatpush1.bf16.msra.mxu0 %v3960
      %4162 = vmatprep.subr.bf16.mxu0 0
      %4163 = vmatpush1.bf16.msra.mxu0 %v3961
      %4164 = vmatprep.subr.bf16.mxu0 0
      %4165 = vmatpush1.bf16.msra.mxu0 %v3962
      %4166 = vmatprep.subr.bf16.mxu0 0
      %4167 = vmatpush1.bf16.msra.mxu0 %v3963
      %4168 = vmatprep.subr.bf16.mxu0 0
      %4169 = vmatpush1.bf16.msra.mxu0 %v3964
      %4170 = vmatprep.subr.bf16.mxu0 0
      %4171 = vmatpush1.bf16.msra.mxu0 %v3965
      %4172 = vmatprep.subr.bf16.mxu0 0
      %4173 = vmatpush1.bf16.msra.mxu0 %v3966
      %4174 = vmatprep.subr.bf16.mxu0 0
      %4175 = vmatpush1.bf16.msra.mxu0 %v3967
      %4176 = vmatprep.subr.bf16.mxu0 0
      %4177 = vmatpush1.bf16.msra.mxu0 %v3968
      %4178 = vmatprep.mubr.bf16.mxu0 %v806
      %4179 = vmatmul.mubr.bf16.gmra.mrb[0].mxu0 %v805
      %v4180 = vpop.f32.mrb[0].mxu0
      %v4181 = vadd.f32 0.0, %v4180
      %v4182 = vpop.f32.mrb[0].mxu0
      %v4183 = vpop.f32.mrb[0].mxu0
      %v4184 = vadd.f32 0.0, %v4183
      %v4185 = vpop.f32.mrb[0].mxu0
      %4186 = vmatprep.mubr.bf16.mxu0 %v808
      %4187 = vmatmul.mubr.bf16.gmra.mrb[0].mxu0 %v807
      %v4188 = vpop.f32.mrb[0].mxu0
      %v4189 = vadd.f32 0.0, %v4188
      %v4190 = vpop.f32.mrb[0].mxu0
      %v4191 = vpop.f32.mrb[0].mxu0
      %v4192 = vadd.f32 0.0, %v4191
      %v4193 = vpop.f32.mrb[0].mxu0
      %4194 = vmatprep.mubr.bf16.mxu0 %v810
      %4195 = vmatmul.mubr.bf16.gmra.mrb[0].mxu0 %v809
      %v4196 = vpop.f32.mrb[0].mxu0
      %v4197 = vadd.f32 0.0, %v4196
      %v4198 = vpop.f32.mrb[0].mxu0
      %v4199 = vpop.f32.mrb[0].mxu0
      %v4200 = vadd.f32 0.0, %v4199
      %v4201 = vpop.f32.mrb[0].mxu0
      %4202 = vmatprep.mubr.bf16.mxu0 %v812
      %4203 = vmatmul.mubr.bf16.gmra.mrb[0].mxu0 %v811
      %v4204 = vpop.f32.mrb[0].mxu0
      %v4205 = vadd.f32 0.0, %v4204
      %v4206 = vpop.f32.mrb[0].mxu0
      %v4207 = vpop.f32.mrb[0].mxu0
      %v4208 = vadd.f32 0.0, %v4207
      %v4209 = vpop.f32.mrb[0].mxu0
      %4210 = vmatprep.mubr.bf16.mxu0 %v814
      %4211 = vmatmul.mubr.bf16.gmra.mrb[0].mxu0 %v813
      %v4212 = vpop.f32.mrb[0].mxu0
      %v4213 = vadd.f32 0.0, %v4212
      %v4214 = vpop.f32.mrb[0].mxu0
      %v4215 = vpop.f32.mrb[0].mxu0
      %v4216 = vadd.f32 0.0, %v4215
      %v4217 = vpop.f32.mrb[0].mxu0
      %4218 = vmatprep.mubr.bf16.mxu0 %v816
      %4219 = vmatmul.mubr.bf16.gmra.mrb[0].mxu0 %v815
      %v4220 = vpop.f32.mrb[0].mxu0
      %v4221 = vadd.f32 0.0, %v4220
      %v4222 = vpop.f32.mrb[0].mxu0
      %v4223 = vpop.f32.mrb[0].mxu0
      %v4224 = vadd.f32 0.0, %v4223
      %v4225 = vpop.f32.mrb[0].mxu0
      %4226 = vmatprep.mubr.bf16.mxu0 %v818
      %4227 = vmatmul.mubr.bf16.gmra.mrb[0].mxu0 %v817
      %v4228 = vpop.f32.mrb[0].mxu0
      %v4229 = vadd.f32 0.0, %v4228
      %v4230 = vpop.f32.mrb[0].mxu0
      %v4231 = vpop.f32.mrb[0].mxu0
      %v4232 = vadd.f32 0.0, %v4231
      %v4233 = vpop.f32.mrb[0].mxu0
      %4234 = vmatprep.mubr.bf16.mxu0 %v820
      %4235 = vmatmul.mubr.bf16.gmra.mrb[0].mxu0 %v819
      %v4236 = vpop.f32.mrb[0].mxu0
      %v4237 = vadd.f32 0.0, %v4236
      %v4238 = vpop.f32.mrb[0].mxu0
      %v4239 = vpop.f32.mrb[0].mxu0
      %v4240 = vadd.f32 0.0, %v4239
      %v4241 = vpop.f32.mrb[0].mxu0
      %4242 = vmatprep.mubr.bf16.mxu0 %v822
      %4243 = vmatmul.mubr.bf16.gmra.mrb[0].mxu0 %v821
      %v4244 = vpop.f32.mrb[0].mxu0
      %v4245 = vadd.f32 0.0, %v4244
      %v4246 = vpop.f32.mrb[0].mxu0
      %v4247 = vpop.f32.mrb[0].mxu0
      %v4248 = vadd.f32 0.0, %v4247
      %v4249 = vpop.f32.mrb[0].mxu0
      %4250 = vmatprep.mubr.bf16.mxu0 %v824
      %4251 = vmatmul.mubr.bf16.gmra.mrb[0].mxu0 %v823
      %v4252 = vpop.f32.mrb[0].mxu0
      %v4253 = vadd.f32 0.0, %v4252
      %v4254 = vpop.f32.mrb[0].mxu0
      %v4255 = vpop.f32.mrb[0].mxu0
      %v4256 = vadd.f32 0.0, %v4255
      %v4257 = vpop.f32.mrb[0].mxu0
      %4258 = vmatprep.mubr.bf16.mxu0 %v826
      %4259 = vmatmul.mubr.bf16.gmra.mrb[0].mxu0 %v825
      %v4260 = vpop.f32.mrb[0].mxu0
      %v4261 = vadd.f32 0.0, %v4260
      %v4262 = vpop.f32.mrb[0].mxu0
      %v4263 = vpop.f32.mrb[0].mxu0
      %v4264 = vadd.f32 0.0, %v4263
      %v4265 = vpop.f32.mrb[0].mxu0
      %4266 = vmatprep.mubr.bf16.mxu0 %v828
      %4267 = vmatmul.mubr.bf16.gmra.mrb[0].mxu0 %v827
      %v4268 = vpop.f32.mrb[0].mxu0
      %v4269 = vadd.f32 0.0, %v4268
      %v4270 = vpop.f32.mrb[0].mxu0
      %v4271 = vpop.f32.mrb[0].mxu0
      %v4272 = vadd.f32 0.0, %v4271
      %v4273 = vpop.f32.mrb[0].mxu0
      %4274 = vmatprep.mubr.bf16.mxu0 %v830
      %4275 = vmatmul.mubr.bf16.gmra.mrb[0].mxu0 %v829
      %v4276 = vpop.f32.mrb[0].mxu0
      %v4277 = vadd.f32 0.0, %v4276
      %v4278 = vpop.f32.mrb[0].mxu0
      %v4279 = vpop.f32.mrb[0].mxu0
      %v4280 = vadd.f32 0.0, %v4279
      %v4281 = vpop.f32.mrb[0].mxu0
      %4282 = vmatprep.mubr.bf16.mxu0 %v832
      %4283 = vmatmul.mubr.bf16.gmra.mrb[0].mxu0 %v831
      %v4284 = vpop.f32.mrb[0].mxu0
      %v4285 = vadd.f32 0.0, %v4284
      %v4286 = vpop.f32.mrb[0].mxu0
      %v4287 = vpop.f32.mrb[0].mxu0
      %v4288 = vadd.f32 0.0, %v4287
      %v4289 = vpop.f32.mrb[0].mxu0
      %4290 = vmatprep.mubr.bf16.mxu0 %v834
      %4291 = vmatmul.mubr.bf16.gmra.mrb[0].mxu0 %v833
      %v4292 = vpop.f32.mrb[0].mxu0
      %v4293 = vadd.f32 0.0, %v4292
      %v4294 = vpop.f32.mrb[0].mxu0
      %v4295 = vpop.f32.mrb[0].mxu0
      %v4296 = vadd.f32 0.0, %v4295
      %v4297 = vpop.f32.mrb[0].mxu0
      %4298 = vmatprep.mubr.bf16.mxu0 %v836
      %4299 = vmatmul.mubr.bf16.gmra.mrb[0].mxu0 %v835
      %v4300 = vpop.f32.mrb[0].mxu0
      %v4301 = vadd.f32 0.0, %v4300
      %v4302 = vpop.f32.mrb[0].mxu0
      %v4303 = vpop.f32.mrb[0].mxu0
      %v4304 = vadd.f32 0.0, %v4303
      %v4305 = vpop.f32.mrb[0].mxu0
      %4306 = vdwg.mxu0
      %v4307 = vpack.c.bf16 %v4184, %v4181
      %v4308 = vpack.c.bf16 %v4192, %v4189
      %v4309 = vpack.c.bf16 %v4200, %v4197
      %v4310 = vpack.c.bf16 %v4208, %v4205
      %v4311 = vpack.c.bf16 %v4216, %v4213
      %v4312 = vpack.c.bf16 %v4224, %v4221
      %v4313 = vpack.c.bf16 %v4232, %v4229
      %v4314 = vpack.c.bf16 %v4240, %v4237
      %v4315 = vpack.c.bf16 %v4248, %v4245
      %v4316 = vpack.c.bf16 %v4256, %v4253
      %v4317 = vpack.c.bf16 %v4264, %v4261
      %v4318 = vpack.c.bf16 %v4272, %v4269
      %v4319 = vpack.c.bf16 %v4280, %v4277
      %v4320 = vpack.c.bf16 %v4288, %v4285
      %v4321 = vpack.c.bf16 %v4296, %v4293
      %v4322 = vpack.c.bf16 %v4304, %v4301
      %v4323 = vld [vmem:[%s6] sm:$0x1]
      %v4324 = vld [vmem:[%s5] sm:$0xf]
      %v4325 = vld [vmem:[%s5 + $0x4] sm:$0xf]
      %v4326 = vld [vmem:[%s5 + $0x8] sm:$0xf]
      %v4327 = vld [vmem:[%s5 + $0xc] sm:$0xf]
      %v4328 = vld [vmem:[%s5 + $0x10] sm:$0xf]
      %v4329 = vld [vmem:[%s5 + $0x14] sm:$0xf]
      %v4330 = vld [vmem:[%s5 + $0x18] sm:$0xf]
      %v4331 = vld [vmem:[%s5 + $0x1c] sm:$0xf]
      %v4332 = vld [vmem:[%s5 + $0x20] sm:$0xf]
      %v4333 = vld [vmem:[%s5 + $0x24] sm:$0xf]
      %v4334 = vld [vmem:[%s5 + $0x28] sm:$0xf]
      %v4335 = vld [vmem:[%s5 + $0x2c] sm:$0xf]
      %v4336 = vld [vmem:[%s5 + $0x30] sm:$0xf]
      %v4337 = vld [vmem:[%s5 + $0x34] sm:$0xf]
      %v4338 = vld [vmem:[%s5 + $0x38] sm:$0xf]
      %v4339 = vld [vmem:[%s5 + $0x3c] sm:$0xf]
      %v4356 = vunpack.c.l.b16 %v4324
      %v4357 = vunpack.c.l.b16 %v4325
      %v4358 = vunpack.c.l.b16 %v4326
      %v4359 = vunpack.c.l.b16 %v4327
      %v4360 = vunpack.c.l.b16 %v4328
      %v4361 = vunpack.c.l.b16 %v4329
      %v4362 = vunpack.c.l.b16 %v4330
      %v4363 = vunpack.c.l.b16 %v4331
      %v4364 = vunpack.c.l.b16 %v4332
      %v4365 = vunpack.c.l.b16 %v4333
      %v4366 = vunpack.c.l.b16 %v4334
      %v4367 = vunpack.c.l.b16 %v4335
      %v4368 = vunpack.c.l.b16 %v4336
      %v4369 = vunpack.c.l.b16 %v4337
      %v4370 = vunpack.c.l.b16 %v4338
      %v4371 = vunpack.c.l.b16 %v4339
      %v4372 = vpack.c.b16 %v4357, %v4356
      %v4373 = vpack.c.b16 %v4359, %v4358
      %v4374 = vpack.c.b16 %v4361, %v4360
      %v4375 = vpack.c.b16 %v4363, %v4362
      %v4376 = vpack.c.b16 %v4365, %v4364
      %v4377 = vpack.c.b16 %v4367, %v4366
      %v4378 = vpack.c.b16 %v4369, %v4368
      %v4379 = vpack.c.b16 %v4371, %v4370
      %4388 = vmatprep.subr.bf16.mxu0 0
      %4389 = vmatpush1.bf16.msra.mxu0 %v4372
      %4390 = vmatprep.subr.bf16.mxu0 0
      %4391 = vmatpush1.bf16.msra.mxu0 %v4373
      %4392 = vmatprep.subr.bf16.mxu0 0
      %4393 = vmatpush1.bf16.msra.mxu0 %v4374
      %4394 = vmatprep.subr.bf16.mxu0 0
      %4395 = vmatpush1.bf16.msra.mxu0 %v4375
      %4396 = vmatprep.subr.bf16.mxu0 0
      %4397 = vmatpush1.bf16.msra.mxu0 %v4376
      %4398 = vmatprep.subr.bf16.mxu0 0
      %4399 = vmatpush1.bf16.msra.mxu0 %v4377
      %4400 = vmatprep.subr.bf16.mxu0 0
      %4401 = vmatpush1.bf16.msra.mxu0 %v4378
      %4402 = vmatprep.subr.bf16.mxu0 0
      %4403 = vmatpush1.bf16.msra.mxu0 %v4379
      %4404 = vmatprep.subr.bf16.mxu0 0
      %4405 = vmatpush1.bf16.msra.mxu0 0
      %4406 = vmatprep.subr.bf16.mxu0 0
      %4407 = vmatpush1.bf16.msra.mxu0 0
      %4408 = vmatprep.subr.bf16.mxu0 0
      %4409 = vmatpush1.bf16.msra.mxu0 0
      %4410 = vmatprep.subr.bf16.mxu0 0
      %4411 = vmatpush1.bf16.msra.mxu0 0
      %4412 = vmatprep.subr.bf16.mxu0 0
      %4413 = vmatpush1.bf16.msra.mxu0 0
      %4414 = vmatprep.subr.bf16.mxu0 0
      %4415 = vmatpush1.bf16.msra.mxu0 0
      %4416 = vmatprep.subr.bf16.mxu0 0
      %4417 = vmatpush1.bf16.msra.mxu0 0
      %4418 = vmatprep.subr.bf16.mxu0 0
      %4419 = vmatpush1.bf16.msra.mxu0 0
      %4420 = vmatprep.mubr.bf16.mxu0 0
      %4421 = vmatmul.mubr.bf16.gmra.mrb[0].mxu0 %v4130
      %v4422 = vpop.f32.mrb[0].mxu0
      %v4423 = vadd.f32 0.0, %v4422
      %v4424 = vpop.f32.mrb[0].mxu0
      %v4425 = vpop.f32.mrb[0].mxu0
      %v4426 = vadd.f32 0.0, %v4425
      %v4427 = vpop.f32.mrb[0].mxu0
      %4428 = vmatprep.mubr.bf16.mxu0 0
      %4429 = vmatmul.mubr.bf16.gmra.mrb[0].mxu0 %v4131
      %v4430 = vpop.f32.mrb[0].mxu0
      %v4431 = vadd.f32 0.0, %v4430
      %v4432 = vpop.f32.mrb[0].mxu0
      %v4433 = vpop.f32.mrb[0].mxu0
      %v4434 = vadd.f32 0.0, %v4433
      %v4435 = vpop.f32.mrb[0].mxu0
      %4436 = vmatprep.mubr.bf16.mxu0 0
      %4437 = vmatmul.mubr.bf16.gmra.mrb[0].mxu0 %v4132
      %v4438 = vpop.f32.mrb[0].mxu0
      %v4439 = vadd.f32 0.0, %v4438
      %v4440 = vpop.f32.mrb[0].mxu0
      %v4441 = vpop.f32.mrb[0].mxu0
      %v4442 = vadd.f32 0.0, %v4441
      %v4443 = vpop.f32.mrb[0].mxu0
      %4444 = vmatprep.mubr.bf16.mxu0 0
      %4445 = vmatmul.mubr.bf16.gmra.mrb[0].mxu0 %v4133
      %v4446 = vpop.f32.mrb[0].mxu0
      %v4447 = vadd.f32 0.0, %v4446
      %v4448 = vpop.f32.mrb[0].mxu0
      %v4449 = vpop.f32.mrb[0].mxu0
      %v4450 = vadd.f32 0.0, %v4449
      %v4451 = vpop.f32.mrb[0].mxu0
      %4452 = vmatprep.mubr.bf16.mxu0 0
      %4453 = vmatmul.mubr.bf16.gmra.mrb[0].mxu0 %v4134
      %v4454 = vpop.f32.mrb[0].mxu0
      %v4455 = vadd.f32 0.0, %v4454
      %v4456 = vpop.f32.mrb[0].mxu0
      %v4457 = vpop.f32.mrb[0].mxu0
      %v4458 = vadd.f32 0.0, %v4457
      %v4459 = vpop.f32.mrb[0].mxu0
      %4460 = vmatprep.mubr.bf16.mxu0 0
      %4461 = vmatmul.mubr.bf16.gmra.mrb[0].mxu0 %v4135
      %v4462 = vpop.f32.mrb[0].mxu0
      %v4463 = vadd.f32 0.0, %v4462
      %v4464 = vpop.f32.mrb[0].mxu0
      %v4465 = vpop.f32.mrb[0].mxu0
      %v4466 = vadd.f32 0.0, %v4465
      %v4467 = vpop.f32.mrb[0].mxu0
      %4468 = vmatprep.mubr.bf16.mxu0 0
      %4469 = vmatmul.mubr.bf16.gmra.mrb[0].mxu0 %v4136
      %v4470 = vpop.f32.mrb[0].mxu0
      %v4471 = vadd.f32 0.0, %v4470
      %v4472 = vpop.f32.mrb[0].mxu0
      %v4473 = vpop.f32.mrb[0].mxu0
      %v4474 = vadd.f32 0.0, %v4473
      %v4475 = vpop.f32.mrb[0].mxu0
      %4476 = vmatprep.mubr.bf16.mxu0 0
      %4477 = vmatmul.mubr.bf16.gmra.mrb[0].mxu0 %v4137
      %v4478 = vpop.f32.mrb[0].mxu0
      %v4479 = vadd.f32 0.0, %v4478
      %v4480 = vpop.f32.mrb[0].mxu0
      %v4481 = vpop.f32.mrb[0].mxu0
      %v4482 = vadd.f32 0.0, %v4481
      %v4483 = vpop.f32.mrb[0].mxu0
      %4484 = vmatprep.mubr.bf16.mxu0 0
      %4485 = vmatmul.mubr.bf16.gmra.mrb[0].mxu0 %v4138
      %v4486 = vpop.f32.mrb[0].mxu0
      %v4487 = vadd.f32 0.0, %v4486
      %v4488 = vpop.f32.mrb[0].mxu0
      %v4489 = vpop.f32.mrb[0].mxu0
      %v4490 = vadd.f32 0.0, %v4489
      %v4491 = vpop.f32.mrb[0].mxu0
      %4492 = vmatprep.mubr.bf16.mxu0 0
      %4493 = vmatmul.mubr.bf16.gmra.mrb[0].mxu0 %v4139
      %v4494 = vpop.f32.mrb[0].mxu0
      %v4495 = vadd.f32 0.0, %v4494
      %v4496 = vpop.f32.mrb[0].mxu0
      %v4497 = vpop.f32.mrb[0].mxu0
      %v4498 = vadd.f32 0.0, %v4497
      %v4499 = vpop.f32.mrb[0].mxu0
      %4500 = vmatprep.mubr.bf16.mxu0 0
      %4501 = vmatmul.mubr.bf16.gmra.mrb[0].mxu0 %v4140
      %v4502 = vpop.f32.mrb[0].mxu0
      %v4503 = vadd.f32 0.0, %v4502
      %v4504 = vpop.f32.mrb[0].mxu0
      %v4505 = vpop.f32.mrb[0].mxu0
      %v4506 = vadd.f32 0.0, %v4505
      %v4507 = vpop.f32.mrb[0].mxu0
      %4508 = vmatprep.mubr.bf16.mxu0 0
      %4509 = vmatmul.mubr.bf16.gmra.mrb[0].mxu0 %v4141
      %v4510 = vpop.f32.mrb[0].mxu0
      %v4511 = vadd.f32 0.0, %v4510
      %v4512 = vpop.f32.mrb[0].mxu0
      %v4513 = vpop.f32.mrb[0].mxu0
      %v4514 = vadd.f32 0.0, %v4513
      %v4515 = vpop.f32.mrb[0].mxu0
      %4516 = vmatprep.mubr.bf16.mxu0 0
      %4517 = vmatmul.mubr.bf16.gmra.mrb[0].mxu0 %v4142
      %v4518 = vpop.f32.mrb[0].mxu0
      %v4519 = vadd.f32 0.0, %v4518
      %v4520 = vpop.f32.mrb[0].mxu0
      %v4521 = vpop.f32.mrb[0].mxu0
      %v4522 = vadd.f32 0.0, %v4521
      %v4523 = vpop.f32.mrb[0].mxu0
      %4524 = vmatprep.mubr.bf16.mxu0 0
      %4525 = vmatmul.mubr.bf16.gmra.mrb[0].mxu0 %v4143
      %v4526 = vpop.f32.mrb[0].mxu0
      %v4527 = vadd.f32 0.0, %v4526
      %v4528 = vpop.f32.mrb[0].mxu0
      %v4529 = vpop.f32.mrb[0].mxu0
      %v4530 = vadd.f32 0.0, %v4529
      %v4531 = vpop.f32.mrb[0].mxu0
      %4532 = vmatprep.mubr.bf16.mxu0 0
      %4533 = vmatmul.mubr.bf16.gmra.mrb[0].mxu0 %v4144
      %v4534 = vpop.f32.mrb[0].mxu0
      %v4535 = vadd.f32 0.0, %v4534
      %v4536 = vpop.f32.mrb[0].mxu0
      %v4537 = vpop.f32.mrb[0].mxu0
      %v4538 = vadd.f32 0.0, %v4537
      %v4539 = vpop.f32.mrb[0].mxu0
      %4540 = vmatprep.mubr.bf16.mxu0 0
      %4541 = vmatmul.mubr.bf16.gmra.mrb[0].mxu0 %v4145
      %v4542 = vpop.f32.mrb[0].mxu0
      %v4543 = vadd.f32 0.0, %v4542
      %v4544 = vpop.f32.mrb[0].mxu0
      %v4545 = vpop.f32.mrb[0].mxu0
      %v4546 = vadd.f32 0.0, %v4545
      %v4547 = vpop.f32.mrb[0].mxu0
      %4548 = vdwg.mxu0
      %v4550 = vlaneseq
      %v4551 = vshrl.u32 %v4550, 7
      %v4552 = vsub.s32 0, %v4551
      %v4553 = vrot.slane %v4323, %v4552
      %v4555 = vadd.f32 %v4553, %v4423
      %v4556 = vadd.f32 %v4553, %v4426
      %v4557 = vadd.f32 %v4553, %v4431
      %v4558 = vadd.f32 %v4553, %v4434
      %v4559 = vadd.f32 %v4553, %v4439
      %v4560 = vadd.f32 %v4553, %v4442
      %v4561 = vadd.f32 %v4553, %v4447
      %v4562 = vadd.f32 %v4553, %v4450
      %v4563 = vadd.f32 %v4553, %v4455
      %v4564 = vadd.f32 %v4553, %v4458
      %v4565 = vadd.f32 %v4553, %v4463
      %v4566 = vadd.f32 %v4553, %v4466
      %v4567 = vadd.f32 %v4553, %v4471
      %v4568 = vadd.f32 %v4553, %v4474
      %v4569 = vadd.f32 %v4553, %v4479
      %v4570 = vadd.f32 %v4553, %v4482
      %v4571 = vadd.f32 %v4553, %v4487
      %v4572 = vadd.f32 %v4553, %v4490
      %v4573 = vadd.f32 %v4553, %v4495
      %v4574 = vadd.f32 %v4553, %v4498
      %v4575 = vadd.f32 %v4553, %v4503
      %v4576 = vadd.f32 %v4553, %v4506
      %v4577 = vadd.f32 %v4553, %v4511
      %v4578 = vadd.f32 %v4553, %v4514
      %v4579 = vadd.f32 %v4553, %v4519
      %v4580 = vadd.f32 %v4553, %v4522
      %v4581 = vadd.f32 %v4553, %v4527
      %v4582 = vadd.f32 %v4553, %v4530
      %v4583 = vadd.f32 %v4553, %v4535
      %v4584 = vadd.f32 %v4553, %v4538
      %v4585 = vadd.f32 %v4553, %v4543
      %v4586 = vadd.f32 %v4553, %v4546
      %s4587 = scalar_lea.vmem %s5, 64
      %v4588 = vld [vmem:[%s4587] sm:$0xf]
      %v4589 = vld [vmem:[%s4587 + $0x4] sm:$0xf]
      %v4590 = vld [vmem:[%s4587 + $0x8] sm:$0xf]
      %v4591 = vld [vmem:[%s4587 + $0xc] sm:$0xf]
      %v4592 = vld [vmem:[%s4587 + $0x10] sm:$0xf]
      %v4593 = vld [vmem:[%s4587 + $0x14] sm:$0xf]
      %v4594 = vld [vmem:[%s4587 + $0x18] sm:$0xf]
      %v4595 = vld [vmem:[%s4587 + $0x1c] sm:$0xf]
      %v4596 = vld [vmem:[%s4587 + $0x20] sm:$0xf]
      %v4597 = vld [vmem:[%s4587 + $0x24] sm:$0xf]
      %v4598 = vld [vmem:[%s4587 + $0x28] sm:$0xf]
      %v4599 = vld [vmem:[%s4587 + $0x2c] sm:$0xf]
      %v4600 = vld [vmem:[%s4587 + $0x30] sm:$0xf]
      %v4601 = vld [vmem:[%s4587 + $0x34] sm:$0xf]
      %v4602 = vld [vmem:[%s4587 + $0x38] sm:$0xf]
      %v4603 = vld [vmem:[%s4587 + $0x3c] sm:$0xf]
      %v4620 = vunpack.c.l.b16 %v4588
      %v4621 = vunpack.c.l.b16 %v4589
      %v4622 = vunpack.c.l.b16 %v4590
      %v4623 = vunpack.c.l.b16 %v4591
      %v4624 = vunpack.c.l.b16 %v4592
      %v4625 = vunpack.c.l.b16 %v4593
      %v4626 = vunpack.c.l.b16 %v4594
      %v4627 = vunpack.c.l.b16 %v4595
      %v4628 = vunpack.c.l.b16 %v4596
      %v4629 = vunpack.c.l.b16 %v4597
      %v4630 = vunpack.c.l.b16 %v4598
      %v4631 = vunpack.c.l.b16 %v4599
      %v4632 = vunpack.c.l.b16 %v4600
      %v4633 = vunpack.c.l.b16 %v4601
      %v4634 = vunpack.c.l.b16 %v4602
      %v4635 = vunpack.c.l.b16 %v4603
      %v4636 = vpack.c.b16 %v4621, %v4620
      %v4637 = vpack.c.b16 %v4623, %v4622
      %v4638 = vpack.c.b16 %v4625, %v4624
      %v4639 = vpack.c.b16 %v4627, %v4626
      %v4640 = vpack.c.b16 %v4629, %v4628
      %v4641 = vpack.c.b16 %v4631, %v4630
      %v4642 = vpack.c.b16 %v4633, %v4632
      %v4643 = vpack.c.b16 %v4635, %v4634
      %4652 = vmatprep.subr.bf16.mxu0 0
      %4653 = vmatpush1.bf16.msra.mxu0 %v4636
      %4654 = vmatprep.subr.bf16.mxu0 0
      %4655 = vmatpush1.bf16.msra.mxu0 %v4637
      %4656 = vmatprep.subr.bf16.mxu0 0
      %4657 = vmatpush1.bf16.msra.mxu0 %v4638
      %4658 = vmatprep.subr.bf16.mxu0 0
      %4659 = vmatpush1.bf16.msra.mxu0 %v4639
      %4660 = vmatprep.subr.bf16.mxu0 0
      %4661 = vmatpush1.bf16.msra.mxu0 %v4640
      %4662 = vmatprep.subr.bf16.mxu0 0
      %4663 = vmatpush1.bf16.msra.mxu0 %v4641
      %4664 = vmatprep.subr.bf16.mxu0 0
      %4665 = vmatpush1.bf16.msra.mxu0 %v4642
      %4666 = vmatprep.subr.bf16.mxu0 0
      %4667 = vmatpush1.bf16.msra.mxu0 %v4643
      %4668 = vmatprep.subr.bf16.mxu0 0
      %4669 = vmatpush1.bf16.msra.mxu0 0
      %4670 = vmatprep.subr.bf16.mxu0 0
      %4671 = vmatpush1.bf16.msra.mxu0 0
      %4672 = vmatprep.subr.bf16.mxu0 0
      %4673 = vmatpush1.bf16.msra.mxu0 0
      %4674 = vmatprep.subr.bf16.mxu0 0
      %4675 = vmatpush1.bf16.msra.mxu0 0
      %4676 = vmatprep.subr.bf16.mxu0 0
      %4677 = vmatpush1.bf16.msra.mxu0 0
      %4678 = vmatprep.subr.bf16.mxu0 0
      %4679 = vmatpush1.bf16.msra.mxu0 0
      %4680 = vmatprep.subr.bf16.mxu0 0
      %4681 = vmatpush1.bf16.msra.mxu0 0
      %4682 = vmatprep.subr.bf16.mxu0 0
      %4683 = vmatpush1.bf16.msra.mxu0 0
      %4684 = vmatprep.mubr.bf16.mxu0 0
      %4685 = vmatmul.mubr.bf16.gmra.mrb[0].mxu0 %v3953
      %v4686 = vpop.f32.mrb[0].mxu0
      %v4687 = vadd.f32 0.0, %v4686
      %v4688 = vpop.f32.mrb[0].mxu0
      %v4689 = vpop.f32.mrb[0].mxu0
      %v4690 = vadd.f32 0.0, %v4689
      %v4691 = vpop.f32.mrb[0].mxu0
      %4692 = vmatprep.mubr.bf16.mxu0 0
      %4693 = vmatmul.mubr.bf16.gmra.mrb[0].mxu0 %v3954
      %v4694 = vpop.f32.mrb[0].mxu0
      %v4695 = vadd.f32 0.0, %v4694
      %v4696 = vpop.f32.mrb[0].mxu0
      %v4697 = vpop.f32.mrb[0].mxu0
      %v4698 = vadd.f32 0.0, %v4697
      %v4699 = vpop.f32.mrb[0].mxu0
      %4700 = vmatprep.mubr.bf16.mxu0 0
      %4701 = vmatmul.mubr.bf16.gmra.mrb[0].mxu0 %v3955
      %v4702 = vpop.f32.mrb[0].mxu0
      %v4703 = vadd.f32 0.0, %v4702
      %v4704 = vpop.f32.mrb[0].mxu0
      %v4705 = vpop.f32.mrb[0].mxu0
      %v4706 = vadd.f32 0.0, %v4705
      %v4707 = vpop.f32.mrb[0].mxu0
      %4708 = vmatprep.mubr.bf16.mxu0 0
      %4709 = vmatmul.mubr.bf16.gmra.mrb[0].mxu0 %v3956
      %v4710 = vpop.f32.mrb[0].mxu0
      %v4711 = vadd.f32 0.0, %v4710
      %v4712 = vpop.f32.mrb[0].mxu0
      %v4713 = vpop.f32.mrb[0].mxu0
      %v4714 = vadd.f32 0.0, %v4713
      %v4715 = vpop.f32.mrb[0].mxu0
      %4716 = vmatprep.mubr.bf16.mxu0 0
      %4717 = vmatmul.mubr.bf16.gmra.mrb[0].mxu0 %v3957
      %v4718 = vpop.f32.mrb[0].mxu0
      %v4719 = vadd.f32 0.0, %v4718
      %v4720 = vpop.f32.mrb[0].mxu0
      %v4721 = vpop.f32.mrb[0].mxu0
      %v4722 = vadd.f32 0.0, %v4721
      %v4723 = vpop.f32.mrb[0].mxu0
      %4724 = vmatprep.mubr.bf16.mxu0 0
      %4725 = vmatmul.mubr.bf16.gmra.mrb[0].mxu0 %v3958
      %v4726 = vpop.f32.mrb[0].mxu0
      %v4727 = vadd.f32 0.0, %v4726
      %v4728 = vpop.f32.mrb[0].mxu0
      %v4729 = vpop.f32.mrb[0].mxu0
      %v4730 = vadd.f32 0.0, %v4729
      %v4731 = vpop.f32.mrb[0].mxu0
      %4732 = vmatprep.mubr.bf16.mxu0 0
      %4733 = vmatmul.mubr.bf16.gmra.mrb[0].mxu0 %v3959
      %v4734 = vpop.f32.mrb[0].mxu0
      %v4735 = vadd.f32 0.0, %v4734
      %v4736 = vpop.f32.mrb[0].mxu0
      %v4737 = vpop.f32.mrb[0].mxu0
      %v4738 = vadd.f32 0.0, %v4737
      %v4739 = vpop.f32.mrb[0].mxu0
      %4740 = vmatprep.mubr.bf16.mxu0 0
      %4741 = vmatmul.mubr.bf16.gmra.mrb[0].mxu0 %v3960
      %v4742 = vpop.f32.mrb[0].mxu0
      %v4743 = vadd.f32 0.0, %v4742
      %v4744 = vpop.f32.mrb[0].mxu0
      %v4745 = vpop.f32.mrb[0].mxu0
      %v4746 = vadd.f32 0.0, %v4745
      %v4747 = vpop.f32.mrb[0].mxu0
      %4748 = vmatprep.mubr.bf16.mxu0 0
      %4749 = vmatmul.mubr.bf16.gmra.mrb[0].mxu0 %v3961
      %v4750 = vpop.f32.mrb[0].mxu0
      %v4751 = vadd.f32 0.0, %v4750
      %v4752 = vpop.f32.mrb[0].mxu0
      %v4753 = vpop.f32.mrb[0].mxu0
      %v4754 = vadd.f32 0.0, %v4753
      %v4755 = vpop.f32.mrb[0].mxu0
      %4756 = vmatprep.mubr.bf16.mxu0 0
      %4757 = vmatmul.mubr.bf16.gmra.mrb[0].mxu0 %v3962
      %v4758 = vpop.f32.mrb[0].mxu0
      %v4759 = vadd.f32 0.0, %v4758
      %v4760 = vpop.f32.mrb[0].mxu0
      %v4761 = vpop.f32.mrb[0].mxu0
      %v4762 = vadd.f32 0.0, %v4761
      %v4763 = vpop.f32.mrb[0].mxu0
      %4764 = vmatprep.mubr.bf16.mxu0 0
      %4765 = vmatmul.mubr.bf16.gmra.mrb[0].mxu0 %v3963
      %v4766 = vpop.f32.mrb[0].mxu0
      %v4767 = vadd.f32 0.0, %v4766
      %v4768 = vpop.f32.mrb[0].mxu0
      %v4769 = vpop.f32.mrb[0].mxu0
      %v4770 = vadd.f32 0.0, %v4769
      %v4771 = vpop.f32.mrb[0].mxu0
      %4772 = vmatprep.mubr.bf16.mxu0 0
      %4773 = vmatmul.mubr.bf16.gmra.mrb[0].mxu0 %v3964
      %v4774 = vpop.f32.mrb[0].mxu0
      %v4775 = vadd.f32 0.0, %v4774
      %v4776 = vpop.f32.mrb[0].mxu0
      %v4777 = vpop.f32.mrb[0].mxu0
      %v4778 = vadd.f32 0.0, %v4777
      %v4779 = vpop.f32.mrb[0].mxu0
      %4780 = vmatprep.mubr.bf16.mxu0 0
      %4781 = vmatmul.mubr.bf16.gmra.mrb[0].mxu0 %v3965
      %v4782 = vpop.f32.mrb[0].mxu0
      %v4783 = vadd.f32 0.0, %v4782
      %v4784 = vpop.f32.mrb[0].mxu0
      %v4785 = vpop.f32.mrb[0].mxu0
      %v4786 = vadd.f32 0.0, %v4785
      %v4787 = vpop.f32.mrb[0].mxu0
      %4788 = vmatprep.mubr.bf16.mxu0 0
      %4789 = vmatmul.mubr.bf16.gmra.mrb[0].mxu0 %v3966
      %v4790 = vpop.f32.mrb[0].mxu0
      %v4791 = vadd.f32 0.0, %v4790
      %v4792 = vpop.f32.mrb[0].mxu0
      %v4793 = vpop.f32.mrb[0].mxu0
      %v4794 = vadd.f32 0.0, %v4793
      %v4795 = vpop.f32.mrb[0].mxu0
      %4796 = vmatprep.mubr.bf16.mxu0 0
      %4797 = vmatmul.mubr.bf16.gmra.mrb[0].mxu0 %v3967
      %v4798 = vpop.f32.mrb[0].mxu0
      %v4799 = vadd.f32 0.0, %v4798
      %v4800 = vpop.f32.mrb[0].mxu0
      %v4801 = vpop.f32.mrb[0].mxu0
      %v4802 = vadd.f32 0.0, %v4801
      %v4803 = vpop.f32.mrb[0].mxu0
      %4804 = vmatprep.mubr.bf16.mxu0 0
      %4805 = vmatmul.mubr.bf16.gmra.mrb[0].mxu0 %v3968
      %v4806 = vpop.f32.mrb[0].mxu0
      %v4807 = vadd.f32 0.0, %v4806
      %v4808 = vpop.f32.mrb[0].mxu0
      %v4809 = vpop.f32.mrb[0].mxu0
      %v4810 = vadd.f32 0.0, %v4809
      %v4811 = vpop.f32.mrb[0].mxu0
      %4812 = vdwg.mxu0
      %v4813 = vadd.f32 %v4555, %v4687
      %v4814 = vadd.f32 %v4556, %v4690
      %v4815 = vadd.f32 %v4557, %v4695
      %v4816 = vadd.f32 %v4558, %v4698
      %v4817 = vadd.f32 %v4559, %v4703
      %v4818 = vadd.f32 %v4560, %v4706
      %v4819 = vadd.f32 %v4561, %v4711
      %v4820 = vadd.f32 %v4562, %v4714
      %v4821 = vadd.f32 %v4563, %v4719
      %v4822 = vadd.f32 %v4564, %v4722
      %v4823 = vadd.f32 %v4565, %v4727
      %v4824 = vadd.f32 %v4566, %v4730
      %v4825 = vadd.f32 %v4567, %v4735
      %v4826 = vadd.f32 %v4568, %v4738
      %v4827 = vadd.f32 %v4569, %v4743
      %v4828 = vadd.f32 %v4570, %v4746
      %v4829 = vadd.f32 %v4571, %v4751
      %v4830 = vadd.f32 %v4572, %v4754
      %v4831 = vadd.f32 %v4573, %v4759
      %v4832 = vadd.f32 %v4574, %v4762
      %v4833 = vadd.f32 %v4575, %v4767
      %v4834 = vadd.f32 %v4576, %v4770
      %v4835 = vadd.f32 %v4577, %v4775
      %v4836 = vadd.f32 %v4578, %v4778
      %v4837 = vadd.f32 %v4579, %v4783
      %v4838 = vadd.f32 %v4580, %v4786
      %v4839 = vadd.f32 %v4581, %v4791
      %v4840 = vadd.f32 %v4582, %v4794
      %v4841 = vadd.f32 %v4583, %v4799
      %v4842 = vadd.f32 %v4584, %v4802
      %v4843 = vadd.f32 %v4585, %v4807
      %v4844 = vadd.f32 %v4586, %v4810
      %s4845 = scalar_lea.vmem %s5, 128
      %v4846 = vld [vmem:[%s4845] sm:$0xf]
      %v4847 = vld [vmem:[%s4845 + $0x4] sm:$0xf]
      %v4848 = vld [vmem:[%s4845 + $0x8] sm:$0xf]
      %v4849 = vld [vmem:[%s4845 + $0xc] sm:$0xf]
      %v4850 = vld [vmem:[%s4845 + $0x10] sm:$0xf]
      %v4851 = vld [vmem:[%s4845 + $0x14] sm:$0xf]
      %v4852 = vld [vmem:[%s4845 + $0x18] sm:$0xf]
      %v4853 = vld [vmem:[%s4845 + $0x1c] sm:$0xf]
      %v4854 = vld [vmem:[%s4845 + $0x20] sm:$0xf]
      %v4855 = vld [vmem:[%s4845 + $0x24] sm:$0xf]
      %v4856 = vld [vmem:[%s4845 + $0x28] sm:$0xf]
      %v4857 = vld [vmem:[%s4845 + $0x2c] sm:$0xf]
      %v4858 = vld [vmem:[%s4845 + $0x30] sm:$0xf]
      %v4859 = vld [vmem:[%s4845 + $0x34] sm:$0xf]
      %v4860 = vld [vmem:[%s4845 + $0x38] sm:$0xf]
      %v4861 = vld [vmem:[%s4845 + $0x3c] sm:$0xf]
      %v4878 = vunpack.c.l.b16 %v4846
      %v4879 = vunpack.c.l.b16 %v4847
      %v4880 = vunpack.c.l.b16 %v4848
      %v4881 = vunpack.c.l.b16 %v4849
      %v4882 = vunpack.c.l.b16 %v4850
      %v4883 = vunpack.c.l.b16 %v4851
      %v4884 = vunpack.c.l.b16 %v4852
      %v4885 = vunpack.c.l.b16 %v4853
      %v4886 = vunpack.c.l.b16 %v4854
      %v4887 = vunpack.c.l.b16 %v4855
      %v4888 = vunpack.c.l.b16 %v4856
      %v4889 = vunpack.c.l.b16 %v4857
      %v4890 = vunpack.c.l.b16 %v4858
      %v4891 = vunpack.c.l.b16 %v4859
      %v4892 = vunpack.c.l.b16 %v4860
      %v4893 = vunpack.c.l.b16 %v4861
      %v4894 = vpack.c.b16 %v4879, %v4878
      %v4895 = vpack.c.b16 %v4881, %v4880
      %v4896 = vpack.c.b16 %v4883, %v4882
      %v4897 = vpack.c.b16 %v4885, %v4884
      %v4898 = vpack.c.b16 %v4887, %v4886
      %v4899 = vpack.c.b16 %v4889, %v4888
      %v4900 = vpack.c.b16 %v4891, %v4890
      %v4901 = vpack.c.b16 %v4893, %v4892
      %4910 = vmatprep.subr.bf16.mxu0 0
      %4911 = vmatpush1.bf16.msra.mxu0 %v4894
      %4912 = vmatprep.subr.bf16.mxu0 0
      %4913 = vmatpush1.bf16.msra.mxu0 %v4895
      %4914 = vmatprep.subr.bf16.mxu0 0
      %4915 = vmatpush1.bf16.msra.mxu0 %v4896
      %4916 = vmatprep.subr.bf16.mxu0 0
      %4917 = vmatpush1.bf16.msra.mxu0 %v4897
      %4918 = vmatprep.subr.bf16.mxu0 0
      %4919 = vmatpush1.bf16.msra.mxu0 %v4898
      %4920 = vmatprep.subr.bf16.mxu0 0
      %4921 = vmatpush1.bf16.msra.mxu0 %v4899
      %4922 = vmatprep.subr.bf16.mxu0 0
      %4923 = vmatpush1.bf16.msra.mxu0 %v4900
      %4924 = vmatprep.subr.bf16.mxu0 0
      %4925 = vmatpush1.bf16.msra.mxu0 %v4901
      %4926 = vmatprep.subr.bf16.mxu0 0
      %4927 = vmatpush1.bf16.msra.mxu0 0
      %4928 = vmatprep.subr.bf16.mxu0 0
      %4929 = vmatpush1.bf16.msra.mxu0 0
      %4930 = vmatprep.subr.bf16.mxu0 0
      %4931 = vmatpush1.bf16.msra.mxu0 0
      %4932 = vmatprep.subr.bf16.mxu0 0
      %4933 = vmatpush1.bf16.msra.mxu0 0
      %4934 = vmatprep.subr.bf16.mxu0 0
      %4935 = vmatpush1.bf16.msra.mxu0 0
      %4936 = vmatprep.subr.bf16.mxu0 0
      %4937 = vmatpush1.bf16.msra.mxu0 0
      %4938 = vmatprep.subr.bf16.mxu0 0
      %4939 = vmatpush1.bf16.msra.mxu0 0
      %4940 = vmatprep.subr.bf16.mxu0 0
      %4941 = vmatpush1.bf16.msra.mxu0 0
      %4942 = vmatprep.mubr.bf16.mxu0 0
      %4943 = vmatmul.mubr.bf16.gmra.mrb[0].mxu0 %v4307
      %v4944 = vpop.f32.mrb[0].mxu0
      %v4945 = vadd.f32 0.0, %v4944
      %v4946 = vpop.f32.mrb[0].mxu0
      %v4947 = vpop.f32.mrb[0].mxu0
      %v4948 = vadd.f32 0.0, %v4947
      %v4949 = vpop.f32.mrb[0].mxu0
      %4950 = vmatprep.mubr.bf16.mxu0 0
      %4951 = vmatmul.mubr.bf16.gmra.mrb[0].mxu0 %v4308
      %v4952 = vpop.f32.mrb[0].mxu0
      %v4953 = vadd.f32 0.0, %v4952
      %v4954 = vpop.f32.mrb[0].mxu0
      %v4955 = vpop.f32.mrb[0].mxu0
      %v4956 = vadd.f32 0.0, %v4955
      %v4957 = vpop.f32.mrb[0].mxu0
      %4958 = vmatprep.mubr.bf16.mxu0 0
      %4959 = vmatmul.mubr.bf16.gmra.mrb[0].mxu0 %v4309
      %v4960 = vpop.f32.mrb[0].mxu0
      %v4961 = vadd.f32 0.0, %v4960
      %v4962 = vpop.f32.mrb[0].mxu0
      %v4963 = vpop.f32.mrb[0].mxu0
      %v4964 = vadd.f32 0.0, %v4963
      %v4965 = vpop.f32.mrb[0].mxu0
      %4966 = vmatprep.mubr.bf16.mxu0 0
      %4967 = vmatmul.mubr.bf16.gmra.mrb[0].mxu0 %v4310
      %v4968 = vpop.f32.mrb[0].mxu0
      %v4969 = vadd.f32 0.0, %v4968
      %v4970 = vpop.f32.mrb[0].mxu0
      %v4971 = vpop.f32.mrb[0].mxu0
      %v4972 = vadd.f32 0.0, %v4971
      %v4973 = vpop.f32.mrb[0].mxu0
      %4974 = vmatprep.mubr.bf16.mxu0 0
      %4975 = vmatmul.mubr.bf16.gmra.mrb[0].mxu0 %v4311
      %v4976 = vpop.f32.mrb[0].mxu0
      %v4977 = vadd.f32 0.0, %v4976
      %v4978 = vpop.f32.mrb[0].mxu0
      %v4979 = vpop.f32.mrb[0].mxu0
      %v4980 = vadd.f32 0.0, %v4979
      %v4981 = vpop.f32.mrb[0].mxu0
      %4982 = vmatprep.mubr.bf16.mxu0 0
      %4983 = vmatmul.mubr.bf16.gmra.mrb[0].mxu0 %v4312
      %v4984 = vpop.f32.mrb[0].mxu0
      %v4985 = vadd.f32 0.0, %v4984
      %v4986 = vpop.f32.mrb[0].mxu0
      %v4987 = vpop.f32.mrb[0].mxu0
      %v4988 = vadd.f32 0.0, %v4987
      %v4989 = vpop.f32.mrb[0].mxu0
      %4990 = vmatprep.mubr.bf16.mxu0 0
      %4991 = vmatmul.mubr.bf16.gmra.mrb[0].mxu0 %v4313
      %v4992 = vpop.f32.mrb[0].mxu0
      %v4993 = vadd.f32 0.0, %v4992
      %v4994 = vpop.f32.mrb[0].mxu0
      %v4995 = vpop.f32.mrb[0].mxu0
      %v4996 = vadd.f32 0.0, %v4995
      %v4997 = vpop.f32.mrb[0].mxu0
      %4998 = vmatprep.mubr.bf16.mxu0 0
      %4999 = vmatmul.mubr.bf16.gmra.mrb[0].mxu0 %v4314
      %v5000 = vpop.f32.mrb[0].mxu0
      %v5001 = vadd.f32 0.0, %v5000
      %v5002 = vpop.f32.mrb[0].mxu0
      %v5003 = vpop.f32.mrb[0].mxu0
      %v5004 = vadd.f32 0.0, %v5003
      %v5005 = vpop.f32.mrb[0].mxu0
      %5006 = vmatprep.mubr.bf16.mxu0 0
      %5007 = vmatmul.mubr.bf16.gmra.mrb[0].mxu0 %v4315
      %v5008 = vpop.f32.mrb[0].mxu0
      %v5009 = vadd.f32 0.0, %v5008
      %v5010 = vpop.f32.mrb[0].mxu0
      %v5011 = vpop.f32.mrb[0].mxu0
      %v5012 = vadd.f32 0.0, %v5011
      %v5013 = vpop.f32.mrb[0].mxu0
      %5014 = vmatprep.mubr.bf16.mxu0 0
      %5015 = vmatmul.mubr.bf16.gmra.mrb[0].mxu0 %v4316
      %v5016 = vpop.f32.mrb[0].mxu0
      %v5017 = vadd.f32 0.0, %v5016
      %v5018 = vpop.f32.mrb[0].mxu0
      %v5019 = vpop.f32.mrb[0].mxu0
      %v5020 = vadd.f32 0.0, %v5019
      %v5021 = vpop.f32.mrb[0].mxu0
      %5022 = vmatprep.mubr.bf16.mxu0 0
      %5023 = vmatmul.mubr.bf16.gmra.mrb[0].mxu0 %v4317
      %v5024 = vpop.f32.mrb[0].mxu0
      %v5025 = vadd.f32 0.0, %v5024
      %v5026 = vpop.f32.mrb[0].mxu0
      %v5027 = vpop.f32.mrb[0].mxu0
      %v5028 = vadd.f32 0.0, %v5027
      %v5029 = vpop.f32.mrb[0].mxu0
      %5030 = vmatprep.mubr.bf16.mxu0 0
      %5031 = vmatmul.mubr.bf16.gmra.mrb[0].mxu0 %v4318
      %v5032 = vpop.f32.mrb[0].mxu0
      %v5033 = vadd.f32 0.0, %v5032
      %v5034 = vpop.f32.mrb[0].mxu0
      %v5035 = vpop.f32.mrb[0].mxu0
      %v5036 = vadd.f32 0.0, %v5035
      %v5037 = vpop.f32.mrb[0].mxu0
      %5038 = vmatprep.mubr.bf16.mxu0 0
      %5039 = vmatmul.mubr.bf16.gmra.mrb[0].mxu0 %v4319
      %v5040 = vpop.f32.mrb[0].mxu0
      %v5041 = vadd.f32 0.0, %v5040
      %v5042 = vpop.f32.mrb[0].mxu0
      %v5043 = vpop.f32.mrb[0].mxu0
      %v5044 = vadd.f32 0.0, %v5043
      %v5045 = vpop.f32.mrb[0].mxu0
      %5046 = vmatprep.mubr.bf16.mxu0 0
      %5047 = vmatmul.mubr.bf16.gmra.mrb[0].mxu0 %v4320
      %v5048 = vpop.f32.mrb[0].mxu0
      %v5049 = vadd.f32 0.0, %v5048
      %v5050 = vpop.f32.mrb[0].mxu0
      %v5051 = vpop.f32.mrb[0].mxu0
      %v5052 = vadd.f32 0.0, %v5051
      %v5053 = vpop.f32.mrb[0].mxu0
      %5054 = vmatprep.mubr.bf16.mxu0 0
      %5055 = vmatmul.mubr.bf16.gmra.mrb[0].mxu0 %v4321
      %v5056 = vpop.f32.mrb[0].mxu0
      %v5057 = vadd.f32 0.0, %v5056
      %v5058 = vpop.f32.mrb[0].mxu0
      %v5059 = vpop.f32.mrb[0].mxu0
      %v5060 = vadd.f32 0.0, %v5059
      %v5061 = vpop.f32.mrb[0].mxu0
      %5062 = vmatprep.mubr.bf16.mxu0 0
      %5063 = vmatmul.mubr.bf16.gmra.mrb[0].mxu0 %v4322
      %v5064 = vpop.f32.mrb[0].mxu0
      %v5065 = vadd.f32 0.0, %v5064
      %v5066 = vpop.f32.mrb[0].mxu0
      %v5067 = vpop.f32.mrb[0].mxu0
      %v5068 = vadd.f32 0.0, %v5067
      %v5069 = vpop.f32.mrb[0].mxu0
      %5070 = vdwg.mxu0
      %v5071 = vadd.f32 %v4813, %v4945
      %v5072 = vadd.f32 %v4814, %v4948
      %v5073 = vadd.f32 %v4815, %v4953
      %v5074 = vadd.f32 %v4816, %v4956
      %v5075 = vadd.f32 %v4817, %v4961
      %v5076 = vadd.f32 %v4818, %v4964
      %v5077 = vadd.f32 %v4819, %v4969
      %v5078 = vadd.f32 %v4820, %v4972
      %v5079 = vadd.f32 %v4821, %v4977
      %v5080 = vadd.f32 %v4822, %v4980
      %v5081 = vadd.f32 %v4823, %v4985
      %v5082 = vadd.f32 %v4824, %v4988
      %v5083 = vadd.f32 %v4825, %v4993
      %v5084 = vadd.f32 %v4826, %v4996
      %v5085 = vadd.f32 %v4827, %v5001
      %v5086 = vadd.f32 %v4828, %v5004
      %v5087 = vadd.f32 %v4829, %v5009
      %v5088 = vadd.f32 %v4830, %v5012
      %v5089 = vadd.f32 %v4831, %v5017
      %v5090 = vadd.f32 %v4832, %v5020
      %v5091 = vadd.f32 %v4833, %v5025
      %v5092 = vadd.f32 %v4834, %v5028
      %v5093 = vadd.f32 %v4835, %v5033
      %v5094 = vadd.f32 %v4836, %v5036
      %v5095 = vadd.f32 %v4837, %v5041
      %v5096 = vadd.f32 %v4838, %v5044
      %v5097 = vadd.f32 %v4839, %v5049
      %v5098 = vadd.f32 %v4840, %v5052
      %v5099 = vadd.f32 %v4841, %v5057
      %v5100 = vadd.f32 %v4842, %v5060
      %v5101 = vadd.f32 %v4843, %v5065
      %v5102 = vadd.f32 %v4844, %v5068
      %v5103 = vmax.f32 %v5071, 0.0
      %v5104 = vmax.f32 %v5072, 0.0
      %v5105 = vmax.f32 %v5073, 0.0
      %v5106 = vmax.f32 %v5074, 0.0
      %v5107 = vmax.f32 %v5075, 0.0
      %v5108 = vmax.f32 %v5076, 0.0
      %v5109 = vmax.f32 %v5077, 0.0
      %v5110 = vmax.f32 %v5078, 0.0
      %v5111 = vmax.f32 %v5079, 0.0
      %v5112 = vmax.f32 %v5080, 0.0
      %v5113 = vmax.f32 %v5081, 0.0
      %v5114 = vmax.f32 %v5082, 0.0
      %v5115 = vmax.f32 %v5083, 0.0
      %v5116 = vmax.f32 %v5084, 0.0
      %v5117 = vmax.f32 %v5085, 0.0
      %v5118 = vmax.f32 %v5086, 0.0
      %v5119 = vmax.f32 %v5087, 0.0
      %v5120 = vmax.f32 %v5088, 0.0
      %v5121 = vmax.f32 %v5089, 0.0
      %v5122 = vmax.f32 %v5090, 0.0
      %v5123 = vmax.f32 %v5091, 0.0
      %v5124 = vmax.f32 %v5092, 0.0
      %v5125 = vmax.f32 %v5093, 0.0
      %v5126 = vmax.f32 %v5094, 0.0
      %v5127 = vmax.f32 %v5095, 0.0
      %v5128 = vmax.f32 %v5096, 0.0
      %v5129 = vmax.f32 %v5097, 0.0
      %v5130 = vmax.f32 %v5098, 0.0
      %v5131 = vmax.f32 %v5099, 0.0
      %v5132 = vmax.f32 %v5100, 0.0
      %v5133 = vmax.f32 %v5101, 0.0
      %v5134 = vmax.f32 %v5102, 0.0
      %v5135 = vpack.c.bf16 %v5104, %v5103
      %v5136 = vpack.c.bf16 %v5106, %v5105
      %v5137 = vpack.c.bf16 %v5108, %v5107
      %v5138 = vpack.c.bf16 %v5110, %v5109
      %v5139 = vpack.c.bf16 %v5112, %v5111
      %v5140 = vpack.c.bf16 %v5114, %v5113
      %v5141 = vpack.c.bf16 %v5116, %v5115
      %v5142 = vpack.c.bf16 %v5118, %v5117
      %v5143 = vpack.c.bf16 %v5120, %v5119
      %v5144 = vpack.c.bf16 %v5122, %v5121
      %v5145 = vpack.c.bf16 %v5124, %v5123
      %v5146 = vpack.c.bf16 %v5126, %v5125
      %v5147 = vpack.c.bf16 %v5128, %v5127
      %v5148 = vpack.c.bf16 %v5130, %v5129
      %v5149 = vpack.c.bf16 %v5132, %v5131
      %v5150 = vpack.c.bf16 %v5134, %v5133
      %5151 = vmatprep.subr.bf16.mxu0 0
      %5152 = vmatpush1.bf16.msra.mxu0 %v5135
      %5153 = vmatprep.subr.bf16.mxu0 0
      %5154 = vmatpush1.bf16.msra.mxu0 %v5136
      %5155 = vmatprep.subr.bf16.mxu0 0
      %5156 = vmatpush1.bf16.msra.mxu0 %v5137
      %5157 = vmatprep.subr.bf16.mxu0 0
      %5158 = vmatpush1.bf16.msra.mxu0 %v5138
      %5159 = vmatprep.subr.bf16.mxu0 0
      %5160 = vmatpush1.bf16.msra.mxu0 %v5139
      %5161 = vmatprep.subr.bf16.mxu0 0
      %5162 = vmatpush1.bf16.msra.mxu0 %v5140
      %5163 = vmatprep.subr.bf16.mxu0 0
      %5164 = vmatpush1.bf16.msra.mxu0 %v5141
      %5165 = vmatprep.subr.bf16.mxu0 0
      %5166 = vmatpush1.bf16.msra.mxu0 %v5142
      %5167 = vmatprep.subr.bf16.mxu0 0
      %5168 = vmatpush1.bf16.msra.mxu0 %v5143
      %5169 = vmatprep.subr.bf16.mxu0 0
      %5170 = vmatpush1.bf16.msra.mxu0 %v5144
      %5171 = vmatprep.subr.bf16.mxu0 0
      %5172 = vmatpush1.bf16.msra.mxu0 %v5145
      %5173 = vmatprep.subr.bf16.mxu0 0
      %5174 = vmatpush1.bf16.msra.mxu0 %v5146
      %5175 = vmatprep.subr.bf16.mxu0 0
      %5176 = vmatpush1.bf16.msra.mxu0 %v5147
      %5177 = vmatprep.subr.bf16.mxu0 0
      %5178 = vmatpush1.bf16.msra.mxu0 %v5148
      %5179 = vmatprep.subr.bf16.mxu0 0
      %5180 = vmatpush1.bf16.msra.mxu0 %v5149
      %5181 = vmatprep.subr.bf16.mxu0 0
      %5182 = vmatpush1.bf16.msra.mxu0 %v5150
      %5183 = vmatprep.mubr.bf16.mxu0 %v1190
      %5184 = vmatmul.mubr.bf16.gmra.mrb[0].mxu0 %v1189
      %v5185 = vpop.f32.mrb[0].mxu0
      %v5186 = vadd.f32 0.0, %v5185
      %v5187 = vpop.f32.mrb[0].mxu0
      %v5188 = vpop.f32.mrb[0].mxu0
      %v5189 = vadd.f32 0.0, %v5188
      %v5190 = vpop.f32.mrb[0].mxu0
      %5191 = vmatprep.mubr.bf16.mxu0 %v1192
      %5192 = vmatmul.mubr.bf16.gmra.mrb[0].mxu0 %v1191
      %v5193 = vpop.f32.mrb[0].mxu0
      %v5194 = vadd.f32 0.0, %v5193
      %v5195 = vpop.f32.mrb[0].mxu0
      %v5196 = vpop.f32.mrb[0].mxu0
      %v5197 = vadd.f32 0.0, %v5196
      %v5198 = vpop.f32.mrb[0].mxu0
      %5199 = vmatprep.mubr.bf16.mxu0 %v1194
      %5200 = vmatmul.mubr.bf16.gmra.mrb[0].mxu0 %v1193
      %v5201 = vpop.f32.mrb[0].mxu0
      %v5202 = vadd.f32 0.0, %v5201
      %v5203 = vpop.f32.mrb[0].mxu0
      %v5204 = vpop.f32.mrb[0].mxu0
      %v5205 = vadd.f32 0.0, %v5204
      %v5206 = vpop.f32.mrb[0].mxu0
      %5207 = vmatprep.mubr.bf16.mxu0 %v1196
      %5208 = vmatmul.mubr.bf16.gmra.mrb[0].mxu0 %v1195
      %v5209 = vpop.f32.mrb[0].mxu0
      %v5210 = vadd.f32 0.0, %v5209
      %v5211 = vpop.f32.mrb[0].mxu0
      %v5212 = vpop.f32.mrb[0].mxu0
      %v5213 = vadd.f32 0.0, %v5212
      %v5214 = vpop.f32.mrb[0].mxu0
      %5215 = vmatprep.mubr.bf16.mxu0 %v1198
      %5216 = vmatmul.mubr.bf16.gmra.mrb[0].mxu0 %v1197
      %v5217 = vpop.f32.mrb[0].mxu0
      %v5218 = vadd.f32 0.0, %v5217
      %v5219 = vpop.f32.mrb[0].mxu0
      %v5220 = vpop.f32.mrb[0].mxu0
      %v5221 = vadd.f32 0.0, %v5220
      %v5222 = vpop.f32.mrb[0].mxu0
      %5223 = vmatprep.mubr.bf16.mxu0 %v1200
      %5224 = vmatmul.mubr.bf16.gmra.mrb[0].mxu0 %v1199
      %v5225 = vpop.f32.mrb[0].mxu0
      %v5226 = vadd.f32 0.0, %v5225
      %v5227 = vpop.f32.mrb[0].mxu0
      %v5228 = vpop.f32.mrb[0].mxu0
      %v5229 = vadd.f32 0.0, %v5228
      %v5230 = vpop.f32.mrb[0].mxu0
      %5231 = vmatprep.mubr.bf16.mxu0 %v1202
      %5232 = vmatmul.mubr.bf16.gmra.mrb[0].mxu0 %v1201
      %v5233 = vpop.f32.mrb[0].mxu0
      %v5234 = vadd.f32 0.0, %v5233
      %v5235 = vpop.f32.mrb[0].mxu0
      %v5236 = vpop.f32.mrb[0].mxu0
      %v5237 = vadd.f32 0.0, %v5236
      %v5238 = vpop.f32.mrb[0].mxu0
      %5239 = vmatprep.mubr.bf16.mxu0 %v1204
      %5240 = vmatmul.mubr.bf16.gmra.mrb[0].mxu0 %v1203
      %v5241 = vpop.f32.mrb[0].mxu0
      %v5242 = vadd.f32 0.0, %v5241
      %v5243 = vpop.f32.mrb[0].mxu0
      %v5244 = vpop.f32.mrb[0].mxu0
      %v5245 = vadd.f32 0.0, %v5244
      %v5246 = vpop.f32.mrb[0].mxu0
      %5247 = vmatprep.mubr.bf16.mxu0 %v1206
      %5248 = vmatmul.mubr.bf16.gmra.mrb[0].mxu0 %v1205
      %v5249 = vpop.f32.mrb[0].mxu0
      %v5250 = vadd.f32 0.0, %v5249
      %v5251 = vpop.f32.mrb[0].mxu0
      %v5252 = vpop.f32.mrb[0].mxu0
      %v5253 = vadd.f32 0.0, %v5252
      %v5254 = vpop.f32.mrb[0].mxu0
      %5255 = vmatprep.mubr.bf16.mxu0 %v1208
      %5256 = vmatmul.mubr.bf16.gmra.mrb[0].mxu0 %v1207
      %v5257 = vpop.f32.mrb[0].mxu0
      %v5258 = vadd.f32 0.0, %v5257
      %v5259 = vpop.f32.mrb[0].mxu0
      %v5260 = vpop.f32.mrb[0].mxu0
      %v5261 = vadd.f32 0.0, %v5260
      %v5262 = vpop.f32.mrb[0].mxu0
      %5263 = vmatprep.mubr.bf16.mxu0 %v1210
      %5264 = vmatmul.mubr.bf16.gmra.mrb[0].mxu0 %v1209
      %v5265 = vpop.f32.mrb[0].mxu0
      %v5266 = vadd.f32 0.0, %v5265
      %v5267 = vpop.f32.mrb[0].mxu0
      %v5268 = vpop.f32.mrb[0].mxu0
      %v5269 = vadd.f32 0.0, %v5268
      %v5270 = vpop.f32.mrb[0].mxu0
      %5271 = vmatprep.mubr.bf16.mxu0 %v1212
      %5272 = vmatmul.mubr.bf16.gmra.mrb[0].mxu0 %v1211
      %v5273 = vpop.f32.mrb[0].mxu0
      %v5274 = vadd.f32 0.0, %v5273
      %v5275 = vpop.f32.mrb[0].mxu0
      %v5276 = vpop.f32.mrb[0].mxu0
      %v5277 = vadd.f32 0.0, %v5276
      %v5278 = vpop.f32.mrb[0].mxu0
      %5279 = vmatprep.mubr.bf16.mxu0 %v1214
      %5280 = vmatmul.mubr.bf16.gmra.mrb[0].mxu0 %v1213
      %v5281 = vpop.f32.mrb[0].mxu0
      %v5282 = vadd.f32 0.0, %v5281
      %v5283 = vpop.f32.mrb[0].mxu0
      %v5284 = vpop.f32.mrb[0].mxu0
      %v5285 = vadd.f32 0.0, %v5284
      %v5286 = vpop.f32.mrb[0].mxu0
      %5287 = vmatprep.mubr.bf16.mxu0 %v1216
      %5288 = vmatmul.mubr.bf16.gmra.mrb[0].mxu0 %v1215
      %v5289 = vpop.f32.mrb[0].mxu0
      %v5290 = vadd.f32 0.0, %v5289
      %v5291 = vpop.f32.mrb[0].mxu0
      %v5292 = vpop.f32.mrb[0].mxu0
      %v5293 = vadd.f32 0.0, %v5292
      %v5294 = vpop.f32.mrb[0].mxu0
      %5295 = vmatprep.mubr.bf16.mxu0 %v1218
      %5296 = vmatmul.mubr.bf16.gmra.mrb[0].mxu0 %v1217
      %v5297 = vpop.f32.mrb[0].mxu0
      %v5298 = vadd.f32 0.0, %v5297
      %v5299 = vpop.f32.mrb[0].mxu0
      %v5300 = vpop.f32.mrb[0].mxu0
      %v5301 = vadd.f32 0.0, %v5300
      %v5302 = vpop.f32.mrb[0].mxu0
      %5303 = vmatprep.mubr.bf16.mxu0 %v1220
      %5304 = vmatmul.mubr.bf16.gmra.mrb[0].mxu0 %v1219
      %v5305 = vpop.f32.mrb[0].mxu0
      %v5306 = vadd.f32 0.0, %v5305
      %v5307 = vpop.f32.mrb[0].mxu0
      %v5308 = vpop.f32.mrb[0].mxu0
      %v5309 = vadd.f32 0.0, %v5308
      %v5310 = vpop.f32.mrb[0].mxu0
      %5311 = vdwg.mxu0
      %v5312 = vpack.c.bf16 %v5189, %v5186
      %v5313 = vpack.c.bf16 %v5197, %v5194
      %v5314 = vpack.c.bf16 %v5205, %v5202
      %v5315 = vpack.c.bf16 %v5213, %v5210
      %v5316 = vpack.c.bf16 %v5221, %v5218
      %v5317 = vpack.c.bf16 %v5229, %v5226
      %v5318 = vpack.c.bf16 %v5237, %v5234
      %v5319 = vpack.c.bf16 %v5245, %v5242
      %v5320 = vpack.c.bf16 %v5253, %v5250
      %v5321 = vpack.c.bf16 %v5261, %v5258
      %v5322 = vpack.c.bf16 %v5269, %v5266
      %v5323 = vpack.c.bf16 %v5277, %v5274
      %v5324 = vpack.c.bf16 %v5285, %v5282
      %v5325 = vpack.c.bf16 %v5293, %v5290
      %v5326 = vpack.c.bf16 %v5301, %v5298
      %v5327 = vpack.c.bf16 %v5309, %v5306
      %5328 = vmatprep.subr.bf16.mxu0 0
      %5329 = vmatpush1.bf16.msra.mxu0 %v5135
      %5330 = vmatprep.subr.bf16.mxu0 0
      %5331 = vmatpush1.bf16.msra.mxu0 %v5136
      %5332 = vmatprep.subr.bf16.mxu0 0
      %5333 = vmatpush1.bf16.msra.mxu0 %v5137
      %5334 = vmatprep.subr.bf16.mxu0 0
      %5335 = vmatpush1.bf16.msra.mxu0 %v5138
      %5336 = vmatprep.subr.bf16.mxu0 0
      %5337 = vmatpush1.bf16.msra.mxu0 %v5139
      %5338 = vmatprep.subr.bf16.mxu0 0
      %5339 = vmatpush1.bf16.msra.mxu0 %v5140
      %5340 = vmatprep.subr.bf16.mxu0 0
      %5341 = vmatpush1.bf16.msra.mxu0 %v5141
      %5342 = vmatprep.subr.bf16.mxu0 0
      %5343 = vmatpush1.bf16.msra.mxu0 %v5142
      %5344 = vmatprep.subr.bf16.mxu0 0
      %5345 = vmatpush1.bf16.msra.mxu0 %v5143
      %5346 = vmatprep.subr.bf16.mxu0 0
      %5347 = vmatpush1.bf16.msra.mxu0 %v5144
      %5348 = vmatprep.subr.bf16.mxu0 0
      %5349 = vmatpush1.bf16.msra.mxu0 %v5145
      %5350 = vmatprep.subr.bf16.mxu0 0
      %5351 = vmatpush1.bf16.msra.mxu0 %v5146
      %5352 = vmatprep.subr.bf16.mxu0 0
      %5353 = vmatpush1.bf16.msra.mxu0 %v5147
      %5354 = vmatprep.subr.bf16.mxu0 0
      %5355 = vmatpush1.bf16.msra.mxu0 %v5148
      %5356 = vmatprep.subr.bf16.mxu0 0
      %5357 = vmatpush1.bf16.msra.mxu0 %v5149
      %5358 = vmatprep.subr.bf16.mxu0 0
      %5359 = vmatpush1.bf16.msra.mxu0 %v5150
      %5360 = vmatprep.mubr.bf16.mxu0 %v1574
      %5361 = vmatmul.mubr.bf16.gmra.mrb[0].mxu0 %v1573
      %v5362 = vpop.f32.mrb[0].mxu0
      %v5363 = vadd.f32 0.0, %v5362
      %v5364 = vpop.f32.mrb[0].mxu0
      %v5365 = vpop.f32.mrb[0].mxu0
      %v5366 = vadd.f32 0.0, %v5365
      %v5367 = vpop.f32.mrb[0].mxu0
      %5368 = vmatprep.mubr.bf16.mxu0 %v1576
      %5369 = vmatmul.mubr.bf16.gmra.mrb[0].mxu0 %v1575
      %v5370 = vpop.f32.mrb[0].mxu0
      %v5371 = vadd.f32 0.0, %v5370
      %v5372 = vpop.f32.mrb[0].mxu0
      %v5373 = vpop.f32.mrb[0].mxu0
      %v5374 = vadd.f32 0.0, %v5373
      %v5375 = vpop.f32.mrb[0].mxu0
      %5376 = vmatprep.mubr.bf16.mxu0 %v1578
      %5377 = vmatmul.mubr.bf16.gmra.mrb[0].mxu0 %v1577
      %v5378 = vpop.f32.mrb[0].mxu0
      %v5379 = vadd.f32 0.0, %v5378
      %v5380 = vpop.f32.mrb[0].mxu0
      %v5381 = vpop.f32.mrb[0].mxu0
      %v5382 = vadd.f32 0.0, %v5381
      %v5383 = vpop.f32.mrb[0].mxu0
      %5384 = vmatprep.mubr.bf16.mxu0 %v1580
      %5385 = vmatmul.mubr.bf16.gmra.mrb[0].mxu0 %v1579
      %v5386 = vpop.f32.mrb[0].mxu0
      %v5387 = vadd.f32 0.0, %v5386
      %v5388 = vpop.f32.mrb[0].mxu0
      %v5389 = vpop.f32.mrb[0].mxu0
      %v5390 = vadd.f32 0.0, %v5389
      %v5391 = vpop.f32.mrb[0].mxu0
      %5392 = vmatprep.mubr.bf16.mxu0 %v1582
      %5393 = vmatmul.mubr.bf16.gmra.mrb[0].mxu0 %v1581
      %v5394 = vpop.f32.mrb[0].mxu0
      %v5395 = vadd.f32 0.0, %v5394
      %v5396 = vpop.f32.mrb[0].mxu0
      %v5397 = vpop.f32.mrb[0].mxu0
      %v5398 = vadd.f32 0.0, %v5397
      %v5399 = vpop.f32.mrb[0].mxu0
      %5400 = vmatprep.mubr.bf16.mxu0 %v1584
      %5401 = vmatmul.mubr.bf16.gmra.mrb[0].mxu0 %v1583
      %v5402 = vpop.f32.mrb[0].mxu0
      %v5403 = vadd.f32 0.0, %v5402
      %v5404 = vpop.f32.mrb[0].mxu0
      %v5405 = vpop.f32.mrb[0].mxu0
      %v5406 = vadd.f32 0.0, %v5405
      %v5407 = vpop.f32.mrb[0].mxu0
      %5408 = vmatprep.mubr.bf16.mxu0 %v1586
      %5409 = vmatmul.mubr.bf16.gmra.mrb[0].mxu0 %v1585
      %v5410 = vpop.f32.mrb[0].mxu0
      %v5411 = vadd.f32 0.0, %v5410
      %v5412 = vpop.f32.mrb[0].mxu0
      %v5413 = vpop.f32.mrb[0].mxu0
      %v5414 = vadd.f32 0.0, %v5413
      %v5415 = vpop.f32.mrb[0].mxu0
      %5416 = vmatprep.mubr.bf16.mxu0 %v1588
      %5417 = vmatmul.mubr.bf16.gmra.mrb[0].mxu0 %v1587
      %v5418 = vpop.f32.mrb[0].mxu0
      %v5419 = vadd.f32 0.0, %v5418
      %v5420 = vpop.f32.mrb[0].mxu0
      %v5421 = vpop.f32.mrb[0].mxu0
      %v5422 = vadd.f32 0.0, %v5421
      %v5423 = vpop.f32.mrb[0].mxu0
      %5424 = vmatprep.mubr.bf16.mxu0 %v1590
      %5425 = vmatmul.mubr.bf16.gmra.mrb[0].mxu0 %v1589
      %v5426 = vpop.f32.mrb[0].mxu0
      %v5427 = vadd.f32 0.0, %v5426
      %v5428 = vpop.f32.mrb[0].mxu0
      %v5429 = vpop.f32.mrb[0].mxu0
      %v5430 = vadd.f32 0.0, %v5429
      %v5431 = vpop.f32.mrb[0].mxu0
      %5432 = vmatprep.mubr.bf16.mxu0 %v1592
      %5433 = vmatmul.mubr.bf16.gmra.mrb[0].mxu0 %v1591
      %v5434 = vpop.f32.mrb[0].mxu0
      %v5435 = vadd.f32 0.0, %v5434
      %v5436 = vpop.f32.mrb[0].mxu0
      %v5437 = vpop.f32.mrb[0].mxu0
      %v5438 = vadd.f32 0.0, %v5437
      %v5439 = vpop.f32.mrb[0].mxu0
      %5440 = vmatprep.mubr.bf16.mxu0 %v1594
      %5441 = vmatmul.mubr.bf16.gmra.mrb[0].mxu0 %v1593
      %v5442 = vpop.f32.mrb[0].mxu0
      %v5443 = vadd.f32 0.0, %v5442
      %v5444 = vpop.f32.mrb[0].mxu0
      %v5445 = vpop.f32.mrb[0].mxu0
      %v5446 = vadd.f32 0.0, %v5445
      %v5447 = vpop.f32.mrb[0].mxu0
      %5448 = vmatprep.mubr.bf16.mxu0 %v1596
      %5449 = vmatmul.mubr.bf16.gmra.mrb[0].mxu0 %v1595
      %v5450 = vpop.f32.mrb[0].mxu0
      %v5451 = vadd.f32 0.0, %v5450
      %v5452 = vpop.f32.mrb[0].mxu0
      %v5453 = vpop.f32.mrb[0].mxu0
      %v5454 = vadd.f32 0.0, %v5453
      %v5455 = vpop.f32.mrb[0].mxu0
      %5456 = vmatprep.mubr.bf16.mxu0 %v1598
      %5457 = vmatmul.mubr.bf16.gmra.mrb[0].mxu0 %v1597
      %v5458 = vpop.f32.mrb[0].mxu0
      %v5459 = vadd.f32 0.0, %v5458
      %v5460 = vpop.f32.mrb[0].mxu0
      %v5461 = vpop.f32.mrb[0].mxu0
      %v5462 = vadd.f32 0.0, %v5461
      %v5463 = vpop.f32.mrb[0].mxu0
      %5464 = vmatprep.mubr.bf16.mxu0 %v1600
      %5465 = vmatmul.mubr.bf16.gmra.mrb[0].mxu0 %v1599
      %v5466 = vpop.f32.mrb[0].mxu0
      %v5467 = vadd.f32 0.0, %v5466
      %v5468 = vpop.f32.mrb[0].mxu0
      %v5469 = vpop.f32.mrb[0].mxu0
      %v5470 = vadd.f32 0.0, %v5469
      %v5471 = vpop.f32.mrb[0].mxu0
      %5472 = vmatprep.mubr.bf16.mxu0 %v1602
      %5473 = vmatmul.mubr.bf16.gmra.mrb[0].mxu0 %v1601
      %v5474 = vpop.f32.mrb[0].mxu0
      %v5475 = vadd.f32 0.0, %v5474
      %v5476 = vpop.f32.mrb[0].mxu0
      %v5477 = vpop.f32.mrb[0].mxu0
      %v5478 = vadd.f32 0.0, %v5477
      %v5479 = vpop.f32.mrb[0].mxu0
      %5480 = vmatprep.mubr.bf16.mxu0 %v1604
      %5481 = vmatmul.mubr.bf16.gmra.mrb[0].mxu0 %v1603
      %v5482 = vpop.f32.mrb[0].mxu0
      %v5483 = vadd.f32 0.0, %v5482
      %v5484 = vpop.f32.mrb[0].mxu0
      %v5485 = vpop.f32.mrb[0].mxu0
      %v5486 = vadd.f32 0.0, %v5485
      %v5487 = vpop.f32.mrb[0].mxu0
      %5488 = vdwg.mxu0
      %v5489 = vpack.c.bf16 %v5366, %v5363
      %v5490 = vpack.c.bf16 %v5374, %v5371
      %v5491 = vpack.c.bf16 %v5382, %v5379
      %v5492 = vpack.c.bf16 %v5390, %v5387
      %v5493 = vpack.c.bf16 %v5398, %v5395
      %v5494 = vpack.c.bf16 %v5406, %v5403
      %v5495 = vpack.c.bf16 %v5414, %v5411
      %v5496 = vpack.c.bf16 %v5422, %v5419
      %v5497 = vpack.c.bf16 %v5430, %v5427
      %v5498 = vpack.c.bf16 %v5438, %v5435
      %v5499 = vpack.c.bf16 %v5446, %v5443
      %v5500 = vpack.c.bf16 %v5454, %v5451
      %v5501 = vpack.c.bf16 %v5462, %v5459
      %v5502 = vpack.c.bf16 %v5470, %v5467
      %v5503 = vpack.c.bf16 %v5478, %v5475
      %v5504 = vpack.c.bf16 %v5486, %v5483
      %v5505 = vld [vmem:[%s8] sm:$0x1]
      %v5506 = vld [vmem:[%s7] sm:$0xf]
      %v5507 = vld [vmem:[%s7 + $0x4] sm:$0xf]
      %v5508 = vld [vmem:[%s7 + $0x8] sm:$0xf]
      %v5509 = vld [vmem:[%s7 + $0xc] sm:$0xf]
      %v5510 = vld [vmem:[%s7 + $0x10] sm:$0xf]
      %v5511 = vld [vmem:[%s7 + $0x14] sm:$0xf]
      %v5512 = vld [vmem:[%s7 + $0x18] sm:$0xf]
      %v5513 = vld [vmem:[%s7 + $0x1c] sm:$0xf]
      %v5514 = vld [vmem:[%s7 + $0x20] sm:$0xf]
      %v5515 = vld [vmem:[%s7 + $0x24] sm:$0xf]
      %v5516 = vld [vmem:[%s7 + $0x28] sm:$0xf]
      %v5517 = vld [vmem:[%s7 + $0x2c] sm:$0xf]
      %v5518 = vld [vmem:[%s7 + $0x30] sm:$0xf]
      %v5519 = vld [vmem:[%s7 + $0x34] sm:$0xf]
      %v5520 = vld [vmem:[%s7 + $0x38] sm:$0xf]
      %v5521 = vld [vmem:[%s7 + $0x3c] sm:$0xf]
      %v5538 = vunpack.c.l.b16 %v5506
      %v5539 = vunpack.c.l.b16 %v5507
      %v5540 = vunpack.c.l.b16 %v5508
      %v5541 = vunpack.c.l.b16 %v5509
      %v5542 = vunpack.c.l.b16 %v5510
      %v5543 = vunpack.c.l.b16 %v5511
      %v5544 = vunpack.c.l.b16 %v5512
      %v5545 = vunpack.c.l.b16 %v5513
      %v5546 = vunpack.c.l.b16 %v5514
      %v5547 = vunpack.c.l.b16 %v5515
      %v5548 = vunpack.c.l.b16 %v5516
      %v5549 = vunpack.c.l.b16 %v5517
      %v5550 = vunpack.c.l.b16 %v5518
      %v5551 = vunpack.c.l.b16 %v5519
      %v5552 = vunpack.c.l.b16 %v5520
      %v5553 = vunpack.c.l.b16 %v5521
      %v5554 = vpack.c.b16 %v5539, %v5538
      %v5555 = vpack.c.b16 %v5541, %v5540
      %v5556 = vpack.c.b16 %v5543, %v5542
      %v5557 = vpack.c.b16 %v5545, %v5544
      %v5558 = vpack.c.b16 %v5547, %v5546
      %v5559 = vpack.c.b16 %v5549, %v5548
      %v5560 = vpack.c.b16 %v5551, %v5550
      %v5561 = vpack.c.b16 %v5553, %v5552
      %5570 = vmatprep.subr.bf16.mxu0 0
      %5571 = vmatpush1.bf16.msra.mxu0 %v5554
      %5572 = vmatprep.subr.bf16.mxu0 0
      %5573 = vmatpush1.bf16.msra.mxu0 %v5555
      %5574 = vmatprep.subr.bf16.mxu0 0
      %5575 = vmatpush1.bf16.msra.mxu0 %v5556
      %5576 = vmatprep.subr.bf16.mxu0 0
      %5577 = vmatpush1.bf16.msra.mxu0 %v5557
      %5578 = vmatprep.subr.bf16.mxu0 0
      %5579 = vmatpush1.bf16.msra.mxu0 %v5558
      %5580 = vmatprep.subr.bf16.mxu0 0
      %5581 = vmatpush1.bf16.msra.mxu0 %v5559
      %5582 = vmatprep.subr.bf16.mxu0 0
      %5583 = vmatpush1.bf16.msra.mxu0 %v5560
      %5584 = vmatprep.subr.bf16.mxu0 0
      %5585 = vmatpush1.bf16.msra.mxu0 %v5561
      %5586 = vmatprep.subr.bf16.mxu0 0
      %5587 = vmatpush1.bf16.msra.mxu0 0
      %5588 = vmatprep.subr.bf16.mxu0 0
      %5589 = vmatpush1.bf16.msra.mxu0 0
      %5590 = vmatprep.subr.bf16.mxu0 0
      %5591 = vmatpush1.bf16.msra.mxu0 0
      %5592 = vmatprep.subr.bf16.mxu0 0
      %5593 = vmatpush1.bf16.msra.mxu0 0
      %5594 = vmatprep.subr.bf16.mxu0 0
      %5595 = vmatpush1.bf16.msra.mxu0 0
      %5596 = vmatprep.subr.bf16.mxu0 0
      %5597 = vmatpush1.bf16.msra.mxu0 0
      %5598 = vmatprep.subr.bf16.mxu0 0
      %5599 = vmatpush1.bf16.msra.mxu0 0
      %5600 = vmatprep.subr.bf16.mxu0 0
      %5601 = vmatpush1.bf16.msra.mxu0 0
      %5602 = vmatprep.mubr.bf16.mxu0 0
      %5603 = vmatmul.mubr.bf16.gmra.mrb[0].mxu0 %v5312
      %v5604 = vpop.f32.mrb[0].mxu0
      %v5605 = vadd.f32 0.0, %v5604
      %v5606 = vpop.f32.mrb[0].mxu0
      %v5607 = vpop.f32.mrb[0].mxu0
      %v5608 = vadd.f32 0.0, %v5607
      %v5609 = vpop.f32.mrb[0].mxu0
      %5610 = vmatprep.mubr.bf16.mxu0 0
      %5611 = vmatmul.mubr.bf16.gmra.mrb[0].mxu0 %v5313
      %v5612 = vpop.f32.mrb[0].mxu0
      %v5613 = vadd.f32 0.0, %v5612
      %v5614 = vpop.f32.mrb[0].mxu0
      %v5615 = vpop.f32.mrb[0].mxu0
      %v5616 = vadd.f32 0.0, %v5615
      %v5617 = vpop.f32.mrb[0].mxu0
      %5618 = vmatprep.mubr.bf16.mxu0 0
      %5619 = vmatmul.mubr.bf16.gmra.mrb[0].mxu0 %v5314
      %v5620 = vpop.f32.mrb[0].mxu0
      %v5621 = vadd.f32 0.0, %v5620
      %v5622 = vpop.f32.mrb[0].mxu0
      %v5623 = vpop.f32.mrb[0].mxu0
      %v5624 = vadd.f32 0.0, %v5623
      %v5625 = vpop.f32.mrb[0].mxu0
      %5626 = vmatprep.mubr.bf16.mxu0 0
      %5627 = vmatmul.mubr.bf16.gmra.mrb[0].mxu0 %v5315
      %v5628 = vpop.f32.mrb[0].mxu0
      %v5629 = vadd.f32 0.0, %v5628
      %v5630 = vpop.f32.mrb[0].mxu0
      %v5631 = vpop.f32.mrb[0].mxu0
      %v5632 = vadd.f32 0.0, %v5631
      %v5633 = vpop.f32.mrb[0].mxu0
      %5634 = vmatprep.mubr.bf16.mxu0 0
      %5635 = vmatmul.mubr.bf16.gmra.mrb[0].mxu0 %v5316
      %v5636 = vpop.f32.mrb[0].mxu0
      %v5637 = vadd.f32 0.0, %v5636
      %v5638 = vpop.f32.mrb[0].mxu0
      %v5639 = vpop.f32.mrb[0].mxu0
      %v5640 = vadd.f32 0.0, %v5639
      %v5641 = vpop.f32.mrb[0].mxu0
      %5642 = vmatprep.mubr.bf16.mxu0 0
      %5643 = vmatmul.mubr.bf16.gmra.mrb[0].mxu0 %v5317
      %v5644 = vpop.f32.mrb[0].mxu0
      %v5645 = vadd.f32 0.0, %v5644
      %v5646 = vpop.f32.mrb[0].mxu0
      %v5647 = vpop.f32.mrb[0].mxu0
      %v5648 = vadd.f32 0.0, %v5647
      %v5649 = vpop.f32.mrb[0].mxu0
      %5650 = vmatprep.mubr.bf16.mxu0 0
      %5651 = vmatmul.mubr.bf16.gmra.mrb[0].mxu0 %v5318
      %v5652 = vpop.f32.mrb[0].mxu0
      %v5653 = vadd.f32 0.0, %v5652
      %v5654 = vpop.f32.mrb[0].mxu0
      %v5655 = vpop.f32.mrb[0].mxu0
      %v5656 = vadd.f32 0.0, %v5655
      %v5657 = vpop.f32.mrb[0].mxu0
      %5658 = vmatprep.mubr.bf16.mxu0 0
      %5659 = vmatmul.mubr.bf16.gmra.mrb[0].mxu0 %v5319
      %v5660 = vpop.f32.mrb[0].mxu0
      %v5661 = vadd.f32 0.0, %v5660
      %v5662 = vpop.f32.mrb[0].mxu0
      %v5663 = vpop.f32.mrb[0].mxu0
      %v5664 = vadd.f32 0.0, %v5663
      %v5665 = vpop.f32.mrb[0].mxu0
      %5666 = vmatprep.mubr.bf16.mxu0 0
      %5667 = vmatmul.mubr.bf16.gmra.mrb[0].mxu0 %v5320
      %v5668 = vpop.f32.mrb[0].mxu0
      %v5669 = vadd.f32 0.0, %v5668
      %v5670 = vpop.f32.mrb[0].mxu0
      %v5671 = vpop.f32.mrb[0].mxu0
      %v5672 = vadd.f32 0.0, %v5671
      %v5673 = vpop.f32.mrb[0].mxu0
      %5674 = vmatprep.mubr.bf16.mxu0 0
      %5675 = vmatmul.mubr.bf16.gmra.mrb[0].mxu0 %v5321
      %v5676 = vpop.f32.mrb[0].mxu0
      %v5677 = vadd.f32 0.0, %v5676
      %v5678 = vpop.f32.mrb[0].mxu0
      %v5679 = vpop.f32.mrb[0].mxu0
      %v5680 = vadd.f32 0.0, %v5679
      %v5681 = vpop.f32.mrb[0].mxu0
      %5682 = vmatprep.mubr.bf16.mxu0 0
      %5683 = vmatmul.mubr.bf16.gmra.mrb[0].mxu0 %v5322
      %v5684 = vpop.f32.mrb[0].mxu0
      %v5685 = vadd.f32 0.0, %v5684
      %v5686 = vpop.f32.mrb[0].mxu0
      %v5687 = vpop.f32.mrb[0].mxu0
      %v5688 = vadd.f32 0.0, %v5687
      %v5689 = vpop.f32.mrb[0].mxu0
      %5690 = vmatprep.mubr.bf16.mxu0 0
      %5691 = vmatmul.mubr.bf16.gmra.mrb[0].mxu0 %v5323
      %v5692 = vpop.f32.mrb[0].mxu0
      %v5693 = vadd.f32 0.0, %v5692
      %v5694 = vpop.f32.mrb[0].mxu0
      %v5695 = vpop.f32.mrb[0].mxu0
      %v5696 = vadd.f32 0.0, %v5695
      %v5697 = vpop.f32.mrb[0].mxu0
      %5698 = vmatprep.mubr.bf16.mxu0 0
      %5699 = vmatmul.mubr.bf16.gmra.mrb[0].mxu0 %v5324
      %v5700 = vpop.f32.mrb[0].mxu0
      %v5701 = vadd.f32 0.0, %v5700
      %v5702 = vpop.f32.mrb[0].mxu0
      %v5703 = vpop.f32.mrb[0].mxu0
      %v5704 = vadd.f32 0.0, %v5703
      %v5705 = vpop.f32.mrb[0].mxu0
      %5706 = vmatprep.mubr.bf16.mxu0 0
      %5707 = vmatmul.mubr.bf16.gmra.mrb[0].mxu0 %v5325
      %v5708 = vpop.f32.mrb[0].mxu0
      %v5709 = vadd.f32 0.0, %v5708
      %v5710 = vpop.f32.mrb[0].mxu0
      %v5711 = vpop.f32.mrb[0].mxu0
      %v5712 = vadd.f32 0.0, %v5711
      %v5713 = vpop.f32.mrb[0].mxu0
      %5714 = vmatprep.mubr.bf16.mxu0 0
      %5715 = vmatmul.mubr.bf16.gmra.mrb[0].mxu0 %v5326
      %v5716 = vpop.f32.mrb[0].mxu0
      %v5717 = vadd.f32 0.0, %v5716
      %v5718 = vpop.f32.mrb[0].mxu0
      %v5719 = vpop.f32.mrb[0].mxu0
      %v5720 = vadd.f32 0.0, %v5719
      %v5721 = vpop.f32.mrb[0].mxu0
      %5722 = vmatprep.mubr.bf16.mxu0 0
      %5723 = vmatmul.mubr.bf16.gmra.mrb[0].mxu0 %v5327
      %v5724 = vpop.f32.mrb[0].mxu0
      %v5725 = vadd.f32 0.0, %v5724
      %v5726 = vpop.f32.mrb[0].mxu0
      %v5727 = vpop.f32.mrb[0].mxu0
      %v5728 = vadd.f32 0.0, %v5727
      %v5729 = vpop.f32.mrb[0].mxu0
      %5730 = vdwg.mxu0
      %v5732 = vlaneseq
      %v5733 = vshrl.u32 %v5732, 7
      %v5734 = vsub.s32 0, %v5733
      %v5735 = vrot.slane %v5505, %v5734
      %v5737 = vadd.f32 %v5735, %v5605
      %v5738 = vadd.f32 %v5735, %v5608
      %v5739 = vadd.f32 %v5735, %v5613
      %v5740 = vadd.f32 %v5735, %v5616
      %v5741 = vadd.f32 %v5735, %v5621
      %v5742 = vadd.f32 %v5735, %v5624
      %v5743 = vadd.f32 %v5735, %v5629
      %v5744 = vadd.f32 %v5735, %v5632
      %v5745 = vadd.f32 %v5735, %v5637
      %v5746 = vadd.f32 %v5735, %v5640
      %v5747 = vadd.f32 %v5735, %v5645
      %v5748 = vadd.f32 %v5735, %v5648
      %v5749 = vadd.f32 %v5735, %v5653
      %v5750 = vadd.f32 %v5735, %v5656
      %v5751 = vadd.f32 %v5735, %v5661
      %v5752 = vadd.f32 %v5735, %v5664
      %v5753 = vadd.f32 %v5735, %v5669
      %v5754 = vadd.f32 %v5735, %v5672
      %v5755 = vadd.f32 %v5735, %v5677
      %v5756 = vadd.f32 %v5735, %v5680
      %v5757 = vadd.f32 %v5735, %v5685
      %v5758 = vadd.f32 %v5735, %v5688
      %v5759 = vadd.f32 %v5735, %v5693
      %v5760 = vadd.f32 %v5735, %v5696
      %v5761 = vadd.f32 %v5735, %v5701
      %v5762 = vadd.f32 %v5735, %v5704
      %v5763 = vadd.f32 %v5735, %v5709
      %v5764 = vadd.f32 %v5735, %v5712
      %v5765 = vadd.f32 %v5735, %v5717
      %v5766 = vadd.f32 %v5735, %v5720
      %v5767 = vadd.f32 %v5735, %v5725
      %v5768 = vadd.f32 %v5735, %v5728
      %s5769 = scalar_lea.vmem %s7, 64
      %v5770 = vld [vmem:[%s5769] sm:$0xf]
      %v5771 = vld [vmem:[%s5769 + $0x4] sm:$0xf]
      %v5772 = vld [vmem:[%s5769 + $0x8] sm:$0xf]
      %v5773 = vld [vmem:[%s5769 + $0xc] sm:$0xf]
      %v5774 = vld [vmem:[%s5769 + $0x10] sm:$0xf]
      %v5775 = vld [vmem:[%s5769 + $0x14] sm:$0xf]
      %v5776 = vld [vmem:[%s5769 + $0x18] sm:$0xf]
      %v5777 = vld [vmem:[%s5769 + $0x1c] sm:$0xf]
      %v5778 = vld [vmem:[%s5769 + $0x20] sm:$0xf]
      %v5779 = vld [vmem:[%s5769 + $0x24] sm:$0xf]
      %v5780 = vld [vmem:[%s5769 + $0x28] sm:$0xf]
      %v5781 = vld [vmem:[%s5769 + $0x2c] sm:$0xf]
      %v5782 = vld [vmem:[%s5769 + $0x30] sm:$0xf]
      %v5783 = vld [vmem:[%s5769 + $0x34] sm:$0xf]
      %v5784 = vld [vmem:[%s5769 + $0x38] sm:$0xf]
      %v5785 = vld [vmem:[%s5769 + $0x3c] sm:$0xf]
      %v5802 = vunpack.c.l.b16 %v5770
      %v5803 = vunpack.c.l.b16 %v5771
      %v5804 = vunpack.c.l.b16 %v5772
      %v5805 = vunpack.c.l.b16 %v5773
      %v5806 = vunpack.c.l.b16 %v5774
      %v5807 = vunpack.c.l.b16 %v5775
      %v5808 = vunpack.c.l.b16 %v5776
      %v5809 = vunpack.c.l.b16 %v5777
      %v5810 = vunpack.c.l.b16 %v5778
      %v5811 = vunpack.c.l.b16 %v5779
      %v5812 = vunpack.c.l.b16 %v5780
      %v5813 = vunpack.c.l.b16 %v5781
      %v5814 = vunpack.c.l.b16 %v5782
      %v5815 = vunpack.c.l.b16 %v5783
      %v5816 = vunpack.c.l.b16 %v5784
      %v5817 = vunpack.c.l.b16 %v5785
      %v5818 = vpack.c.b16 %v5803, %v5802
      %v5819 = vpack.c.b16 %v5805, %v5804
      %v5820 = vpack.c.b16 %v5807, %v5806
      %v5821 = vpack.c.b16 %v5809, %v5808
      %v5822 = vpack.c.b16 %v5811, %v5810
      %v5823 = vpack.c.b16 %v5813, %v5812
      %v5824 = vpack.c.b16 %v5815, %v5814
      %v5825 = vpack.c.b16 %v5817, %v5816
      %5834 = vmatprep.subr.bf16.mxu0 0
      %5835 = vmatpush1.bf16.msra.mxu0 %v5818
      %5836 = vmatprep.subr.bf16.mxu0 0
      %5837 = vmatpush1.bf16.msra.mxu0 %v5819
      %5838 = vmatprep.subr.bf16.mxu0 0
      %5839 = vmatpush1.bf16.msra.mxu0 %v5820
      %5840 = vmatprep.subr.bf16.mxu0 0
      %5841 = vmatpush1.bf16.msra.mxu0 %v5821
      %5842 = vmatprep.subr.bf16.mxu0 0
      %5843 = vmatpush1.bf16.msra.mxu0 %v5822
      %5844 = vmatprep.subr.bf16.mxu0 0
      %5845 = vmatpush1.bf16.msra.mxu0 %v5823
      %5846 = vmatprep.subr.bf16.mxu0 0
      %5847 = vmatpush1.bf16.msra.mxu0 %v5824
      %5848 = vmatprep.subr.bf16.mxu0 0
      %5849 = vmatpush1.bf16.msra.mxu0 %v5825
      %5850 = vmatprep.subr.bf16.mxu0 0
      %5851 = vmatpush1.bf16.msra.mxu0 0
      %5852 = vmatprep.subr.bf16.mxu0 0
      %5853 = vmatpush1.bf16.msra.mxu0 0
      %5854 = vmatprep.subr.bf16.mxu0 0
      %5855 = vmatpush1.bf16.msra.mxu0 0
      %5856 = vmatprep.subr.bf16.mxu0 0
      %5857 = vmatpush1.bf16.msra.mxu0 0
      %5858 = vmatprep.subr.bf16.mxu0 0
      %5859 = vmatpush1.bf16.msra.mxu0 0
      %5860 = vmatprep.subr.bf16.mxu0 0
      %5861 = vmatpush1.bf16.msra.mxu0 0
      %5862 = vmatprep.subr.bf16.mxu0 0
      %5863 = vmatpush1.bf16.msra.mxu0 0
      %5864 = vmatprep.subr.bf16.mxu0 0
      %5865 = vmatpush1.bf16.msra.mxu0 0
      %5866 = vmatprep.mubr.bf16.mxu0 0
      %5867 = vmatmul.mubr.bf16.gmra.mrb[0].mxu0 %v5135
      %v5868 = vpop.f32.mrb[0].mxu0
      %v5869 = vadd.f32 0.0, %v5868
      %v5870 = vpop.f32.mrb[0].mxu0
      %v5871 = vpop.f32.mrb[0].mxu0
      %v5872 = vadd.f32 0.0, %v5871
      %v5873 = vpop.f32.mrb[0].mxu0
      %5874 = vmatprep.mubr.bf16.mxu0 0
      %5875 = vmatmul.mubr.bf16.gmra.mrb[0].mxu0 %v5136
      %v5876 = vpop.f32.mrb[0].mxu0
      %v5877 = vadd.f32 0.0, %v5876
      %v5878 = vpop.f32.mrb[0].mxu0
      %v5879 = vpop.f32.mrb[0].mxu0
      %v5880 = vadd.f32 0.0, %v5879
      %v5881 = vpop.f32.mrb[0].mxu0
      %5882 = vmatprep.mubr.bf16.mxu0 0
      %5883 = vmatmul.mubr.bf16.gmra.mrb[0].mxu0 %v5137
      %v5884 = vpop.f32.mrb[0].mxu0
      %v5885 = vadd.f32 0.0, %v5884
      %v5886 = vpop.f32.mrb[0].mxu0
      %v5887 = vpop.f32.mrb[0].mxu0
      %v5888 = vadd.f32 0.0, %v5887
      %v5889 = vpop.f32.mrb[0].mxu0
      %5890 = vmatprep.mubr.bf16.mxu0 0
      %5891 = vmatmul.mubr.bf16.gmra.mrb[0].mxu0 %v5138
      %v5892 = vpop.f32.mrb[0].mxu0
      %v5893 = vadd.f32 0.0, %v5892
      %v5894 = vpop.f32.mrb[0].mxu0
      %v5895 = vpop.f32.mrb[0].mxu0
      %v5896 = vadd.f32 0.0, %v5895
      %v5897 = vpop.f32.mrb[0].mxu0
      %5898 = vmatprep.mubr.bf16.mxu0 0
      %5899 = vmatmul.mubr.bf16.gmra.mrb[0].mxu0 %v5139
      %v5900 = vpop.f32.mrb[0].mxu0
      %v5901 = vadd.f32 0.0, %v5900
      %v5902 = vpop.f32.mrb[0].mxu0
      %v5903 = vpop.f32.mrb[0].mxu0
      %v5904 = vadd.f32 0.0, %v5903
      %v5905 = vpop.f32.mrb[0].mxu0
      %5906 = vmatprep.mubr.bf16.mxu0 0
      %5907 = vmatmul.mubr.bf16.gmra.mrb[0].mxu0 %v5140
      %v5908 = vpop.f32.mrb[0].mxu0
      %v5909 = vadd.f32 0.0, %v5908
      %v5910 = vpop.f32.mrb[0].mxu0
      %v5911 = vpop.f32.mrb[0].mxu0
      %v5912 = vadd.f32 0.0, %v5911
      %v5913 = vpop.f32.mrb[0].mxu0
      %5914 = vmatprep.mubr.bf16.mxu0 0
      %5915 = vmatmul.mubr.bf16.gmra.mrb[0].mxu0 %v5141
      %v5916 = vpop.f32.mrb[0].mxu0
      %v5917 = vadd.f32 0.0, %v5916
      %v5918 = vpop.f32.mrb[0].mxu0
      %v5919 = vpop.f32.mrb[0].mxu0
      %v5920 = vadd.f32 0.0, %v5919
      %v5921 = vpop.f32.mrb[0].mxu0
      %5922 = vmatprep.mubr.bf16.mxu0 0
      %5923 = vmatmul.mubr.bf16.gmra.mrb[0].mxu0 %v5142
      %v5924 = vpop.f32.mrb[0].mxu0
      %v5925 = vadd.f32 0.0, %v5924
      %v5926 = vpop.f32.mrb[0].mxu0
      %v5927 = vpop.f32.mrb[0].mxu0
      %v5928 = vadd.f32 0.0, %v5927
      %v5929 = vpop.f32.mrb[0].mxu0
      %5930 = vmatprep.mubr.bf16.mxu0 0
      %5931 = vmatmul.mubr.bf16.gmra.mrb[0].mxu0 %v5143
      %v5932 = vpop.f32.mrb[0].mxu0
      %v5933 = vadd.f32 0.0, %v5932
      %v5934 = vpop.f32.mrb[0].mxu0
      %v5935 = vpop.f32.mrb[0].mxu0
      %v5936 = vadd.f32 0.0, %v5935
      %v5937 = vpop.f32.mrb[0].mxu0
      %5938 = vmatprep.mubr.bf16.mxu0 0
      %5939 = vmatmul.mubr.bf16.gmra.mrb[0].mxu0 %v5144
      %v5940 = vpop.f32.mrb[0].mxu0
      %v5941 = vadd.f32 0.0, %v5940
      %v5942 = vpop.f32.mrb[0].mxu0
      %v5943 = vpop.f32.mrb[0].mxu0
      %v5944 = vadd.f32 0.0, %v5943
      %v5945 = vpop.f32.mrb[0].mxu0
      %5946 = vmatprep.mubr.bf16.mxu0 0
      %5947 = vmatmul.mubr.bf16.gmra.mrb[0].mxu0 %v5145
      %v5948 = vpop.f32.mrb[0].mxu0
      %v5949 = vadd.f32 0.0, %v5948
      %v5950 = vpop.f32.mrb[0].mxu0
      %v5951 = vpop.f32.mrb[0].mxu0
      %v5952 = vadd.f32 0.0, %v5951
      %v5953 = vpop.f32.mrb[0].mxu0
      %5954 = vmatprep.mubr.bf16.mxu0 0
      %5955 = vmatmul.mubr.bf16.gmra.mrb[0].mxu0 %v5146
      %v5956 = vpop.f32.mrb[0].mxu0
      %v5957 = vadd.f32 0.0, %v5956
      %v5958 = vpop.f32.mrb[0].mxu0
      %v5959 = vpop.f32.mrb[0].mxu0
      %v5960 = vadd.f32 0.0, %v5959
      %v5961 = vpop.f32.mrb[0].mxu0
      %5962 = vmatprep.mubr.bf16.mxu0 0
      %5963 = vmatmul.mubr.bf16.gmra.mrb[0].mxu0 %v5147
      %v5964 = vpop.f32.mrb[0].mxu0
      %v5965 = vadd.f32 0.0, %v5964
      %v5966 = vpop.f32.mrb[0].mxu0
      %v5967 = vpop.f32.mrb[0].mxu0
      %v5968 = vadd.f32 0.0, %v5967
      %v5969 = vpop.f32.mrb[0].mxu0
      %5970 = vmatprep.mubr.bf16.mxu0 0
      %5971 = vmatmul.mubr.bf16.gmra.mrb[0].mxu0 %v5148
      %v5972 = vpop.f32.mrb[0].mxu0
      %v5973 = vadd.f32 0.0, %v5972
      %v5974 = vpop.f32.mrb[0].mxu0
      %v5975 = vpop.f32.mrb[0].mxu0
      %v5976 = vadd.f32 0.0, %v5975
      %v5977 = vpop.f32.mrb[0].mxu0
      %5978 = vmatprep.mubr.bf16.mxu0 0
      %5979 = vmatmul.mubr.bf16.gmra.mrb[0].mxu0 %v5149
      %v5980 = vpop.f32.mrb[0].mxu0
      %v5981 = vadd.f32 0.0, %v5980
      %v5982 = vpop.f32.mrb[0].mxu0
      %v5983 = vpop.f32.mrb[0].mxu0
      %v5984 = vadd.f32 0.0, %v5983
      %v5985 = vpop.f32.mrb[0].mxu0
      %5986 = vmatprep.mubr.bf16.mxu0 0
      %5987 = vmatmul.mubr.bf16.gmra.mrb[0].mxu0 %v5150
      %v5988 = vpop.f32.mrb[0].mxu0
      %v5989 = vadd.f32 0.0, %v5988
      %v5990 = vpop.f32.mrb[0].mxu0
      %v5991 = vpop.f32.mrb[0].mxu0
      %v5992 = vadd.f32 0.0, %v5991
      %v5993 = vpop.f32.mrb[0].mxu0
      %5994 = vdwg.mxu0
      %v5995 = vadd.f32 %v5737, %v5869
      %v5996 = vadd.f32 %v5738, %v5872
      %v5997 = vadd.f32 %v5739, %v5877
      %v5998 = vadd.f32 %v5740, %v5880
      %v5999 = vadd.f32 %v5741, %v5885
      %v6000 = vadd.f32 %v5742, %v5888
      %v6001 = vadd.f32 %v5743, %v5893
      %v6002 = vadd.f32 %v5744, %v5896
      %v6003 = vadd.f32 %v5745, %v5901
      %v6004 = vadd.f32 %v5746, %v5904
      %v6005 = vadd.f32 %v5747, %v5909
      %v6006 = vadd.f32 %v5748, %v5912
      %v6007 = vadd.f32 %v5749, %v5917
      %v6008 = vadd.f32 %v5750, %v5920
      %v6009 = vadd.f32 %v5751, %v5925
      %v6010 = vadd.f32 %v5752, %v5928
      %v6011 = vadd.f32 %v5753, %v5933
      %v6012 = vadd.f32 %v5754, %v5936
      %v6013 = vadd.f32 %v5755, %v5941
      %v6014 = vadd.f32 %v5756, %v5944
      %v6015 = vadd.f32 %v5757, %v5949
      %v6016 = vadd.f32 %v5758, %v5952
      %v6017 = vadd.f32 %v5759, %v5957
      %v6018 = vadd.f32 %v5760, %v5960
      %v6019 = vadd.f32 %v5761, %v5965
      %v6020 = vadd.f32 %v5762, %v5968
      %v6021 = vadd.f32 %v5763, %v5973
      %v6022 = vadd.f32 %v5764, %v5976
      %v6023 = vadd.f32 %v5765, %v5981
      %v6024 = vadd.f32 %v5766, %v5984
      %v6025 = vadd.f32 %v5767, %v5989
      %v6026 = vadd.f32 %v5768, %v5992
      %s6027 = scalar_lea.vmem %s7, 128
      %v6028 = vld [vmem:[%s6027] sm:$0xf]
      %v6029 = vld [vmem:[%s6027 + $0x4] sm:$0xf]
      %v6030 = vld [vmem:[%s6027 + $0x8] sm:$0xf]
      %v6031 = vld [vmem:[%s6027 + $0xc] sm:$0xf]
      %v6032 = vld [vmem:[%s6027 + $0x10] sm:$0xf]
      %v6033 = vld [vmem:[%s6027 + $0x14] sm:$0xf]
      %v6034 = vld [vmem:[%s6027 + $0x18] sm:$0xf]
      %v6035 = vld [vmem:[%s6027 + $0x1c] sm:$0xf]
      %v6036 = vld [vmem:[%s6027 + $0x20] sm:$0xf]
      %v6037 = vld [vmem:[%s6027 + $0x24] sm:$0xf]
      %v6038 = vld [vmem:[%s6027 + $0x28] sm:$0xf]
      %v6039 = vld [vmem:[%s6027 + $0x2c] sm:$0xf]
      %v6040 = vld [vmem:[%s6027 + $0x30] sm:$0xf]
      %v6041 = vld [vmem:[%s6027 + $0x34] sm:$0xf]
      %v6042 = vld [vmem:[%s6027 + $0x38] sm:$0xf]
      %v6043 = vld [vmem:[%s6027 + $0x3c] sm:$0xf]
      %v6060 = vunpack.c.l.b16 %v6028
      %v6061 = vunpack.c.l.b16 %v6029
      %v6062 = vunpack.c.l.b16 %v6030
      %v6063 = vunpack.c.l.b16 %v6031
      %v6064 = vunpack.c.l.b16 %v6032
      %v6065 = vunpack.c.l.b16 %v6033
      %v6066 = vunpack.c.l.b16 %v6034
      %v6067 = vunpack.c.l.b16 %v6035
      %v6068 = vunpack.c.l.b16 %v6036
      %v6069 = vunpack.c.l.b16 %v6037
      %v6070 = vunpack.c.l.b16 %v6038
      %v6071 = vunpack.c.l.b16 %v6039
      %v6072 = vunpack.c.l.b16 %v6040
      %v6073 = vunpack.c.l.b16 %v6041
      %v6074 = vunpack.c.l.b16 %v6042
      %v6075 = vunpack.c.l.b16 %v6043
      %v6076 = vpack.c.b16 %v6061, %v6060
      %v6077 = vpack.c.b16 %v6063, %v6062
      %v6078 = vpack.c.b16 %v6065, %v6064
      %v6079 = vpack.c.b16 %v6067, %v6066
      %v6080 = vpack.c.b16 %v6069, %v6068
      %v6081 = vpack.c.b16 %v6071, %v6070
      %v6082 = vpack.c.b16 %v6073, %v6072
      %v6083 = vpack.c.b16 %v6075, %v6074
      %6092 = vmatprep.subr.bf16.mxu0 0
      %6093 = vmatpush1.bf16.msra.mxu0 %v6076
      %6094 = vmatprep.subr.bf16.mxu0 0
      %6095 = vmatpush1.bf16.msra.mxu0 %v6077
      %6096 = vmatprep.subr.bf16.mxu0 0
      %6097 = vmatpush1.bf16.msra.mxu0 %v6078
      %6098 = vmatprep.subr.bf16.mxu0 0
      %6099 = vmatpush1.bf16.msra.mxu0 %v6079
      %6100 = vmatprep.subr.bf16.mxu0 0
      %6101 = vmatpush1.bf16.msra.mxu0 %v6080
      %6102 = vmatprep.subr.bf16.mxu0 0
      %6103 = vmatpush1.bf16.msra.mxu0 %v6081
      %6104 = vmatprep.subr.bf16.mxu0 0
      %6105 = vmatpush1.bf16.msra.mxu0 %v6082
      %6106 = vmatprep.subr.bf16.mxu0 0
      %6107 = vmatpush1.bf16.msra.mxu0 %v6083
      %6108 = vmatprep.subr.bf16.mxu0 0
      %6109 = vmatpush1.bf16.msra.mxu0 0
      %6110 = vmatprep.subr.bf16.mxu0 0
      %6111 = vmatpush1.bf16.msra.mxu0 0
      %6112 = vmatprep.subr.bf16.mxu0 0
      %6113 = vmatpush1.bf16.msra.mxu0 0
      %6114 = vmatprep.subr.bf16.mxu0 0
      %6115 = vmatpush1.bf16.msra.mxu0 0
      %6116 = vmatprep.subr.bf16.mxu0 0
      %6117 = vmatpush1.bf16.msra.mxu0 0
      %6118 = vmatprep.subr.bf16.mxu0 0
      %6119 = vmatpush1.bf16.msra.mxu0 0
      %6120 = vmatprep.subr.bf16.mxu0 0
      %6121 = vmatpush1.bf16.msra.mxu0 0
      %6122 = vmatprep.subr.bf16.mxu0 0
      %6123 = vmatpush1.bf16.msra.mxu0 0
      %6124 = vmatprep.mubr.bf16.mxu0 0
      %6125 = vmatmul.mubr.bf16.gmra.mrb[0].mxu0 %v5489
      %v6126 = vpop.f32.mrb[0].mxu0
      %v6127 = vadd.f32 0.0, %v6126
      %v6128 = vpop.f32.mrb[0].mxu0
      %v6129 = vpop.f32.mrb[0].mxu0
      %v6130 = vadd.f32 0.0, %v6129
      %v6131 = vpop.f32.mrb[0].mxu0
      %6132 = vmatprep.mubr.bf16.mxu0 0
      %6133 = vmatmul.mubr.bf16.gmra.mrb[0].mxu0 %v5490
      %v6134 = vpop.f32.mrb[0].mxu0
      %v6135 = vadd.f32 0.0, %v6134
      %v6136 = vpop.f32.mrb[0].mxu0
      %v6137 = vpop.f32.mrb[0].mxu0
      %v6138 = vadd.f32 0.0, %v6137
      %v6139 = vpop.f32.mrb[0].mxu0
      %6140 = vmatprep.mubr.bf16.mxu0 0
      %6141 = vmatmul.mubr.bf16.gmra.mrb[0].mxu0 %v5491
      %v6142 = vpop.f32.mrb[0].mxu0
      %v6143 = vadd.f32 0.0, %v6142
      %v6144 = vpop.f32.mrb[0].mxu0
      %v6145 = vpop.f32.mrb[0].mxu0
      %v6146 = vadd.f32 0.0, %v6145
      %v6147 = vpop.f32.mrb[0].mxu0
      %6148 = vmatprep.mubr.bf16.mxu0 0
      %6149 = vmatmul.mubr.bf16.gmra.mrb[0].mxu0 %v5492
      %v6150 = vpop.f32.mrb[0].mxu0
      %v6151 = vadd.f32 0.0, %v6150
      %v6152 = vpop.f32.mrb[0].mxu0
      %v6153 = vpop.f32.mrb[0].mxu0
      %v6154 = vadd.f32 0.0, %v6153
      %v6155 = vpop.f32.mrb[0].mxu0
      %6156 = vmatprep.mubr.bf16.mxu0 0
      %6157 = vmatmul.mubr.bf16.gmra.mrb[0].mxu0 %v5493
      %v6158 = vpop.f32.mrb[0].mxu0
      %v6159 = vadd.f32 0.0, %v6158
      %v6160 = vpop.f32.mrb[0].mxu0
      %v6161 = vpop.f32.mrb[0].mxu0
      %v6162 = vadd.f32 0.0, %v6161
      %v6163 = vpop.f32.mrb[0].mxu0
      %6164 = vmatprep.mubr.bf16.mxu0 0
      %6165 = vmatmul.mubr.bf16.gmra.mrb[0].mxu0 %v5494
      %v6166 = vpop.f32.mrb[0].mxu0
      %v6167 = vadd.f32 0.0, %v6166
      %v6168 = vpop.f32.mrb[0].mxu0
      %v6169 = vpop.f32.mrb[0].mxu0
      %v6170 = vadd.f32 0.0, %v6169
      %v6171 = vpop.f32.mrb[0].mxu0
      %6172 = vmatprep.mubr.bf16.mxu0 0
      %6173 = vmatmul.mubr.bf16.gmra.mrb[0].mxu0 %v5495
      %v6174 = vpop.f32.mrb[0].mxu0
      %v6175 = vadd.f32 0.0, %v6174
      %v6176 = vpop.f32.mrb[0].mxu0
      %v6177 = vpop.f32.mrb[0].mxu0
      %v6178 = vadd.f32 0.0, %v6177
      %v6179 = vpop.f32.mrb[0].mxu0
      %6180 = vmatprep.mubr.bf16.mxu0 0
      %6181 = vmatmul.mubr.bf16.gmra.mrb[0].mxu0 %v5496
      %v6182 = vpop.f32.mrb[0].mxu0
      %v6183 = vadd.f32 0.0, %v6182
      %v6184 = vpop.f32.mrb[0].mxu0
      %v6185 = vpop.f32.mrb[0].mxu0
      %v6186 = vadd.f32 0.0, %v6185
      %v6187 = vpop.f32.mrb[0].mxu0
      %6188 = vmatprep.mubr.bf16.mxu0 0
      %6189 = vmatmul.mubr.bf16.gmra.mrb[0].mxu0 %v5497
      %v6190 = vpop.f32.mrb[0].mxu0
      %v6191 = vadd.f32 0.0, %v6190
      %v6192 = vpop.f32.mrb[0].mxu0
      %v6193 = vpop.f32.mrb[0].mxu0
      %v6194 = vadd.f32 0.0, %v6193
      %v6195 = vpop.f32.mrb[0].mxu0
      %6196 = vmatprep.mubr.bf16.mxu0 0
      %6197 = vmatmul.mubr.bf16.gmra.mrb[0].mxu0 %v5498
      %v6198 = vpop.f32.mrb[0].mxu0
      %v6199 = vadd.f32 0.0, %v6198
      %v6200 = vpop.f32.mrb[0].mxu0
      %v6201 = vpop.f32.mrb[0].mxu0
      %v6202 = vadd.f32 0.0, %v6201
      %v6203 = vpop.f32.mrb[0].mxu0
      %6204 = vmatprep.mubr.bf16.mxu0 0
      %6205 = vmatmul.mubr.bf16.gmra.mrb[0].mxu0 %v5499
      %v6206 = vpop.f32.mrb[0].mxu0
      %v6207 = vadd.f32 0.0, %v6206
      %v6208 = vpop.f32.mrb[0].mxu0
      %v6209 = vpop.f32.mrb[0].mxu0
      %v6210 = vadd.f32 0.0, %v6209
      %v6211 = vpop.f32.mrb[0].mxu0
      %6212 = vmatprep.mubr.bf16.mxu0 0
      %6213 = vmatmul.mubr.bf16.gmra.mrb[0].mxu0 %v5500
      %v6214 = vpop.f32.mrb[0].mxu0
      %v6215 = vadd.f32 0.0, %v6214
      %v6216 = vpop.f32.mrb[0].mxu0
      %v6217 = vpop.f32.mrb[0].mxu0
      %v6218 = vadd.f32 0.0, %v6217
      %v6219 = vpop.f32.mrb[0].mxu0
      %6220 = vmatprep.mubr.bf16.mxu0 0
      %6221 = vmatmul.mubr.bf16.gmra.mrb[0].mxu0 %v5501
      %v6222 = vpop.f32.mrb[0].mxu0
      %v6223 = vadd.f32 0.0, %v6222
      %v6224 = vpop.f32.mrb[0].mxu0
      %v6225 = vpop.f32.mrb[0].mxu0
      %v6226 = vadd.f32 0.0, %v6225
      %v6227 = vpop.f32.mrb[0].mxu0
      %6228 = vmatprep.mubr.bf16.mxu0 0
      %6229 = vmatmul.mubr.bf16.gmra.mrb[0].mxu0 %v5502
      %v6230 = vpop.f32.mrb[0].mxu0
      %v6231 = vadd.f32 0.0, %v6230
      %v6232 = vpop.f32.mrb[0].mxu0
      %v6233 = vpop.f32.mrb[0].mxu0
      %v6234 = vadd.f32 0.0, %v6233
      %v6235 = vpop.f32.mrb[0].mxu0
      %6236 = vmatprep.mubr.bf16.mxu0 0
      %6237 = vmatmul.mubr.bf16.gmra.mrb[0].mxu0 %v5503
      %v6238 = vpop.f32.mrb[0].mxu0
      %v6239 = vadd.f32 0.0, %v6238
      %v6240 = vpop.f32.mrb[0].mxu0
      %v6241 = vpop.f32.mrb[0].mxu0
      %v6242 = vadd.f32 0.0, %v6241
      %v6243 = vpop.f32.mrb[0].mxu0
      %6244 = vmatprep.mubr.bf16.mxu0 0
      %6245 = vmatmul.mubr.bf16.gmra.mrb[0].mxu0 %v5504
      %v6246 = vpop.f32.mrb[0].mxu0
      %v6247 = vadd.f32 0.0, %v6246
      %v6248 = vpop.f32.mrb[0].mxu0
      %v6249 = vpop.f32.mrb[0].mxu0
      %v6250 = vadd.f32 0.0, %v6249
      %v6251 = vpop.f32.mrb[0].mxu0
      %6252 = vdwg.mxu0
      %v6253 = vadd.f32 %v5995, %v6127
      %v6254 = vadd.f32 %v5996, %v6130
      %v6255 = vadd.f32 %v5997, %v6135
      %v6256 = vadd.f32 %v5998, %v6138
      %v6257 = vadd.f32 %v5999, %v6143
      %v6258 = vadd.f32 %v6000, %v6146
      %v6259 = vadd.f32 %v6001, %v6151
      %v6260 = vadd.f32 %v6002, %v6154
      %v6261 = vadd.f32 %v6003, %v6159
      %v6262 = vadd.f32 %v6004, %v6162
      %v6263 = vadd.f32 %v6005, %v6167
      %v6264 = vadd.f32 %v6006, %v6170
      %v6265 = vadd.f32 %v6007, %v6175
      %v6266 = vadd.f32 %v6008, %v6178
      %v6267 = vadd.f32 %v6009, %v6183
      %v6268 = vadd.f32 %v6010, %v6186
      %v6269 = vadd.f32 %v6011, %v6191
      %v6270 = vadd.f32 %v6012, %v6194
      %v6271 = vadd.f32 %v6013, %v6199
      %v6272 = vadd.f32 %v6014, %v6202
      %v6273 = vadd.f32 %v6015, %v6207
      %v6274 = vadd.f32 %v6016, %v6210
      %v6275 = vadd.f32 %v6017, %v6215
      %v6276 = vadd.f32 %v6018, %v6218
      %v6277 = vadd.f32 %v6019, %v6223
      %v6278 = vadd.f32 %v6020, %v6226
      %v6279 = vadd.f32 %v6021, %v6231
      %v6280 = vadd.f32 %v6022, %v6234
      %v6281 = vadd.f32 %v6023, %v6239
      %v6282 = vadd.f32 %v6024, %v6242
      %v6283 = vadd.f32 %v6025, %v6247
      %v6284 = vadd.f32 %v6026, %v6250
      %v6285 = vadd.f32 %v6253, %v337
      %v6286 = vadd.f32 %v6254, %v338
      %v6287 = vadd.f32 %v6255, %v339
      %v6288 = vadd.f32 %v6256, %v340
      %v6289 = vadd.f32 %v6257, %v341
      %v6290 = vadd.f32 %v6258, %v342
      %v6291 = vadd.f32 %v6259, %v343
      %v6292 = vadd.f32 %v6260, %v344
      %v6293 = vadd.f32 %v6261, %v345
      %v6294 = vadd.f32 %v6262, %v346
      %v6295 = vadd.f32 %v6263, %v347
      %v6296 = vadd.f32 %v6264, %v348
      %v6297 = vadd.f32 %v6265, %v349
      %v6298 = vadd.f32 %v6266, %v350
      %v6299 = vadd.f32 %v6267, %v351
      %v6300 = vadd.f32 %v6268, %v352
      %v6301 = vadd.f32 %v6269, %v353
      %v6302 = vadd.f32 %v6270, %v354
      %v6303 = vadd.f32 %v6271, %v355
      %v6304 = vadd.f32 %v6272, %v356
      %v6305 = vadd.f32 %v6273, %v357
      %v6306 = vadd.f32 %v6274, %v358
      %v6307 = vadd.f32 %v6275, %v359
      %v6308 = vadd.f32 %v6276, %v360
      %v6309 = vadd.f32 %v6277, %v361
      %v6310 = vadd.f32 %v6278, %v362
      %v6311 = vadd.f32 %v6279, %v363
      %v6312 = vadd.f32 %v6280, %v364
      %v6313 = vadd.f32 %v6281, %v365
      %v6314 = vadd.f32 %v6282, %v366
      %v6315 = vadd.f32 %v6283, %v367
      %v6316 = vadd.f32 %v6284, %v368
      %v6317 = vmax.f32 %v6285, 0.0
      %v6318 = vmax.f32 %v6286, 0.0
      %v6319 = vmax.f32 %v6287, 0.0
      %v6320 = vmax.f32 %v6288, 0.0
      %v6321 = vmax.f32 %v6289, 0.0
      %v6322 = vmax.f32 %v6290, 0.0
      %v6323 = vmax.f32 %v6291, 0.0
      %v6324 = vmax.f32 %v6292, 0.0
      %v6325 = vmax.f32 %v6293, 0.0
      %v6326 = vmax.f32 %v6294, 0.0
      %v6327 = vmax.f32 %v6295, 0.0
      %v6328 = vmax.f32 %v6296, 0.0
      %v6329 = vmax.f32 %v6297, 0.0
      %v6330 = vmax.f32 %v6298, 0.0
      %v6331 = vmax.f32 %v6299, 0.0
      %v6332 = vmax.f32 %v6300, 0.0
      %v6333 = vmax.f32 %v6301, 0.0
      %v6334 = vmax.f32 %v6302, 0.0
      %v6335 = vmax.f32 %v6303, 0.0
      %v6336 = vmax.f32 %v6304, 0.0
      %v6337 = vmax.f32 %v6305, 0.0
      %v6338 = vmax.f32 %v6306, 0.0
      %v6339 = vmax.f32 %v6307, 0.0
      %v6340 = vmax.f32 %v6308, 0.0
      %v6341 = vmax.f32 %v6309, 0.0
      %v6342 = vmax.f32 %v6310, 0.0
      %v6343 = vmax.f32 %v6311, 0.0
      %v6344 = vmax.f32 %v6312, 0.0
      %v6345 = vmax.f32 %v6313, 0.0
      %v6346 = vmax.f32 %v6314, 0.0
      %v6347 = vmax.f32 %v6315, 0.0
      %v6348 = vmax.f32 %v6316, 0.0
      %6349 = vst [vmem:[%s334] sm:$0xff] %v6317
      %6350 = vst [vmem:[%s334 + $0x8] sm:$0xff] %v6318
      %6351 = vst [vmem:[%s334 + $0x10] sm:$0xff] %v6319
      %6352 = vst [vmem:[%s334 + $0x18] sm:$0xff] %v6320
      %6353 = vst [vmem:[%s334 + $0x20] sm:$0xff] %v6321
      %6354 = vst [vmem:[%s334 + $0x28] sm:$0xff] %v6322
      %6355 = vst [vmem:[%s334 + $0x30] sm:$0xff] %v6323
      %6356 = vst [vmem:[%s334 + $0x38] sm:$0xff] %v6324
      %6357 = vst [vmem:[%s334 + $0x40] sm:$0xff] %v6325
      %6358 = vst [vmem:[%s334 + $0x48] sm:$0xff] %v6326
      %6359 = vst [vmem:[%s334 + $0x50] sm:$0xff] %v6327
      %6360 = vst [vmem:[%s334 + $0x58] sm:$0xff] %v6328
      %6361 = vst [vmem:[%s334 + $0x60] sm:$0xff] %v6329
      %6362 = vst [vmem:[%s334 + $0x68] sm:$0xff] %v6330
      %6363 = vst [vmem:[%s334 + $0x70] sm:$0xff] %v6331
      %6364 = vst [vmem:[%s334 + $0x78] sm:$0xff] %v6332
      %6365 = vst [vmem:[%s334 + $0x80] sm:$0xff] %v6333
      %6366 = vst [vmem:[%s334 + $0x88] sm:$0xff] %v6334
      %6367 = vst [vmem:[%s334 + $0x90] sm:$0xff] %v6335
      %6368 = vst [vmem:[%s334 + $0x98] sm:$0xff] %v6336
      %6369 = vst [vmem:[%s334 + $0xa0] sm:$0xff] %v6337
      %6370 = vst [vmem:[%s334 + $0xa8] sm:$0xff] %v6338
      %6371 = vst [vmem:[%s334 + $0xb0] sm:$0xff] %v6339
      %6372 = vst [vmem:[%s334 + $0xb8] sm:$0xff] %v6340
      %6373 = vst [vmem:[%s334 + $0xc0] sm:$0xff] %v6341
      %6374 = vst [vmem:[%s334 + $0xc8] sm:$0xff] %v6342
      %6375 = vst [vmem:[%s334 + $0xd0] sm:$0xff] %v6343
      %6376 = vst [vmem:[%s334 + $0xd8] sm:$0xff] %v6344
      %6377 = vst [vmem:[%s334 + $0xe0] sm:$0xff] %v6345
      %6378 = vst [vmem:[%s334 + $0xe8] sm:$0xff] %v6346
      %6379 = vst [vmem:[%s334 + $0xf0] sm:$0xff] %v6347
      %6380 = vst [vmem:[%s334 + $0xf8] sm:$0xff] %v6348
      %s6381 = smul.u32 32, %s20
      %p6382 = scmp.lt.s32.totalorder %s6381, 63
      %s6383 = scalar_select %p6382, %s6381, 63
      %s6384 = smul.addr %s6383, 8
      %s6385 = scalar_lea.vmem %s9, %s6384
      // Predicated region
      $region57: #{decoder_forward.11} parent=55 // pred_check
        %p6386 = pneg %p232
      $region58: #{decoder_forward.11} parent=55 // pred_check_branch
        %6388 = sbr.rel (%p6386) target = $region60
      $region59: #{decoder_forward.11} parent=55 // pred_region
        %s6389 = smul.u32 32, %s20
      $region60: #{decoder_forward.11} parent=55 // pred_fallthru
        _
    $region56: #{decoder_forward.11} parent=5 // pred_fallthru
      _
    %p6390 = scmp.le.s32.totalorder 2, %s15
    // Predicated region
    $region61: #{decoder_forward.11} parent=5 // pred_check
      %p6391 = pneg %p6390
    $region62: #{decoder_forward.11} parent=5 // pred_check_branch
      %6393 = sbr.rel (%p6391) target = $region64
    $region63: #{decoder_forward.11} parent=5 // pred_region
      %s6394 = ssub.s32 %s15, 2
      // Predicated region
      $region65: #{decoder_forward.11} parent=63 // pred_check
        %p6395 = pneg %p238
      $region66: #{decoder_forward.11} parent=63 // pred_check_branch
        %6397 = sbr.rel (%p6395) target = $region68
      $region67: #{decoder_forward.11} parent=63 // pred_region
        %s6398 = smul.u32 32, %s21
        %p6399 = scmp.lt.s32.totalorder %s6398, 63
        %s6400 = scalar_select %p6399, %s6398, 63
        %s6401 = smul.addr %s6400, 8
        %s6402 = scalar_lea.vmem %s9, %s6401
      $region68: #{decoder_forward.11} parent=63 // pred_fallthru
        _
    $region64: #{decoder_forward.11} parent=5 // pred_fallthru
      _
  $region6: #{decoder_forward.11} parent=0 // loop_footer
    %s19 = sadd.s32 1, %s15
  $region7: #{decoder_forward.11} parent=0 // loop_footer_branch
    %14 = sbr.rel target = $region3
  $region8: #{decoder_forward.11} parent=0 // loop_exit
    _

</llo_original>
